<compile_context>
chip_gen: v7x
topology: tpu7x:2x2x1
jax: 0.10.0
libtpu: 0.0.40
codegen_flags: <defaults>
</compile_context>

<pallas_src>
import jax
import jax.numpy as jnp
from jax import lax
from jax.experimental import pallas as pl
from jax.experimental.pallas import tpu as pltpu

TB = 128  # batch tile — the lane dimension inside the kernel


def _lenet5_kernel(
    x_ref,                      # (32, 32, TB) spatially pre-padded input, batch in lanes
    w1s_ref, b1s_ref,           # SMEM: (6, 25), (6,)      conv1 weights / bias
    w2s_ref, b2s_ref,           # SMEM: (16, 150), (16,)   conv2 weights / bias
    wfc1_ref, bfc1_ref,         # VMEM: (120, 400), (120, 1)
    wfc2_ref, bfc2_ref,         # VMEM: (84, 120), (84, 1)
    wfc3_ref, bfc3_ref,         # VMEM: (C, 84), (C, 1)
    o_ref,                      # (C, TB) logits, batch in lanes
    p1_ref,                     # (6, 14, 14, TB)  scratch: pooled conv1 maps
    ptmp1_ref,                  # (14, 28, TB)     scratch: pool1 row sums
    p2_ref,                     # (16, 5, 5, TB)   scratch: pooled conv2 maps
    ptmp2_ref,                  # (5, 10, TB)      scratch: pool2 row sums
    f_ref,                      # (400, TB)        scratch: flattened features
):
    tb = x_ref.shape[-1]
    f32 = jnp.float32

    # ---- conv1 (1 -> 6, 5x5, input pre-padded to 32x32) + tanh + 2x2 avgpool
    def conv1_channel(o, carry):
        def kh_step(kh, acc):
            for kw in range(5):                      # static sublane offsets
                acc = acc + (w1s_ref[o, kh * 5 + kw]
                             * x_ref[pl.ds(kh, 28), kw:kw + 28, :])
            return acc

        acc = lax.fori_loop(0, 5, kh_step,
                            jnp.full((28, 28, tb), b1s_ref[o], f32))
        h = jnp.tanh(acc).reshape(14, 2, 28, tb)     # split rows (leading dim only)
        ptmp1_ref[...] = h[:, 0] + h[:, 1]           # (14, 28, tb): row pairs summed
        p1_ref[o] = 0.25 * (ptmp1_ref[:, pl.ds(0, 14, stride=2), :]
                            + ptmp1_ref[:, pl.ds(1, 14, stride=2), :])
        return carry

    lax.fori_loop(0, 6, conv1_channel, 0)

    # ---- conv2 (6 -> 16, 5x5, valid) + tanh + 2x2 avgpool -------------------
    def conv2_channel(o, carry):
        def cin_step(c, acc):
            for kh in range(5):
                for kw in range(5):
                    acc = acc + (w2s_ref[o, c * 25 + kh * 5 + kw]
                                 * p1_ref[c, kh:kh + 10, kw:kw + 10, :])
            return acc

        acc = lax.fori_loop(0, 6, cin_step,
                            jnp.full((10, 10, tb), b2s_ref[o], f32))
        h = jnp.tanh(acc).reshape(5, 2, 10, tb)
        ptmp2_ref[...] = h[:, 0] + h[:, 1]           # (5, 10, tb)
        p2_ref[o] = 0.25 * (ptmp2_ref[:, pl.ds(0, 5, stride=2), :]
                            + ptmp2_ref[:, pl.ds(1, 5, stride=2), :])
        return carry

    lax.fori_loop(0, 16, conv2_channel, 0)

    # ---- flatten in PyTorch (C, H, W) order into a (400, TB) feature matrix -
    for c in range(16):
        pc = p2_ref[c]                               # (5, 5, tb): (h, w, batch)
        for r in range(5):
            f_ref[c * 25 + r * 5:c * 25 + (r + 1) * 5, :] = pc[r]

    # ---- classifier: fc1 -> tanh -> fc2 -> tanh -> fc3 (MXU matmuls) --------
    feats = f_ref[...]                                       # (400, tb)
    a1 = jnp.tanh(jnp.dot(wfc1_ref[...], feats, preferred_element_type=f32)
                  + bfc1_ref[...])
    a2 = jnp.tanh(jnp.dot(wfc2_ref[...], a1, preferred_element_type=f32)
                  + bfc2_ref[...])
    o_ref[...] = (jnp.dot(wfc3_ref[...], a2, preferred_element_type=f32)
                  + bfc3_ref[...])


@jax.jit
def lenet5_forward(params, x):
    """x: (B, 1, 28, 28) float32 -> logits (B, num_classes)."""
    B = x.shape[0]
    n_cls = params["fc3_w"].shape[0]
    b_pad = ((B + TB - 1) // TB) * TB

    # NCHW -> spatially padded (conv1 padding=2), batch moved into lanes.
    xp = jnp.pad(x[:, 0].astype(jnp.float32),
                 ((0, b_pad - B), (2, 2), (2, 2)))          # (b_pad, 32, 32)
    xt = jnp.transpose(xp, (1, 2, 0))                       # (32, 32, b_pad)

    w1s = params["conv1_w"].reshape(6, 25).astype(jnp.float32)
    b1s = params["conv1_b"].astype(jnp.float32)
    w2s = params["conv2_w"].reshape(16, 150).astype(jnp.float32)
    b2s = params["conv2_b"].astype(jnp.float32)
    wfc1 = params["fc1_w"].astype(jnp.float32)              # (120, 400)
    bfc1 = params["fc1_b"].reshape(-1, 1).astype(jnp.float32)
    wfc2 = params["fc2_w"].astype(jnp.float32)              # (84, 120)
    bfc2 = params["fc2_b"].reshape(-1, 1).astype(jnp.float32)
    wfc3 = params["fc3_w"].astype(jnp.float32)              # (n_cls, 84)
    bfc3 = params["fc3_b"].reshape(-1, 1).astype(jnp.float32)

    smem = pl.BlockSpec(memory_space=pltpu.MemorySpace.SMEM)
    out = pl.pallas_call(
        _lenet5_kernel,
        out_shape=jax.ShapeDtypeStruct((n_cls, b_pad), jnp.float32),
        grid=(b_pad // TB,),
        in_specs=[
            pl.BlockSpec((32, 32, TB), lambda i: (0, 0, i)),   # input batch tile
            smem, smem, smem, smem,                            # conv weights / biases
            pl.BlockSpec(wfc1.shape, lambda i: (0, 0)),
            pl.BlockSpec(bfc1.shape, lambda i: (0, 0)),
            pl.BlockSpec(wfc2.shape, lambda i: (0, 0)),
            pl.BlockSpec(bfc2.shape, lambda i: (0, 0)),
            pl.BlockSpec(wfc3.shape, lambda i: (0, 0)),
            pl.BlockSpec(bfc3.shape, lambda i: (0, 0)),
        ],
        out_specs=pl.BlockSpec((n_cls, TB), lambda i: (0, i)),
        scratch_shapes=[
            pltpu.VMEM((6, 14, 14, TB), jnp.float32),    # pooled layer-1 maps
            pltpu.VMEM((14, 28, TB), jnp.float32),       # pool1 row-sum tmp
            pltpu.VMEM((16, 5, 5, TB), jnp.float32),     # pooled layer-2 maps
            pltpu.VMEM((5, 10, TB), jnp.float32),        # pool2 row-sum tmp
            pltpu.VMEM((400, TB), jnp.float32),          # flattened features
        ],
        compiler_params=pltpu.CompilerParams(
            dimension_semantics=("parallel",)),
    )(xt, w1s, b1s, w2s, b2s, wfc1, bfc1, wfc2, bfc2, wfc3, bfc3)

    return out[:, :B].T                                     # (B, num_classes)


def init_params(key, num_classes=10):
    """Synthetic parameters in the exact PyTorch layouts of LeNet5V1."""
    ks = jax.random.split(key, 10)

    def uni(k, shape, fan_in):
        bound = float(fan_in) ** -0.5
        return jax.random.uniform(k, shape, jnp.float32, -bound, bound)

    return {
        "conv1_w": uni(ks[0], (6, 1, 5, 5), 25),
        "conv1_b": uni(ks[1], (6,), 25),
        "conv2_w": uni(ks[2], (16, 6, 5, 5), 150),
        "conv2_b": uni(ks[3], (16,), 150),
        "fc1_w": uni(ks[4], (120, 400), 400),
        "fc1_b": uni(ks[5], (120,), 400),
        "fc2_w": uni(ks[6], (84, 120), 120),
        "fc2_b": uni(ks[7], (84,), 120),
        "fc3_w": uni(ks[8], (num_classes, 84), 84),
        "fc3_b": uni(ks[9], (num_classes,), 84),
    }


def lenet5_reference(params, x):
    """Plain-JAX reference of the PyTorch module (correctness check only)."""
    hp = lax.Precision.HIGHEST
    dn = ("NCHW", "OIHW", "NCHW")
    B = x.shape[0]
    y = lax.conv_general_dilated(x, params["conv1_w"], (1, 1), ((2, 2), (2, 2)),
                                 dimension_numbers=dn, precision=hp)
    y = jnp.tanh(y + params["conv1_b"][None, :, None, None])
    y = y.reshape(B, 6, 14, 2, 14, 2).mean(axis=(3, 5))
    y = lax.conv_general_dilated(y, params["conv2_w"], (1, 1), ((0, 0), (0, 0)),
                                 dimension_numbers=dn, precision=hp)
    y = jnp.tanh(y + params["conv2_b"][None, :, None, None])
    y = y.reshape(B, 16, 5, 2, 5, 2).mean(axis=(3, 5))
    y = y.reshape(B, 400)
    y = jnp.tanh(jnp.matmul(y, params["fc1_w"].T, precision=hp) + params["fc1_b"])
    y = jnp.tanh(jnp.matmul(y, params["fc2_w"].T, precision=hp) + params["fc2_b"])
    return jnp.matmul(y, params["fc3_w"].T, precision=hp) + params["fc3_b"]


if __name__ == "__main__":
    key = jax.random.PRNGKey(0)
    pkey, xkey = jax.random.split(key)
    params = init_params(pkey)
    # LeNet-5 requires 28x28 spatial input so that flatten -> 16*5*5 = 400.
    x = jax.random.normal(xkey, (2, 1, 28, 28), dtype=jnp.float32)

    logits = lenet5_forward(params, x)
    jax.block_until_ready(logits)
    assert logits.shape == (2, 10), logits.shape

    ref = lenet5_reference(params, x)
    err = float(jnp.max(jnp.abs(logits - ref)))
    assert err < 5e-2, f"kernel/reference mismatch: max abs err = {err}"
    print("KERNEL_OK")
</pallas_src>

<mosaic_0001>
module attributes {stable_mosaic.version = 11 : i64} {
  func.func @_lenet5_kernel(%arg0: i32, %arg1: memref<32x32x128xf32, #tpu.memory_space<vmem>>, %arg2: memref<6x25xf32, #tpu.memory_space<smem>>, %arg3: memref<6xf32, #tpu.memory_space<smem>>, %arg4: memref<16x150xf32, #tpu.memory_space<smem>>, %arg5: memref<16xf32, #tpu.memory_space<smem>>, %arg6: memref<120x400xf32, #tpu.memory_space<vmem>>, %arg7: memref<120x1xf32, #tpu.memory_space<vmem>>, %arg8: memref<84x120xf32, #tpu.memory_space<vmem>>, %arg9: memref<84x1xf32, #tpu.memory_space<vmem>>, %arg10: memref<10x84xf32, #tpu.memory_space<vmem>>, %arg11: memref<10x1xf32, #tpu.memory_space<vmem>>, %arg12: memref<10x128xf32, #tpu.memory_space<vmem>>, %arg13: memref<6x14x14x128xf32, #tpu.memory_space<vmem>>, %arg14: memref<14x28x128xf32, #tpu.memory_space<vmem>>, %arg15: memref<16x5x5x128xf32, #tpu.memory_space<vmem>>, %arg16: memref<5x10x128xf32, #tpu.memory_space<vmem>>, %arg17: memref<400x128xf32, #tpu.memory_space<vmem>>) attributes {dimension_semantics = [#tpu.dimension_semantics<parallel>], iteration_bounds = array<i64: 1>, scalar_prefetch = 0 : i64, scratch_operands = 5 : i64, tpu.core_type = #tpu.core_type<tc>, window_params = [{transform_indices = @transform_0, window_bounds = array<i64: 32, 32, 128>}, {transform_indices = @transform_1, window_bounds = array<i64: 6, 25>}, {transform_indices = @transform_2, window_bounds = array<i64: 6>}, {transform_indices = @transform_3, window_bounds = array<i64: 16, 150>}, {transform_indices = @transform_4, window_bounds = array<i64: 16>}, {pipeline_mode = #tpu.pipeline_mode<synchronous>, transform_indices = @transform_5, window_bounds = array<i64: 120, 400>}, {pipeline_mode = #tpu.pipeline_mode<synchronous>, transform_indices = @transform_6, window_bounds = array<i64: 120, 1>}, {pipeline_mode = #tpu.pipeline_mode<synchronous>, transform_indices = @transform_7, window_bounds = array<i64: 84, 120>}, {pipeline_mode = #tpu.pipeline_mode<synchronous>, transform_indices = @transform_8, window_bounds = array<i64: 84, 1>}, {pipeline_mode = #tpu.pipeline_mode<synchronous>, transform_indices = @transform_9, window_bounds = array<i64: 10, 84>}, {pipeline_mode = #tpu.pipeline_mode<synchronous>, transform_indices = @transform_10, window_bounds = array<i64: 10, 1>}, {transform_indices = @transform_11, window_bounds = array<i64: 10, 128>}]} {
    %c0_i32 = arith.constant 0 : i32
    %c6_i32 = arith.constant 6 : i32
    %0 = arith.addi %c0_i32, %c6_i32 : i32
    %c1_i32 = arith.constant 1 : i32
    scf.for %arg18 = %c0_i32 to %0 step %c1_i32  : i32 {
      %293 = arith.index_cast %arg18 : i32 to index
      %294 = memref.load %arg3[%293] : memref<6xf32, #tpu.memory_space<smem>>
      %295 = vector.broadcast %294 : f32 to vector<28x28x128xf32>
      %c0_i32_154 = arith.constant 0 : i32
      %c5_i32 = arith.constant 5 : i32
      %296 = arith.addi %c0_i32_154, %c5_i32 : i32
      %c1_i32_155 = arith.constant 1 : i32
      %297 = scf.for %arg19 = %c0_i32_154 to %296 step %c1_i32_155 iter_args(%arg20 = %295) -> (vector<28x28x128xf32>)  : i32 {
        %c5_i32_170 = arith.constant 5 : i32
        %315 = arith.muli %arg19, %c5_i32_170 : i32
        %c0_i32_171 = arith.constant 0 : i32
        %316 = arith.addi %315, %c0_i32_171 : i32
        %317 = arith.index_cast %arg18 : i32 to index
        %318 = arith.index_cast %316 : i32 to index
        %319 = memref.load %arg2[%317, %318] : memref<6x25xf32, #tpu.memory_space<smem>>
        %320 = arith.index_cast %arg19 : i32 to index
        %c0_172 = arith.constant 0 : index
        %c0_173 = arith.constant 0 : index
        %321 = vector.load %arg1[%320, %c0_172, %c0_173] : memref<32x32x128xf32, #tpu.memory_space<vmem>>, vector<28x28x128xf32>
        %322 = vector.broadcast %319 : f32 to vector<28x28x128xf32>
        %323 = arith.mulf %322, %321 : vector<28x28x128xf32>
        %324 = arith.addf %arg20, %323 : vector<28x28x128xf32>
        %c5_i32_174 = arith.constant 5 : i32
        %325 = arith.muli %arg19, %c5_i32_174 : i32
        %c1_i32_175 = arith.constant 1 : i32
        %326 = arith.addi %325, %c1_i32_175 : i32
        %327 = arith.index_cast %arg18 : i32 to index
        %328 = arith.index_cast %326 : i32 to index
        %329 = memref.load %arg2[%327, %328] : memref<6x25xf32, #tpu.memory_space<smem>>
        %330 = arith.index_cast %arg19 : i32 to index
        %c1_176 = arith.constant 1 : index
        %c0_177 = arith.constant 0 : index
        %331 = vector.load %arg1[%330, %c1_176, %c0_177] : memref<32x32x128xf32, #tpu.memory_space<vmem>>, vector<28x28x128xf32>
        %332 = vector.broadcast %329 : f32 to vector<28x28x128xf32>
        %333 = arith.mulf %332, %331 : vector<28x28x128xf32>
        %334 = arith.addf %324, %333 : vector<28x28x128xf32>
        %c5_i32_178 = arith.constant 5 : i32
        %335 = arith.muli %arg19, %c5_i32_178 : i32
        %c2_i32 = arith.constant 2 : i32
        %336 = arith.addi %335, %c2_i32 : i32
        %337 = arith.index_cast %arg18 : i32 to index
        %338 = arith.index_cast %336 : i32 to index
        %339 = memref.load %arg2[%337, %338] : memref<6x25xf32, #tpu.memory_space<smem>>
        %340 = arith.index_cast %arg19 : i32 to index
        %c2_179 = arith.constant 2 : index
        %c0_180 = arith.constant 0 : index
        %341 = vector.load %arg1[%340, %c2_179, %c0_180] : memref<32x32x128xf32, #tpu.memory_space<vmem>>, vector<28x28x128xf32>
        %342 = vector.broadcast %339 : f32 to vector<28x28x128xf32>
        %343 = arith.mulf %342, %341 : vector<28x28x128xf32>
        %344 = arith.addf %334, %343 : vector<28x28x128xf32>
        %c5_i32_181 = arith.constant 5 : i32
        %345 = arith.muli %arg19, %c5_i32_181 : i32
        %c3_i32 = arith.constant 3 : i32
        %346 = arith.addi %345, %c3_i32 : i32
        %347 = arith.index_cast %arg18 : i32 to index
        %348 = arith.index_cast %346 : i32 to index
        %349 = memref.load %arg2[%347, %348] : memref<6x25xf32, #tpu.memory_space<smem>>
        %350 = arith.index_cast %arg19 : i32 to index
        %c3_182 = arith.constant 3 : index
        %c0_183 = arith.constant 0 : index
        %351 = vector.load %arg1[%350, %c3_182, %c0_183] : memref<32x32x128xf32, #tpu.memory_space<vmem>>, vector<28x28x128xf32>
        %352 = vector.broadcast %349 : f32 to vector<28x28x128xf32>
        %353 = arith.mulf %352, %351 : vector<28x28x128xf32>
        %354 = arith.addf %344, %353 : vector<28x28x128xf32>
        %c5_i32_184 = arith.constant 5 : i32
        %355 = arith.muli %arg19, %c5_i32_184 : i32
        %c4_i32 = arith.constant 4 : i32
        %356 = arith.addi %355, %c4_i32 : i32
        %357 = arith.index_cast %arg18 : i32 to index
        %358 = arith.index_cast %356 : i32 to index
        %359 = memref.load %arg2[%357, %358] : memref<6x25xf32, #tpu.memory_space<smem>>
        %360 = arith.index_cast %arg19 : i32 to index
        %c4_185 = arith.constant 4 : index
        %c0_186 = arith.constant 0 : index
        %361 = vector.load %arg1[%360, %c4_185, %c0_186] : memref<32x32x128xf32, #tpu.memory_space<vmem>>, vector<28x28x128xf32>
        %362 = vector.broadcast %359 : f32 to vector<28x28x128xf32>
        %363 = arith.mulf %362, %361 : vector<28x28x128xf32>
        %364 = arith.addf %354, %363 : vector<28x28x128xf32>
        scf.yield %364 : vector<28x28x128xf32>
      }
      %c5_i32_156 = arith.constant 5 : i32
      %298 = math.tanh %297 : vector<28x28x128xf32>
      %299 = vector.shape_cast %298 : vector<28x28x128xf32> to vector<14x2x28x128xf32>
      %300 = vector.extract_strided_slice %299 {offsets = [0, 0, 0, 0], sizes = [14, 1, 28, 128], strides = [1, 1, 1, 1]} : vector<14x2x28x128xf32> to vector<14x1x28x128xf32>
      %301 = vector.shape_cast %300 : vector<14x1x28x128xf32> to vector<14x28x128xf32>
      %302 = vector.extract_strided_slice %299 {offsets = [0, 1, 0, 0], sizes = [14, 1, 28, 128], strides = [1, 1, 1, 1]} : vector<14x2x28x128xf32> to vector<14x1x28x128xf32>
      %303 = vector.shape_cast %302 : vector<14x1x28x128xf32> to vector<14x28x128xf32>
      %304 = arith.addf %301, %303 : vector<14x28x128xf32>
      %c0_157 = arith.constant 0 : index
      %c0_158 = arith.constant 0 : index
      %c0_159 = arith.constant 0 : index
      %305 = vector.load %arg14[%c0_157, %c0_158, %c0_159] : memref<14x28x128xf32, #tpu.memory_space<vmem>>, vector<14x28x128xf32>
      tpu.vector_store %arg14[%c0_157, %c0_158, %c0_159], %304 {strides = array<i32>} : memref<14x28x128xf32, #tpu.memory_space<vmem>>, vector<14x28x128xf32>,
      %c0_160 = arith.constant 0 : index
      %c0_161 = arith.constant 0 : index
      %c0_162 = arith.constant 0 : index
      %306 = tpu.strided_load %arg14[%c0_160, %c0_161, %c0_162] {strides = array<i32: 1, 2, 1>} : memref<14x28x128xf32, #tpu.memory_space<vmem>>, vector<14x14x128xf32>
      %c0_163 = arith.constant 0 : index
      %c1_164 = arith.constant 1 : index
      %c0_165 = arith.constant 0 : index
      %307 = tpu.strided_load %arg14[%c0_163, %c1_164, %c0_165] {strides = array<i32: 1, 2, 1>} : memref<14x28x128xf32, #tpu.memory_space<vmem>>, vector<14x14x128xf32>
      %308 = arith.addf %306, %307 : vector<14x14x128xf32>
      %cst_166 = arith.constant 2.500000e-01 : f32
      %309 = vector.broadcast %cst_166 : f32 to vector<14x14x128xf32>
      %310 = arith.mulf %309, %308 : vector<14x14x128xf32>
      %311 = arith.index_cast %arg18 : i32 to index
      %c0_167 = arith.constant 0 : index
      %c0_168 = arith.constant 0 : index
      %c0_169 = arith.constant 0 : index
      %312 = vector.load %arg13[%311, %c0_167, %c0_168, %c0_169] : memref<6x14x14x128xf32, #tpu.memory_space<vmem>>, vector<1x14x14x128xf32>
      %313 = vector.shape_cast %312 : vector<1x14x14x128xf32> to vector<14x14x128xf32>
      %314 = vector.shape_cast %310 : vector<14x14x128xf32> to vector<1x14x14x128xf32>
      tpu.vector_store %arg13[%311, %c0_167, %c0_168, %c0_169], %314 {strides = array<i32>} : memref<6x14x14x128xf32, #tpu.memory_space<vmem>>, vector<1x14x14x128xf32>,
    }
    %c6_i32_0 = arith.constant 6 : i32
    %c0_i32_1 = arith.constant 0 : i32
    %c16_i32 = arith.constant 16 : i32
    %1 = arith.addi %c0_i32_1, %c16_i32 : i32
    %c1_i32_2 = arith.constant 1 : i32
    scf.for %arg18 = %c0_i32_1 to %1 step %c1_i32_2  : i32 {
      %293 = arith.index_cast %arg18 : i32 to index
      %294 = memref.load %arg5[%293] : memref<16xf32, #tpu.memory_space<smem>>
      %295 = vector.broadcast %294 : f32 to vector<10x10x128xf32>
      %c0_i32_154 = arith.constant 0 : i32
      %c6_i32_155 = arith.constant 6 : i32
      %296 = arith.addi %c0_i32_154, %c6_i32_155 : i32
      %c1_i32_156 = arith.constant 1 : i32
      %297 = scf.for %arg19 = %c0_i32_154 to %296 step %c1_i32_156 iter_args(%arg20 = %295) -> (vector<10x10x128xf32>)  : i32 {
        %c25_i32 = arith.constant 25 : i32
        %315 = arith.muli %arg19, %c25_i32 : i32
        %c0_i32_171 = arith.constant 0 : i32
        %316 = arith.addi %315, %c0_i32_171 : i32
        %c0_i32_172 = arith.constant 0 : i32
        %317 = arith.addi %316, %c0_i32_172 : i32
        %318 = arith.index_cast %arg18 : i32 to index
        %319 = arith.index_cast %317 : i32 to index
        %320 = memref.load %arg4[%318, %319] : memref<16x150xf32, #tpu.memory_space<smem>>
        %321 = arith.index_cast %arg19 : i32 to index
        %c0_173 = arith.constant 0 : index
        %c0_174 = arith.constant 0 : index
        %c0_175 = arith.constant 0 : index
        %322 = vector.load %arg13[%321, %c0_173, %c0_174, %c0_175] : memref<6x14x14x128xf32, #tpu.memory_space<vmem>>, vector<1x10x10x128xf32>
        %323 = vector.shape_cast %322 : vector<1x10x10x128xf32> to vector<10x10x128xf32>
        %324 = vector.broadcast %320 : f32 to vector<10x10x128xf32>
        %325 = arith.mulf %324, %323 : vector<10x10x128xf32>
        %326 = arith.addf %arg20, %325 : vector<10x10x128xf32>
        %c25_i32_176 = arith.constant 25 : i32
        %327 = arith.muli %arg19, %c25_i32_176 : i32
        %c0_i32_177 = arith.constant 0 : i32
        %328 = arith.addi %327, %c0_i32_177 : i32
        %c1_i32_178 = arith.constant 1 : i32
        %329 = arith.addi %328, %c1_i32_178 : i32
        %330 = arith.index_cast %arg18 : i32 to index
        %331 = arith.index_cast %329 : i32 to index
        %332 = memref.load %arg4[%330, %331] : memref<16x150xf32, #tpu.memory_space<smem>>
        %333 = arith.index_cast %arg19 : i32 to index
        %c0_179 = arith.constant 0 : index
        %c1_180 = arith.constant 1 : index
        %c0_181 = arith.constant 0 : index
        %334 = vector.load %arg13[%333, %c0_179, %c1_180, %c0_181] : memref<6x14x14x128xf32, #tpu.memory_space<vmem>>, vector<1x10x10x128xf32>
        %335 = vector.shape_cast %334 : vector<1x10x10x128xf32> to vector<10x10x128xf32>
        %336 = vector.broadcast %332 : f32 to vector<10x10x128xf32>
        %337 = arith.mulf %336, %335 : vector<10x10x128xf32>
        %338 = arith.addf %326, %337 : vector<10x10x128xf32>
        %c25_i32_182 = arith.constant 25 : i32
        %339 = arith.muli %arg19, %c25_i32_182 : i32
        %c0_i32_183 = arith.constant 0 : i32
        %340 = arith.addi %339, %c0_i32_183 : i32
        %c2_i32 = arith.constant 2 : i32
        %341 = arith.addi %340, %c2_i32 : i32
        %342 = arith.index_cast %arg18 : i32 to index
        %343 = arith.index_cast %341 : i32 to index
        %344 = memref.load %arg4[%342, %343] : memref<16x150xf32, #tpu.memory_space<smem>>
        %345 = arith.index_cast %arg19 : i32 to index
        %c0_184 = arith.constant 0 : index
        %c2_185 = arith.constant 2 : index
        %c0_186 = arith.constant 0 : index
        %346 = vector.load %arg13[%345, %c0_184, %c2_185, %c0_186] : memref<6x14x14x128xf32, #tpu.memory_space<vmem>>, vector<1x10x10x128xf32>
        %347 = vector.shape_cast %346 : vector<1x10x10x128xf32> to vector<10x10x128xf32>
        %348 = vector.broadcast %344 : f32 to vector<10x10x128xf32>
        %349 = arith.mulf %348, %347 : vector<10x10x128xf32>
        %350 = arith.addf %338, %349 : vector<10x10x128xf32>
        %c25_i32_187 = arith.constant 25 : i32
        %351 = arith.muli %arg19, %c25_i32_187 : i32
        %c0_i32_188 = arith.constant 0 : i32
        %352 = arith.addi %351, %c0_i32_188 : i32
        %c3_i32 = arith.constant 3 : i32
        %353 = arith.addi %352, %c3_i32 : i32
        %354 = arith.index_cast %arg18 : i32 to index
        %355 = arith.index_cast %353 : i32 to index
        %356 = memref.load %arg4[%354, %355] : memref<16x150xf32, #tpu.memory_space<smem>>
        %357 = arith.index_cast %arg19 : i32 to index
        %c0_189 = arith.constant 0 : index
        %c3_190 = arith.constant 3 : index
        %c0_191 = arith.constant 0 : index
        %358 = vector.load %arg13[%357, %c0_189, %c3_190, %c0_191] : memref<6x14x14x128xf32, #tpu.memory_space<vmem>>, vector<1x10x10x128xf32>
        %359 = vector.shape_cast %358 : vector<1x10x10x128xf32> to vector<10x10x128xf32>
        %360 = vector.broadcast %356 : f32 to vector<10x10x128xf32>
        %361 = arith.mulf %360, %359 : vector<10x10x128xf32>
        %362 = arith.addf %350, %361 : vector<10x10x128xf32>
        %c25_i32_192 = arith.constant 25 : i32
        %363 = arith.muli %arg19, %c25_i32_192 : i32
        %c0_i32_193 = arith.constant 0 : i32
        %364 = arith.addi %363, %c0_i32_193 : i32
        %c4_i32 = arith.constant 4 : i32
        %365 = arith.addi %364, %c4_i32 : i32
        %366 = arith.index_cast %arg18 : i32 to index
        %367 = arith.index_cast %365 : i32 to index
        %368 = memref.load %arg4[%366, %367] : memref<16x150xf32, #tpu.memory_space<smem>>
        %369 = arith.index_cast %arg19 : i32 to index
        %c0_194 = arith.constant 0 : index
        %c4_195 = arith.constant 4 : index
        %c0_196 = arith.constant 0 : index
        %370 = vector.load %arg13[%369, %c0_194, %c4_195, %c0_196] : memref<6x14x14x128xf32, #tpu.memory_space<vmem>>, vector<1x10x10x128xf32>
        %371 = vector.shape_cast %370 : vector<1x10x10x128xf32> to vector<10x10x128xf32>
        %372 = vector.broadcast %368 : f32 to vector<10x10x128xf32>
        %373 = arith.mulf %372, %371 : vector<10x10x128xf32>
        %374 = arith.addf %362, %373 : vector<10x10x128xf32>
        %c25_i32_197 = arith.constant 25 : i32
        %375 = arith.muli %arg19, %c25_i32_197 : i32
        %c5_i32 = arith.constant 5 : i32
        %376 = arith.addi %375, %c5_i32 : i32
        %c0_i32_198 = arith.constant 0 : i32
        %377 = arith.addi %376, %c0_i32_198 : i32
        %378 = arith.index_cast %arg18 : i32 to index
        %379 = arith.index_cast %377 : i32 to index
        %380 = memref.load %arg4[%378, %379] : memref<16x150xf32, #tpu.memory_space<smem>>
        %381 = arith.index_cast %arg19 : i32 to index
        %c1_199 = arith.constant 1 : index
        %c0_200 = arith.constant 0 : index
        %c0_201 = arith.constant 0 : index
        %382 = vector.load %arg13[%381, %c1_199, %c0_200, %c0_201] : memref<6x14x14x128xf32, #tpu.memory_space<vmem>>, vector<1x10x10x128xf32>
        %383 = vector.shape_cast %382 : vector<1x10x10x128xf32> to vector<10x10x128xf32>
        %384 = vector.broadcast %380 : f32 to vector<10x10x128xf32>
        %385 = arith.mulf %384, %383 : vector<10x10x128xf32>
        %386 = arith.addf %374, %385 : vector<10x10x128xf32>
        %c25_i32_202 = arith.constant 25 : i32
        %387 = arith.muli %arg19, %c25_i32_202 : i32
        %c5_i32_203 = arith.constant 5 : i32
        %388 = arith.addi %387, %c5_i32_203 : i32
        %c1_i32_204 = arith.constant 1 : i32
        %389 = arith.addi %388, %c1_i32_204 : i32
        %390 = arith.index_cast %arg18 : i32 to index
        %391 = arith.index_cast %389 : i32 to index
        %392 = memref.load %arg4[%390, %391] : memref<16x150xf32, #tpu.memory_space<smem>>
        %393 = arith.index_cast %arg19 : i32 to index
        %c1_205 = arith.constant 1 : index
        %c1_206 = arith.constant 1 : index
        %c0_207 = arith.constant 0 : index
        %394 = vector.load %arg13[%393, %c1_205, %c1_206, %c0_207] : memref<6x14x14x128xf32, #tpu.memory_space<vmem>>, vector<1x10x10x128xf32>
        %395 = vector.shape_cast %394 : vector<1x10x10x128xf32> to vector<10x10x128xf32>
        %396 = vector.broadcast %392 : f32 to vector<10x10x128xf32>
        %397 = arith.mulf %396, %395 : vector<10x10x128xf32>
        %398 = arith.addf %386, %397 : vector<10x10x128xf32>
        %c25_i32_208 = arith.constant 25 : i32
        %399 = arith.muli %arg19, %c25_i32_208 : i32
        %c5_i32_209 = arith.constant 5 : i32
        %400 = arith.addi %399, %c5_i32_209 : i32
        %c2_i32_210 = arith.constant 2 : i32
        %401 = arith.addi %400, %c2_i32_210 : i32
        %402 = arith.index_cast %arg18 : i32 to index
        %403 = arith.index_cast %401 : i32 to index
        %404 = memref.load %arg4[%402, %403] : memref<16x150xf32, #tpu.memory_space<smem>>
        %405 = arith.index_cast %arg19 : i32 to index
        %c1_211 = arith.constant 1 : index
        %c2_212 = arith.constant 2 : index
        %c0_213 = arith.constant 0 : index
        %406 = vector.load %arg13[%405, %c1_211, %c2_212, %c0_213] : memref<6x14x14x128xf32, #tpu.memory_space<vmem>>, vector<1x10x10x128xf32>
        %407 = vector.shape_cast %406 : vector<1x10x10x128xf32> to vector<10x10x128xf32>
        %408 = vector.broadcast %404 : f32 to vector<10x10x128xf32>
        %409 = arith.mulf %408, %407 : vector<10x10x128xf32>
        %410 = arith.addf %398, %409 : vector<10x10x128xf32>
        %c25_i32_214 = arith.constant 25 : i32
        %411 = arith.muli %arg19, %c25_i32_214 : i32
        %c5_i32_215 = arith.constant 5 : i32
        %412 = arith.addi %411, %c5_i32_215 : i32
        %c3_i32_216 = arith.constant 3 : i32
        %413 = arith.addi %412, %c3_i32_216 : i32
        %414 = arith.index_cast %arg18 : i32 to index
        %415 = arith.index_cast %413 : i32 to index
        %416 = memref.load %arg4[%414, %415] : memref<16x150xf32, #tpu.memory_space<smem>>
        %417 = arith.index_cast %arg19 : i32 to index
        %c1_217 = arith.constant 1 : index
        %c3_218 = arith.constant 3 : index
        %c0_219 = arith.constant 0 : index
        %418 = vector.load %arg13[%417, %c1_217, %c3_218, %c0_219] : memref<6x14x14x128xf32, #tpu.memory_space<vmem>>, vector<1x10x10x128xf32>
        %419 = vector.shape_cast %418 : vector<1x10x10x128xf32> to vector<10x10x128xf32>
        %420 = vector.broadcast %416 : f32 to vector<10x10x128xf32>
        %421 = arith.mulf %420, %419 : vector<10x10x128xf32>
        %422 = arith.addf %410, %421 : vector<10x10x128xf32>
        %c25_i32_220 = arith.constant 25 : i32
        %423 = arith.muli %arg19, %c25_i32_220 : i32
        %c5_i32_221 = arith.constant 5 : i32
        %424 = arith.addi %423, %c5_i32_221 : i32
        %c4_i32_222 = arith.constant 4 : i32
        %425 = arith.addi %424, %c4_i32_222 : i32
        %426 = arith.index_cast %arg18 : i32 to index
        %427 = arith.index_cast %425 : i32 to index
        %428 = memref.load %arg4[%426, %427] : memref<16x150xf32, #tpu.memory_space<smem>>
        %429 = arith.index_cast %arg19 : i32 to index
        %c1_223 = arith.constant 1 : index
        %c4_224 = arith.constant 4 : index
        %c0_225 = arith.constant 0 : index
        %430 = vector.load %arg13[%429, %c1_223, %c4_224, %c0_225] : memref<6x14x14x128xf32, #tpu.memory_space<vmem>>, vector<1x10x10x128xf32>
        %431 = vector.shape_cast %430 : vector<1x10x10x128xf32> to vector<10x10x128xf32>
        %432 = vector.broadcast %428 : f32 to vector<10x10x128xf32>
        %433 = arith.mulf %432, %431 : vector<10x10x128xf32>
        %434 = arith.addf %422, %433 : vector<10x10x128xf32>
        %c25_i32_226 = arith.constant 25 : i32
        %435 = arith.muli %arg19, %c25_i32_226 : i32
        %c10_i32 = arith.constant 10 : i32
        %436 = arith.addi %435, %c10_i32 : i32
        %c0_i32_227 = arith.constant 0 : i32
        %437 = arith.addi %436, %c0_i32_227 : i32
        %438 = arith.index_cast %arg18 : i32 to index
        %439 = arith.index_cast %437 : i32 to index
        %440 = memref.load %arg4[%438, %439] : memref<16x150xf32, #tpu.memory_space<smem>>
        %441 = arith.index_cast %arg19 : i32 to index
        %c2_228 = arith.constant 2 : index
        %c0_229 = arith.constant 0 : index
        %c0_230 = arith.constant 0 : index
        %442 = vector.load %arg13[%441, %c2_228, %c0_229, %c0_230] : memref<6x14x14x128xf32, #tpu.memory_space<vmem>>, vector<1x10x10x128xf32>
        %443 = vector.shape_cast %442 : vector<1x10x10x128xf32> to vector<10x10x128xf32>
        %444 = vector.broadcast %440 : f32 to vector<10x10x128xf32>
        %445 = arith.mulf %444, %443 : vector<10x10x128xf32>
        %446 = arith.addf %434, %445 : vector<10x10x128xf32>
        %c25_i32_231 = arith.constant 25 : i32
        %447 = arith.muli %arg19, %c25_i32_231 : i32
        %c10_i32_232 = arith.constant 10 : i32
        %448 = arith.addi %447, %c10_i32_232 : i32
        %c1_i32_233 = arith.constant 1 : i32
        %449 = arith.addi %448, %c1_i32_233 : i32
        %450 = arith.index_cast %arg18 : i32 to index
        %451 = arith.index_cast %449 : i32 to index
        %452 = memref.load %arg4[%450, %451] : memref<16x150xf32, #tpu.memory_space<smem>>
        %453 = arith.index_cast %arg19 : i32 to index
        %c2_234 = arith.constant 2 : index
        %c1_235 = arith.constant 1 : index
        %c0_236 = arith.constant 0 : index
        %454 = vector.load %arg13[%453, %c2_234, %c1_235, %c0_236] : memref<6x14x14x128xf32, #tpu.memory_space<vmem>>, vector<1x10x10x128xf32>
        %455 = vector.shape_cast %454 : vector<1x10x10x128xf32> to vector<10x10x128xf32>
        %456 = vector.broadcast %452 : f32 to vector<10x10x128xf32>
        %457 = arith.mulf %456, %455 : vector<10x10x128xf32>
        %458 = arith.addf %446, %457 : vector<10x10x128xf32>
        %c25_i32_237 = arith.constant 25 : i32
        %459 = arith.muli %arg19, %c25_i32_237 : i32
        %c10_i32_238 = arith.constant 10 : i32
        %460 = arith.addi %459, %c10_i32_238 : i32
        %c2_i32_239 = arith.constant 2 : i32
        %461 = arith.addi %460, %c2_i32_239 : i32
        %462 = arith.index_cast %arg18 : i32 to index
        %463 = arith.index_cast %461 : i32 to index
        %464 = memref.load %arg4[%462, %463] : memref<16x150xf32, #tpu.memory_space<smem>>
        %465 = arith.index_cast %arg19 : i32 to index
        %c2_240 = arith.constant 2 : index
        %c2_241 = arith.constant 2 : index
        %c0_242 = arith.constant 0 : index
        %466 = vector.load %arg13[%465, %c2_240, %c2_241, %c0_242] : memref<6x14x14x128xf32, #tpu.memory_space<vmem>>, vector<1x10x10x128xf32>
        %467 = vector.shape_cast %466 : vector<1x10x10x128xf32> to vector<10x10x128xf32>
        %468 = vector.broadcast %464 : f32 to vector<10x10x128xf32>
        %469 = arith.mulf %468, %467 : vector<10x10x128xf32>
        %470 = arith.addf %458, %469 : vector<10x10x128xf32>
        %c25_i32_243 = arith.constant 25 : i32
        %471 = arith.muli %arg19, %c25_i32_243 : i32
        %c10_i32_244 = arith.constant 10 : i32
        %472 = arith.addi %471, %c10_i32_244 : i32
        %c3_i32_245 = arith.constant 3 : i32
        %473 = arith.addi %472, %c3_i32_245 : i32
        %474 = arith.index_cast %arg18 : i32 to index
        %475 = arith.index_cast %473 : i32 to index
        %476 = memref.load %arg4[%474, %475] : memref<16x150xf32, #tpu.memory_space<smem>>
        %477 = arith.index_cast %arg19 : i32 to index
        %c2_246 = arith.constant 2 : index
        %c3_247 = arith.constant 3 : index
        %c0_248 = arith.constant 0 : index
        %478 = vector.load %arg13[%477, %c2_246, %c3_247, %c0_248] : memref<6x14x14x128xf32, #tpu.memory_space<vmem>>, vector<1x10x10x128xf32>
        %479 = vector.shape_cast %478 : vector<1x10x10x128xf32> to vector<10x10x128xf32>
        %480 = vector.broadcast %476 : f32 to vector<10x10x128xf32>
        %481 = arith.mulf %480, %479 : vector<10x10x128xf32>
        %482 = arith.addf %470, %481 : vector<10x10x128xf32>
        %c25_i32_249 = arith.constant 25 : i32
        %483 = arith.muli %arg19, %c25_i32_249 : i32
        %c10_i32_250 = arith.constant 10 : i32
        %484 = arith.addi %483, %c10_i32_250 : i32
        %c4_i32_251 = arith.constant 4 : i32
        %485 = arith.addi %484, %c4_i32_251 : i32
        %486 = arith.index_cast %arg18 : i32 to index
        %487 = arith.index_cast %485 : i32 to index
        %488 = memref.load %arg4[%486, %487] : memref<16x150xf32, #tpu.memory_space<smem>>
        %489 = arith.index_cast %arg19 : i32 to index
        %c2_252 = arith.constant 2 : index
        %c4_253 = arith.constant 4 : index
        %c0_254 = arith.constant 0 : index
        %490 = vector.load %arg13[%489, %c2_252, %c4_253, %c0_254] : memref<6x14x14x128xf32, #tpu.memory_space<vmem>>, vector<1x10x10x128xf32>
        %491 = vector.shape_cast %490 : vector<1x10x10x128xf32> to vector<10x10x128xf32>
        %492 = vector.broadcast %488 : f32 to vector<10x10x128xf32>
        %493 = arith.mulf %492, %491 : vector<10x10x128xf32>
        %494 = arith.addf %482, %493 : vector<10x10x128xf32>
        %c25_i32_255 = arith.constant 25 : i32
        %495 = arith.muli %arg19, %c25_i32_255 : i32
        %c15_i32 = arith.constant 15 : i32
        %496 = arith.addi %495, %c15_i32 : i32
        %c0_i32_256 = arith.constant 0 : i32
        %497 = arith.addi %496, %c0_i32_256 : i32
        %498 = arith.index_cast %arg18 : i32 to index
        %499 = arith.index_cast %497 : i32 to index
        %500 = memref.load %arg4[%498, %499] : memref<16x150xf32, #tpu.memory_space<smem>>
        %501 = arith.index_cast %arg19 : i32 to index
        %c3_257 = arith.constant 3 : index
        %c0_258 = arith.constant 0 : index
        %c0_259 = arith.constant 0 : index
        %502 = vector.load %arg13[%501, %c3_257, %c0_258, %c0_259] : memref<6x14x14x128xf32, #tpu.memory_space<vmem>>, vector<1x10x10x128xf32>
        %503 = vector.shape_cast %502 : vector<1x10x10x128xf32> to vector<10x10x128xf32>
        %504 = vector.broadcast %500 : f32 to vector<10x10x128xf32>
        %505 = arith.mulf %504, %503 : vector<10x10x128xf32>
        %506 = arith.addf %494, %505 : vector<10x10x128xf32>
        %c25_i32_260 = arith.constant 25 : i32
        %507 = arith.muli %arg19, %c25_i32_260 : i32
        %c15_i32_261 = arith.constant 15 : i32
        %508 = arith.addi %507, %c15_i32_261 : i32
        %c1_i32_262 = arith.constant 1 : i32
        %509 = arith.addi %508, %c1_i32_262 : i32
        %510 = arith.index_cast %arg18 : i32 to index
        %511 = arith.index_cast %509 : i32 to index
        %512 = memref.load %arg4[%510, %511] : memref<16x150xf32, #tpu.memory_space<smem>>
        %513 = arith.index_cast %arg19 : i32 to index
        %c3_263 = arith.constant 3 : index
        %c1_264 = arith.constant 1 : index
        %c0_265 = arith.constant 0 : index
        %514 = vector.load %arg13[%513, %c3_263, %c1_264, %c0_265] : memref<6x14x14x128xf32, #tpu.memory_space<vmem>>, vector<1x10x10x128xf32>
        %515 = vector.shape_cast %514 : vector<1x10x10x128xf32> to vector<10x10x128xf32>
        %516 = vector.broadcast %512 : f32 to vector<10x10x128xf32>
        %517 = arith.mulf %516, %515 : vector<10x10x128xf32>
        %518 = arith.addf %506, %517 : vector<10x10x128xf32>
        %c25_i32_266 = arith.constant 25 : i32
        %519 = arith.muli %arg19, %c25_i32_266 : i32
        %c15_i32_267 = arith.constant 15 : i32
        %520 = arith.addi %519, %c15_i32_267 : i32
        %c2_i32_268 = arith.constant 2 : i32
        %521 = arith.addi %520, %c2_i32_268 : i32
        %522 = arith.index_cast %arg18 : i32 to index
        %523 = arith.index_cast %521 : i32 to index
        %524 = memref.load %arg4[%522, %523] : memref<16x150xf32, #tpu.memory_space<smem>>
        %525 = arith.index_cast %arg19 : i32 to index
        %c3_269 = arith.constant 3 : index
        %c2_270 = arith.constant 2 : index
        %c0_271 = arith.constant 0 : index
        %526 = vector.load %arg13[%525, %c3_269, %c2_270, %c0_271] : memref<6x14x14x128xf32, #tpu.memory_space<vmem>>, vector<1x10x10x128xf32>
        %527 = vector.shape_cast %526 : vector<1x10x10x128xf32> to vector<10x10x128xf32>
        %528 = vector.broadcast %524 : f32 to vector<10x10x128xf32>
        %529 = arith.mulf %528, %527 : vector<10x10x128xf32>
        %530 = arith.addf %518, %529 : vector<10x10x128xf32>
        %c25_i32_272 = arith.constant 25 : i32
        %531 = arith.muli %arg19, %c25_i32_272 : i32
        %c15_i32_273 = arith.constant 15 : i32
        %532 = arith.addi %531, %c15_i32_273 : i32
        %c3_i32_274 = arith.constant 3 : i32
        %533 = arith.addi %532, %c3_i32_274 : i32
        %534 = arith.index_cast %arg18 : i32 to index
        %535 = arith.index_cast %533 : i32 to index
        %536 = memref.load %arg4[%534, %535] : memref<16x150xf32, #tpu.memory_space<smem>>
        %537 = arith.index_cast %arg19 : i32 to index
        %c3_275 = arith.constant 3 : index
        %c3_276 = arith.constant 3 : index
        %c0_277 = arith.constant 0 : index
        %538 = vector.load %arg13[%537, %c3_275, %c3_276, %c0_277] : memref<6x14x14x128xf32, #tpu.memory_space<vmem>>, vector<1x10x10x128xf32>
        %539 = vector.shape_cast %538 : vector<1x10x10x128xf32> to vector<10x10x128xf32>
        %540 = vector.broadcast %536 : f32 to vector<10x10x128xf32>
        %541 = arith.mulf %540, %539 : vector<10x10x128xf32>
        %542 = arith.addf %530, %541 : vector<10x10x128xf32>
        %c25_i32_278 = arith.constant 25 : i32
        %543 = arith.muli %arg19, %c25_i32_278 : i32
        %c15_i32_279 = arith.constant 15 : i32
        %544 = arith.addi %543, %c15_i32_279 : i32
        %c4_i32_280 = arith.constant 4 : i32
        %545 = arith.addi %544, %c4_i32_280 : i32
        %546 = arith.index_cast %arg18 : i32 to index
        %547 = arith.index_cast %545 : i32 to index
        %548 = memref.load %arg4[%546, %547] : memref<16x150xf32, #tpu.memory_space<smem>>
        %549 = arith.index_cast %arg19 : i32 to index
        %c3_281 = arith.constant 3 : index
        %c4_282 = arith.constant 4 : index
        %c0_283 = arith.constant 0 : index
        %550 = vector.load %arg13[%549, %c3_281, %c4_282, %c0_283] : memref<6x14x14x128xf32, #tpu.memory_space<vmem>>, vector<1x10x10x128xf32>
        %551 = vector.shape_cast %550 : vector<1x10x10x128xf32> to vector<10x10x128xf32>
        %552 = vector.broadcast %548 : f32 to vector<10x10x128xf32>
        %553 = arith.mulf %552, %551 : vector<10x10x128xf32>
        %554 = arith.addf %542, %553 : vector<10x10x128xf32>
        %c25_i32_284 = arith.constant 25 : i32
        %555 = arith.muli %arg19, %c25_i32_284 : i32
        %c20_i32 = arith.constant 20 : i32
        %556 = arith.addi %555, %c20_i32 : i32
        %c0_i32_285 = arith.constant 0 : i32
        %557 = arith.addi %556, %c0_i32_285 : i32
        %558 = arith.index_cast %arg18 : i32 to index
        %559 = arith.index_cast %557 : i32 to index
        %560 = memref.load %arg4[%558, %559] : memref<16x150xf32, #tpu.memory_space<smem>>
        %561 = arith.index_cast %arg19 : i32 to index
        %c4_286 = arith.constant 4 : index
        %c0_287 = arith.constant 0 : index
        %c0_288 = arith.constant 0 : index
        %562 = vector.load %arg13[%561, %c4_286, %c0_287, %c0_288] : memref<6x14x14x128xf32, #tpu.memory_space<vmem>>, vector<1x10x10x128xf32>
        %563 = vector.shape_cast %562 : vector<1x10x10x128xf32> to vector<10x10x128xf32>
        %564 = vector.broadcast %560 : f32 to vector<10x10x128xf32>
        %565 = arith.mulf %564, %563 : vector<10x10x128xf32>
        %566 = arith.addf %554, %565 : vector<10x10x128xf32>
        %c25_i32_289 = arith.constant 25 : i32
        %567 = arith.muli %arg19, %c25_i32_289 : i32
        %c20_i32_290 = arith.constant 20 : i32
        %568 = arith.addi %567, %c20_i32_290 : i32
        %c1_i32_291 = arith.constant 1 : i32
        %569 = arith.addi %568, %c1_i32_291 : i32
        %570 = arith.index_cast %arg18 : i32 to index
        %571 = arith.index_cast %569 : i32 to index
        %572 = memref.load %arg4[%570, %571] : memref<16x150xf32, #tpu.memory_space<smem>>
        %573 = arith.index_cast %arg19 : i32 to index
        %c4_292 = arith.constant 4 : index
        %c1_293 = arith.constant 1 : index
        %c0_294 = arith.constant 0 : index
        %574 = vector.load %arg13[%573, %c4_292, %c1_293, %c0_294] : memref<6x14x14x128xf32, #tpu.memory_space<vmem>>, vector<1x10x10x128xf32>
        %575 = vector.shape_cast %574 : vector<1x10x10x128xf32> to vector<10x10x128xf32>
        %576 = vector.broadcast %572 : f32 to vector<10x10x128xf32>
        %577 = arith.mulf %576, %575 : vector<10x10x128xf32>
        %578 = arith.addf %566, %577 : vector<10x10x128xf32>
        %c25_i32_295 = arith.constant 25 : i32
        %579 = arith.muli %arg19, %c25_i32_295 : i32
        %c20_i32_296 = arith.constant 20 : i32
        %580 = arith.addi %579, %c20_i32_296 : i32
        %c2_i32_297 = arith.constant 2 : i32
        %581 = arith.addi %580, %c2_i32_297 : i32
        %582 = arith.index_cast %arg18 : i32 to index
        %583 = arith.index_cast %581 : i32 to index
        %584 = memref.load %arg4[%582, %583] : memref<16x150xf32, #tpu.memory_space<smem>>
        %585 = arith.index_cast %arg19 : i32 to index
        %c4_298 = arith.constant 4 : index
        %c2_299 = arith.constant 2 : index
        %c0_300 = arith.constant 0 : index
        %586 = vector.load %arg13[%585, %c4_298, %c2_299, %c0_300] : memref<6x14x14x128xf32, #tpu.memory_space<vmem>>, vector<1x10x10x128xf32>
        %587 = vector.shape_cast %586 : vector<1x10x10x128xf32> to vector<10x10x128xf32>
        %588 = vector.broadcast %584 : f32 to vector<10x10x128xf32>
        %589 = arith.mulf %588, %587 : vector<10x10x128xf32>
        %590 = arith.addf %578, %589 : vector<10x10x128xf32>
        %c25_i32_301 = arith.constant 25 : i32
        %591 = arith.muli %arg19, %c25_i32_301 : i32
        %c20_i32_302 = arith.constant 20 : i32
        %592 = arith.addi %591, %c20_i32_302 : i32
        %c3_i32_303 = arith.constant 3 : i32
        %593 = arith.addi %592, %c3_i32_303 : i32
        %594 = arith.index_cast %arg18 : i32 to index
        %595 = arith.index_cast %593 : i32 to index
        %596 = memref.load %arg4[%594, %595] : memref<16x150xf32, #tpu.memory_space<smem>>
        %597 = arith.index_cast %arg19 : i32 to index
        %c4_304 = arith.constant 4 : index
        %c3_305 = arith.constant 3 : index
        %c0_306 = arith.constant 0 : index
        %598 = vector.load %arg13[%597, %c4_304, %c3_305, %c0_306] : memref<6x14x14x128xf32, #tpu.memory_space<vmem>>, vector<1x10x10x128xf32>
        %599 = vector.shape_cast %598 : vector<1x10x10x128xf32> to vector<10x10x128xf32>
        %600 = vector.broadcast %596 : f32 to vector<10x10x128xf32>
        %601 = arith.mulf %600, %599 : vector<10x10x128xf32>
        %602 = arith.addf %590, %601 : vector<10x10x128xf32>
        %c25_i32_307 = arith.constant 25 : i32
        %603 = arith.muli %arg19, %c25_i32_307 : i32
        %c20_i32_308 = arith.constant 20 : i32
        %604 = arith.addi %603, %c20_i32_308 : i32
        %c4_i32_309 = arith.constant 4 : i32
        %605 = arith.addi %604, %c4_i32_309 : i32
        %606 = arith.index_cast %arg18 : i32 to index
        %607 = arith.index_cast %605 : i32 to index
        %608 = memref.load %arg4[%606, %607] : memref<16x150xf32, #tpu.memory_space<smem>>
        %609 = arith.index_cast %arg19 : i32 to index
        %c4_310 = arith.constant 4 : index
        %c4_311 = arith.constant 4 : index
        %c0_312 = arith.constant 0 : index
        %610 = vector.load %arg13[%609, %c4_310, %c4_311, %c0_312] : memref<6x14x14x128xf32, #tpu.memory_space<vmem>>, vector<1x10x10x128xf32>
        %611 = vector.shape_cast %610 : vector<1x10x10x128xf32> to vector<10x10x128xf32>
        %612 = vector.broadcast %608 : f32 to vector<10x10x128xf32>
        %613 = arith.mulf %612, %611 : vector<10x10x128xf32>
        %614 = arith.addf %602, %613 : vector<10x10x128xf32>
        scf.yield %614 : vector<10x10x128xf32>
      }
      %c6_i32_157 = arith.constant 6 : i32
      %298 = math.tanh %297 : vector<10x10x128xf32>
      %299 = vector.shape_cast %298 : vector<10x10x128xf32> to vector<5x2x10x128xf32>
      %300 = vector.extract_strided_slice %299 {offsets = [0, 0, 0, 0], sizes = [5, 1, 10, 128], strides = [1, 1, 1, 1]} : vector<5x2x10x128xf32> to vector<5x1x10x128xf32>
      %301 = vector.shape_cast %300 : vector<5x1x10x128xf32> to vector<5x10x128xf32>
      %302 = vector.extract_strided_slice %299 {offsets = [0, 1, 0, 0], sizes = [5, 1, 10, 128], strides = [1, 1, 1, 1]} : vector<5x2x10x128xf32> to vector<5x1x10x128xf32>
      %303 = vector.shape_cast %302 : vector<5x1x10x128xf32> to vector<5x10x128xf32>
      %304 = arith.addf %301, %303 : vector<5x10x128xf32>
      %c0_158 = arith.constant 0 : index
      %c0_159 = arith.constant 0 : index
      %c0_160 = arith.constant 0 : index
      %305 = vector.load %arg16[%c0_158, %c0_159, %c0_160] : memref<5x10x128xf32, #tpu.memory_space<vmem>>, vector<5x10x128xf32>
      tpu.vector_store %arg16[%c0_158, %c0_159, %c0_160], %304 {strides = array<i32>} : memref<5x10x128xf32, #tpu.memory_space<vmem>>, vector<5x10x128xf32>,
      %c0_161 = arith.constant 0 : index
      %c0_162 = arith.constant 0 : index
      %c0_163 = arith.constant 0 : index
      %306 = tpu.strided_load %arg16[%c0_161, %c0_162, %c0_163] {strides = array<i32: 1, 2, 1>} : memref<5x10x128xf32, #tpu.memory_space<vmem>>, vector<5x5x128xf32>
      %c0_164 = arith.constant 0 : index
      %c1_165 = arith.constant 1 : index
      %c0_166 = arith.constant 0 : index
      %307 = tpu.strided_load %arg16[%c0_164, %c1_165, %c0_166] {strides = array<i32: 1, 2, 1>} : memref<5x10x128xf32, #tpu.memory_space<vmem>>, vector<5x5x128xf32>
      %308 = arith.addf %306, %307 : vector<5x5x128xf32>
      %cst_167 = arith.constant 2.500000e-01 : f32
      %309 = vector.broadcast %cst_167 : f32 to vector<5x5x128xf32>
      %310 = arith.mulf %309, %308 : vector<5x5x128xf32>
      %311 = arith.index_cast %arg18 : i32 to index
      %c0_168 = arith.constant 0 : index
      %c0_169 = arith.constant 0 : index
      %c0_170 = arith.constant 0 : index
      %312 = vector.load %arg15[%311, %c0_168, %c0_169, %c0_170] : memref<16x5x5x128xf32, #tpu.memory_space<vmem>>, vector<1x5x5x128xf32>
      %313 = vector.shape_cast %312 : vector<1x5x5x128xf32> to vector<5x5x128xf32>
      %314 = vector.shape_cast %310 : vector<5x5x128xf32> to vector<1x5x5x128xf32>
      tpu.vector_store %arg15[%311, %c0_168, %c0_169, %c0_170], %314 {strides = array<i32>} : memref<16x5x5x128xf32, #tpu.memory_space<vmem>>, vector<1x5x5x128xf32>,
    }
    %c16_i32_3 = arith.constant 16 : i32
    %c0 = arith.constant 0 : index
    %c0_4 = arith.constant 0 : index
    %c0_5 = arith.constant 0 : index
    %c0_6 = arith.constant 0 : index
    %2 = vector.load %arg15[%c0, %c0_4, %c0_5, %c0_6] : memref<16x5x5x128xf32, #tpu.memory_space<vmem>>, vector<1x5x5x128xf32>
    %3 = vector.shape_cast %2 : vector<1x5x5x128xf32> to vector<5x5x128xf32>
    %4 = vector.extract_strided_slice %3 {offsets = [0, 0, 0], sizes = [1, 5, 128], strides = [1, 1, 1]} : vector<5x5x128xf32> to vector<1x5x128xf32>
    %5 = vector.shape_cast %4 : vector<1x5x128xf32> to vector<5x128xf32>
    %c0_7 = arith.constant 0 : index
    %c0_8 = arith.constant 0 : index
    %6 = vector.load %arg17[%c0_7, %c0_8] : memref<400x128xf32, #tpu.memory_space<vmem>>, vector<5x128xf32>
    tpu.vector_store %arg17[%c0_7, %c0_8], %5 {strides = array<i32>} : memref<400x128xf32, #tpu.memory_space<vmem>>, vector<5x128xf32>,
    %7 = vector.extract_strided_slice %3 {offsets = [1, 0, 0], sizes = [1, 5, 128], strides = [1, 1, 1]} : vector<5x5x128xf32> to vector<1x5x128xf32>
    %8 = vector.shape_cast %7 : vector<1x5x128xf32> to vector<5x128xf32>
    %c5 = arith.constant 5 : index
    %c0_9 = arith.constant 0 : index
    %9 = vector.load %arg17[%c5, %c0_9] : memref<400x128xf32, #tpu.memory_space<vmem>>, vector<5x128xf32>
    tpu.vector_store %arg17[%c5, %c0_9], %8 {strides = array<i32>} : memref<400x128xf32, #tpu.memory_space<vmem>>, vector<5x128xf32>,
    %10 = vector.extract_strided_slice %3 {offsets = [2, 0, 0], sizes = [1, 5, 128], strides = [1, 1, 1]} : vector<5x5x128xf32> to vector<1x5x128xf32>
    %11 = vector.shape_cast %10 : vector<1x5x128xf32> to vector<5x128xf32>
    %c10 = arith.constant 10 : index
    %c0_10 = arith.constant 0 : index
    %12 = vector.load %arg17[%c10, %c0_10] : memref<400x128xf32, #tpu.memory_space<vmem>>, vector<5x128xf32>
    tpu.vector_store %arg17[%c10, %c0_10], %11 {strides = array<i32>} : memref<400x128xf32, #tpu.memory_space<vmem>>, vector<5x128xf32>,
    %13 = vector.extract_strided_slice %3 {offsets = [3, 0, 0], sizes = [1, 5, 128], strides = [1, 1, 1]} : vector<5x5x128xf32> to vector<1x5x128xf32>
    %14 = vector.shape_cast %13 : vector<1x5x128xf32> to vector<5x128xf32>
    %c15 = arith.constant 15 : index
    %c0_11 = arith.constant 0 : index
    %15 = vector.load %arg17[%c15, %c0_11] : memref<400x128xf32, #tpu.memory_space<vmem>>, vector<5x128xf32>
    tpu.vector_store %arg17[%c15, %c0_11], %14 {strides = array<i32>} : memref<400x128xf32, #tpu.memory_space<vmem>>, vector<5x128xf32>,
    %16 = vector.extract_strided_slice %3 {offsets = [4, 0, 0], sizes = [1, 5, 128], strides = [1, 1, 1]} : vector<5x5x128xf32> to vector<1x5x128xf32>
    %17 = vector.shape_cast %16 : vector<1x5x128xf32> to vector<5x128xf32>
    %c20 = arith.constant 20 : index
    %c0_12 = arith.constant 0 : index
    %18 = vector.load %arg17[%c20, %c0_12] : memref<400x128xf32, #tpu.memory_space<vmem>>, vector<5x128xf32>
    tpu.vector_store %arg17[%c20, %c0_12], %17 {strides = array<i32>} : memref<400x128xf32, #tpu.memory_space<vmem>>, vector<5x128xf32>,
    %c1 = arith.constant 1 : index
    %c0_13 = arith.constant 0 : index
    %c0_14 = arith.constant 0 : index
    %c0_15 = arith.constant 0 : index
    %19 = vector.load %arg15[%c1, %c0_13, %c0_14, %c0_15] : memref<16x5x5x128xf32, #tpu.memory_space<vmem>>, vector<1x5x5x128xf32>
    %20 = vector.shape_cast %19 : vector<1x5x5x128xf32> to vector<5x5x128xf32>
    %21 = vector.extract_strided_slice %20 {offsets = [0, 0, 0], sizes = [1, 5, 128], strides = [1, 1, 1]} : vector<5x5x128xf32> to vector<1x5x128xf32>
    %22 = vector.shape_cast %21 : vector<1x5x128xf32> to vector<5x128xf32>
    %c25 = arith.constant 25 : index
    %c0_16 = arith.constant 0 : index
    %23 = vector.load %arg17[%c25, %c0_16] : memref<400x128xf32, #tpu.memory_space<vmem>>, vector<5x128xf32>
    tpu.vector_store %arg17[%c25, %c0_16], %22 {strides = array<i32>} : memref<400x128xf32, #tpu.memory_space<vmem>>, vector<5x128xf32>,
    %24 = vector.extract_strided_slice %20 {offsets = [1, 0, 0], sizes = [1, 5, 128], strides = [1, 1, 1]} : vector<5x5x128xf32> to vector<1x5x128xf32>
    %25 = vector.shape_cast %24 : vector<1x5x128xf32> to vector<5x128xf32>
    %c30 = arith.constant 30 : index
    %c0_17 = arith.constant 0 : index
    %26 = vector.load %arg17[%c30, %c0_17] : memref<400x128xf32, #tpu.memory_space<vmem>>, vector<5x128xf32>
    tpu.vector_store %arg17[%c30, %c0_17], %25 {strides = array<i32>} : memref<400x128xf32, #tpu.memory_space<vmem>>, vector<5x128xf32>,
    %27 = vector.extract_strided_slice %20 {offsets = [2, 0, 0], sizes = [1, 5, 128], strides = [1, 1, 1]} : vector<5x5x128xf32> to vector<1x5x128xf32>
    %28 = vector.shape_cast %27 : vector<1x5x128xf32> to vector<5x128xf32>
    %c35 = arith.constant 35 : index
    %c0_18 = arith.constant 0 : index
    %29 = vector.load %arg17[%c35, %c0_18] : memref<400x128xf32, #tpu.memory_space<vmem>>, vector<5x128xf32>
    tpu.vector_store %arg17[%c35, %c0_18], %28 {strides = array<i32>} : memref<400x128xf32, #tpu.memory_space<vmem>>, vector<5x128xf32>,
    %30 = vector.extract_strided_slice %20 {offsets = [3, 0, 0], sizes = [1, 5, 128], strides = [1, 1, 1]} : vector<5x5x128xf32> to vector<1x5x128xf32>
    %31 = vector.shape_cast %30 : vector<1x5x128xf32> to vector<5x128xf32>
    %c40 = arith.constant 40 : index
    %c0_19 = arith.constant 0 : index
    %32 = vector.load %arg17[%c40, %c0_19] : memref<400x128xf32, #tpu.memory_space<vmem>>, vector<5x128xf32>
    tpu.vector_store %arg17[%c40, %c0_19], %31 {strides = array<i32>} : memref<400x128xf32, #tpu.memory_space<vmem>>, vector<5x128xf32>,
    %33 = vector.extract_strided_slice %20 {offsets = [4, 0, 0], sizes = [1, 5, 128], strides = [1, 1, 1]} : vector<5x5x128xf32> to vector<1x5x128xf32>
    %34 = vector.shape_cast %33 : vector<1x5x128xf32> to vector<5x128xf32>
    %c45 = arith.constant 45 : index
    %c0_20 = arith.constant 0 : index
    %35 = vector.load %arg17[%c45, %c0_20] : memref<400x128xf32, #tpu.memory_space<vmem>>, vector<5x128xf32>
    tpu.vector_store %arg17[%c45, %c0_20], %34 {strides = array<i32>} : memref<400x128xf32, #tpu.memory_space<vmem>>, vector<5x128xf32>,
    %c2 = arith.constant 2 : index
    %c0_21 = arith.constant 0 : index
    %c0_22 = arith.constant 0 : index
    %c0_23 = arith.constant 0 : index
    %36 = vector.load %arg15[%c2, %c0_21, %c0_22, %c0_23] : memref<16x5x5x128xf32, #tpu.memory_space<vmem>>, vector<1x5x5x128xf32>
    %37 = vector.shape_cast %36 : vector<1x5x5x128xf32> to vector<5x5x128xf32>
    %38 = vector.extract_strided_slice %37 {offsets = [0, 0, 0], sizes = [1, 5, 128], strides = [1, 1, 1]} : vector<5x5x128xf32> to vector<1x5x128xf32>
    %39 = vector.shape_cast %38 : vector<1x5x128xf32> to vector<5x128xf32>
    %c50 = arith.constant 50 : index
    %c0_24 = arith.constant 0 : index
    %40 = vector.load %arg17[%c50, %c0_24] : memref<400x128xf32, #tpu.memory_space<vmem>>, vector<5x128xf32>
    tpu.vector_store %arg17[%c50, %c0_24], %39 {strides = array<i32>} : memref<400x128xf32, #tpu.memory_space<vmem>>, vector<5x128xf32>,
    %41 = vector.extract_strided_slice %37 {offsets = [1, 0, 0], sizes = [1, 5, 128], strides = [1, 1, 1]} : vector<5x5x128xf32> to vector<1x5x128xf32>
    %42 = vector.shape_cast %41 : vector<1x5x128xf32> to vector<5x128xf32>
    %c55 = arith.constant 55 : index
    %c0_25 = arith.constant 0 : index
    %43 = vector.load %arg17[%c55, %c0_25] : memref<400x128xf32, #tpu.memory_space<vmem>>, vector<5x128xf32>
    tpu.vector_store %arg17[%c55, %c0_25], %42 {strides = array<i32>} : memref<400x128xf32, #tpu.memory_space<vmem>>, vector<5x128xf32>,
    %44 = vector.extract_strided_slice %37 {offsets = [2, 0, 0], sizes = [1, 5, 128], strides = [1, 1, 1]} : vector<5x5x128xf32> to vector<1x5x128xf32>
    %45 = vector.shape_cast %44 : vector<1x5x128xf32> to vector<5x128xf32>
    %c60 = arith.constant 60 : index
    %c0_26 = arith.constant 0 : index
    %46 = vector.load %arg17[%c60, %c0_26] : memref<400x128xf32, #tpu.memory_space<vmem>>, vector<5x128xf32>
    tpu.vector_store %arg17[%c60, %c0_26], %45 {strides = array<i32>} : memref<400x128xf32, #tpu.memory_space<vmem>>, vector<5x128xf32>,
    %47 = vector.extract_strided_slice %37 {offsets = [3, 0, 0], sizes = [1, 5, 128], strides = [1, 1, 1]} : vector<5x5x128xf32> to vector<1x5x128xf32>
    %48 = vector.shape_cast %47 : vector<1x5x128xf32> to vector<5x128xf32>
    %c65 = arith.constant 65 : index
    %c0_27 = arith.constant 0 : index
    %49 = vector.load %arg17[%c65, %c0_27] : memref<400x128xf32, #tpu.memory_space<vmem>>, vector<5x128xf32>
    tpu.vector_store %arg17[%c65, %c0_27], %48 {strides = array<i32>} : memref<400x128xf32, #tpu.memory_space<vmem>>, vector<5x128xf32>,
    %50 = vector.extract_strided_slice %37 {offsets = [4, 0, 0], sizes = [1, 5, 128], strides = [1, 1, 1]} : vector<5x5x128xf32> to vector<1x5x128xf32>
    %51 = vector.shape_cast %50 : vector<1x5x128xf32> to vector<5x128xf32>
    %c70 = arith.constant 70 : index
    %c0_28 = arith.constant 0 : index
    %52 = vector.load %arg17[%c70, %c0_28] : memref<400x128xf32, #tpu.memory_space<vmem>>, vector<5x128xf32>
    tpu.vector_store %arg17[%c70, %c0_28], %51 {strides = array<i32>} : memref<400x128xf32, #tpu.memory_space<vmem>>, vector<5x128xf32>,
    %c3 = arith.constant 3 : index
    %c0_29 = arith.constant 0 : index
    %c0_30 = arith.constant 0 : index
    %c0_31 = arith.constant 0 : index
    %53 = vector.load %arg15[%c3, %c0_29, %c0_30, %c0_31] : memref<16x5x5x128xf32, #tpu.memory_space<vmem>>, vector<1x5x5x128xf32>
    %54 = vector.shape_cast %53 : vector<1x5x5x128xf32> to vector<5x5x128xf32>
    %55 = vector.extract_strided_slice %54 {offsets = [0, 0, 0], sizes = [1, 5, 128], strides = [1, 1, 1]} : vector<5x5x128xf32> to vector<1x5x128xf32>
    %56 = vector.shape_cast %55 : vector<1x5x128xf32> to vector<5x128xf32>
    %c75 = arith.constant 75 : index
    %c0_32 = arith.constant 0 : index
    %57 = vector.load %arg17[%c75, %c0_32] : memref<400x128xf32, #tpu.memory_space<vmem>>, vector<5x128xf32>
    tpu.vector_store %arg17[%c75, %c0_32], %56 {strides = array<i32>} : memref<400x128xf32, #tpu.memory_space<vmem>>, vector<5x128xf32>,
    %58 = vector.extract_strided_slice %54 {offsets = [1, 0, 0], sizes = [1, 5, 128], strides = [1, 1, 1]} : vector<5x5x128xf32> to vector<1x5x128xf32>
    %59 = vector.shape_cast %58 : vector<1x5x128xf32> to vector<5x128xf32>
    %c80 = arith.constant 80 : index
    %c0_33 = arith.constant 0 : index
    %60 = vector.load %arg17[%c80, %c0_33] : memref<400x128xf32, #tpu.memory_space<vmem>>, vector<5x128xf32>
    tpu.vector_store %arg17[%c80, %c0_33], %59 {strides = array<i32>} : memref<400x128xf32, #tpu.memory_space<vmem>>, vector<5x128xf32>,
    %61 = vector.extract_strided_slice %54 {offsets = [2, 0, 0], sizes = [1, 5, 128], strides = [1, 1, 1]} : vector<5x5x128xf32> to vector<1x5x128xf32>
    %62 = vector.shape_cast %61 : vector<1x5x128xf32> to vector<5x128xf32>
    %c85 = arith.constant 85 : index
    %c0_34 = arith.constant 0 : index
    %63 = vector.load %arg17[%c85, %c0_34] : memref<400x128xf32, #tpu.memory_space<vmem>>, vector<5x128xf32>
    tpu.vector_store %arg17[%c85, %c0_34], %62 {strides = array<i32>} : memref<400x128xf32, #tpu.memory_space<vmem>>, vector<5x128xf32>,
    %64 = vector.extract_strided_slice %54 {offsets = [3, 0, 0], sizes = [1, 5, 128], strides = [1, 1, 1]} : vector<5x5x128xf32> to vector<1x5x128xf32>
    %65 = vector.shape_cast %64 : vector<1x5x128xf32> to vector<5x128xf32>
    %c90 = arith.constant 90 : index
    %c0_35 = arith.constant 0 : index
    %66 = vector.load %arg17[%c90, %c0_35] : memref<400x128xf32, #tpu.memory_space<vmem>>, vector<5x128xf32>
    tpu.vector_store %arg17[%c90, %c0_35], %65 {strides = array<i32>} : memref<400x128xf32, #tpu.memory_space<vmem>>, vector<5x128xf32>,
    %67 = vector.extract_strided_slice %54 {offsets = [4, 0, 0], sizes = [1, 5, 128], strides = [1, 1, 1]} : vector<5x5x128xf32> to vector<1x5x128xf32>
    %68 = vector.shape_cast %67 : vector<1x5x128xf32> to vector<5x128xf32>
    %c95 = arith.constant 95 : index
    %c0_36 = arith.constant 0 : index
    %69 = vector.load %arg17[%c95, %c0_36] : memref<400x128xf32, #tpu.memory_space<vmem>>, vector<5x128xf32>
    tpu.vector_store %arg17[%c95, %c0_36], %68 {strides = array<i32>} : memref<400x128xf32, #tpu.memory_space<vmem>>, vector<5x128xf32>,
    %c4 = arith.constant 4 : index
    %c0_37 = arith.constant 0 : index
    %c0_38 = arith.constant 0 : index
    %c0_39 = arith.constant 0 : index
    %70 = vector.load %arg15[%c4, %c0_37, %c0_38, %c0_39] : memref<16x5x5x128xf32, #tpu.memory_space<vmem>>, vector<1x5x5x128xf32>
    %71 = vector.shape_cast %70 : vector<1x5x5x128xf32> to vector<5x5x128xf32>
    %72 = vector.extract_strided_slice %71 {offsets = [0, 0, 0], sizes = [1, 5, 128], strides = [1, 1, 1]} : vector<5x5x128xf32> to vector<1x5x128xf32>
    %73 = vector.shape_cast %72 : vector<1x5x128xf32> to vector<5x128xf32>
    %c100 = arith.constant 100 : index
    %c0_40 = arith.constant 0 : index
    %74 = vector.load %arg17[%c100, %c0_40] : memref<400x128xf32, #tpu.memory_space<vmem>>, vector<5x128xf32>
    tpu.vector_store %arg17[%c100, %c0_40], %73 {strides = array<i32>} : memref<400x128xf32, #tpu.memory_space<vmem>>, vector<5x128xf32>,
    %75 = vector.extract_strided_slice %71 {offsets = [1, 0, 0], sizes = [1, 5, 128], strides = [1, 1, 1]} : vector<5x5x128xf32> to vector<1x5x128xf32>
    %76 = vector.shape_cast %75 : vector<1x5x128xf32> to vector<5x128xf32>
    %c105 = arith.constant 105 : index
    %c0_41 = arith.constant 0 : index
    %77 = vector.load %arg17[%c105, %c0_41] : memref<400x128xf32, #tpu.memory_space<vmem>>, vector<5x128xf32>
    tpu.vector_store %arg17[%c105, %c0_41], %76 {strides = array<i32>} : memref<400x128xf32, #tpu.memory_space<vmem>>, vector<5x128xf32>,
    %78 = vector.extract_strided_slice %71 {offsets = [2, 0, 0], sizes = [1, 5, 128], strides = [1, 1, 1]} : vector<5x5x128xf32> to vector<1x5x128xf32>
    %79 = vector.shape_cast %78 : vector<1x5x128xf32> to vector<5x128xf32>
    %c110 = arith.constant 110 : index
    %c0_42 = arith.constant 0 : index
    %80 = vector.load %arg17[%c110, %c0_42] : memref<400x128xf32, #tpu.memory_space<vmem>>, vector<5x128xf32>
    tpu.vector_store %arg17[%c110, %c0_42], %79 {strides = array<i32>} : memref<400x128xf32, #tpu.memory_space<vmem>>, vector<5x128xf32>,
    %81 = vector.extract_strided_slice %71 {offsets = [3, 0, 0], sizes = [1, 5, 128], strides = [1, 1, 1]} : vector<5x5x128xf32> to vector<1x5x128xf32>
    %82 = vector.shape_cast %81 : vector<1x5x128xf32> to vector<5x128xf32>
    %c115 = arith.constant 115 : index
    %c0_43 = arith.constant 0 : index
    %83 = vector.load %arg17[%c115, %c0_43] : memref<400x128xf32, #tpu.memory_space<vmem>>, vector<5x128xf32>
    tpu.vector_store %arg17[%c115, %c0_43], %82 {strides = array<i32>} : memref<400x128xf32, #tpu.memory_space<vmem>>, vector<5x128xf32>,
    %84 = vector.extract_strided_slice %71 {offsets = [4, 0, 0], sizes = [1, 5, 128], strides = [1, 1, 1]} : vector<5x5x128xf32> to vector<1x5x128xf32>
    %85 = vector.shape_cast %84 : vector<1x5x128xf32> to vector<5x128xf32>
    %c120 = arith.constant 120 : index
    %c0_44 = arith.constant 0 : index
    %86 = vector.load %arg17[%c120, %c0_44] : memref<400x128xf32, #tpu.memory_space<vmem>>, vector<5x128xf32>
    tpu.vector_store %arg17[%c120, %c0_44], %85 {strides = array<i32>} : memref<400x128xf32, #tpu.memory_space<vmem>>, vector<5x128xf32>,
    %c5_45 = arith.constant 5 : index
    %c0_46 = arith.constant 0 : index
    %c0_47 = arith.constant 0 : index
    %c0_48 = arith.constant 0 : index
    %87 = vector.load %arg15[%c5_45, %c0_46, %c0_47, %c0_48] : memref<16x5x5x128xf32, #tpu.memory_space<vmem>>, vector<1x5x5x128xf32>
    %88 = vector.shape_cast %87 : vector<1x5x5x128xf32> to vector<5x5x128xf32>
    %89 = vector.extract_strided_slice %88 {offsets = [0, 0, 0], sizes = [1, 5, 128], strides = [1, 1, 1]} : vector<5x5x128xf32> to vector<1x5x128xf32>
    %90 = vector.shape_cast %89 : vector<1x5x128xf32> to vector<5x128xf32>
    %c125 = arith.constant 125 : index
    %c0_49 = arith.constant 0 : index
    %91 = vector.load %arg17[%c125, %c0_49] : memref<400x128xf32, #tpu.memory_space<vmem>>, vector<5x128xf32>
    tpu.vector_store %arg17[%c125, %c0_49], %90 {strides = array<i32>} : memref<400x128xf32, #tpu.memory_space<vmem>>, vector<5x128xf32>,
    %92 = vector.extract_strided_slice %88 {offsets = [1, 0, 0], sizes = [1, 5, 128], strides = [1, 1, 1]} : vector<5x5x128xf32> to vector<1x5x128xf32>
    %93 = vector.shape_cast %92 : vector<1x5x128xf32> to vector<5x128xf32>
    %c130 = arith.constant 130 : index
    %c0_50 = arith.constant 0 : index
    %94 = vector.load %arg17[%c130, %c0_50] : memref<400x128xf32, #tpu.memory_space<vmem>>, vector<5x128xf32>
    tpu.vector_store %arg17[%c130, %c0_50], %93 {strides = array<i32>} : memref<400x128xf32, #tpu.memory_space<vmem>>, vector<5x128xf32>,
    %95 = vector.extract_strided_slice %88 {offsets = [2, 0, 0], sizes = [1, 5, 128], strides = [1, 1, 1]} : vector<5x5x128xf32> to vector<1x5x128xf32>
    %96 = vector.shape_cast %95 : vector<1x5x128xf32> to vector<5x128xf32>
    %c135 = arith.constant 135 : index
    %c0_51 = arith.constant 0 : index
    %97 = vector.load %arg17[%c135, %c0_51] : memref<400x128xf32, #tpu.memory_space<vmem>>, vector<5x128xf32>
    tpu.vector_store %arg17[%c135, %c0_51], %96 {strides = array<i32>} : memref<400x128xf32, #tpu.memory_space<vmem>>, vector<5x128xf32>,
    %98 = vector.extract_strided_slice %88 {offsets = [3, 0, 0], sizes = [1, 5, 128], strides = [1, 1, 1]} : vector<5x5x128xf32> to vector<1x5x128xf32>
    %99 = vector.shape_cast %98 : vector<1x5x128xf32> to vector<5x128xf32>
    %c140 = arith.constant 140 : index
    %c0_52 = arith.constant 0 : index
    %100 = vector.load %arg17[%c140, %c0_52] : memref<400x128xf32, #tpu.memory_space<vmem>>, vector<5x128xf32>
    tpu.vector_store %arg17[%c140, %c0_52], %99 {strides = array<i32>} : memref<400x128xf32, #tpu.memory_space<vmem>>, vector<5x128xf32>,
    %101 = vector.extract_strided_slice %88 {offsets = [4, 0, 0], sizes = [1, 5, 128], strides = [1, 1, 1]} : vector<5x5x128xf32> to vector<1x5x128xf32>
    %102 = vector.shape_cast %101 : vector<1x5x128xf32> to vector<5x128xf32>
    %c145 = arith.constant 145 : index
    %c0_53 = arith.constant 0 : index
    %103 = vector.load %arg17[%c145, %c0_53] : memref<400x128xf32, #tpu.memory_space<vmem>>, vector<5x128xf32>
    tpu.vector_store %arg17[%c145, %c0_53], %102 {strides = array<i32>} : memref<400x128xf32, #tpu.memory_space<vmem>>, vector<5x128xf32>,
    %c6 = arith.constant 6 : index
    %c0_54 = arith.constant 0 : index
    %c0_55 = arith.constant 0 : index
    %c0_56 = arith.constant 0 : index
    %104 = vector.load %arg15[%c6, %c0_54, %c0_55, %c0_56] : memref<16x5x5x128xf32, #tpu.memory_space<vmem>>, vector<1x5x5x128xf32>
    %105 = vector.shape_cast %104 : vector<1x5x5x128xf32> to vector<5x5x128xf32>
    %106 = vector.extract_strided_slice %105 {offsets = [0, 0, 0], sizes = [1, 5, 128], strides = [1, 1, 1]} : vector<5x5x128xf32> to vector<1x5x128xf32>
    %107 = vector.shape_cast %106 : vector<1x5x128xf32> to vector<5x128xf32>
    %c150 = arith.constant 150 : index
    %c0_57 = arith.constant 0 : index
    %108 = vector.load %arg17[%c150, %c0_57] : memref<400x128xf32, #tpu.memory_space<vmem>>, vector<5x128xf32>
    tpu.vector_store %arg17[%c150, %c0_57], %107 {strides = array<i32>} : memref<400x128xf32, #tpu.memory_space<vmem>>, vector<5x128xf32>,
    %109 = vector.extract_strided_slice %105 {offsets = [1, 0, 0], sizes = [1, 5, 128], strides = [1, 1, 1]} : vector<5x5x128xf32> to vector<1x5x128xf32>
    %110 = vector.shape_cast %109 : vector<1x5x128xf32> to vector<5x128xf32>
    %c155 = arith.constant 155 : index
    %c0_58 = arith.constant 0 : index
    %111 = vector.load %arg17[%c155, %c0_58] : memref<400x128xf32, #tpu.memory_space<vmem>>, vector<5x128xf32>
    tpu.vector_store %arg17[%c155, %c0_58], %110 {strides = array<i32>} : memref<400x128xf32, #tpu.memory_space<vmem>>, vector<5x128xf32>,
    %112 = vector.extract_strided_slice %105 {offsets = [2, 0, 0], sizes = [1, 5, 128], strides = [1, 1, 1]} : vector<5x5x128xf32> to vector<1x5x128xf32>
    %113 = vector.shape_cast %112 : vector<1x5x128xf32> to vector<5x128xf32>
    %c160 = arith.constant 160 : index
    %c0_59 = arith.constant 0 : index
    %114 = vector.load %arg17[%c160, %c0_59] : memref<400x128xf32, #tpu.memory_space<vmem>>, vector<5x128xf32>
    tpu.vector_store %arg17[%c160, %c0_59], %113 {strides = array<i32>} : memref<400x128xf32, #tpu.memory_space<vmem>>, vector<5x128xf32>,
    %115 = vector.extract_strided_slice %105 {offsets = [3, 0, 0], sizes = [1, 5, 128], strides = [1, 1, 1]} : vector<5x5x128xf32> to vector<1x5x128xf32>
    %116 = vector.shape_cast %115 : vector<1x5x128xf32> to vector<5x128xf32>
    %c165 = arith.constant 165 : index
    %c0_60 = arith.constant 0 : index
    %117 = vector.load %arg17[%c165, %c0_60] : memref<400x128xf32, #tpu.memory_space<vmem>>, vector<5x128xf32>
    tpu.vector_store %arg17[%c165, %c0_60], %116 {strides = array<i32>} : memref<400x128xf32, #tpu.memory_space<vmem>>, vector<5x128xf32>,
    %118 = vector.extract_strided_slice %105 {offsets = [4, 0, 0], sizes = [1, 5, 128], strides = [1, 1, 1]} : vector<5x5x128xf32> to vector<1x5x128xf32>
    %119 = vector.shape_cast %118 : vector<1x5x128xf32> to vector<5x128xf32>
    %c170 = arith.constant 170 : index
    %c0_61 = arith.constant 0 : index
    %120 = vector.load %arg17[%c170, %c0_61] : memref<400x128xf32, #tpu.memory_space<vmem>>, vector<5x128xf32>
    tpu.vector_store %arg17[%c170, %c0_61], %119 {strides = array<i32>} : memref<400x128xf32, #tpu.memory_space<vmem>>, vector<5x128xf32>,
    %c7 = arith.constant 7 : index
    %c0_62 = arith.constant 0 : index
    %c0_63 = arith.constant 0 : index
    %c0_64 = arith.constant 0 : index
    %121 = vector.load %arg15[%c7, %c0_62, %c0_63, %c0_64] : memref<16x5x5x128xf32, #tpu.memory_space<vmem>>, vector<1x5x5x128xf32>
    %122 = vector.shape_cast %121 : vector<1x5x5x128xf32> to vector<5x5x128xf32>
    %123 = vector.extract_strided_slice %122 {offsets = [0, 0, 0], sizes = [1, 5, 128], strides = [1, 1, 1]} : vector<5x5x128xf32> to vector<1x5x128xf32>
    %124 = vector.shape_cast %123 : vector<1x5x128xf32> to vector<5x128xf32>
    %c175 = arith.constant 175 : index
    %c0_65 = arith.constant 0 : index
    %125 = vector.load %arg17[%c175, %c0_65] : memref<400x128xf32, #tpu.memory_space<vmem>>, vector<5x128xf32>
    tpu.vector_store %arg17[%c175, %c0_65], %124 {strides = array<i32>} : memref<400x128xf32, #tpu.memory_space<vmem>>, vector<5x128xf32>,
    %126 = vector.extract_strided_slice %122 {offsets = [1, 0, 0], sizes = [1, 5, 128], strides = [1, 1, 1]} : vector<5x5x128xf32> to vector<1x5x128xf32>
    %127 = vector.shape_cast %126 : vector<1x5x128xf32> to vector<5x128xf32>
    %c180 = arith.constant 180 : index
    %c0_66 = arith.constant 0 : index
    %128 = vector.load %arg17[%c180, %c0_66] : memref<400x128xf32, #tpu.memory_space<vmem>>, vector<5x128xf32>
    tpu.vector_store %arg17[%c180, %c0_66], %127 {strides = array<i32>} : memref<400x128xf32, #tpu.memory_space<vmem>>, vector<5x128xf32>,
    %129 = vector.extract_strided_slice %122 {offsets = [2, 0, 0], sizes = [1, 5, 128], strides = [1, 1, 1]} : vector<5x5x128xf32> to vector<1x5x128xf32>
    %130 = vector.shape_cast %129 : vector<1x5x128xf32> to vector<5x128xf32>
    %c185 = arith.constant 185 : index
    %c0_67 = arith.constant 0 : index
    %131 = vector.load %arg17[%c185, %c0_67] : memref<400x128xf32, #tpu.memory_space<vmem>>, vector<5x128xf32>
    tpu.vector_store %arg17[%c185, %c0_67], %130 {strides = array<i32>} : memref<400x128xf32, #tpu.memory_space<vmem>>, vector<5x128xf32>,
    %132 = vector.extract_strided_slice %122 {offsets = [3, 0, 0], sizes = [1, 5, 128], strides = [1, 1, 1]} : vector<5x5x128xf32> to vector<1x5x128xf32>
    %133 = vector.shape_cast %132 : vector<1x5x128xf32> to vector<5x128xf32>
    %c190 = arith.constant 190 : index
    %c0_68 = arith.constant 0 : index
    %134 = vector.load %arg17[%c190, %c0_68] : memref<400x128xf32, #tpu.memory_space<vmem>>, vector<5x128xf32>
    tpu.vector_store %arg17[%c190, %c0_68], %133 {strides = array<i32>} : memref<400x128xf32, #tpu.memory_space<vmem>>, vector<5x128xf32>,
    %135 = vector.extract_strided_slice %122 {offsets = [4, 0, 0], sizes = [1, 5, 128], strides = [1, 1, 1]} : vector<5x5x128xf32> to vector<1x5x128xf32>
    %136 = vector.shape_cast %135 : vector<1x5x128xf32> to vector<5x128xf32>
    %c195 = arith.constant 195 : index
    %c0_69 = arith.constant 0 : index
    %137 = vector.load %arg17[%c195, %c0_69] : memref<400x128xf32, #tpu.memory_space<vmem>>, vector<5x128xf32>
    tpu.vector_store %arg17[%c195, %c0_69], %136 {strides = array<i32>} : memref<400x128xf32, #tpu.memory_space<vmem>>, vector<5x128xf32>,
    %c8 = arith.constant 8 : index
    %c0_70 = arith.constant 0 : index
    %c0_71 = arith.constant 0 : index
    %c0_72 = arith.constant 0 : index
    %138 = vector.load %arg15[%c8, %c0_70, %c0_71, %c0_72] : memref<16x5x5x128xf32, #tpu.memory_space<vmem>>, vector<1x5x5x128xf32>
    %139 = vector.shape_cast %138 : vector<1x5x5x128xf32> to vector<5x5x128xf32>
    %140 = vector.extract_strided_slice %139 {offsets = [0, 0, 0], sizes = [1, 5, 128], strides = [1, 1, 1]} : vector<5x5x128xf32> to vector<1x5x128xf32>
    %141 = vector.shape_cast %140 : vector<1x5x128xf32> to vector<5x128xf32>
    %c200 = arith.constant 200 : index
    %c0_73 = arith.constant 0 : index
    %142 = vector.load %arg17[%c200, %c0_73] : memref<400x128xf32, #tpu.memory_space<vmem>>, vector<5x128xf32>
    tpu.vector_store %arg17[%c200, %c0_73], %141 {strides = array<i32>} : memref<400x128xf32, #tpu.memory_space<vmem>>, vector<5x128xf32>,
    %143 = vector.extract_strided_slice %139 {offsets = [1, 0, 0], sizes = [1, 5, 128], strides = [1, 1, 1]} : vector<5x5x128xf32> to vector<1x5x128xf32>
    %144 = vector.shape_cast %143 : vector<1x5x128xf32> to vector<5x128xf32>
    %c205 = arith.constant 205 : index
    %c0_74 = arith.constant 0 : index
    %145 = vector.load %arg17[%c205, %c0_74] : memref<400x128xf32, #tpu.memory_space<vmem>>, vector<5x128xf32>
    tpu.vector_store %arg17[%c205, %c0_74], %144 {strides = array<i32>} : memref<400x128xf32, #tpu.memory_space<vmem>>, vector<5x128xf32>,
    %146 = vector.extract_strided_slice %139 {offsets = [2, 0, 0], sizes = [1, 5, 128], strides = [1, 1, 1]} : vector<5x5x128xf32> to vector<1x5x128xf32>
    %147 = vector.shape_cast %146 : vector<1x5x128xf32> to vector<5x128xf32>
    %c210 = arith.constant 210 : index
    %c0_75 = arith.constant 0 : index
    %148 = vector.load %arg17[%c210, %c0_75] : memref<400x128xf32, #tpu.memory_space<vmem>>, vector<5x128xf32>
    tpu.vector_store %arg17[%c210, %c0_75], %147 {strides = array<i32>} : memref<400x128xf32, #tpu.memory_space<vmem>>, vector<5x128xf32>,
    %149 = vector.extract_strided_slice %139 {offsets = [3, 0, 0], sizes = [1, 5, 128], strides = [1, 1, 1]} : vector<5x5x128xf32> to vector<1x5x128xf32>
    %150 = vector.shape_cast %149 : vector<1x5x128xf32> to vector<5x128xf32>
    %c215 = arith.constant 215 : index
    %c0_76 = arith.constant 0 : index
    %151 = vector.load %arg17[%c215, %c0_76] : memref<400x128xf32, #tpu.memory_space<vmem>>, vector<5x128xf32>
    tpu.vector_store %arg17[%c215, %c0_76], %150 {strides = array<i32>} : memref<400x128xf32, #tpu.memory_space<vmem>>, vector<5x128xf32>,
    %152 = vector.extract_strided_slice %139 {offsets = [4, 0, 0], sizes = [1, 5, 128], strides = [1, 1, 1]} : vector<5x5x128xf32> to vector<1x5x128xf32>
    %153 = vector.shape_cast %152 : vector<1x5x128xf32> to vector<5x128xf32>
    %c220 = arith.constant 220 : index
    %c0_77 = arith.constant 0 : index
    %154 = vector.load %arg17[%c220, %c0_77] : memref<400x128xf32, #tpu.memory_space<vmem>>, vector<5x128xf32>
    tpu.vector_store %arg17[%c220, %c0_77], %153 {strides = array<i32>} : memref<400x128xf32, #tpu.memory_space<vmem>>, vector<5x128xf32>,
    %c9 = arith.constant 9 : index
    %c0_78 = arith.constant 0 : index
    %c0_79 = arith.constant 0 : index
    %c0_80 = arith.constant 0 : index
    %155 = vector.load %arg15[%c9, %c0_78, %c0_79, %c0_80] : memref<16x5x5x128xf32, #tpu.memory_space<vmem>>, vector<1x5x5x128xf32>
    %156 = vector.shape_cast %155 : vector<1x5x5x128xf32> to vector<5x5x128xf32>
    %157 = vector.extract_strided_slice %156 {offsets = [0, 0, 0], sizes = [1, 5, 128], strides = [1, 1, 1]} : vector<5x5x128xf32> to vector<1x5x128xf32>
    %158 = vector.shape_cast %157 : vector<1x5x128xf32> to vector<5x128xf32>
    %c225 = arith.constant 225 : index
    %c0_81 = arith.constant 0 : index
    %159 = vector.load %arg17[%c225, %c0_81] : memref<400x128xf32, #tpu.memory_space<vmem>>, vector<5x128xf32>
    tpu.vector_store %arg17[%c225, %c0_81], %158 {strides = array<i32>} : memref<400x128xf32, #tpu.memory_space<vmem>>, vector<5x128xf32>,
    %160 = vector.extract_strided_slice %156 {offsets = [1, 0, 0], sizes = [1, 5, 128], strides = [1, 1, 1]} : vector<5x5x128xf32> to vector<1x5x128xf32>
    %161 = vector.shape_cast %160 : vector<1x5x128xf32> to vector<5x128xf32>
    %c230 = arith.constant 230 : index
    %c0_82 = arith.constant 0 : index
    %162 = vector.load %arg17[%c230, %c0_82] : memref<400x128xf32, #tpu.memory_space<vmem>>, vector<5x128xf32>
    tpu.vector_store %arg17[%c230, %c0_82], %161 {strides = array<i32>} : memref<400x128xf32, #tpu.memory_space<vmem>>, vector<5x128xf32>,
    %163 = vector.extract_strided_slice %156 {offsets = [2, 0, 0], sizes = [1, 5, 128], strides = [1, 1, 1]} : vector<5x5x128xf32> to vector<1x5x128xf32>
    %164 = vector.shape_cast %163 : vector<1x5x128xf32> to vector<5x128xf32>
    %c235 = arith.constant 235 : index
    %c0_83 = arith.constant 0 : index
    %165 = vector.load %arg17[%c235, %c0_83] : memref<400x128xf32, #tpu.memory_space<vmem>>, vector<5x128xf32>
    tpu.vector_store %arg17[%c235, %c0_83], %164 {strides = array<i32>} : memref<400x128xf32, #tpu.memory_space<vmem>>, vector<5x128xf32>,
    %166 = vector.extract_strided_slice %156 {offsets = [3, 0, 0], sizes = [1, 5, 128], strides = [1, 1, 1]} : vector<5x5x128xf32> to vector<1x5x128xf32>
    %167 = vector.shape_cast %166 : vector<1x5x128xf32> to vector<5x128xf32>
    %c240 = arith.constant 240 : index
    %c0_84 = arith.constant 0 : index
    %168 = vector.load %arg17[%c240, %c0_84] : memref<400x128xf32, #tpu.memory_space<vmem>>, vector<5x128xf32>
    tpu.vector_store %arg17[%c240, %c0_84], %167 {strides = array<i32>} : memref<400x128xf32, #tpu.memory_space<vmem>>, vector<5x128xf32>,
    %169 = vector.extract_strided_slice %156 {offsets = [4, 0, 0], sizes = [1, 5, 128], strides = [1, 1, 1]} : vector<5x5x128xf32> to vector<1x5x128xf32>
    %170 = vector.shape_cast %169 : vector<1x5x128xf32> to vector<5x128xf32>
    %c245 = arith.constant 245 : index
    %c0_85 = arith.constant 0 : index
    %171 = vector.load %arg17[%c245, %c0_85] : memref<400x128xf32, #tpu.memory_space<vmem>>, vector<5x128xf32>
    tpu.vector_store %arg17[%c245, %c0_85], %170 {strides = array<i32>} : memref<400x128xf32, #tpu.memory_space<vmem>>, vector<5x128xf32>,
    %c10_86 = arith.constant 10 : index
    %c0_87 = arith.constant 0 : index
    %c0_88 = arith.constant 0 : index
    %c0_89 = arith.constant 0 : index
    %172 = vector.load %arg15[%c10_86, %c0_87, %c0_88, %c0_89] : memref<16x5x5x128xf32, #tpu.memory_space<vmem>>, vector<1x5x5x128xf32>
    %173 = vector.shape_cast %172 : vector<1x5x5x128xf32> to vector<5x5x128xf32>
    %174 = vector.extract_strided_slice %173 {offsets = [0, 0, 0], sizes = [1, 5, 128], strides = [1, 1, 1]} : vector<5x5x128xf32> to vector<1x5x128xf32>
    %175 = vector.shape_cast %174 : vector<1x5x128xf32> to vector<5x128xf32>
    %c250 = arith.constant 250 : index
    %c0_90 = arith.constant 0 : index
    %176 = vector.load %arg17[%c250, %c0_90] : memref<400x128xf32, #tpu.memory_space<vmem>>, vector<5x128xf32>
    tpu.vector_store %arg17[%c250, %c0_90], %175 {strides = array<i32>} : memref<400x128xf32, #tpu.memory_space<vmem>>, vector<5x128xf32>,
    %177 = vector.extract_strided_slice %173 {offsets = [1, 0, 0], sizes = [1, 5, 128], strides = [1, 1, 1]} : vector<5x5x128xf32> to vector<1x5x128xf32>
    %178 = vector.shape_cast %177 : vector<1x5x128xf32> to vector<5x128xf32>
    %c255 = arith.constant 255 : index
    %c0_91 = arith.constant 0 : index
    %179 = vector.load %arg17[%c255, %c0_91] : memref<400x128xf32, #tpu.memory_space<vmem>>, vector<5x128xf32>
    tpu.vector_store %arg17[%c255, %c0_91], %178 {strides = array<i32>} : memref<400x128xf32, #tpu.memory_space<vmem>>, vector<5x128xf32>,
    %180 = vector.extract_strided_slice %173 {offsets = [2, 0, 0], sizes = [1, 5, 128], strides = [1, 1, 1]} : vector<5x5x128xf32> to vector<1x5x128xf32>
    %181 = vector.shape_cast %180 : vector<1x5x128xf32> to vector<5x128xf32>
    %c260 = arith.constant 260 : index
    %c0_92 = arith.constant 0 : index
    %182 = vector.load %arg17[%c260, %c0_92] : memref<400x128xf32, #tpu.memory_space<vmem>>, vector<5x128xf32>
    tpu.vector_store %arg17[%c260, %c0_92], %181 {strides = array<i32>} : memref<400x128xf32, #tpu.memory_space<vmem>>, vector<5x128xf32>,
    %183 = vector.extract_strided_slice %173 {offsets = [3, 0, 0], sizes = [1, 5, 128], strides = [1, 1, 1]} : vector<5x5x128xf32> to vector<1x5x128xf32>
    %184 = vector.shape_cast %183 : vector<1x5x128xf32> to vector<5x128xf32>
    %c265 = arith.constant 265 : index
    %c0_93 = arith.constant 0 : index
    %185 = vector.load %arg17[%c265, %c0_93] : memref<400x128xf32, #tpu.memory_space<vmem>>, vector<5x128xf32>
    tpu.vector_store %arg17[%c265, %c0_93], %184 {strides = array<i32>} : memref<400x128xf32, #tpu.memory_space<vmem>>, vector<5x128xf32>,
    %186 = vector.extract_strided_slice %173 {offsets = [4, 0, 0], sizes = [1, 5, 128], strides = [1, 1, 1]} : vector<5x5x128xf32> to vector<1x5x128xf32>
    %187 = vector.shape_cast %186 : vector<1x5x128xf32> to vector<5x128xf32>
    %c270 = arith.constant 270 : index
    %c0_94 = arith.constant 0 : index
    %188 = vector.load %arg17[%c270, %c0_94] : memref<400x128xf32, #tpu.memory_space<vmem>>, vector<5x128xf32>
    tpu.vector_store %arg17[%c270, %c0_94], %187 {strides = array<i32>} : memref<400x128xf32, #tpu.memory_space<vmem>>, vector<5x128xf32>,
    %c11 = arith.constant 11 : index
    %c0_95 = arith.constant 0 : index
    %c0_96 = arith.constant 0 : index
    %c0_97 = arith.constant 0 : index
    %189 = vector.load %arg15[%c11, %c0_95, %c0_96, %c0_97] : memref<16x5x5x128xf32, #tpu.memory_space<vmem>>, vector<1x5x5x128xf32>
    %190 = vector.shape_cast %189 : vector<1x5x5x128xf32> to vector<5x5x128xf32>
    %191 = vector.extract_strided_slice %190 {offsets = [0, 0, 0], sizes = [1, 5, 128], strides = [1, 1, 1]} : vector<5x5x128xf32> to vector<1x5x128xf32>
    %192 = vector.shape_cast %191 : vector<1x5x128xf32> to vector<5x128xf32>
    %c275 = arith.constant 275 : index
    %c0_98 = arith.constant 0 : index
    %193 = vector.load %arg17[%c275, %c0_98] : memref<400x128xf32, #tpu.memory_space<vmem>>, vector<5x128xf32>
    tpu.vector_store %arg17[%c275, %c0_98], %192 {strides = array<i32>} : memref<400x128xf32, #tpu.memory_space<vmem>>, vector<5x128xf32>,
    %194 = vector.extract_strided_slice %190 {offsets = [1, 0, 0], sizes = [1, 5, 128], strides = [1, 1, 1]} : vector<5x5x128xf32> to vector<1x5x128xf32>
    %195 = vector.shape_cast %194 : vector<1x5x128xf32> to vector<5x128xf32>
    %c280 = arith.constant 280 : index
    %c0_99 = arith.constant 0 : index
    %196 = vector.load %arg17[%c280, %c0_99] : memref<400x128xf32, #tpu.memory_space<vmem>>, vector<5x128xf32>
    tpu.vector_store %arg17[%c280, %c0_99], %195 {strides = array<i32>} : memref<400x128xf32, #tpu.memory_space<vmem>>, vector<5x128xf32>,
    %197 = vector.extract_strided_slice %190 {offsets = [2, 0, 0], sizes = [1, 5, 128], strides = [1, 1, 1]} : vector<5x5x128xf32> to vector<1x5x128xf32>
    %198 = vector.shape_cast %197 : vector<1x5x128xf32> to vector<5x128xf32>
    %c285 = arith.constant 285 : index
    %c0_100 = arith.constant 0 : index
    %199 = vector.load %arg17[%c285, %c0_100] : memref<400x128xf32, #tpu.memory_space<vmem>>, vector<5x128xf32>
    tpu.vector_store %arg17[%c285, %c0_100], %198 {strides = array<i32>} : memref<400x128xf32, #tpu.memory_space<vmem>>, vector<5x128xf32>,
    %200 = vector.extract_strided_slice %190 {offsets = [3, 0, 0], sizes = [1, 5, 128], strides = [1, 1, 1]} : vector<5x5x128xf32> to vector<1x5x128xf32>
    %201 = vector.shape_cast %200 : vector<1x5x128xf32> to vector<5x128xf32>
    %c290 = arith.constant 290 : index
    %c0_101 = arith.constant 0 : index
    %202 = vector.load %arg17[%c290, %c0_101] : memref<400x128xf32, #tpu.memory_space<vmem>>, vector<5x128xf32>
    tpu.vector_store %arg17[%c290, %c0_101], %201 {strides = array<i32>} : memref<400x128xf32, #tpu.memory_space<vmem>>, vector<5x128xf32>,
    %203 = vector.extract_strided_slice %190 {offsets = [4, 0, 0], sizes = [1, 5, 128], strides = [1, 1, 1]} : vector<5x5x128xf32> to vector<1x5x128xf32>
    %204 = vector.shape_cast %203 : vector<1x5x128xf32> to vector<5x128xf32>
    %c295 = arith.constant 295 : index
    %c0_102 = arith.constant 0 : index
    %205 = vector.load %arg17[%c295, %c0_102] : memref<400x128xf32, #tpu.memory_space<vmem>>, vector<5x128xf32>
    tpu.vector_store %arg17[%c295, %c0_102], %204 {strides = array<i32>} : memref<400x128xf32, #tpu.memory_space<vmem>>, vector<5x128xf32>,
    %c12 = arith.constant 12 : index
    %c0_103 = arith.constant 0 : index
    %c0_104 = arith.constant 0 : index
    %c0_105 = arith.constant 0 : index
    %206 = vector.load %arg15[%c12, %c0_103, %c0_104, %c0_105] : memref<16x5x5x128xf32, #tpu.memory_space<vmem>>, vector<1x5x5x128xf32>
    %207 = vector.shape_cast %206 : vector<1x5x5x128xf32> to vector<5x5x128xf32>
    %208 = vector.extract_strided_slice %207 {offsets = [0, 0, 0], sizes = [1, 5, 128], strides = [1, 1, 1]} : vector<5x5x128xf32> to vector<1x5x128xf32>
    %209 = vector.shape_cast %208 : vector<1x5x128xf32> to vector<5x128xf32>
    %c300 = arith.constant 300 : index
    %c0_106 = arith.constant 0 : index
    %210 = vector.load %arg17[%c300, %c0_106] : memref<400x128xf32, #tpu.memory_space<vmem>>, vector<5x128xf32>
    tpu.vector_store %arg17[%c300, %c0_106], %209 {strides = array<i32>} : memref<400x128xf32, #tpu.memory_space<vmem>>, vector<5x128xf32>,
    %211 = vector.extract_strided_slice %207 {offsets = [1, 0, 0], sizes = [1, 5, 128], strides = [1, 1, 1]} : vector<5x5x128xf32> to vector<1x5x128xf32>
    %212 = vector.shape_cast %211 : vector<1x5x128xf32> to vector<5x128xf32>
    %c305 = arith.constant 305 : index
    %c0_107 = arith.constant 0 : index
    %213 = vector.load %arg17[%c305, %c0_107] : memref<400x128xf32, #tpu.memory_space<vmem>>, vector<5x128xf32>
    tpu.vector_store %arg17[%c305, %c0_107], %212 {strides = array<i32>} : memref<400x128xf32, #tpu.memory_space<vmem>>, vector<5x128xf32>,
    %214 = vector.extract_strided_slice %207 {offsets = [2, 0, 0], sizes = [1, 5, 128], strides = [1, 1, 1]} : vector<5x5x128xf32> to vector<1x5x128xf32>
    %215 = vector.shape_cast %214 : vector<1x5x128xf32> to vector<5x128xf32>
    %c310 = arith.constant 310 : index
    %c0_108 = arith.constant 0 : index
    %216 = vector.load %arg17[%c310, %c0_108] : memref<400x128xf32, #tpu.memory_space<vmem>>, vector<5x128xf32>
    tpu.vector_store %arg17[%c310, %c0_108], %215 {strides = array<i32>} : memref<400x128xf32, #tpu.memory_space<vmem>>, vector<5x128xf32>,
    %217 = vector.extract_strided_slice %207 {offsets = [3, 0, 0], sizes = [1, 5, 128], strides = [1, 1, 1]} : vector<5x5x128xf32> to vector<1x5x128xf32>
    %218 = vector.shape_cast %217 : vector<1x5x128xf32> to vector<5x128xf32>
    %c315 = arith.constant 315 : index
    %c0_109 = arith.constant 0 : index
    %219 = vector.load %arg17[%c315, %c0_109] : memref<400x128xf32, #tpu.memory_space<vmem>>, vector<5x128xf32>
    tpu.vector_store %arg17[%c315, %c0_109], %218 {strides = array<i32>} : memref<400x128xf32, #tpu.memory_space<vmem>>, vector<5x128xf32>,
    %220 = vector.extract_strided_slice %207 {offsets = [4, 0, 0], sizes = [1, 5, 128], strides = [1, 1, 1]} : vector<5x5x128xf32> to vector<1x5x128xf32>
    %221 = vector.shape_cast %220 : vector<1x5x128xf32> to vector<5x128xf32>
    %c320 = arith.constant 320 : index
    %c0_110 = arith.constant 0 : index
    %222 = vector.load %arg17[%c320, %c0_110] : memref<400x128xf32, #tpu.memory_space<vmem>>, vector<5x128xf32>
    tpu.vector_store %arg17[%c320, %c0_110], %221 {strides = array<i32>} : memref<400x128xf32, #tpu.memory_space<vmem>>, vector<5x128xf32>,
    %c13 = arith.constant 13 : index
    %c0_111 = arith.constant 0 : index
    %c0_112 = arith.constant 0 : index
    %c0_113 = arith.constant 0 : index
    %223 = vector.load %arg15[%c13, %c0_111, %c0_112, %c0_113] : memref<16x5x5x128xf32, #tpu.memory_space<vmem>>, vector<1x5x5x128xf32>
    %224 = vector.shape_cast %223 : vector<1x5x5x128xf32> to vector<5x5x128xf32>
    %225 = vector.extract_strided_slice %224 {offsets = [0, 0, 0], sizes = [1, 5, 128], strides = [1, 1, 1]} : vector<5x5x128xf32> to vector<1x5x128xf32>
    %226 = vector.shape_cast %225 : vector<1x5x128xf32> to vector<5x128xf32>
    %c325 = arith.constant 325 : index
    %c0_114 = arith.constant 0 : index
    %227 = vector.load %arg17[%c325, %c0_114] : memref<400x128xf32, #tpu.memory_space<vmem>>, vector<5x128xf32>
    tpu.vector_store %arg17[%c325, %c0_114], %226 {strides = array<i32>} : memref<400x128xf32, #tpu.memory_space<vmem>>, vector<5x128xf32>,
    %228 = vector.extract_strided_slice %224 {offsets = [1, 0, 0], sizes = [1, 5, 128], strides = [1, 1, 1]} : vector<5x5x128xf32> to vector<1x5x128xf32>
    %229 = vector.shape_cast %228 : vector<1x5x128xf32> to vector<5x128xf32>
    %c330 = arith.constant 330 : index
    %c0_115 = arith.constant 0 : index
    %230 = vector.load %arg17[%c330, %c0_115] : memref<400x128xf32, #tpu.memory_space<vmem>>, vector<5x128xf32>
    tpu.vector_store %arg17[%c330, %c0_115], %229 {strides = array<i32>} : memref<400x128xf32, #tpu.memory_space<vmem>>, vector<5x128xf32>,
    %231 = vector.extract_strided_slice %224 {offsets = [2, 0, 0], sizes = [1, 5, 128], strides = [1, 1, 1]} : vector<5x5x128xf32> to vector<1x5x128xf32>
    %232 = vector.shape_cast %231 : vector<1x5x128xf32> to vector<5x128xf32>
    %c335 = arith.constant 335 : index
    %c0_116 = arith.constant 0 : index
    %233 = vector.load %arg17[%c335, %c0_116] : memref<400x128xf32, #tpu.memory_space<vmem>>, vector<5x128xf32>
    tpu.vector_store %arg17[%c335, %c0_116], %232 {strides = array<i32>} : memref<400x128xf32, #tpu.memory_space<vmem>>, vector<5x128xf32>,
    %234 = vector.extract_strided_slice %224 {offsets = [3, 0, 0], sizes = [1, 5, 128], strides = [1, 1, 1]} : vector<5x5x128xf32> to vector<1x5x128xf32>
    %235 = vector.shape_cast %234 : vector<1x5x128xf32> to vector<5x128xf32>
    %c340 = arith.constant 340 : index
    %c0_117 = arith.constant 0 : index
    %236 = vector.load %arg17[%c340, %c0_117] : memref<400x128xf32, #tpu.memory_space<vmem>>, vector<5x128xf32>
    tpu.vector_store %arg17[%c340, %c0_117], %235 {strides = array<i32>} : memref<400x128xf32, #tpu.memory_space<vmem>>, vector<5x128xf32>,
    %237 = vector.extract_strided_slice %224 {offsets = [4, 0, 0], sizes = [1, 5, 128], strides = [1, 1, 1]} : vector<5x5x128xf32> to vector<1x5x128xf32>
    %238 = vector.shape_cast %237 : vector<1x5x128xf32> to vector<5x128xf32>
    %c345 = arith.constant 345 : index
    %c0_118 = arith.constant 0 : index
    %239 = vector.load %arg17[%c345, %c0_118] : memref<400x128xf32, #tpu.memory_space<vmem>>, vector<5x128xf32>
    tpu.vector_store %arg17[%c345, %c0_118], %238 {strides = array<i32>} : memref<400x128xf32, #tpu.memory_space<vmem>>, vector<5x128xf32>,
    %c14 = arith.constant 14 : index
    %c0_119 = arith.constant 0 : index
    %c0_120 = arith.constant 0 : index
    %c0_121 = arith.constant 0 : index
    %240 = vector.load %arg15[%c14, %c0_119, %c0_120, %c0_121] : memref<16x5x5x128xf32, #tpu.memory_space<vmem>>, vector<1x5x5x128xf32>
    %241 = vector.shape_cast %240 : vector<1x5x5x128xf32> to vector<5x5x128xf32>
    %242 = vector.extract_strided_slice %241 {offsets = [0, 0, 0], sizes = [1, 5, 128], strides = [1, 1, 1]} : vector<5x5x128xf32> to vector<1x5x128xf32>
    %243 = vector.shape_cast %242 : vector<1x5x128xf32> to vector<5x128xf32>
    %c350 = arith.constant 350 : index
    %c0_122 = arith.constant 0 : index
    %244 = vector.load %arg17[%c350, %c0_122] : memref<400x128xf32, #tpu.memory_space<vmem>>, vector<5x128xf32>
    tpu.vector_store %arg17[%c350, %c0_122], %243 {strides = array<i32>} : memref<400x128xf32, #tpu.memory_space<vmem>>, vector<5x128xf32>,
    %245 = vector.extract_strided_slice %241 {offsets = [1, 0, 0], sizes = [1, 5, 128], strides = [1, 1, 1]} : vector<5x5x128xf32> to vector<1x5x128xf32>
    %246 = vector.shape_cast %245 : vector<1x5x128xf32> to vector<5x128xf32>
    %c355 = arith.constant 355 : index
    %c0_123 = arith.constant 0 : index
    %247 = vector.load %arg17[%c355, %c0_123] : memref<400x128xf32, #tpu.memory_space<vmem>>, vector<5x128xf32>
    tpu.vector_store %arg17[%c355, %c0_123], %246 {strides = array<i32>} : memref<400x128xf32, #tpu.memory_space<vmem>>, vector<5x128xf32>,
    %248 = vector.extract_strided_slice %241 {offsets = [2, 0, 0], sizes = [1, 5, 128], strides = [1, 1, 1]} : vector<5x5x128xf32> to vector<1x5x128xf32>
    %249 = vector.shape_cast %248 : vector<1x5x128xf32> to vector<5x128xf32>
    %c360 = arith.constant 360 : index
    %c0_124 = arith.constant 0 : index
    %250 = vector.load %arg17[%c360, %c0_124] : memref<400x128xf32, #tpu.memory_space<vmem>>, vector<5x128xf32>
    tpu.vector_store %arg17[%c360, %c0_124], %249 {strides = array<i32>} : memref<400x128xf32, #tpu.memory_space<vmem>>, vector<5x128xf32>,
    %251 = vector.extract_strided_slice %241 {offsets = [3, 0, 0], sizes = [1, 5, 128], strides = [1, 1, 1]} : vector<5x5x128xf32> to vector<1x5x128xf32>
    %252 = vector.shape_cast %251 : vector<1x5x128xf32> to vector<5x128xf32>
    %c365 = arith.constant 365 : index
    %c0_125 = arith.constant 0 : index
    %253 = vector.load %arg17[%c365, %c0_125] : memref<400x128xf32, #tpu.memory_space<vmem>>, vector<5x128xf32>
    tpu.vector_store %arg17[%c365, %c0_125], %252 {strides = array<i32>} : memref<400x128xf32, #tpu.memory_space<vmem>>, vector<5x128xf32>,
    %254 = vector.extract_strided_slice %241 {offsets = [4, 0, 0], sizes = [1, 5, 128], strides = [1, 1, 1]} : vector<5x5x128xf32> to vector<1x5x128xf32>
    %255 = vector.shape_cast %254 : vector<1x5x128xf32> to vector<5x128xf32>
    %c370 = arith.constant 370 : index
    %c0_126 = arith.constant 0 : index
    %256 = vector.load %arg17[%c370, %c0_126] : memref<400x128xf32, #tpu.memory_space<vmem>>, vector<5x128xf32>
    tpu.vector_store %arg17[%c370, %c0_126], %255 {strides = array<i32>} : memref<400x128xf32, #tpu.memory_space<vmem>>, vector<5x128xf32>,
    %c15_127 = arith.constant 15 : index
    %c0_128 = arith.constant 0 : index
    %c0_129 = arith.constant 0 : index
    %c0_130 = arith.constant 0 : index
    %257 = vector.load %arg15[%c15_127, %c0_128, %c0_129, %c0_130] : memref<16x5x5x128xf32, #tpu.memory_space<vmem>>, vector<1x5x5x128xf32>
    %258 = vector.shape_cast %257 : vector<1x5x5x128xf32> to vector<5x5x128xf32>
    %259 = vector.extract_strided_slice %258 {offsets = [0, 0, 0], sizes = [1, 5, 128], strides = [1, 1, 1]} : vector<5x5x128xf32> to vector<1x5x128xf32>
    %260 = vector.shape_cast %259 : vector<1x5x128xf32> to vector<5x128xf32>
    %c375 = arith.constant 375 : index
    %c0_131 = arith.constant 0 : index
    %261 = vector.load %arg17[%c375, %c0_131] : memref<400x128xf32, #tpu.memory_space<vmem>>, vector<5x128xf32>
    tpu.vector_store %arg17[%c375, %c0_131], %260 {strides = array<i32>} : memref<400x128xf32, #tpu.memory_space<vmem>>, vector<5x128xf32>,
    %262 = vector.extract_strided_slice %258 {offsets = [1, 0, 0], sizes = [1, 5, 128], strides = [1, 1, 1]} : vector<5x5x128xf32> to vector<1x5x128xf32>
    %263 = vector.shape_cast %262 : vector<1x5x128xf32> to vector<5x128xf32>
    %c380 = arith.constant 380 : index
    %c0_132 = arith.constant 0 : index
    %264 = vector.load %arg17[%c380, %c0_132] : memref<400x128xf32, #tpu.memory_space<vmem>>, vector<5x128xf32>
    tpu.vector_store %arg17[%c380, %c0_132], %263 {strides = array<i32>} : memref<400x128xf32, #tpu.memory_space<vmem>>, vector<5x128xf32>,
    %265 = vector.extract_strided_slice %258 {offsets = [2, 0, 0], sizes = [1, 5, 128], strides = [1, 1, 1]} : vector<5x5x128xf32> to vector<1x5x128xf32>
    %266 = vector.shape_cast %265 : vector<1x5x128xf32> to vector<5x128xf32>
    %c385 = arith.constant 385 : index
    %c0_133 = arith.constant 0 : index
    %267 = vector.load %arg17[%c385, %c0_133] : memref<400x128xf32, #tpu.memory_space<vmem>>, vector<5x128xf32>
    tpu.vector_store %arg17[%c385, %c0_133], %266 {strides = array<i32>} : memref<400x128xf32, #tpu.memory_space<vmem>>, vector<5x128xf32>,
    %268 = vector.extract_strided_slice %258 {offsets = [3, 0, 0], sizes = [1, 5, 128], strides = [1, 1, 1]} : vector<5x5x128xf32> to vector<1x5x128xf32>
    %269 = vector.shape_cast %268 : vector<1x5x128xf32> to vector<5x128xf32>
    %c390 = arith.constant 390 : index
    %c0_134 = arith.constant 0 : index
    %270 = vector.load %arg17[%c390, %c0_134] : memref<400x128xf32, #tpu.memory_space<vmem>>, vector<5x128xf32>
    tpu.vector_store %arg17[%c390, %c0_134], %269 {strides = array<i32>} : memref<400x128xf32, #tpu.memory_space<vmem>>, vector<5x128xf32>,
    %271 = vector.extract_strided_slice %258 {offsets = [4, 0, 0], sizes = [1, 5, 128], strides = [1, 1, 1]} : vector<5x5x128xf32> to vector<1x5x128xf32>
    %272 = vector.shape_cast %271 : vector<1x5x128xf32> to vector<5x128xf32>
    %c395 = arith.constant 395 : index
    %c0_135 = arith.constant 0 : index
    %273 = vector.load %arg17[%c395, %c0_135] : memref<400x128xf32, #tpu.memory_space<vmem>>, vector<5x128xf32>
    tpu.vector_store %arg17[%c395, %c0_135], %272 {strides = array<i32>} : memref<400x128xf32, #tpu.memory_space<vmem>>, vector<5x128xf32>,
    %c0_136 = arith.constant 0 : index
    %c0_137 = arith.constant 0 : index
    %274 = vector.load %arg17[%c0_136, %c0_137] : memref<400x128xf32, #tpu.memory_space<vmem>>, vector<400x128xf32>
    %c0_138 = arith.constant 0 : index
    %c0_139 = arith.constant 0 : index
    %275 = vector.load %arg6[%c0_138, %c0_139] : memref<120x400xf32, #tpu.memory_space<vmem>>, vector<120x400xf32>
    %cst = arith.constant dense<0.000000e+00> : vector<120x128xf32>
    %276 = tpu.matmul %275, %274, %cst {dimension_numbers = #tpu.dot_dimension_numbers<[1], [0], [0], [1], [0, 0, 1, 1], [], []>} : vector<120x400xf32>, vector<400x128xf32>, vector<120x128xf32> -> vector<120x128xf32>
    %c0_140 = arith.constant 0 : index
    %c0_141 = arith.constant 0 : index
    %277 = vector.load %arg7[%c0_140, %c0_141] : memref<120x1xf32, #tpu.memory_space<vmem>>, vector<120x1xf32>
    %278 = vector.broadcast %277 : vector<120x1xf32> to vector<120x128xf32>
    %279 = arith.addf %276, %278 : vector<120x128xf32>
    %280 = math.tanh %279 : vector<120x128xf32>
    %c0_142 = arith.constant 0 : index
    %c0_143 = arith.constant 0 : index
    %281 = vector.load %arg8[%c0_142, %c0_143] : memref<84x120xf32, #tpu.memory_space<vmem>>, vector<84x120xf32>
    %cst_144 = arith.constant dense<0.000000e+00> : vector<84x128xf32>
    %282 = tpu.matmul %281, %280, %cst_144 {dimension_numbers = #tpu.dot_dimension_numbers<[1], [0], [0], [1], [0, 0, 1, 1], [], []>} : vector<84x120xf32>, vector<120x128xf32>, vector<84x128xf32> -> vector<84x128xf32>
    %c0_145 = arith.constant 0 : index
    %c0_146 = arith.constant 0 : index
    %283 = vector.load %arg9[%c0_145, %c0_146] : memref<84x1xf32, #tpu.memory_space<vmem>>, vector<84x1xf32>
    %284 = vector.broadcast %283 : vector<84x1xf32> to vector<84x128xf32>
    %285 = arith.addf %282, %284 : vector<84x128xf32>
    %286 = math.tanh %285 : vector<84x128xf32>
    %c0_147 = arith.constant 0 : index
    %c0_148 = arith.constant 0 : index
    %287 = vector.load %arg10[%c0_147, %c0_148] : memref<10x84xf32, #tpu.memory_space<vmem>>, vector<10x84xf32>
    %cst_149 = arith.constant dense<0.000000e+00> : vector<10x128xf32>
    %288 = tpu.matmul %287, %286, %cst_149 {dimension_numbers = #tpu.dot_dimension_numbers<[1], [0], [0], [1], [0, 0, 1, 1], [], []>} : vector<10x84xf32>, vector<84x128xf32>, vector<10x128xf32> -> vector<10x128xf32>
    %c0_150 = arith.constant 0 : index
    %c0_151 = arith.constant 0 : index
    %289 = vector.load %arg11[%c0_150, %c0_151] : memref<10x1xf32, #tpu.memory_space<vmem>>, vector<10x1xf32>
    %290 = vector.broadcast %289 : vector<10x1xf32> to vector<10x128xf32>
    %291 = arith.addf %288, %290 : vector<10x128xf32>
    %c0_152 = arith.constant 0 : index
    %c0_153 = arith.constant 0 : index
    %292 = vector.load %arg12[%c0_152, %c0_153] : memref<10x128xf32, #tpu.memory_space<vmem>>, vector<10x128xf32>
    tpu.vector_store %arg12[%c0_152, %c0_153], %291 {strides = array<i32>} : memref<10x128xf32, #tpu.memory_space<vmem>>, vector<10x128xf32>,
    return
  }
  func.func @transform_0(%arg0: i32) -> (i32, i32, i32) {
    %c0_i32 = arith.constant 0 : i32
    %c0_i32_0 = arith.constant 0 : i32
    %c0_i32_1 = arith.constant 0 : i32
    return %c0_i32, %c0_i32_0, %arg0 : i32, i32, i32
  }
  func.func @transform_1(%arg0: i32) -> (i32, i32) {
    %c0_i32 = arith.constant 0 : i32
    %c0_i32_0 = arith.constant 0 : i32
    %c0_i32_1 = arith.constant 0 : i32
    return %c0_i32, %c0_i32_0 : i32, i32
  }
  func.func @transform_2(%arg0: i32) -> i32 {
    %c0_i32 = arith.constant 0 : i32
    %c0_i32_0 = arith.constant 0 : i32
    return %c0_i32 : i32
  }
  func.func @transform_3(%arg0: i32) -> (i32, i32) {
    %c0_i32 = arith.constant 0 : i32
    %c0_i32_0 = arith.constant 0 : i32
    %c0_i32_1 = arith.constant 0 : i32
    return %c0_i32, %c0_i32_0 : i32, i32
  }
  func.func @transform_4(%arg0: i32) -> i32 {
    %c0_i32 = arith.constant 0 : i32
    %c0_i32_0 = arith.constant 0 : i32
    return %c0_i32 : i32
  }
  func.func @transform_5(%arg0: i32) -> (i32, i32) {
    %c0_i32 = arith.constant 0 : i32
    %c0_i32_0 = arith.constant 0 : i32
    %c0_i32_1 = arith.constant 0 : i32
    return %c0_i32, %c0_i32_0 : i32, i32
  }
  func.func @transform_6(%arg0: i32) -> (i32, i32) {
    %c0_i32 = arith.constant 0 : i32
    %c0_i32_0 = arith.constant 0 : i32
    %c0_i32_1 = arith.constant 0 : i32
    return %c0_i32, %c0_i32_0 : i32, i32
  }
  func.func @transform_7(%arg0: i32) -> (i32, i32) {
    %c0_i32 = arith.constant 0 : i32
    %c0_i32_0 = arith.constant 0 : i32
    %c0_i32_1 = arith.constant 0 : i32
    return %c0_i32, %c0_i32_0 : i32, i32
  }
  func.func @transform_8(%arg0: i32) -> (i32, i32) {
    %c0_i32 = arith.constant 0 : i32
    %c0_i32_0 = arith.constant 0 : i32
    %c0_i32_1 = arith.constant 0 : i32
    return %c0_i32, %c0_i32_0 : i32, i32
  }
  func.func @transform_9(%arg0: i32) -> (i32, i32) {
    %c0_i32 = arith.constant 0 : i32
    %c0_i32_0 = arith.constant 0 : i32
    %c0_i32_1 = arith.constant 0 : i32
    return %c0_i32, %c0_i32_0 : i32, i32
  }
  func.func @transform_10(%arg0: i32) -> (i32, i32) {
    %c0_i32 = arith.constant 0 : i32
    %c0_i32_0 = arith.constant 0 : i32
    %c0_i32_1 = arith.constant 0 : i32
    return %c0_i32, %c0_i32_0 : i32, i32
  }
  func.func @transform_11(%arg0: i32) -> (i32, i32) {
    %c0_i32 = arith.constant 0 : i32
    %c0_i32_0 = arith.constant 0 : i32
    return %c0_i32, %arg0 : i32, i32
  }
}

</mosaic_0001>

<llo_original>
// kernel: lenet5_forward.1
$region0: #{lenet5_forward.1}
  #allocation0 [shape = 'u32[]', space=smem, size = 0x4, offset = 0x4, fixed_abs, tag = 'smem constant byte address 0x4 - core index']
  #allocation1 [shape = 'u32[144,128]{1,0:T(1,128)}', space=vmem, size = 0x12000, scoped, tag = 'internal scratch']
  #allocation2 [shape = 'f32[6,14,14,128]{3,2,1,0:T(8,128)}', space=vmem, size = 0xa8000, scoped, tag = 'scratch operand']
  #allocation3 [shape = 'f32[14,28,128]{2,1,0:T(8,128)}', space=vmem, size = 0x38000, scoped, tag = 'scratch operand']
  #allocation4 [shape = 'f32[16,5,5,128]{3,2,1,0:T(8,128)}', space=vmem, size = 0x50000, scoped, tag = 'scratch operand']
  #allocation5 [shape = 'f32[5,10,128]{2,1,0:T(8,128)}', space=vmem, size = 0xa000, scoped, tag = 'scratch operand']
  #allocation6 [shape = 'f32[400,128]{1,0:T(8,128)}', space=vmem, size = 0x32000, scoped, tag = 'scratch operand']
  %s0 = inlined_call_operand.vmem [shape: f32[32,32,128], index: 0, kind: input, shape index: {}]
  %s1 = inlined_call_operand.vmem [shape: f32[6,25], index: 1, kind: input, shape index: {}]
  %s2 = inlined_call_operand.vmem [shape: f32[6], index: 2, kind: input, shape index: {}]
  %s3 = inlined_call_operand.vmem [shape: f32[16,150], index: 3, kind: input, shape index: {}]
  %s4 = inlined_call_operand.vmem [shape: f32[16], index: 4, kind: input, shape index: {}]
  %s5 = inlined_call_operand.vmem [shape: f32[120,400], index: 5, kind: input, shape index: {}]
  %s6 = inlined_call_operand.vmem [shape: f32[120,1], index: 6, kind: input, shape index: {}]
  %s7 = inlined_call_operand.vmem [shape: f32[84,120], index: 7, kind: input, shape index: {}]
  %s8 = inlined_call_operand.vmem [shape: f32[84,1], index: 8, kind: input, shape index: {}]
  %s9 = inlined_call_operand.vmem [shape: f32[10,84], index: 9, kind: input, shape index: {}]
  %s10 = inlined_call_operand.vmem [shape: f32[10,1], index: 10, kind: input, shape index: {}]
  %s11 = inlined_call_operand.vmem [shape: f32[10,128], index: 11, kind: output, shape index: {}]
  %s12 = sld [smem:[#allocation0]]
  $region98: #{lenet5_forward.1} parent=0
    _
  %s14 = ssub.s32 1, %s12
  %s15 = scalar_select 0, %s14, %s12
  $region1: #{lenet5_forward.1} parent=0
    #allocation7 [shape = 'u8[4096]{0}', space=smem, size = 0x1000, scoped, tag = 'input window, operand 1, single buffered']
    #allocation8 [shape = 's32[1]{0}', space=sflag, size = 0x4, scoped, tag = 'scoped memory for lenet5_forward.1']
    #allocation9 [shape = 'u8[512]{0}', space=smem, size = 0x200, scoped, tag = 'input window, operand 2, single buffered']
    #allocation10 [shape = 's32[1]{0}', space=sflag, size = 0x4, scoped, tag = 'scoped memory for lenet5_forward.1']
    #allocation11 [shape = 'u8[16384]{0}', space=smem, size = 0x4000, scoped, tag = 'input window, operand 3, single buffered']
    #allocation12 [shape = 'u8[512]{0}', space=smem, size = 0x200, scoped, tag = 'input window, operand 4, single buffered']
    #allocation13 [shape = 's32[1]{0}', space=sflag, size = 0x4, scoped, tag = 'scoped memory for lenet5_forward.1']
    %16 = vsyncpa [#allocation8], 0
    %17 = vsyncpa [#allocation10], 0
    %18 = vsyncpa [#allocation13], 0
    // Predicated region
    $region2: #{lenet5_forward.1} parent=1 // pred_check
      _
    $region3: #{lenet5_forward.1} parent=1 // pred_check_branch
      %20 = sbr.rel (0) target = $region5
    $region4: #{lenet5_forward.1} parent=1 // pred_region
      _
    $region5: #{lenet5_forward.1} parent=1 // pred_fallthru
      _
    // Predicated region
    $region6: #{lenet5_forward.1} parent=1 // pred_check
      _
    $region7: #{lenet5_forward.1} parent=1 // pred_check_branch
      %22 = sbr.rel (0) target = $region9
    $region8: #{lenet5_forward.1} parent=1 // pred_region
      %s24 = ssub.s32 128, 128
      %25 = vsyncadd [#allocation8], %s24
      %s27 = sshll.u32 %s1, 4
      %s28 = int_to_ptr.vmem [resolvable:$true] %s27
      %30 = dma.vmem_to_smem %s28, 128, [#allocation7], [#allocation8]
    $region9: #{lenet5_forward.1} parent=1 // pred_fallthru
      _
    // Predicated region
    $region10: #{lenet5_forward.1} parent=1 // pred_check
      _
    $region11: #{lenet5_forward.1} parent=1 // pred_check_branch
      %32 = sbr.rel (0) target = $region13
    $region12: #{lenet5_forward.1} parent=1 // pred_region
      %s34 = ssub.s32 16, 16
      %35 = vsyncadd [#allocation10], %s34
      %s37 = sshll.u32 %s2, 4
      %s38 = int_to_ptr.vmem [resolvable:$true] %s37
      %40 = dma.vmem_to_smem %s38, 16, [#allocation9], [#allocation10]
    $region13: #{lenet5_forward.1} parent=1 // pred_fallthru
      _
    // Predicated region
    $region14: #{lenet5_forward.1} parent=1 // pred_check
      _
    $region15: #{lenet5_forward.1} parent=1 // pred_check_branch
      %42 = sbr.rel (0) target = $region17
    $region16: #{lenet5_forward.1} parent=1 // pred_region
      %s44 = ssub.s32 512, 512
      %45 = vsyncadd [#allocation10], %s44
      %s46 = sshll.u32 %s3, 4
      %s47 = int_to_ptr.vmem [resolvable:$true] %s46
      %52 = dma.vmem_to_smem %s47, 512, [#allocation11], [#allocation10], 256, 256, 16
    $region17: #{lenet5_forward.1} parent=1 // pred_fallthru
      _
    // Predicated region
    $region18: #{lenet5_forward.1} parent=1 // pred_check
      _
    $region19: #{lenet5_forward.1} parent=1 // pred_check_branch
      %54 = sbr.rel (0) target = $region21
    $region20: #{lenet5_forward.1} parent=1 // pred_region
      %s56 = ssub.s32 16, 16
      %57 = vsyncadd [#allocation13], %s56
      %s59 = sshll.u32 %s4, 4
      %s60 = int_to_ptr.vmem [resolvable:$true] %s59
      %62 = dma.vmem_to_smem %s60, 16, [#allocation12], [#allocation13]
    $region21: #{lenet5_forward.1} parent=1 // pred_fallthru
      _
    // Predicated region
    $region22: #{lenet5_forward.1} parent=1 // pred_check
      _
    $region23: #{lenet5_forward.1} parent=1 // pred_check_branch
      %64 = sbr.rel (0) target = $region25
    $region24: #{lenet5_forward.1} parent=1 // pred_region
      _
    $region25: #{lenet5_forward.1} parent=1 // pred_fallthru
      _
    // Predicated region
    $region26: #{lenet5_forward.1} parent=1 // pred_check
      _
    $region27: #{lenet5_forward.1} parent=1 // pred_check_branch
      %66 = sbr.rel (0) target = $region29
    $region28: #{lenet5_forward.1} parent=1 // pred_region
      _
    $region29: #{lenet5_forward.1} parent=1 // pred_fallthru
      _
    // Predicated region
    $region30: #{lenet5_forward.1} parent=1 // pred_check
      _
    $region31: #{lenet5_forward.1} parent=1 // pred_check_branch
      %68 = sbr.rel (0) target = $region33
    $region32: #{lenet5_forward.1} parent=1 // pred_region
      _
    $region33: #{lenet5_forward.1} parent=1 // pred_fallthru
      _
    // Predicated region
    $region34: #{lenet5_forward.1} parent=1 // pred_check
      _
    $region35: #{lenet5_forward.1} parent=1 // pred_check_branch
      %70 = sbr.rel (0) target = $region37
    $region36: #{lenet5_forward.1} parent=1 // pred_region
      _
    $region37: #{lenet5_forward.1} parent=1 // pred_fallthru
      _
    // Predicated region
    $region38: #{lenet5_forward.1} parent=1 // pred_check
      _
    $region39: #{lenet5_forward.1} parent=1 // pred_check_branch
      %72 = sbr.rel (0) target = $region41
    $region40: #{lenet5_forward.1} parent=1 // pred_region
      _
    $region41: #{lenet5_forward.1} parent=1 // pred_fallthru
      _
    // Predicated region
    $region42: #{lenet5_forward.1} parent=1 // pred_check
      _
    $region43: #{lenet5_forward.1} parent=1 // pred_check_branch
      %74 = sbr.rel (0) target = $region45
    $region44: #{lenet5_forward.1} parent=1 // pred_region
      _
    $region45: #{lenet5_forward.1} parent=1 // pred_fallthru
      _
    // Predicated region
    $region46: #{lenet5_forward.1} parent=1 // pred_check
      _
    $region47: #{lenet5_forward.1} parent=1 // pred_check_branch
      %76 = sbr.rel (0) target = $region49
    $region48: #{lenet5_forward.1} parent=1 // pred_region
      %77 = dma.done [#allocation8], 128
    $region49: #{lenet5_forward.1} parent=1 // pred_fallthru
      _
    // Predicated region
    $region50: #{lenet5_forward.1} parent=1 // pred_check
      _
    $region51: #{lenet5_forward.1} parent=1 // pred_check_branch
      %79 = sbr.rel (0) target = $region53
    $region52: #{lenet5_forward.1} parent=1 // pred_region
      %80 = dma.done [#allocation10], 16
    $region53: #{lenet5_forward.1} parent=1 // pred_fallthru
      _
    // Predicated region
    $region54: #{lenet5_forward.1} parent=1 // pred_check
      _
    $region55: #{lenet5_forward.1} parent=1 // pred_check_branch
      %82 = sbr.rel (0) target = $region57
    $region56: #{lenet5_forward.1} parent=1 // pred_region
      %83 = dma.done [#allocation10], 512
    $region57: #{lenet5_forward.1} parent=1 // pred_fallthru
      _
    // Predicated region
    $region58: #{lenet5_forward.1} parent=1 // pred_check
      _
    $region59: #{lenet5_forward.1} parent=1 // pred_check_branch
      %85 = sbr.rel (0) target = $region61
    $region60: #{lenet5_forward.1} parent=1 // pred_region
      %86 = dma.done [#allocation13], 16
    $region61: #{lenet5_forward.1} parent=1 // pred_fallthru
      _
    %87 = sfence
    loop: start=0, step=1, limit=6
    $region62: #{lenet5_forward.1} parent=1 // loop_pre_header
      _
    $region63: #{lenet5_forward.1} parent=1 // loop_header
      %s89 = sphi 0, %s93
      %p90 = scmp.ge.s32.totalorder %s89, 6
    $region64: #{lenet5_forward.1} parent=1 // loop_header_branch
      %92 = sbr.rel (%p90) target = $region68
    $region65: #{lenet5_forward.1} parent=1 // loop_body
      %s94 = sld [smem:[#allocation9 + %s89]]
      %v95 = vstv %s94
      loop: start=0, step=1, limit=5
      $region69: #{lenet5_forward.1} parent=65 // loop_pre_header
        _
      $region70: #{lenet5_forward.1} parent=65 // loop_header
        %s97 = sphi 0, %s101
        %p98 = scmp.ge.s32.totalorder %s97, 5
        %v102 = vphi %v95, %v1834
        %v103 = vphi %v95, %v1835
        %v104 = vphi %v95, %v1836
        %v105 = vphi %v95, %v1837
        %v106 = vphi %v95, %v1838
        %v107 = vphi %v95, %v1839
        %v108 = vphi %v95, %v1840
        %v109 = vphi %v95, %v1841
        %v110 = vphi %v95, %v1842
        %v111 = vphi %v95, %v1843
        %v112 = vphi %v95, %v1844
        %v113 = vphi %v95, %v1845
        %v114 = vphi %v95, %v1846
        %v115 = vphi %v95, %v1847
        %v116 = vphi %v95, %v1848
        %v117 = vphi %v95, %v1849
        %v118 = vphi %v95, %v1850
        %v119 = vphi %v95, %v1851
        %v120 = vphi %v95, %v1852
        %v121 = vphi %v95, %v1853
        %v122 = vphi %v95, %v1854
        %v123 = vphi %v95, %v1855
        %v124 = vphi %v95, %v1856
        %v125 = vphi %v95, %v1857
        %v126 = vphi %v95, %v1858
        %v127 = vphi %v95, %v1859
        %v128 = vphi %v95, %v1860
        %v129 = vphi %v95, %v1861
        %v130 = vphi %v95, %v1862
        %v131 = vphi %v95, %v1863
        %v132 = vphi %v95, %v1864
        %v133 = vphi %v95, %v1865
        %v134 = vphi %v95, %v1866
        %v135 = vphi %v95, %v1867
        %v136 = vphi %v95, %v1868
        %v137 = vphi %v95, %v1869
        %v138 = vphi %v95, %v1870
        %v139 = vphi %v95, %v1871
        %v140 = vphi %v95, %v1872
        %v141 = vphi %v95, %v1873
        %v142 = vphi %v95, %v1874
        %v143 = vphi %v95, %v1875
        %v144 = vphi %v95, %v1876
        %v145 = vphi %v95, %v1877
        %v146 = vphi %v95, %v1878
        %v147 = vphi %v95, %v1879
        %v148 = vphi %v95, %v1880
        %v149 = vphi %v95, %v1881
        %v150 = vphi %v95, %v1882
        %v151 = vphi %v95, %v1883
        %v152 = vphi %v95, %v1884
        %v153 = vphi %v95, %v1885
        %v154 = vphi %v95, %v1886
        %v155 = vphi %v95, %v1887
        %v156 = vphi %v95, %v1888
        %v157 = vphi %v95, %v1889
        %v158 = vphi %v95, %v1890
        %v159 = vphi %v95, %v1891
        %v160 = vphi %v95, %v1892
        %v161 = vphi %v95, %v1893
        %v162 = vphi %v95, %v1894
        %v163 = vphi %v95, %v1895
        %v164 = vphi %v95, %v1896
        %v165 = vphi %v95, %v1897
        %v166 = vphi %v95, %v1898
        %v167 = vphi %v95, %v1899
        %v168 = vphi %v95, %v1900
        %v169 = vphi %v95, %v1901
        %v170 = vphi %v95, %v1902
        %v171 = vphi %v95, %v1903
        %v172 = vphi %v95, %v1904
        %v173 = vphi %v95, %v1905
        %v174 = vphi %v95, %v1906
        %v175 = vphi %v95, %v1907
        %v176 = vphi %v95, %v1908
        %v177 = vphi %v95, %v1909
        %v178 = vphi %v95, %v1910
        %v179 = vphi %v95, %v1911
        %v180 = vphi %v95, %v1912
        %v181 = vphi %v95, %v1913
        %v182 = vphi %v95, %v1914
        %v183 = vphi %v95, %v1915
        %v184 = vphi %v95, %v1916
        %v185 = vphi %v95, %v1917
        %v186 = vphi %v95, %v1918
        %v187 = vphi %v95, %v1919
        %v188 = vphi %v95, %v1920
        %v189 = vphi %v95, %v1921
        %v190 = vphi %v95, %v1922
        %v191 = vphi %v95, %v1923
        %v192 = vphi %v95, %v1924
        %v193 = vphi %v95, %v1925
        %v194 = vphi %v95, %v1926
        %v195 = vphi %v95, %v1927
        %v196 = vphi %v95, %v1928
        %v197 = vphi %v95, %v1929
        %v198 = vphi %v95, %v1930
        %v199 = vphi %v95, %v1931
        %v200 = vphi %v95, %v1932
        %v201 = vphi %v95, %v1933
        %v202 = vphi %v95, %v1934
        %v203 = vphi %v95, %v1935
        %v204 = vphi %v95, %v1936
        %v205 = vphi %v95, %v1937
        %v206 = vphi %v95, %v1938
        %v207 = vphi %v95, %v1939
        %v208 = vphi %v95, %v1940
        %v209 = vphi %v95, %v1941
        %v210 = vphi %v95, %v1942
        %v211 = vphi %v95, %v1943
        %v212 = vphi %v95, %v1944
        %v213 = vphi %v95, %v1945
      $region71: #{lenet5_forward.1} parent=65 // loop_header_branch
        %100 = sbr.rel (%p98) target = $region75
      $region72: #{lenet5_forward.1} parent=65 // loop_body
        %s214 = smul.u32 %s97, 5
        %s215 = sshra.s32 %s214, 7
        %s216 = sand.u32 %s214, 127
        %s217 = sadd.s32 %s215, %s89
        %s218 = smul.u32 %s217, 128
        %s219 = sshra.s32 %s214, 7
        %s220 = sand.u32 %s214, 127
        %s221 = sadd.s32 %s218, %s220
        %s222 = sld [smem:[#allocation7 + %s221]]
        %s223 = smul.u32 %s97, 32
        %s224 = scalar_lea.vmem %s0, %s223
        %v225 = vld [vmem:[%s224] sm:$0xff]
        %v226 = vld [vmem:[%s224 + $0x8] sm:$0xff]
        %v227 = vld [vmem:[%s224 + $0x10] sm:$0xff]
        %v228 = vld [vmem:[%s224 + $0x18] sm:$0xf]
        %v229 = vld [vmem:[%s224 + $0x20] sm:$0xff]
        %v230 = vld [vmem:[%s224 + $0x28] sm:$0xff]
        %v231 = vld [vmem:[%s224 + $0x30] sm:$0xff]
        %v232 = vld [vmem:[%s224 + $0x38] sm:$0xf]
        %v233 = vld [vmem:[%s224 + $0x40] sm:$0xff]
        %v234 = vld [vmem:[%s224 + $0x48] sm:$0xff]
        %v235 = vld [vmem:[%s224 + $0x50] sm:$0xff]
        %v236 = vld [vmem:[%s224 + $0x58] sm:$0xf]
        %v237 = vld [vmem:[%s224 + $0x60] sm:$0xff]
        %v238 = vld [vmem:[%s224 + $0x68] sm:$0xff]
        %v239 = vld [vmem:[%s224 + $0x70] sm:$0xff]
        %v240 = vld [vmem:[%s224 + $0x78] sm:$0xf]
        %v241 = vld [vmem:[%s224 + $0x80] sm:$0xff]
        %v242 = vld [vmem:[%s224 + $0x88] sm:$0xff]
        %v243 = vld [vmem:[%s224 + $0x90] sm:$0xff]
        %v244 = vld [vmem:[%s224 + $0x98] sm:$0xf]
        %v245 = vld [vmem:[%s224 + $0xa0] sm:$0xff]
        %v246 = vld [vmem:[%s224 + $0xa8] sm:$0xff]
        %v247 = vld [vmem:[%s224 + $0xb0] sm:$0xff]
        %v248 = vld [vmem:[%s224 + $0xb8] sm:$0xf]
        %v249 = vld [vmem:[%s224 + $0xc0] sm:$0xff]
        %v250 = vld [vmem:[%s224 + $0xc8] sm:$0xff]
        %v251 = vld [vmem:[%s224 + $0xd0] sm:$0xff]
        %v252 = vld [vmem:[%s224 + $0xd8] sm:$0xf]
        %v253 = vld [vmem:[%s224 + $0xe0] sm:$0xff]
        %v254 = vld [vmem:[%s224 + $0xe8] sm:$0xff]
        %v255 = vld [vmem:[%s224 + $0xf0] sm:$0xff]
        %v256 = vld [vmem:[%s224 + $0xf8] sm:$0xf]
        %v257 = vld [vmem:[%s224 + $0x100] sm:$0xff]
        %v258 = vld [vmem:[%s224 + $0x108] sm:$0xff]
        %v259 = vld [vmem:[%s224 + $0x110] sm:$0xff]
        %v260 = vld [vmem:[%s224 + $0x118] sm:$0xf]
        %v261 = vld [vmem:[%s224 + $0x120] sm:$0xff]
        %v262 = vld [vmem:[%s224 + $0x128] sm:$0xff]
        %v263 = vld [vmem:[%s224 + $0x130] sm:$0xff]
        %v264 = vld [vmem:[%s224 + $0x138] sm:$0xf]
        %v265 = vld [vmem:[%s224 + $0x140] sm:$0xff]
        %v266 = vld [vmem:[%s224 + $0x148] sm:$0xff]
        %v267 = vld [vmem:[%s224 + $0x150] sm:$0xff]
        %v268 = vld [vmem:[%s224 + $0x158] sm:$0xf]
        %v269 = vld [vmem:[%s224 + $0x160] sm:$0xff]
        %v270 = vld [vmem:[%s224 + $0x168] sm:$0xff]
        %v271 = vld [vmem:[%s224 + $0x170] sm:$0xff]
        %v272 = vld [vmem:[%s224 + $0x178] sm:$0xf]
        %v273 = vld [vmem:[%s224 + $0x180] sm:$0xff]
        %v274 = vld [vmem:[%s224 + $0x188] sm:$0xff]
        %v275 = vld [vmem:[%s224 + $0x190] sm:$0xff]
        %v276 = vld [vmem:[%s224 + $0x198] sm:$0xf]
        %v277 = vld [vmem:[%s224 + $0x1a0] sm:$0xff]
        %v278 = vld [vmem:[%s224 + $0x1a8] sm:$0xff]
        %v279 = vld [vmem:[%s224 + $0x1b0] sm:$0xff]
        %v280 = vld [vmem:[%s224 + $0x1b8] sm:$0xf]
        %v281 = vld [vmem:[%s224 + $0x1c0] sm:$0xff]
        %v282 = vld [vmem:[%s224 + $0x1c8] sm:$0xff]
        %v283 = vld [vmem:[%s224 + $0x1d0] sm:$0xff]
        %v284 = vld [vmem:[%s224 + $0x1d8] sm:$0xf]
        %v285 = vld [vmem:[%s224 + $0x1e0] sm:$0xff]
        %v286 = vld [vmem:[%s224 + $0x1e8] sm:$0xff]
        %v287 = vld [vmem:[%s224 + $0x1f0] sm:$0xff]
        %v288 = vld [vmem:[%s224 + $0x1f8] sm:$0xf]
        %v289 = vld [vmem:[%s224 + $0x200] sm:$0xff]
        %v290 = vld [vmem:[%s224 + $0x208] sm:$0xff]
        %v291 = vld [vmem:[%s224 + $0x210] sm:$0xff]
        %v292 = vld [vmem:[%s224 + $0x218] sm:$0xf]
        %v293 = vld [vmem:[%s224 + $0x220] sm:$0xff]
        %v294 = vld [vmem:[%s224 + $0x228] sm:$0xff]
        %v295 = vld [vmem:[%s224 + $0x230] sm:$0xff]
        %v296 = vld [vmem:[%s224 + $0x238] sm:$0xf]
        %v297 = vld [vmem:[%s224 + $0x240] sm:$0xff]
        %v298 = vld [vmem:[%s224 + $0x248] sm:$0xff]
        %v299 = vld [vmem:[%s224 + $0x250] sm:$0xff]
        %v300 = vld [vmem:[%s224 + $0x258] sm:$0xf]
        %v301 = vld [vmem:[%s224 + $0x260] sm:$0xff]
        %v302 = vld [vmem:[%s224 + $0x268] sm:$0xff]
        %v303 = vld [vmem:[%s224 + $0x270] sm:$0xff]
        %v304 = vld [vmem:[%s224 + $0x278] sm:$0xf]
        %v305 = vld [vmem:[%s224 + $0x280] sm:$0xff]
        %v306 = vld [vmem:[%s224 + $0x288] sm:$0xff]
        %v307 = vld [vmem:[%s224 + $0x290] sm:$0xff]
        %v308 = vld [vmem:[%s224 + $0x298] sm:$0xf]
        %v309 = vld [vmem:[%s224 + $0x2a0] sm:$0xff]
        %v310 = vld [vmem:[%s224 + $0x2a8] sm:$0xff]
        %v311 = vld [vmem:[%s224 + $0x2b0] sm:$0xff]
        %v312 = vld [vmem:[%s224 + $0x2b8] sm:$0xf]
        %v313 = vld [vmem:[%s224 + $0x2c0] sm:$0xff]
        %v314 = vld [vmem:[%s224 + $0x2c8] sm:$0xff]
        %v315 = vld [vmem:[%s224 + $0x2d0] sm:$0xff]
        %v316 = vld [vmem:[%s224 + $0x2d8] sm:$0xf]
        %v317 = vld [vmem:[%s224 + $0x2e0] sm:$0xff]
        %v318 = vld [vmem:[%s224 + $0x2e8] sm:$0xff]
        %v319 = vld [vmem:[%s224 + $0x2f0] sm:$0xff]
        %v320 = vld [vmem:[%s224 + $0x2f8] sm:$0xf]
        %v321 = vld [vmem:[%s224 + $0x300] sm:$0xff]
        %v322 = vld [vmem:[%s224 + $0x308] sm:$0xff]
        %v323 = vld [vmem:[%s224 + $0x310] sm:$0xff]
        %v324 = vld [vmem:[%s224 + $0x318] sm:$0xf]
        %v325 = vld [vmem:[%s224 + $0x320] sm:$0xff]
        %v326 = vld [vmem:[%s224 + $0x328] sm:$0xff]
        %v327 = vld [vmem:[%s224 + $0x330] sm:$0xff]
        %v328 = vld [vmem:[%s224 + $0x338] sm:$0xf]
        %v329 = vld [vmem:[%s224 + $0x340] sm:$0xff]
        %v330 = vld [vmem:[%s224 + $0x348] sm:$0xff]
        %v331 = vld [vmem:[%s224 + $0x350] sm:$0xff]
        %v332 = vld [vmem:[%s224 + $0x358] sm:$0xf]
        %v333 = vld [vmem:[%s224 + $0x360] sm:$0xff]
        %v334 = vld [vmem:[%s224 + $0x368] sm:$0xff]
        %v335 = vld [vmem:[%s224 + $0x370] sm:$0xff]
        %v336 = vld [vmem:[%s224 + $0x378] sm:$0xf]
        %v337 = vstv %s222
        %v338 = vmul.f32 %v337, %v225
        %v339 = vmul.f32 %v337, %v226
        %v340 = vmul.f32 %v337, %v227
        %v341 = vmul.f32 %v337, %v228
        %v342 = vmul.f32 %v337, %v229
        %v343 = vmul.f32 %v337, %v230
        %v344 = vmul.f32 %v337, %v231
        %v345 = vmul.f32 %v337, %v232
        %v346 = vmul.f32 %v337, %v233
        %v347 = vmul.f32 %v337, %v234
        %v348 = vmul.f32 %v337, %v235
        %v349 = vmul.f32 %v337, %v236
        %v350 = vmul.f32 %v337, %v237
        %v351 = vmul.f32 %v337, %v238
        %v352 = vmul.f32 %v337, %v239
        %v353 = vmul.f32 %v337, %v240
        %v354 = vmul.f32 %v337, %v241
        %v355 = vmul.f32 %v337, %v242
        %v356 = vmul.f32 %v337, %v243
        %v357 = vmul.f32 %v337, %v244
        %v358 = vmul.f32 %v337, %v245
        %v359 = vmul.f32 %v337, %v246
        %v360 = vmul.f32 %v337, %v247
        %v361 = vmul.f32 %v337, %v248
        %v362 = vmul.f32 %v337, %v249
        %v363 = vmul.f32 %v337, %v250
        %v364 = vmul.f32 %v337, %v251
        %v365 = vmul.f32 %v337, %v252
        %v366 = vmul.f32 %v337, %v253
        %v367 = vmul.f32 %v337, %v254
        %v368 = vmul.f32 %v337, %v255
        %v369 = vmul.f32 %v337, %v256
        %v370 = vmul.f32 %v337, %v257
        %v371 = vmul.f32 %v337, %v258
        %v372 = vmul.f32 %v337, %v259
        %v373 = vmul.f32 %v337, %v260
        %v374 = vmul.f32 %v337, %v261
        %v375 = vmul.f32 %v337, %v262
        %v376 = vmul.f32 %v337, %v263
        %v377 = vmul.f32 %v337, %v264
        %v378 = vmul.f32 %v337, %v265
        %v379 = vmul.f32 %v337, %v266
        %v380 = vmul.f32 %v337, %v267
        %v381 = vmul.f32 %v337, %v268
        %v382 = vmul.f32 %v337, %v269
        %v383 = vmul.f32 %v337, %v270
        %v384 = vmul.f32 %v337, %v271
        %v385 = vmul.f32 %v337, %v272
        %v386 = vmul.f32 %v337, %v273
        %v387 = vmul.f32 %v337, %v274
        %v388 = vmul.f32 %v337, %v275
        %v389 = vmul.f32 %v337, %v276
        %v390 = vmul.f32 %v337, %v277
        %v391 = vmul.f32 %v337, %v278
        %v392 = vmul.f32 %v337, %v279
        %v393 = vmul.f32 %v337, %v280
        %v394 = vmul.f32 %v337, %v281
        %v395 = vmul.f32 %v337, %v282
        %v396 = vmul.f32 %v337, %v283
        %v397 = vmul.f32 %v337, %v284
        %v398 = vmul.f32 %v337, %v285
        %v399 = vmul.f32 %v337, %v286
        %v400 = vmul.f32 %v337, %v287
        %v401 = vmul.f32 %v337, %v288
        %v402 = vmul.f32 %v337, %v289
        %v403 = vmul.f32 %v337, %v290
        %v404 = vmul.f32 %v337, %v291
        %v405 = vmul.f32 %v337, %v292
        %v406 = vmul.f32 %v337, %v293
        %v407 = vmul.f32 %v337, %v294
        %v408 = vmul.f32 %v337, %v295
        %v409 = vmul.f32 %v337, %v296
        %v410 = vmul.f32 %v337, %v297
        %v411 = vmul.f32 %v337, %v298
        %v412 = vmul.f32 %v337, %v299
        %v413 = vmul.f32 %v337, %v300
        %v414 = vmul.f32 %v337, %v301
        %v415 = vmul.f32 %v337, %v302
        %v416 = vmul.f32 %v337, %v303
        %v417 = vmul.f32 %v337, %v304
        %v418 = vmul.f32 %v337, %v305
        %v419 = vmul.f32 %v337, %v306
        %v420 = vmul.f32 %v337, %v307
        %v421 = vmul.f32 %v337, %v308
        %v422 = vmul.f32 %v337, %v309
        %v423 = vmul.f32 %v337, %v310
        %v424 = vmul.f32 %v337, %v311
        %v425 = vmul.f32 %v337, %v312
        %v426 = vmul.f32 %v337, %v313
        %v427 = vmul.f32 %v337, %v314
        %v428 = vmul.f32 %v337, %v315
        %v429 = vmul.f32 %v337, %v316
        %v430 = vmul.f32 %v337, %v317
        %v431 = vmul.f32 %v337, %v318
        %v432 = vmul.f32 %v337, %v319
        %v433 = vmul.f32 %v337, %v320
        %v434 = vmul.f32 %v337, %v321
        %v435 = vmul.f32 %v337, %v322
        %v436 = vmul.f32 %v337, %v323
        %v437 = vmul.f32 %v337, %v324
        %v438 = vmul.f32 %v337, %v325
        %v439 = vmul.f32 %v337, %v326
        %v440 = vmul.f32 %v337, %v327
        %v441 = vmul.f32 %v337, %v328
        %v442 = vmul.f32 %v337, %v329
        %v443 = vmul.f32 %v337, %v330
        %v444 = vmul.f32 %v337, %v331
        %v445 = vmul.f32 %v337, %v332
        %v446 = vmul.f32 %v337, %v333
        %v447 = vmul.f32 %v337, %v334
        %v448 = vmul.f32 %v337, %v335
        %v449 = vmul.f32 %v337, %v336
        %v450 = vadd.f32 %v102, %v338
        %v451 = vadd.f32 %v103, %v339
        %v452 = vadd.f32 %v104, %v340
        %v453 = vadd.f32 %v105, %v341
        %v454 = vadd.f32 %v106, %v342
        %v455 = vadd.f32 %v107, %v343
        %v456 = vadd.f32 %v108, %v344
        %v457 = vadd.f32 %v109, %v345
        %v458 = vadd.f32 %v110, %v346
        %v459 = vadd.f32 %v111, %v347
        %v460 = vadd.f32 %v112, %v348
        %v461 = vadd.f32 %v113, %v349
        %v462 = vadd.f32 %v114, %v350
        %v463 = vadd.f32 %v115, %v351
        %v464 = vadd.f32 %v116, %v352
        %v465 = vadd.f32 %v117, %v353
        %v466 = vadd.f32 %v118, %v354
        %v467 = vadd.f32 %v119, %v355
        %v468 = vadd.f32 %v120, %v356
        %v469 = vadd.f32 %v121, %v357
        %v470 = vadd.f32 %v122, %v358
        %v471 = vadd.f32 %v123, %v359
        %v472 = vadd.f32 %v124, %v360
        %v473 = vadd.f32 %v125, %v361
        %v474 = vadd.f32 %v126, %v362
        %v475 = vadd.f32 %v127, %v363
        %v476 = vadd.f32 %v128, %v364
        %v477 = vadd.f32 %v129, %v365
        %v478 = vadd.f32 %v130, %v366
        %v479 = vadd.f32 %v131, %v367
        %v480 = vadd.f32 %v132, %v368
        %v481 = vadd.f32 %v133, %v369
        %v482 = vadd.f32 %v134, %v370
        %v483 = vadd.f32 %v135, %v371
        %v484 = vadd.f32 %v136, %v372
        %v485 = vadd.f32 %v137, %v373
        %v486 = vadd.f32 %v138, %v374
        %v487 = vadd.f32 %v139, %v375
        %v488 = vadd.f32 %v140, %v376
        %v489 = vadd.f32 %v141, %v377
        %v490 = vadd.f32 %v142, %v378
        %v491 = vadd.f32 %v143, %v379
        %v492 = vadd.f32 %v144, %v380
        %v493 = vadd.f32 %v145, %v381
        %v494 = vadd.f32 %v146, %v382
        %v495 = vadd.f32 %v147, %v383
        %v496 = vadd.f32 %v148, %v384
        %v497 = vadd.f32 %v149, %v385
        %v498 = vadd.f32 %v150, %v386
        %v499 = vadd.f32 %v151, %v387
        %v500 = vadd.f32 %v152, %v388
        %v501 = vadd.f32 %v153, %v389
        %v502 = vadd.f32 %v154, %v390
        %v503 = vadd.f32 %v155, %v391
        %v504 = vadd.f32 %v156, %v392
        %v505 = vadd.f32 %v157, %v393
        %v506 = vadd.f32 %v158, %v394
        %v507 = vadd.f32 %v159, %v395
        %v508 = vadd.f32 %v160, %v396
        %v509 = vadd.f32 %v161, %v397
        %v510 = vadd.f32 %v162, %v398
        %v511 = vadd.f32 %v163, %v399
        %v512 = vadd.f32 %v164, %v400
        %v513 = vadd.f32 %v165, %v401
        %v514 = vadd.f32 %v166, %v402
        %v515 = vadd.f32 %v167, %v403
        %v516 = vadd.f32 %v168, %v404
        %v517 = vadd.f32 %v169, %v405
        %v518 = vadd.f32 %v170, %v406
        %v519 = vadd.f32 %v171, %v407
        %v520 = vadd.f32 %v172, %v408
        %v521 = vadd.f32 %v173, %v409
        %v522 = vadd.f32 %v174, %v410
        %v523 = vadd.f32 %v175, %v411
        %v524 = vadd.f32 %v176, %v412
        %v525 = vadd.f32 %v177, %v413
        %v526 = vadd.f32 %v178, %v414
        %v527 = vadd.f32 %v179, %v415
        %v528 = vadd.f32 %v180, %v416
        %v529 = vadd.f32 %v181, %v417
        %v530 = vadd.f32 %v182, %v418
        %v531 = vadd.f32 %v183, %v419
        %v532 = vadd.f32 %v184, %v420
        %v533 = vadd.f32 %v185, %v421
        %v534 = vadd.f32 %v186, %v422
        %v535 = vadd.f32 %v187, %v423
        %v536 = vadd.f32 %v188, %v424
        %v537 = vadd.f32 %v189, %v425
        %v538 = vadd.f32 %v190, %v426
        %v539 = vadd.f32 %v191, %v427
        %v540 = vadd.f32 %v192, %v428
        %v541 = vadd.f32 %v193, %v429
        %v542 = vadd.f32 %v194, %v430
        %v543 = vadd.f32 %v195, %v431
        %v544 = vadd.f32 %v196, %v432
        %v545 = vadd.f32 %v197, %v433
        %v546 = vadd.f32 %v198, %v434
        %v547 = vadd.f32 %v199, %v435
        %v548 = vadd.f32 %v200, %v436
        %v549 = vadd.f32 %v201, %v437
        %v550 = vadd.f32 %v202, %v438
        %v551 = vadd.f32 %v203, %v439
        %v552 = vadd.f32 %v204, %v440
        %v553 = vadd.f32 %v205, %v441
        %v554 = vadd.f32 %v206, %v442
        %v555 = vadd.f32 %v207, %v443
        %v556 = vadd.f32 %v208, %v444
        %v557 = vadd.f32 %v209, %v445
        %v558 = vadd.f32 %v210, %v446
        %v559 = vadd.f32 %v211, %v447
        %v560 = vadd.f32 %v212, %v448
        %v561 = vadd.f32 %v213, %v449
        %s562 = sadd.s32 %s214, 1
        %s563 = sshra.s32 %s562, 7
        %s564 = sand.u32 %s562, 127
        %s565 = sadd.s32 %s563, %s89
        %s566 = smul.u32 %s565, 128
        %s567 = sshra.s32 %s562, 7
        %s568 = sand.u32 %s562, 127
        %s569 = sadd.s32 %s566, %s568
        %s570 = sld [smem:[#allocation7 + %s569]]
        %v571 = vld [vmem:[%s224 + $0x1] sm:$0xff]
        %v572 = vld [vmem:[%s224 + $0x9] sm:$0xff]
        %v573 = vld [vmem:[%s224 + $0x11] sm:$0xff]
        %v574 = vld [vmem:[%s224 + $0x19] sm:$0xf]
        %v575 = vld [vmem:[%s224 + $0x21] sm:$0xff]
        %v576 = vld [vmem:[%s224 + $0x29] sm:$0xff]
        %v577 = vld [vmem:[%s224 + $0x31] sm:$0xff]
        %v578 = vld [vmem:[%s224 + $0x39] sm:$0xf]
        %v579 = vld [vmem:[%s224 + $0x41] sm:$0xff]
        %v580 = vld [vmem:[%s224 + $0x49] sm:$0xff]
        %v581 = vld [vmem:[%s224 + $0x51] sm:$0xff]
        %v582 = vld [vmem:[%s224 + $0x59] sm:$0xf]
        %v583 = vld [vmem:[%s224 + $0x61] sm:$0xff]
        %v584 = vld [vmem:[%s224 + $0x69] sm:$0xff]
        %v585 = vld [vmem:[%s224 + $0x71] sm:$0xff]
        %v586 = vld [vmem:[%s224 + $0x79] sm:$0xf]
        %v587 = vld [vmem:[%s224 + $0x81] sm:$0xff]
        %v588 = vld [vmem:[%s224 + $0x89] sm:$0xff]
        %v589 = vld [vmem:[%s224 + $0x91] sm:$0xff]
        %v590 = vld [vmem:[%s224 + $0x99] sm:$0xf]
        %v591 = vld [vmem:[%s224 + $0xa1] sm:$0xff]
        %v592 = vld [vmem:[%s224 + $0xa9] sm:$0xff]
        %v593 = vld [vmem:[%s224 + $0xb1] sm:$0xff]
        %v594 = vld [vmem:[%s224 + $0xb9] sm:$0xf]
        %v595 = vld [vmem:[%s224 + $0xc1] sm:$0xff]
        %v596 = vld [vmem:[%s224 + $0xc9] sm:$0xff]
        %v597 = vld [vmem:[%s224 + $0xd1] sm:$0xff]
        %v598 = vld [vmem:[%s224 + $0xd9] sm:$0xf]
        %v599 = vld [vmem:[%s224 + $0xe1] sm:$0xff]
        %v600 = vld [vmem:[%s224 + $0xe9] sm:$0xff]
        %v601 = vld [vmem:[%s224 + $0xf1] sm:$0xff]
        %v602 = vld [vmem:[%s224 + $0xf9] sm:$0xf]
        %v603 = vld [vmem:[%s224 + $0x101] sm:$0xff]
        %v604 = vld [vmem:[%s224 + $0x109] sm:$0xff]
        %v605 = vld [vmem:[%s224 + $0x111] sm:$0xff]
        %v606 = vld [vmem:[%s224 + $0x119] sm:$0xf]
        %v607 = vld [vmem:[%s224 + $0x121] sm:$0xff]
        %v608 = vld [vmem:[%s224 + $0x129] sm:$0xff]
        %v609 = vld [vmem:[%s224 + $0x131] sm:$0xff]
        %v610 = vld [vmem:[%s224 + $0x139] sm:$0xf]
        %v611 = vld [vmem:[%s224 + $0x141] sm:$0xff]
        %v612 = vld [vmem:[%s224 + $0x149] sm:$0xff]
        %v613 = vld [vmem:[%s224 + $0x151] sm:$0xff]
        %v614 = vld [vmem:[%s224 + $0x159] sm:$0xf]
        %v615 = vld [vmem:[%s224 + $0x161] sm:$0xff]
        %v616 = vld [vmem:[%s224 + $0x169] sm:$0xff]
        %v617 = vld [vmem:[%s224 + $0x171] sm:$0xff]
        %v618 = vld [vmem:[%s224 + $0x179] sm:$0xf]
        %v619 = vld [vmem:[%s224 + $0x181] sm:$0xff]
        %v620 = vld [vmem:[%s224 + $0x189] sm:$0xff]
        %v621 = vld [vmem:[%s224 + $0x191] sm:$0xff]
        %v622 = vld [vmem:[%s224 + $0x199] sm:$0xf]
        %v623 = vld [vmem:[%s224 + $0x1a1] sm:$0xff]
        %v624 = vld [vmem:[%s224 + $0x1a9] sm:$0xff]
        %v625 = vld [vmem:[%s224 + $0x1b1] sm:$0xff]
        %v626 = vld [vmem:[%s224 + $0x1b9] sm:$0xf]
        %v627 = vld [vmem:[%s224 + $0x1c1] sm:$0xff]
        %v628 = vld [vmem:[%s224 + $0x1c9] sm:$0xff]
        %v629 = vld [vmem:[%s224 + $0x1d1] sm:$0xff]
        %v630 = vld [vmem:[%s224 + $0x1d9] sm:$0xf]
        %v631 = vld [vmem:[%s224 + $0x1e1] sm:$0xff]
        %v632 = vld [vmem:[%s224 + $0x1e9] sm:$0xff]
        %v633 = vld [vmem:[%s224 + $0x1f1] sm:$0xff]
        %v634 = vld [vmem:[%s224 + $0x1f9] sm:$0xf]
        %v635 = vld [vmem:[%s224 + $0x201] sm:$0xff]
        %v636 = vld [vmem:[%s224 + $0x209] sm:$0xff]
        %v637 = vld [vmem:[%s224 + $0x211] sm:$0xff]
        %v638 = vld [vmem:[%s224 + $0x219] sm:$0xf]
        %v639 = vld [vmem:[%s224 + $0x221] sm:$0xff]
        %v640 = vld [vmem:[%s224 + $0x229] sm:$0xff]
        %v641 = vld [vmem:[%s224 + $0x231] sm:$0xff]
        %v642 = vld [vmem:[%s224 + $0x239] sm:$0xf]
        %v643 = vld [vmem:[%s224 + $0x241] sm:$0xff]
        %v644 = vld [vmem:[%s224 + $0x249] sm:$0xff]
        %v645 = vld [vmem:[%s224 + $0x251] sm:$0xff]
        %v646 = vld [vmem:[%s224 + $0x259] sm:$0xf]
        %v647 = vld [vmem:[%s224 + $0x261] sm:$0xff]
        %v648 = vld [vmem:[%s224 + $0x269] sm:$0xff]
        %v649 = vld [vmem:[%s224 + $0x271] sm:$0xff]
        %v650 = vld [vmem:[%s224 + $0x279] sm:$0xf]
        %v651 = vld [vmem:[%s224 + $0x281] sm:$0xff]
        %v652 = vld [vmem:[%s224 + $0x289] sm:$0xff]
        %v653 = vld [vmem:[%s224 + $0x291] sm:$0xff]
        %v654 = vld [vmem:[%s224 + $0x299] sm:$0xf]
        %v655 = vld [vmem:[%s224 + $0x2a1] sm:$0xff]
        %v656 = vld [vmem:[%s224 + $0x2a9] sm:$0xff]
        %v657 = vld [vmem:[%s224 + $0x2b1] sm:$0xff]
        %v658 = vld [vmem:[%s224 + $0x2b9] sm:$0xf]
        %v659 = vld [vmem:[%s224 + $0x2c1] sm:$0xff]
        %v660 = vld [vmem:[%s224 + $0x2c9] sm:$0xff]
        %v661 = vld [vmem:[%s224 + $0x2d1] sm:$0xff]
        %v662 = vld [vmem:[%s224 + $0x2d9] sm:$0xf]
        %v663 = vld [vmem:[%s224 + $0x2e1] sm:$0xff]
        %v664 = vld [vmem:[%s224 + $0x2e9] sm:$0xff]
        %v665 = vld [vmem:[%s224 + $0x2f1] sm:$0xff]
        %v666 = vld [vmem:[%s224 + $0x2f9] sm:$0xf]
        %v667 = vld [vmem:[%s224 + $0x301] sm:$0xff]
        %v668 = vld [vmem:[%s224 + $0x309] sm:$0xff]
        %v669 = vld [vmem:[%s224 + $0x311] sm:$0xff]
        %v670 = vld [vmem:[%s224 + $0x319] sm:$0xf]
        %v671 = vld [vmem:[%s224 + $0x321] sm:$0xff]
        %v672 = vld [vmem:[%s224 + $0x329] sm:$0xff]
        %v673 = vld [vmem:[%s224 + $0x331] sm:$0xff]
        %v674 = vld [vmem:[%s224 + $0x339] sm:$0xf]
        %v675 = vld [vmem:[%s224 + $0x341] sm:$0xff]
        %v676 = vld [vmem:[%s224 + $0x349] sm:$0xff]
        %v677 = vld [vmem:[%s224 + $0x351] sm:$0xff]
        %v678 = vld [vmem:[%s224 + $0x359] sm:$0xf]
        %v679 = vld [vmem:[%s224 + $0x361] sm:$0xff]
        %v680 = vld [vmem:[%s224 + $0x369] sm:$0xff]
        %v681 = vld [vmem:[%s224 + $0x371] sm:$0xff]
        %v682 = vld [vmem:[%s224 + $0x379] sm:$0xf]
        %v683 = vstv %s570
        %v684 = vmul.f32 %v683, %v571
        %v685 = vmul.f32 %v683, %v572
        %v686 = vmul.f32 %v683, %v573
        %v687 = vmul.f32 %v683, %v574
        %v688 = vmul.f32 %v683, %v575
        %v689 = vmul.f32 %v683, %v576
        %v690 = vmul.f32 %v683, %v577
        %v691 = vmul.f32 %v683, %v578
        %v692 = vmul.f32 %v683, %v579
        %v693 = vmul.f32 %v683, %v580
        %v694 = vmul.f32 %v683, %v581
        %v695 = vmul.f32 %v683, %v582
        %v696 = vmul.f32 %v683, %v583
        %v697 = vmul.f32 %v683, %v584
        %v698 = vmul.f32 %v683, %v585
        %v699 = vmul.f32 %v683, %v586
        %v700 = vmul.f32 %v683, %v587
        %v701 = vmul.f32 %v683, %v588
        %v702 = vmul.f32 %v683, %v589
        %v703 = vmul.f32 %v683, %v590
        %v704 = vmul.f32 %v683, %v591
        %v705 = vmul.f32 %v683, %v592
        %v706 = vmul.f32 %v683, %v593
        %v707 = vmul.f32 %v683, %v594
        %v708 = vmul.f32 %v683, %v595
        %v709 = vmul.f32 %v683, %v596
        %v710 = vmul.f32 %v683, %v597
        %v711 = vmul.f32 %v683, %v598
        %v712 = vmul.f32 %v683, %v599
        %v713 = vmul.f32 %v683, %v600
        %v714 = vmul.f32 %v683, %v601
        %v715 = vmul.f32 %v683, %v602
        %v716 = vmul.f32 %v683, %v603
        %v717 = vmul.f32 %v683, %v604
        %v718 = vmul.f32 %v683, %v605
        %v719 = vmul.f32 %v683, %v606
        %v720 = vmul.f32 %v683, %v607
        %v721 = vmul.f32 %v683, %v608
        %v722 = vmul.f32 %v683, %v609
        %v723 = vmul.f32 %v683, %v610
        %v724 = vmul.f32 %v683, %v611
        %v725 = vmul.f32 %v683, %v612
        %v726 = vmul.f32 %v683, %v613
        %v727 = vmul.f32 %v683, %v614
        %v728 = vmul.f32 %v683, %v615
        %v729 = vmul.f32 %v683, %v616
        %v730 = vmul.f32 %v683, %v617
        %v731 = vmul.f32 %v683, %v618
        %v732 = vmul.f32 %v683, %v619
        %v733 = vmul.f32 %v683, %v620
        %v734 = vmul.f32 %v683, %v621
        %v735 = vmul.f32 %v683, %v622
        %v736 = vmul.f32 %v683, %v623
        %v737 = vmul.f32 %v683, %v624
        %v738 = vmul.f32 %v683, %v625
        %v739 = vmul.f32 %v683, %v626
        %v740 = vmul.f32 %v683, %v627
        %v741 = vmul.f32 %v683, %v628
        %v742 = vmul.f32 %v683, %v629
        %v743 = vmul.f32 %v683, %v630
        %v744 = vmul.f32 %v683, %v631
        %v745 = vmul.f32 %v683, %v632
        %v746 = vmul.f32 %v683, %v633
        %v747 = vmul.f32 %v683, %v634
        %v748 = vmul.f32 %v683, %v635
        %v749 = vmul.f32 %v683, %v636
        %v750 = vmul.f32 %v683, %v637
        %v751 = vmul.f32 %v683, %v638
        %v752 = vmul.f32 %v683, %v639
        %v753 = vmul.f32 %v683, %v640
        %v754 = vmul.f32 %v683, %v641
        %v755 = vmul.f32 %v683, %v642
        %v756 = vmul.f32 %v683, %v643
        %v757 = vmul.f32 %v683, %v644
        %v758 = vmul.f32 %v683, %v645
        %v759 = vmul.f32 %v683, %v646
        %v760 = vmul.f32 %v683, %v647
        %v761 = vmul.f32 %v683, %v648
        %v762 = vmul.f32 %v683, %v649
        %v763 = vmul.f32 %v683, %v650
        %v764 = vmul.f32 %v683, %v651
        %v765 = vmul.f32 %v683, %v652
        %v766 = vmul.f32 %v683, %v653
        %v767 = vmul.f32 %v683, %v654
        %v768 = vmul.f32 %v683, %v655
        %v769 = vmul.f32 %v683, %v656
        %v770 = vmul.f32 %v683, %v657
        %v771 = vmul.f32 %v683, %v658
        %v772 = vmul.f32 %v683, %v659
        %v773 = vmul.f32 %v683, %v660
        %v774 = vmul.f32 %v683, %v661
        %v775 = vmul.f32 %v683, %v662
        %v776 = vmul.f32 %v683, %v663
        %v777 = vmul.f32 %v683, %v664
        %v778 = vmul.f32 %v683, %v665
        %v779 = vmul.f32 %v683, %v666
        %v780 = vmul.f32 %v683, %v667
        %v781 = vmul.f32 %v683, %v668
        %v782 = vmul.f32 %v683, %v669
        %v783 = vmul.f32 %v683, %v670
        %v784 = vmul.f32 %v683, %v671
        %v785 = vmul.f32 %v683, %v672
        %v786 = vmul.f32 %v683, %v673
        %v787 = vmul.f32 %v683, %v674
        %v788 = vmul.f32 %v683, %v675
        %v789 = vmul.f32 %v683, %v676
        %v790 = vmul.f32 %v683, %v677
        %v791 = vmul.f32 %v683, %v678
        %v792 = vmul.f32 %v683, %v679
        %v793 = vmul.f32 %v683, %v680
        %v794 = vmul.f32 %v683, %v681
        %v795 = vmul.f32 %v683, %v682
        %v796 = vadd.f32 %v450, %v684
        %v797 = vadd.f32 %v451, %v685
        %v798 = vadd.f32 %v452, %v686
        %v799 = vadd.f32 %v453, %v687
        %v800 = vadd.f32 %v454, %v688
        %v801 = vadd.f32 %v455, %v689
        %v802 = vadd.f32 %v456, %v690
        %v803 = vadd.f32 %v457, %v691
        %v804 = vadd.f32 %v458, %v692
        %v805 = vadd.f32 %v459, %v693
        %v806 = vadd.f32 %v460, %v694
        %v807 = vadd.f32 %v461, %v695
        %v808 = vadd.f32 %v462, %v696
        %v809 = vadd.f32 %v463, %v697
        %v810 = vadd.f32 %v464, %v698
        %v811 = vadd.f32 %v465, %v699
        %v812 = vadd.f32 %v466, %v700
        %v813 = vadd.f32 %v467, %v701
        %v814 = vadd.f32 %v468, %v702
        %v815 = vadd.f32 %v469, %v703
        %v816 = vadd.f32 %v470, %v704
        %v817 = vadd.f32 %v471, %v705
        %v818 = vadd.f32 %v472, %v706
        %v819 = vadd.f32 %v473, %v707
        %v820 = vadd.f32 %v474, %v708
        %v821 = vadd.f32 %v475, %v709
        %v822 = vadd.f32 %v476, %v710
        %v823 = vadd.f32 %v477, %v711
        %v824 = vadd.f32 %v478, %v712
        %v825 = vadd.f32 %v479, %v713
        %v826 = vadd.f32 %v480, %v714
        %v827 = vadd.f32 %v481, %v715
        %v828 = vadd.f32 %v482, %v716
        %v829 = vadd.f32 %v483, %v717
        %v830 = vadd.f32 %v484, %v718
        %v831 = vadd.f32 %v485, %v719
        %v832 = vadd.f32 %v486, %v720
        %v833 = vadd.f32 %v487, %v721
        %v834 = vadd.f32 %v488, %v722
        %v835 = vadd.f32 %v489, %v723
        %v836 = vadd.f32 %v490, %v724
        %v837 = vadd.f32 %v491, %v725
        %v838 = vadd.f32 %v492, %v726
        %v839 = vadd.f32 %v493, %v727
        %v840 = vadd.f32 %v494, %v728
        %v841 = vadd.f32 %v495, %v729
        %v842 = vadd.f32 %v496, %v730
        %v843 = vadd.f32 %v497, %v731
        %v844 = vadd.f32 %v498, %v732
        %v845 = vadd.f32 %v499, %v733
        %v846 = vadd.f32 %v500, %v734
        %v847 = vadd.f32 %v501, %v735
        %v848 = vadd.f32 %v502, %v736
        %v849 = vadd.f32 %v503, %v737
        %v850 = vadd.f32 %v504, %v738
        %v851 = vadd.f32 %v505, %v739
        %v852 = vadd.f32 %v506, %v740
        %v853 = vadd.f32 %v507, %v741
        %v854 = vadd.f32 %v508, %v742
        %v855 = vadd.f32 %v509, %v743
        %v856 = vadd.f32 %v510, %v744
        %v857 = vadd.f32 %v511, %v745
        %v858 = vadd.f32 %v512, %v746
        %v859 = vadd.f32 %v513, %v747
        %v860 = vadd.f32 %v514, %v748
        %v861 = vadd.f32 %v515, %v749
        %v862 = vadd.f32 %v516, %v750
        %v863 = vadd.f32 %v517, %v751
        %v864 = vadd.f32 %v518, %v752
        %v865 = vadd.f32 %v519, %v753
        %v866 = vadd.f32 %v520, %v754
        %v867 = vadd.f32 %v521, %v755
        %v868 = vadd.f32 %v522, %v756
        %v869 = vadd.f32 %v523, %v757
        %v870 = vadd.f32 %v524, %v758
        %v871 = vadd.f32 %v525, %v759
        %v872 = vadd.f32 %v526, %v760
        %v873 = vadd.f32 %v527, %v761
        %v874 = vadd.f32 %v528, %v762
        %v875 = vadd.f32 %v529, %v763
        %v876 = vadd.f32 %v530, %v764
        %v877 = vadd.f32 %v531, %v765
        %v878 = vadd.f32 %v532, %v766
        %v879 = vadd.f32 %v533, %v767
        %v880 = vadd.f32 %v534, %v768
        %v881 = vadd.f32 %v535, %v769
        %v882 = vadd.f32 %v536, %v770
        %v883 = vadd.f32 %v537, %v771
        %v884 = vadd.f32 %v538, %v772
        %v885 = vadd.f32 %v539, %v773
        %v886 = vadd.f32 %v540, %v774
        %v887 = vadd.f32 %v541, %v775
        %v888 = vadd.f32 %v542, %v776
        %v889 = vadd.f32 %v543, %v777
        %v890 = vadd.f32 %v544, %v778
        %v891 = vadd.f32 %v545, %v779
        %v892 = vadd.f32 %v546, %v780
        %v893 = vadd.f32 %v547, %v781
        %v894 = vadd.f32 %v548, %v782
        %v895 = vadd.f32 %v549, %v783
        %v896 = vadd.f32 %v550, %v784
        %v897 = vadd.f32 %v551, %v785
        %v898 = vadd.f32 %v552, %v786
        %v899 = vadd.f32 %v553, %v787
        %v900 = vadd.f32 %v554, %v788
        %v901 = vadd.f32 %v555, %v789
        %v902 = vadd.f32 %v556, %v790
        %v903 = vadd.f32 %v557, %v791
        %v904 = vadd.f32 %v558, %v792
        %v905 = vadd.f32 %v559, %v793
        %v906 = vadd.f32 %v560, %v794
        %v907 = vadd.f32 %v561, %v795
        %s908 = sadd.s32 %s214, 2
        %s909 = sshra.s32 %s908, 7
        %s910 = sand.u32 %s908, 127
        %s911 = sadd.s32 %s909, %s89
        %s912 = smul.u32 %s911, 128
        %s913 = sshra.s32 %s908, 7
        %s914 = sand.u32 %s908, 127
        %s915 = sadd.s32 %s912, %s914
        %s916 = sld [smem:[#allocation7 + %s915]]
        %v917 = vld [vmem:[%s224 + $0x2] sm:$0xff]
        %v918 = vld [vmem:[%s224 + $0xa] sm:$0xff]
        %v919 = vld [vmem:[%s224 + $0x12] sm:$0xff]
        %v920 = vld [vmem:[%s224 + $0x1a] sm:$0xf]
        %v921 = vld [vmem:[%s224 + $0x22] sm:$0xff]
        %v922 = vld [vmem:[%s224 + $0x2a] sm:$0xff]
        %v923 = vld [vmem:[%s224 + $0x32] sm:$0xff]
        %v924 = vld [vmem:[%s224 + $0x3a] sm:$0xf]
        %v925 = vld [vmem:[%s224 + $0x42] sm:$0xff]
        %v926 = vld [vmem:[%s224 + $0x4a] sm:$0xff]
        %v927 = vld [vmem:[%s224 + $0x52] sm:$0xff]
        %v928 = vld [vmem:[%s224 + $0x5a] sm:$0xf]
        %v929 = vld [vmem:[%s224 + $0x62] sm:$0xff]
        %v930 = vld [vmem:[%s224 + $0x6a] sm:$0xff]
        %v931 = vld [vmem:[%s224 + $0x72] sm:$0xff]
        %v932 = vld [vmem:[%s224 + $0x7a] sm:$0xf]
        %v933 = vld [vmem:[%s224 + $0x82] sm:$0xff]
        %v934 = vld [vmem:[%s224 + $0x8a] sm:$0xff]
        %v935 = vld [vmem:[%s224 + $0x92] sm:$0xff]
        %v936 = vld [vmem:[%s224 + $0x9a] sm:$0xf]
        %v937 = vld [vmem:[%s224 + $0xa2] sm:$0xff]
        %v938 = vld [vmem:[%s224 + $0xaa] sm:$0xff]
        %v939 = vld [vmem:[%s224 + $0xb2] sm:$0xff]
        %v940 = vld [vmem:[%s224 + $0xba] sm:$0xf]
        %v941 = vld [vmem:[%s224 + $0xc2] sm:$0xff]
        %v942 = vld [vmem:[%s224 + $0xca] sm:$0xff]
        %v943 = vld [vmem:[%s224 + $0xd2] sm:$0xff]
        %v944 = vld [vmem:[%s224 + $0xda] sm:$0xf]
        %v945 = vld [vmem:[%s224 + $0xe2] sm:$0xff]
        %v946 = vld [vmem:[%s224 + $0xea] sm:$0xff]
        %v947 = vld [vmem:[%s224 + $0xf2] sm:$0xff]
        %v948 = vld [vmem:[%s224 + $0xfa] sm:$0xf]
        %v949 = vld [vmem:[%s224 + $0x102] sm:$0xff]
        %v950 = vld [vmem:[%s224 + $0x10a] sm:$0xff]
        %v951 = vld [vmem:[%s224 + $0x112] sm:$0xff]
        %v952 = vld [vmem:[%s224 + $0x11a] sm:$0xf]
        %v953 = vld [vmem:[%s224 + $0x122] sm:$0xff]
        %v954 = vld [vmem:[%s224 + $0x12a] sm:$0xff]
        %v955 = vld [vmem:[%s224 + $0x132] sm:$0xff]
        %v956 = vld [vmem:[%s224 + $0x13a] sm:$0xf]
        %v957 = vld [vmem:[%s224 + $0x142] sm:$0xff]
        %v958 = vld [vmem:[%s224 + $0x14a] sm:$0xff]
        %v959 = vld [vmem:[%s224 + $0x152] sm:$0xff]
        %v960 = vld [vmem:[%s224 + $0x15a] sm:$0xf]
        %v961 = vld [vmem:[%s224 + $0x162] sm:$0xff]
        %v962 = vld [vmem:[%s224 + $0x16a] sm:$0xff]
        %v963 = vld [vmem:[%s224 + $0x172] sm:$0xff]
        %v964 = vld [vmem:[%s224 + $0x17a] sm:$0xf]
        %v965 = vld [vmem:[%s224 + $0x182] sm:$0xff]
        %v966 = vld [vmem:[%s224 + $0x18a] sm:$0xff]
        %v967 = vld [vmem:[%s224 + $0x192] sm:$0xff]
        %v968 = vld [vmem:[%s224 + $0x19a] sm:$0xf]
        %v969 = vld [vmem:[%s224 + $0x1a2] sm:$0xff]
        %v970 = vld [vmem:[%s224 + $0x1aa] sm:$0xff]
        %v971 = vld [vmem:[%s224 + $0x1b2] sm:$0xff]
        %v972 = vld [vmem:[%s224 + $0x1ba] sm:$0xf]
        %v973 = vld [vmem:[%s224 + $0x1c2] sm:$0xff]
        %v974 = vld [vmem:[%s224 + $0x1ca] sm:$0xff]
        %v975 = vld [vmem:[%s224 + $0x1d2] sm:$0xff]
        %v976 = vld [vmem:[%s224 + $0x1da] sm:$0xf]
        %v977 = vld [vmem:[%s224 + $0x1e2] sm:$0xff]
        %v978 = vld [vmem:[%s224 + $0x1ea] sm:$0xff]
        %v979 = vld [vmem:[%s224 + $0x1f2] sm:$0xff]
        %v980 = vld [vmem:[%s224 + $0x1fa] sm:$0xf]
        %v981 = vld [vmem:[%s224 + $0x202] sm:$0xff]
        %v982 = vld [vmem:[%s224 + $0x20a] sm:$0xff]
        %v983 = vld [vmem:[%s224 + $0x212] sm:$0xff]
        %v984 = vld [vmem:[%s224 + $0x21a] sm:$0xf]
        %v985 = vld [vmem:[%s224 + $0x222] sm:$0xff]
        %v986 = vld [vmem:[%s224 + $0x22a] sm:$0xff]
        %v987 = vld [vmem:[%s224 + $0x232] sm:$0xff]
        %v988 = vld [vmem:[%s224 + $0x23a] sm:$0xf]
        %v989 = vld [vmem:[%s224 + $0x242] sm:$0xff]
        %v990 = vld [vmem:[%s224 + $0x24a] sm:$0xff]
        %v991 = vld [vmem:[%s224 + $0x252] sm:$0xff]
        %v992 = vld [vmem:[%s224 + $0x25a] sm:$0xf]
        %v993 = vld [vmem:[%s224 + $0x262] sm:$0xff]
        %v994 = vld [vmem:[%s224 + $0x26a] sm:$0xff]
        %v995 = vld [vmem:[%s224 + $0x272] sm:$0xff]
        %v996 = vld [vmem:[%s224 + $0x27a] sm:$0xf]
        %v997 = vld [vmem:[%s224 + $0x282] sm:$0xff]
        %v998 = vld [vmem:[%s224 + $0x28a] sm:$0xff]
        %v999 = vld [vmem:[%s224 + $0x292] sm:$0xff]
        %v1000 = vld [vmem:[%s224 + $0x29a] sm:$0xf]
        %v1001 = vld [vmem:[%s224 + $0x2a2] sm:$0xff]
        %v1002 = vld [vmem:[%s224 + $0x2aa] sm:$0xff]
        %v1003 = vld [vmem:[%s224 + $0x2b2] sm:$0xff]
        %v1004 = vld [vmem:[%s224 + $0x2ba] sm:$0xf]
        %v1005 = vld [vmem:[%s224 + $0x2c2] sm:$0xff]
        %v1006 = vld [vmem:[%s224 + $0x2ca] sm:$0xff]
        %v1007 = vld [vmem:[%s224 + $0x2d2] sm:$0xff]
        %v1008 = vld [vmem:[%s224 + $0x2da] sm:$0xf]
        %v1009 = vld [vmem:[%s224 + $0x2e2] sm:$0xff]
        %v1010 = vld [vmem:[%s224 + $0x2ea] sm:$0xff]
        %v1011 = vld [vmem:[%s224 + $0x2f2] sm:$0xff]
        %v1012 = vld [vmem:[%s224 + $0x2fa] sm:$0xf]
        %v1013 = vld [vmem:[%s224 + $0x302] sm:$0xff]
        %v1014 = vld [vmem:[%s224 + $0x30a] sm:$0xff]
        %v1015 = vld [vmem:[%s224 + $0x312] sm:$0xff]
        %v1016 = vld [vmem:[%s224 + $0x31a] sm:$0xf]
        %v1017 = vld [vmem:[%s224 + $0x322] sm:$0xff]
        %v1018 = vld [vmem:[%s224 + $0x32a] sm:$0xff]
        %v1019 = vld [vmem:[%s224 + $0x332] sm:$0xff]
        %v1020 = vld [vmem:[%s224 + $0x33a] sm:$0xf]
        %v1021 = vld [vmem:[%s224 + $0x342] sm:$0xff]
        %v1022 = vld [vmem:[%s224 + $0x34a] sm:$0xff]
        %v1023 = vld [vmem:[%s224 + $0x352] sm:$0xff]
        %v1024 = vld [vmem:[%s224 + $0x35a] sm:$0xf]
        %v1025 = vld [vmem:[%s224 + $0x362] sm:$0xff]
        %v1026 = vld [vmem:[%s224 + $0x36a] sm:$0xff]
        %v1027 = vld [vmem:[%s224 + $0x372] sm:$0xff]
        %v1028 = vld [vmem:[%s224 + $0x37a] sm:$0xf]
        %v1029 = vstv %s916
        %v1030 = vmul.f32 %v1029, %v917
        %v1031 = vmul.f32 %v1029, %v918
        %v1032 = vmul.f32 %v1029, %v919
        %v1033 = vmul.f32 %v1029, %v920
        %v1034 = vmul.f32 %v1029, %v921
        %v1035 = vmul.f32 %v1029, %v922
        %v1036 = vmul.f32 %v1029, %v923
        %v1037 = vmul.f32 %v1029, %v924
        %v1038 = vmul.f32 %v1029, %v925
        %v1039 = vmul.f32 %v1029, %v926
        %v1040 = vmul.f32 %v1029, %v927
        %v1041 = vmul.f32 %v1029, %v928
        %v1042 = vmul.f32 %v1029, %v929
        %v1043 = vmul.f32 %v1029, %v930
        %v1044 = vmul.f32 %v1029, %v931
        %v1045 = vmul.f32 %v1029, %v932
        %v1046 = vmul.f32 %v1029, %v933
        %v1047 = vmul.f32 %v1029, %v934
        %v1048 = vmul.f32 %v1029, %v935
        %v1049 = vmul.f32 %v1029, %v936
        %v1050 = vmul.f32 %v1029, %v937
        %v1051 = vmul.f32 %v1029, %v938
        %v1052 = vmul.f32 %v1029, %v939
        %v1053 = vmul.f32 %v1029, %v940
        %v1054 = vmul.f32 %v1029, %v941
        %v1055 = vmul.f32 %v1029, %v942
        %v1056 = vmul.f32 %v1029, %v943
        %v1057 = vmul.f32 %v1029, %v944
        %v1058 = vmul.f32 %v1029, %v945
        %v1059 = vmul.f32 %v1029, %v946
        %v1060 = vmul.f32 %v1029, %v947
        %v1061 = vmul.f32 %v1029, %v948
        %v1062 = vmul.f32 %v1029, %v949
        %v1063 = vmul.f32 %v1029, %v950
        %v1064 = vmul.f32 %v1029, %v951
        %v1065 = vmul.f32 %v1029, %v952
        %v1066 = vmul.f32 %v1029, %v953
        %v1067 = vmul.f32 %v1029, %v954
        %v1068 = vmul.f32 %v1029, %v955
        %v1069 = vmul.f32 %v1029, %v956
        %v1070 = vmul.f32 %v1029, %v957
        %v1071 = vmul.f32 %v1029, %v958
        %v1072 = vmul.f32 %v1029, %v959
        %v1073 = vmul.f32 %v1029, %v960
        %v1074 = vmul.f32 %v1029, %v961
        %v1075 = vmul.f32 %v1029, %v962
        %v1076 = vmul.f32 %v1029, %v963
        %v1077 = vmul.f32 %v1029, %v964
        %v1078 = vmul.f32 %v1029, %v965
        %v1079 = vmul.f32 %v1029, %v966
        %v1080 = vmul.f32 %v1029, %v967
        %v1081 = vmul.f32 %v1029, %v968
        %v1082 = vmul.f32 %v1029, %v969
        %v1083 = vmul.f32 %v1029, %v970
        %v1084 = vmul.f32 %v1029, %v971
        %v1085 = vmul.f32 %v1029, %v972
        %v1086 = vmul.f32 %v1029, %v973
        %v1087 = vmul.f32 %v1029, %v974
        %v1088 = vmul.f32 %v1029, %v975
        %v1089 = vmul.f32 %v1029, %v976
        %v1090 = vmul.f32 %v1029, %v977
        %v1091 = vmul.f32 %v1029, %v978
        %v1092 = vmul.f32 %v1029, %v979
        %v1093 = vmul.f32 %v1029, %v980
        %v1094 = vmul.f32 %v1029, %v981
        %v1095 = vmul.f32 %v1029, %v982
        %v1096 = vmul.f32 %v1029, %v983
        %v1097 = vmul.f32 %v1029, %v984
        %v1098 = vmul.f32 %v1029, %v985
        %v1099 = vmul.f32 %v1029, %v986
        %v1100 = vmul.f32 %v1029, %v987
        %v1101 = vmul.f32 %v1029, %v988
        %v1102 = vmul.f32 %v1029, %v989
        %v1103 = vmul.f32 %v1029, %v990
        %v1104 = vmul.f32 %v1029, %v991
        %v1105 = vmul.f32 %v1029, %v992
        %v1106 = vmul.f32 %v1029, %v993
        %v1107 = vmul.f32 %v1029, %v994
        %v1108 = vmul.f32 %v1029, %v995
        %v1109 = vmul.f32 %v1029, %v996
        %v1110 = vmul.f32 %v1029, %v997
        %v1111 = vmul.f32 %v1029, %v998
        %v1112 = vmul.f32 %v1029, %v999
        %v1113 = vmul.f32 %v1029, %v1000
        %v1114 = vmul.f32 %v1029, %v1001
        %v1115 = vmul.f32 %v1029, %v1002
        %v1116 = vmul.f32 %v1029, %v1003
        %v1117 = vmul.f32 %v1029, %v1004
        %v1118 = vmul.f32 %v1029, %v1005
        %v1119 = vmul.f32 %v1029, %v1006
        %v1120 = vmul.f32 %v1029, %v1007
        %v1121 = vmul.f32 %v1029, %v1008
        %v1122 = vmul.f32 %v1029, %v1009
        %v1123 = vmul.f32 %v1029, %v1010
        %v1124 = vmul.f32 %v1029, %v1011
        %v1125 = vmul.f32 %v1029, %v1012
        %v1126 = vmul.f32 %v1029, %v1013
        %v1127 = vmul.f32 %v1029, %v1014
        %v1128 = vmul.f32 %v1029, %v1015
        %v1129 = vmul.f32 %v1029, %v1016
        %v1130 = vmul.f32 %v1029, %v1017
        %v1131 = vmul.f32 %v1029, %v1018
        %v1132 = vmul.f32 %v1029, %v1019
        %v1133 = vmul.f32 %v1029, %v1020
        %v1134 = vmul.f32 %v1029, %v1021
        %v1135 = vmul.f32 %v1029, %v1022
        %v1136 = vmul.f32 %v1029, %v1023
        %v1137 = vmul.f32 %v1029, %v1024
        %v1138 = vmul.f32 %v1029, %v1025
        %v1139 = vmul.f32 %v1029, %v1026
        %v1140 = vmul.f32 %v1029, %v1027
        %v1141 = vmul.f32 %v1029, %v1028
        %v1142 = vadd.f32 %v796, %v1030
        %v1143 = vadd.f32 %v797, %v1031
        %v1144 = vadd.f32 %v798, %v1032
        %v1145 = vadd.f32 %v799, %v1033
        %v1146 = vadd.f32 %v800, %v1034
        %v1147 = vadd.f32 %v801, %v1035
        %v1148 = vadd.f32 %v802, %v1036
        %v1149 = vadd.f32 %v803, %v1037
        %v1150 = vadd.f32 %v804, %v1038
        %v1151 = vadd.f32 %v805, %v1039
        %v1152 = vadd.f32 %v806, %v1040
        %v1153 = vadd.f32 %v807, %v1041
        %v1154 = vadd.f32 %v808, %v1042
        %v1155 = vadd.f32 %v809, %v1043
        %v1156 = vadd.f32 %v810, %v1044
        %v1157 = vadd.f32 %v811, %v1045
        %v1158 = vadd.f32 %v812, %v1046
        %v1159 = vadd.f32 %v813, %v1047
        %v1160 = vadd.f32 %v814, %v1048
        %v1161 = vadd.f32 %v815, %v1049
        %v1162 = vadd.f32 %v816, %v1050
        %v1163 = vadd.f32 %v817, %v1051
        %v1164 = vadd.f32 %v818, %v1052
        %v1165 = vadd.f32 %v819, %v1053
        %v1166 = vadd.f32 %v820, %v1054
        %v1167 = vadd.f32 %v821, %v1055
        %v1168 = vadd.f32 %v822, %v1056
        %v1169 = vadd.f32 %v823, %v1057
        %v1170 = vadd.f32 %v824, %v1058
        %v1171 = vadd.f32 %v825, %v1059
        %v1172 = vadd.f32 %v826, %v1060
        %v1173 = vadd.f32 %v827, %v1061
        %v1174 = vadd.f32 %v828, %v1062
        %v1175 = vadd.f32 %v829, %v1063
        %v1176 = vadd.f32 %v830, %v1064
        %v1177 = vadd.f32 %v831, %v1065
        %v1178 = vadd.f32 %v832, %v1066
        %v1179 = vadd.f32 %v833, %v1067
        %v1180 = vadd.f32 %v834, %v1068
        %v1181 = vadd.f32 %v835, %v1069
        %v1182 = vadd.f32 %v836, %v1070
        %v1183 = vadd.f32 %v837, %v1071
        %v1184 = vadd.f32 %v838, %v1072
        %v1185 = vadd.f32 %v839, %v1073
        %v1186 = vadd.f32 %v840, %v1074
        %v1187 = vadd.f32 %v841, %v1075
        %v1188 = vadd.f32 %v842, %v1076
        %v1189 = vadd.f32 %v843, %v1077
        %v1190 = vadd.f32 %v844, %v1078
        %v1191 = vadd.f32 %v845, %v1079
        %v1192 = vadd.f32 %v846, %v1080
        %v1193 = vadd.f32 %v847, %v1081
        %v1194 = vadd.f32 %v848, %v1082
        %v1195 = vadd.f32 %v849, %v1083
        %v1196 = vadd.f32 %v850, %v1084
        %v1197 = vadd.f32 %v851, %v1085
        %v1198 = vadd.f32 %v852, %v1086
        %v1199 = vadd.f32 %v853, %v1087
        %v1200 = vadd.f32 %v854, %v1088
        %v1201 = vadd.f32 %v855, %v1089
        %v1202 = vadd.f32 %v856, %v1090
        %v1203 = vadd.f32 %v857, %v1091
        %v1204 = vadd.f32 %v858, %v1092
        %v1205 = vadd.f32 %v859, %v1093
        %v1206 = vadd.f32 %v860, %v1094
        %v1207 = vadd.f32 %v861, %v1095
        %v1208 = vadd.f32 %v862, %v1096
        %v1209 = vadd.f32 %v863, %v1097
        %v1210 = vadd.f32 %v864, %v1098
        %v1211 = vadd.f32 %v865, %v1099
        %v1212 = vadd.f32 %v866, %v1100
        %v1213 = vadd.f32 %v867, %v1101
        %v1214 = vadd.f32 %v868, %v1102
        %v1215 = vadd.f32 %v869, %v1103
        %v1216 = vadd.f32 %v870, %v1104
        %v1217 = vadd.f32 %v871, %v1105
        %v1218 = vadd.f32 %v872, %v1106
        %v1219 = vadd.f32 %v873, %v1107
        %v1220 = vadd.f32 %v874, %v1108
        %v1221 = vadd.f32 %v875, %v1109
        %v1222 = vadd.f32 %v876, %v1110
        %v1223 = vadd.f32 %v877, %v1111
        %v1224 = vadd.f32 %v878, %v1112
        %v1225 = vadd.f32 %v879, %v1113
        %v1226 = vadd.f32 %v880, %v1114
        %v1227 = vadd.f32 %v881, %v1115
        %v1228 = vadd.f32 %v882, %v1116
        %v1229 = vadd.f32 %v883, %v1117
        %v1230 = vadd.f32 %v884, %v1118
        %v1231 = vadd.f32 %v885, %v1119
        %v1232 = vadd.f32 %v886, %v1120
        %v1233 = vadd.f32 %v887, %v1121
        %v1234 = vadd.f32 %v888, %v1122
        %v1235 = vadd.f32 %v889, %v1123
        %v1236 = vadd.f32 %v890, %v1124
        %v1237 = vadd.f32 %v891, %v1125
        %v1238 = vadd.f32 %v892, %v1126
        %v1239 = vadd.f32 %v893, %v1127
        %v1240 = vadd.f32 %v894, %v1128
        %v1241 = vadd.f32 %v895, %v1129
        %v1242 = vadd.f32 %v896, %v1130
        %v1243 = vadd.f32 %v897, %v1131
        %v1244 = vadd.f32 %v898, %v1132
        %v1245 = vadd.f32 %v899, %v1133
        %v1246 = vadd.f32 %v900, %v1134
        %v1247 = vadd.f32 %v901, %v1135
        %v1248 = vadd.f32 %v902, %v1136
        %v1249 = vadd.f32 %v903, %v1137
        %v1250 = vadd.f32 %v904, %v1138
        %v1251 = vadd.f32 %v905, %v1139
        %v1252 = vadd.f32 %v906, %v1140
        %v1253 = vadd.f32 %v907, %v1141
        %s1254 = sadd.s32 %s214, 3
        %s1255 = sshra.s32 %s1254, 7
        %s1256 = sand.u32 %s1254, 127
        %s1257 = sadd.s32 %s1255, %s89
        %s1258 = smul.u32 %s1257, 128
        %s1259 = sshra.s32 %s1254, 7
        %s1260 = sand.u32 %s1254, 127
        %s1261 = sadd.s32 %s1258, %s1260
        %s1262 = sld [smem:[#allocation7 + %s1261]]
        %v1263 = vld [vmem:[%s224 + $0x3] sm:$0xff]
        %v1264 = vld [vmem:[%s224 + $0xb] sm:$0xff]
        %v1265 = vld [vmem:[%s224 + $0x13] sm:$0xff]
        %v1266 = vld [vmem:[%s224 + $0x1b] sm:$0xf]
        %v1267 = vld [vmem:[%s224 + $0x23] sm:$0xff]
        %v1268 = vld [vmem:[%s224 + $0x2b] sm:$0xff]
        %v1269 = vld [vmem:[%s224 + $0x33] sm:$0xff]
        %v1270 = vld [vmem:[%s224 + $0x3b] sm:$0xf]
        %v1271 = vld [vmem:[%s224 + $0x43] sm:$0xff]
        %v1272 = vld [vmem:[%s224 + $0x4b] sm:$0xff]
        %v1273 = vld [vmem:[%s224 + $0x53] sm:$0xff]
        %v1274 = vld [vmem:[%s224 + $0x5b] sm:$0xf]
        %v1275 = vld [vmem:[%s224 + $0x63] sm:$0xff]
        %v1276 = vld [vmem:[%s224 + $0x6b] sm:$0xff]
        %v1277 = vld [vmem:[%s224 + $0x73] sm:$0xff]
        %v1278 = vld [vmem:[%s224 + $0x7b] sm:$0xf]
        %v1279 = vld [vmem:[%s224 + $0x83] sm:$0xff]
        %v1280 = vld [vmem:[%s224 + $0x8b] sm:$0xff]
        %v1281 = vld [vmem:[%s224 + $0x93] sm:$0xff]
        %v1282 = vld [vmem:[%s224 + $0x9b] sm:$0xf]
        %v1283 = vld [vmem:[%s224 + $0xa3] sm:$0xff]
        %v1284 = vld [vmem:[%s224 + $0xab] sm:$0xff]
        %v1285 = vld [vmem:[%s224 + $0xb3] sm:$0xff]
        %v1286 = vld [vmem:[%s224 + $0xbb] sm:$0xf]
        %v1287 = vld [vmem:[%s224 + $0xc3] sm:$0xff]
        %v1288 = vld [vmem:[%s224 + $0xcb] sm:$0xff]
        %v1289 = vld [vmem:[%s224 + $0xd3] sm:$0xff]
        %v1290 = vld [vmem:[%s224 + $0xdb] sm:$0xf]
        %v1291 = vld [vmem:[%s224 + $0xe3] sm:$0xff]
        %v1292 = vld [vmem:[%s224 + $0xeb] sm:$0xff]
        %v1293 = vld [vmem:[%s224 + $0xf3] sm:$0xff]
        %v1294 = vld [vmem:[%s224 + $0xfb] sm:$0xf]
        %v1295 = vld [vmem:[%s224 + $0x103] sm:$0xff]
        %v1296 = vld [vmem:[%s224 + $0x10b] sm:$0xff]
        %v1297 = vld [vmem:[%s224 + $0x113] sm:$0xff]
        %v1298 = vld [vmem:[%s224 + $0x11b] sm:$0xf]
        %v1299 = vld [vmem:[%s224 + $0x123] sm:$0xff]
        %v1300 = vld [vmem:[%s224 + $0x12b] sm:$0xff]
        %v1301 = vld [vmem:[%s224 + $0x133] sm:$0xff]
        %v1302 = vld [vmem:[%s224 + $0x13b] sm:$0xf]
        %v1303 = vld [vmem:[%s224 + $0x143] sm:$0xff]
        %v1304 = vld [vmem:[%s224 + $0x14b] sm:$0xff]
        %v1305 = vld [vmem:[%s224 + $0x153] sm:$0xff]
        %v1306 = vld [vmem:[%s224 + $0x15b] sm:$0xf]
        %v1307 = vld [vmem:[%s224 + $0x163] sm:$0xff]
        %v1308 = vld [vmem:[%s224 + $0x16b] sm:$0xff]
        %v1309 = vld [vmem:[%s224 + $0x173] sm:$0xff]
        %v1310 = vld [vmem:[%s224 + $0x17b] sm:$0xf]
        %v1311 = vld [vmem:[%s224 + $0x183] sm:$0xff]
        %v1312 = vld [vmem:[%s224 + $0x18b] sm:$0xff]
        %v1313 = vld [vmem:[%s224 + $0x193] sm:$0xff]
        %v1314 = vld [vmem:[%s224 + $0x19b] sm:$0xf]
        %v1315 = vld [vmem:[%s224 + $0x1a3] sm:$0xff]
        %v1316 = vld [vmem:[%s224 + $0x1ab] sm:$0xff]
        %v1317 = vld [vmem:[%s224 + $0x1b3] sm:$0xff]
        %v1318 = vld [vmem:[%s224 + $0x1bb] sm:$0xf]
        %v1319 = vld [vmem:[%s224 + $0x1c3] sm:$0xff]
        %v1320 = vld [vmem:[%s224 + $0x1cb] sm:$0xff]
        %v1321 = vld [vmem:[%s224 + $0x1d3] sm:$0xff]
        %v1322 = vld [vmem:[%s224 + $0x1db] sm:$0xf]
        %v1323 = vld [vmem:[%s224 + $0x1e3] sm:$0xff]
        %v1324 = vld [vmem:[%s224 + $0x1eb] sm:$0xff]
        %v1325 = vld [vmem:[%s224 + $0x1f3] sm:$0xff]
        %v1326 = vld [vmem:[%s224 + $0x1fb] sm:$0xf]
        %v1327 = vld [vmem:[%s224 + $0x203] sm:$0xff]
        %v1328 = vld [vmem:[%s224 + $0x20b] sm:$0xff]
        %v1329 = vld [vmem:[%s224 + $0x213] sm:$0xff]
        %v1330 = vld [vmem:[%s224 + $0x21b] sm:$0xf]
        %v1331 = vld [vmem:[%s224 + $0x223] sm:$0xff]
        %v1332 = vld [vmem:[%s224 + $0x22b] sm:$0xff]
        %v1333 = vld [vmem:[%s224 + $0x233] sm:$0xff]
        %v1334 = vld [vmem:[%s224 + $0x23b] sm:$0xf]
        %v1335 = vld [vmem:[%s224 + $0x243] sm:$0xff]
        %v1336 = vld [vmem:[%s224 + $0x24b] sm:$0xff]
        %v1337 = vld [vmem:[%s224 + $0x253] sm:$0xff]
        %v1338 = vld [vmem:[%s224 + $0x25b] sm:$0xf]
        %v1339 = vld [vmem:[%s224 + $0x263] sm:$0xff]
        %v1340 = vld [vmem:[%s224 + $0x26b] sm:$0xff]
        %v1341 = vld [vmem:[%s224 + $0x273] sm:$0xff]
        %v1342 = vld [vmem:[%s224 + $0x27b] sm:$0xf]
        %v1343 = vld [vmem:[%s224 + $0x283] sm:$0xff]
        %v1344 = vld [vmem:[%s224 + $0x28b] sm:$0xff]
        %v1345 = vld [vmem:[%s224 + $0x293] sm:$0xff]
        %v1346 = vld [vmem:[%s224 + $0x29b] sm:$0xf]
        %v1347 = vld [vmem:[%s224 + $0x2a3] sm:$0xff]
        %v1348 = vld [vmem:[%s224 + $0x2ab] sm:$0xff]
        %v1349 = vld [vmem:[%s224 + $0x2b3] sm:$0xff]
        %v1350 = vld [vmem:[%s224 + $0x2bb] sm:$0xf]
        %v1351 = vld [vmem:[%s224 + $0x2c3] sm:$0xff]
        %v1352 = vld [vmem:[%s224 + $0x2cb] sm:$0xff]
        %v1353 = vld [vmem:[%s224 + $0x2d3] sm:$0xff]
        %v1354 = vld [vmem:[%s224 + $0x2db] sm:$0xf]
        %v1355 = vld [vmem:[%s224 + $0x2e3] sm:$0xff]
        %v1356 = vld [vmem:[%s224 + $0x2eb] sm:$0xff]
        %v1357 = vld [vmem:[%s224 + $0x2f3] sm:$0xff]
        %v1358 = vld [vmem:[%s224 + $0x2fb] sm:$0xf]
        %v1359 = vld [vmem:[%s224 + $0x303] sm:$0xff]
        %v1360 = vld [vmem:[%s224 + $0x30b] sm:$0xff]
        %v1361 = vld [vmem:[%s224 + $0x313] sm:$0xff]
        %v1362 = vld [vmem:[%s224 + $0x31b] sm:$0xf]
        %v1363 = vld [vmem:[%s224 + $0x323] sm:$0xff]
        %v1364 = vld [vmem:[%s224 + $0x32b] sm:$0xff]
        %v1365 = vld [vmem:[%s224 + $0x333] sm:$0xff]
        %v1366 = vld [vmem:[%s224 + $0x33b] sm:$0xf]
        %v1367 = vld [vmem:[%s224 + $0x343] sm:$0xff]
        %v1368 = vld [vmem:[%s224 + $0x34b] sm:$0xff]
        %v1369 = vld [vmem:[%s224 + $0x353] sm:$0xff]
        %v1370 = vld [vmem:[%s224 + $0x35b] sm:$0xf]
        %v1371 = vld [vmem:[%s224 + $0x363] sm:$0xff]
        %v1372 = vld [vmem:[%s224 + $0x36b] sm:$0xff]
        %v1373 = vld [vmem:[%s224 + $0x373] sm:$0xff]
        %v1374 = vld [vmem:[%s224 + $0x37b] sm:$0xf]
        %v1375 = vstv %s1262
        %v1376 = vmul.f32 %v1375, %v1263
        %v1377 = vmul.f32 %v1375, %v1264
        %v1378 = vmul.f32 %v1375, %v1265
        %v1379 = vmul.f32 %v1375, %v1266
        %v1380 = vmul.f32 %v1375, %v1267
        %v1381 = vmul.f32 %v1375, %v1268
        %v1382 = vmul.f32 %v1375, %v1269
        %v1383 = vmul.f32 %v1375, %v1270
        %v1384 = vmul.f32 %v1375, %v1271
        %v1385 = vmul.f32 %v1375, %v1272
        %v1386 = vmul.f32 %v1375, %v1273
        %v1387 = vmul.f32 %v1375, %v1274
        %v1388 = vmul.f32 %v1375, %v1275
        %v1389 = vmul.f32 %v1375, %v1276
        %v1390 = vmul.f32 %v1375, %v1277
        %v1391 = vmul.f32 %v1375, %v1278
        %v1392 = vmul.f32 %v1375, %v1279
        %v1393 = vmul.f32 %v1375, %v1280
        %v1394 = vmul.f32 %v1375, %v1281
        %v1395 = vmul.f32 %v1375, %v1282
        %v1396 = vmul.f32 %v1375, %v1283
        %v1397 = vmul.f32 %v1375, %v1284
        %v1398 = vmul.f32 %v1375, %v1285
        %v1399 = vmul.f32 %v1375, %v1286
        %v1400 = vmul.f32 %v1375, %v1287
        %v1401 = vmul.f32 %v1375, %v1288
        %v1402 = vmul.f32 %v1375, %v1289
        %v1403 = vmul.f32 %v1375, %v1290
        %v1404 = vmul.f32 %v1375, %v1291
        %v1405 = vmul.f32 %v1375, %v1292
        %v1406 = vmul.f32 %v1375, %v1293
        %v1407 = vmul.f32 %v1375, %v1294
        %v1408 = vmul.f32 %v1375, %v1295
        %v1409 = vmul.f32 %v1375, %v1296
        %v1410 = vmul.f32 %v1375, %v1297
        %v1411 = vmul.f32 %v1375, %v1298
        %v1412 = vmul.f32 %v1375, %v1299
        %v1413 = vmul.f32 %v1375, %v1300
        %v1414 = vmul.f32 %v1375, %v1301
        %v1415 = vmul.f32 %v1375, %v1302
        %v1416 = vmul.f32 %v1375, %v1303
        %v1417 = vmul.f32 %v1375, %v1304
        %v1418 = vmul.f32 %v1375, %v1305
        %v1419 = vmul.f32 %v1375, %v1306
        %v1420 = vmul.f32 %v1375, %v1307
        %v1421 = vmul.f32 %v1375, %v1308
        %v1422 = vmul.f32 %v1375, %v1309
        %v1423 = vmul.f32 %v1375, %v1310
        %v1424 = vmul.f32 %v1375, %v1311
        %v1425 = vmul.f32 %v1375, %v1312
        %v1426 = vmul.f32 %v1375, %v1313
        %v1427 = vmul.f32 %v1375, %v1314
        %v1428 = vmul.f32 %v1375, %v1315
        %v1429 = vmul.f32 %v1375, %v1316
        %v1430 = vmul.f32 %v1375, %v1317
        %v1431 = vmul.f32 %v1375, %v1318
        %v1432 = vmul.f32 %v1375, %v1319
        %v1433 = vmul.f32 %v1375, %v1320
        %v1434 = vmul.f32 %v1375, %v1321
        %v1435 = vmul.f32 %v1375, %v1322
        %v1436 = vmul.f32 %v1375, %v1323
        %v1437 = vmul.f32 %v1375, %v1324
        %v1438 = vmul.f32 %v1375, %v1325
        %v1439 = vmul.f32 %v1375, %v1326
        %v1440 = vmul.f32 %v1375, %v1327
        %v1441 = vmul.f32 %v1375, %v1328
        %v1442 = vmul.f32 %v1375, %v1329
        %v1443 = vmul.f32 %v1375, %v1330
        %v1444 = vmul.f32 %v1375, %v1331
        %v1445 = vmul.f32 %v1375, %v1332
        %v1446 = vmul.f32 %v1375, %v1333
        %v1447 = vmul.f32 %v1375, %v1334
        %v1448 = vmul.f32 %v1375, %v1335
        %v1449 = vmul.f32 %v1375, %v1336
        %v1450 = vmul.f32 %v1375, %v1337
        %v1451 = vmul.f32 %v1375, %v1338
        %v1452 = vmul.f32 %v1375, %v1339
        %v1453 = vmul.f32 %v1375, %v1340
        %v1454 = vmul.f32 %v1375, %v1341
        %v1455 = vmul.f32 %v1375, %v1342
        %v1456 = vmul.f32 %v1375, %v1343
        %v1457 = vmul.f32 %v1375, %v1344
        %v1458 = vmul.f32 %v1375, %v1345
        %v1459 = vmul.f32 %v1375, %v1346
        %v1460 = vmul.f32 %v1375, %v1347
        %v1461 = vmul.f32 %v1375, %v1348
        %v1462 = vmul.f32 %v1375, %v1349
        %v1463 = vmul.f32 %v1375, %v1350
        %v1464 = vmul.f32 %v1375, %v1351
        %v1465 = vmul.f32 %v1375, %v1352
        %v1466 = vmul.f32 %v1375, %v1353
        %v1467 = vmul.f32 %v1375, %v1354
        %v1468 = vmul.f32 %v1375, %v1355
        %v1469 = vmul.f32 %v1375, %v1356
        %v1470 = vmul.f32 %v1375, %v1357
        %v1471 = vmul.f32 %v1375, %v1358
        %v1472 = vmul.f32 %v1375, %v1359
        %v1473 = vmul.f32 %v1375, %v1360
        %v1474 = vmul.f32 %v1375, %v1361
        %v1475 = vmul.f32 %v1375, %v1362
        %v1476 = vmul.f32 %v1375, %v1363
        %v1477 = vmul.f32 %v1375, %v1364
        %v1478 = vmul.f32 %v1375, %v1365
        %v1479 = vmul.f32 %v1375, %v1366
        %v1480 = vmul.f32 %v1375, %v1367
        %v1481 = vmul.f32 %v1375, %v1368
        %v1482 = vmul.f32 %v1375, %v1369
        %v1483 = vmul.f32 %v1375, %v1370
        %v1484 = vmul.f32 %v1375, %v1371
        %v1485 = vmul.f32 %v1375, %v1372
        %v1486 = vmul.f32 %v1375, %v1373
        %v1487 = vmul.f32 %v1375, %v1374
        %v1488 = vadd.f32 %v1142, %v1376
        %v1489 = vadd.f32 %v1143, %v1377
        %v1490 = vadd.f32 %v1144, %v1378
        %v1491 = vadd.f32 %v1145, %v1379
        %v1492 = vadd.f32 %v1146, %v1380
        %v1493 = vadd.f32 %v1147, %v1381
        %v1494 = vadd.f32 %v1148, %v1382
        %v1495 = vadd.f32 %v1149, %v1383
        %v1496 = vadd.f32 %v1150, %v1384
        %v1497 = vadd.f32 %v1151, %v1385
        %v1498 = vadd.f32 %v1152, %v1386
        %v1499 = vadd.f32 %v1153, %v1387
        %v1500 = vadd.f32 %v1154, %v1388
        %v1501 = vadd.f32 %v1155, %v1389
        %v1502 = vadd.f32 %v1156, %v1390
        %v1503 = vadd.f32 %v1157, %v1391
        %v1504 = vadd.f32 %v1158, %v1392
        %v1505 = vadd.f32 %v1159, %v1393
        %v1506 = vadd.f32 %v1160, %v1394
        %v1507 = vadd.f32 %v1161, %v1395
        %v1508 = vadd.f32 %v1162, %v1396
        %v1509 = vadd.f32 %v1163, %v1397
        %v1510 = vadd.f32 %v1164, %v1398
        %v1511 = vadd.f32 %v1165, %v1399
        %v1512 = vadd.f32 %v1166, %v1400
        %v1513 = vadd.f32 %v1167, %v1401
        %v1514 = vadd.f32 %v1168, %v1402
        %v1515 = vadd.f32 %v1169, %v1403
        %v1516 = vadd.f32 %v1170, %v1404
        %v1517 = vadd.f32 %v1171, %v1405
        %v1518 = vadd.f32 %v1172, %v1406
        %v1519 = vadd.f32 %v1173, %v1407
        %v1520 = vadd.f32 %v1174, %v1408
        %v1521 = vadd.f32 %v1175, %v1409
        %v1522 = vadd.f32 %v1176, %v1410
        %v1523 = vadd.f32 %v1177, %v1411
        %v1524 = vadd.f32 %v1178, %v1412
        %v1525 = vadd.f32 %v1179, %v1413
        %v1526 = vadd.f32 %v1180, %v1414
        %v1527 = vadd.f32 %v1181, %v1415
        %v1528 = vadd.f32 %v1182, %v1416
        %v1529 = vadd.f32 %v1183, %v1417
        %v1530 = vadd.f32 %v1184, %v1418
        %v1531 = vadd.f32 %v1185, %v1419
        %v1532 = vadd.f32 %v1186, %v1420
        %v1533 = vadd.f32 %v1187, %v1421
        %v1534 = vadd.f32 %v1188, %v1422
        %v1535 = vadd.f32 %v1189, %v1423
        %v1536 = vadd.f32 %v1190, %v1424
        %v1537 = vadd.f32 %v1191, %v1425
        %v1538 = vadd.f32 %v1192, %v1426
        %v1539 = vadd.f32 %v1193, %v1427
        %v1540 = vadd.f32 %v1194, %v1428
        %v1541 = vadd.f32 %v1195, %v1429
        %v1542 = vadd.f32 %v1196, %v1430
        %v1543 = vadd.f32 %v1197, %v1431
        %v1544 = vadd.f32 %v1198, %v1432
        %v1545 = vadd.f32 %v1199, %v1433
        %v1546 = vadd.f32 %v1200, %v1434
        %v1547 = vadd.f32 %v1201, %v1435
        %v1548 = vadd.f32 %v1202, %v1436
        %v1549 = vadd.f32 %v1203, %v1437
        %v1550 = vadd.f32 %v1204, %v1438
        %v1551 = vadd.f32 %v1205, %v1439
        %v1552 = vadd.f32 %v1206, %v1440
        %v1553 = vadd.f32 %v1207, %v1441
        %v1554 = vadd.f32 %v1208, %v1442
        %v1555 = vadd.f32 %v1209, %v1443
        %v1556 = vadd.f32 %v1210, %v1444
        %v1557 = vadd.f32 %v1211, %v1445
        %v1558 = vadd.f32 %v1212, %v1446
        %v1559 = vadd.f32 %v1213, %v1447
        %v1560 = vadd.f32 %v1214, %v1448
        %v1561 = vadd.f32 %v1215, %v1449
        %v1562 = vadd.f32 %v1216, %v1450
        %v1563 = vadd.f32 %v1217, %v1451
        %v1564 = vadd.f32 %v1218, %v1452
        %v1565 = vadd.f32 %v1219, %v1453
        %v1566 = vadd.f32 %v1220, %v1454
        %v1567 = vadd.f32 %v1221, %v1455
        %v1568 = vadd.f32 %v1222, %v1456
        %v1569 = vadd.f32 %v1223, %v1457
        %v1570 = vadd.f32 %v1224, %v1458
        %v1571 = vadd.f32 %v1225, %v1459
        %v1572 = vadd.f32 %v1226, %v1460
        %v1573 = vadd.f32 %v1227, %v1461
        %v1574 = vadd.f32 %v1228, %v1462
        %v1575 = vadd.f32 %v1229, %v1463
        %v1576 = vadd.f32 %v1230, %v1464
        %v1577 = vadd.f32 %v1231, %v1465
        %v1578 = vadd.f32 %v1232, %v1466
        %v1579 = vadd.f32 %v1233, %v1467
        %v1580 = vadd.f32 %v1234, %v1468
        %v1581 = vadd.f32 %v1235, %v1469
        %v1582 = vadd.f32 %v1236, %v1470
        %v1583 = vadd.f32 %v1237, %v1471
        %v1584 = vadd.f32 %v1238, %v1472
        %v1585 = vadd.f32 %v1239, %v1473
        %v1586 = vadd.f32 %v1240, %v1474
        %v1587 = vadd.f32 %v1241, %v1475
        %v1588 = vadd.f32 %v1242, %v1476
        %v1589 = vadd.f32 %v1243, %v1477
        %v1590 = vadd.f32 %v1244, %v1478
        %v1591 = vadd.f32 %v1245, %v1479
        %v1592 = vadd.f32 %v1246, %v1480
        %v1593 = vadd.f32 %v1247, %v1481
        %v1594 = vadd.f32 %v1248, %v1482
        %v1595 = vadd.f32 %v1249, %v1483
        %v1596 = vadd.f32 %v1250, %v1484
        %v1597 = vadd.f32 %v1251, %v1485
        %v1598 = vadd.f32 %v1252, %v1486
        %v1599 = vadd.f32 %v1253, %v1487
        %s1600 = sadd.s32 %s214, 4
        %s1601 = sshra.s32 %s1600, 7
        %s1602 = sand.u32 %s1600, 127
        %s1603 = sadd.s32 %s1601, %s89
        %s1604 = smul.u32 %s1603, 128
        %s1605 = sshra.s32 %s1600, 7
        %s1606 = sand.u32 %s1600, 127
        %s1607 = sadd.s32 %s1604, %s1606
        %s1608 = sld [smem:[#allocation7 + %s1607]]
        %v1609 = vld [vmem:[%s224 + $0x4] sm:$0xff]
        %v1610 = vld [vmem:[%s224 + $0xc] sm:$0xff]
        %v1611 = vld [vmem:[%s224 + $0x14] sm:$0xff]
        %v1612 = vld [vmem:[%s224 + $0x1c] sm:$0xf]
        %v1613 = vld [vmem:[%s224 + $0x24] sm:$0xff]
        %v1614 = vld [vmem:[%s224 + $0x2c] sm:$0xff]
        %v1615 = vld [vmem:[%s224 + $0x34] sm:$0xff]
        %v1616 = vld [vmem:[%s224 + $0x3c] sm:$0xf]
        %v1617 = vld [vmem:[%s224 + $0x44] sm:$0xff]
        %v1618 = vld [vmem:[%s224 + $0x4c] sm:$0xff]
        %v1619 = vld [vmem:[%s224 + $0x54] sm:$0xff]
        %v1620 = vld [vmem:[%s224 + $0x5c] sm:$0xf]
        %v1621 = vld [vmem:[%s224 + $0x64] sm:$0xff]
        %v1622 = vld [vmem:[%s224 + $0x6c] sm:$0xff]
        %v1623 = vld [vmem:[%s224 + $0x74] sm:$0xff]
        %v1624 = vld [vmem:[%s224 + $0x7c] sm:$0xf]
        %v1625 = vld [vmem:[%s224 + $0x84] sm:$0xff]
        %v1626 = vld [vmem:[%s224 + $0x8c] sm:$0xff]
        %v1627 = vld [vmem:[%s224 + $0x94] sm:$0xff]
        %v1628 = vld [vmem:[%s224 + $0x9c] sm:$0xf]
        %v1629 = vld [vmem:[%s224 + $0xa4] sm:$0xff]
        %v1630 = vld [vmem:[%s224 + $0xac] sm:$0xff]
        %v1631 = vld [vmem:[%s224 + $0xb4] sm:$0xff]
        %v1632 = vld [vmem:[%s224 + $0xbc] sm:$0xf]
        %v1633 = vld [vmem:[%s224 + $0xc4] sm:$0xff]
        %v1634 = vld [vmem:[%s224 + $0xcc] sm:$0xff]
        %v1635 = vld [vmem:[%s224 + $0xd4] sm:$0xff]
        %v1636 = vld [vmem:[%s224 + $0xdc] sm:$0xf]
        %v1637 = vld [vmem:[%s224 + $0xe4] sm:$0xff]
        %v1638 = vld [vmem:[%s224 + $0xec] sm:$0xff]
        %v1639 = vld [vmem:[%s224 + $0xf4] sm:$0xff]
        %v1640 = vld [vmem:[%s224 + $0xfc] sm:$0xf]
        %v1641 = vld [vmem:[%s224 + $0x104] sm:$0xff]
        %v1642 = vld [vmem:[%s224 + $0x10c] sm:$0xff]
        %v1643 = vld [vmem:[%s224 + $0x114] sm:$0xff]
        %v1644 = vld [vmem:[%s224 + $0x11c] sm:$0xf]
        %v1645 = vld [vmem:[%s224 + $0x124] sm:$0xff]
        %v1646 = vld [vmem:[%s224 + $0x12c] sm:$0xff]
        %v1647 = vld [vmem:[%s224 + $0x134] sm:$0xff]
        %v1648 = vld [vmem:[%s224 + $0x13c] sm:$0xf]
        %v1649 = vld [vmem:[%s224 + $0x144] sm:$0xff]
        %v1650 = vld [vmem:[%s224 + $0x14c] sm:$0xff]
        %v1651 = vld [vmem:[%s224 + $0x154] sm:$0xff]
        %v1652 = vld [vmem:[%s224 + $0x15c] sm:$0xf]
        %v1653 = vld [vmem:[%s224 + $0x164] sm:$0xff]
        %v1654 = vld [vmem:[%s224 + $0x16c] sm:$0xff]
        %v1655 = vld [vmem:[%s224 + $0x174] sm:$0xff]
        %v1656 = vld [vmem:[%s224 + $0x17c] sm:$0xf]
        %v1657 = vld [vmem:[%s224 + $0x184] sm:$0xff]
        %v1658 = vld [vmem:[%s224 + $0x18c] sm:$0xff]
        %v1659 = vld [vmem:[%s224 + $0x194] sm:$0xff]
        %v1660 = vld [vmem:[%s224 + $0x19c] sm:$0xf]
        %v1661 = vld [vmem:[%s224 + $0x1a4] sm:$0xff]
        %v1662 = vld [vmem:[%s224 + $0x1ac] sm:$0xff]
        %v1663 = vld [vmem:[%s224 + $0x1b4] sm:$0xff]
        %v1664 = vld [vmem:[%s224 + $0x1bc] sm:$0xf]
        %v1665 = vld [vmem:[%s224 + $0x1c4] sm:$0xff]
        %v1666 = vld [vmem:[%s224 + $0x1cc] sm:$0xff]
        %v1667 = vld [vmem:[%s224 + $0x1d4] sm:$0xff]
        %v1668 = vld [vmem:[%s224 + $0x1dc] sm:$0xf]
        %v1669 = vld [vmem:[%s224 + $0x1e4] sm:$0xff]
        %v1670 = vld [vmem:[%s224 + $0x1ec] sm:$0xff]
        %v1671 = vld [vmem:[%s224 + $0x1f4] sm:$0xff]
        %v1672 = vld [vmem:[%s224 + $0x1fc] sm:$0xf]
        %v1673 = vld [vmem:[%s224 + $0x204] sm:$0xff]
        %v1674 = vld [vmem:[%s224 + $0x20c] sm:$0xff]
        %v1675 = vld [vmem:[%s224 + $0x214] sm:$0xff]
        %v1676 = vld [vmem:[%s224 + $0x21c] sm:$0xf]
        %v1677 = vld [vmem:[%s224 + $0x224] sm:$0xff]
        %v1678 = vld [vmem:[%s224 + $0x22c] sm:$0xff]
        %v1679 = vld [vmem:[%s224 + $0x234] sm:$0xff]
        %v1680 = vld [vmem:[%s224 + $0x23c] sm:$0xf]
        %v1681 = vld [vmem:[%s224 + $0x244] sm:$0xff]
        %v1682 = vld [vmem:[%s224 + $0x24c] sm:$0xff]
        %v1683 = vld [vmem:[%s224 + $0x254] sm:$0xff]
        %v1684 = vld [vmem:[%s224 + $0x25c] sm:$0xf]
        %v1685 = vld [vmem:[%s224 + $0x264] sm:$0xff]
        %v1686 = vld [vmem:[%s224 + $0x26c] sm:$0xff]
        %v1687 = vld [vmem:[%s224 + $0x274] sm:$0xff]
        %v1688 = vld [vmem:[%s224 + $0x27c] sm:$0xf]
        %v1689 = vld [vmem:[%s224 + $0x284] sm:$0xff]
        %v1690 = vld [vmem:[%s224 + $0x28c] sm:$0xff]
        %v1691 = vld [vmem:[%s224 + $0x294] sm:$0xff]
        %v1692 = vld [vmem:[%s224 + $0x29c] sm:$0xf]
        %v1693 = vld [vmem:[%s224 + $0x2a4] sm:$0xff]
        %v1694 = vld [vmem:[%s224 + $0x2ac] sm:$0xff]
        %v1695 = vld [vmem:[%s224 + $0x2b4] sm:$0xff]
        %v1696 = vld [vmem:[%s224 + $0x2bc] sm:$0xf]
        %v1697 = vld [vmem:[%s224 + $0x2c4] sm:$0xff]
        %v1698 = vld [vmem:[%s224 + $0x2cc] sm:$0xff]
        %v1699 = vld [vmem:[%s224 + $0x2d4] sm:$0xff]
        %v1700 = vld [vmem:[%s224 + $0x2dc] sm:$0xf]
        %v1701 = vld [vmem:[%s224 + $0x2e4] sm:$0xff]
        %v1702 = vld [vmem:[%s224 + $0x2ec] sm:$0xff]
        %v1703 = vld [vmem:[%s224 + $0x2f4] sm:$0xff]
        %v1704 = vld [vmem:[%s224 + $0x2fc] sm:$0xf]
        %v1705 = vld [vmem:[%s224 + $0x304] sm:$0xff]
        %v1706 = vld [vmem:[%s224 + $0x30c] sm:$0xff]
        %v1707 = vld [vmem:[%s224 + $0x314] sm:$0xff]
        %v1708 = vld [vmem:[%s224 + $0x31c] sm:$0xf]
        %v1709 = vld [vmem:[%s224 + $0x324] sm:$0xff]
        %v1710 = vld [vmem:[%s224 + $0x32c] sm:$0xff]
        %v1711 = vld [vmem:[%s224 + $0x334] sm:$0xff]
        %v1712 = vld [vmem:[%s224 + $0x33c] sm:$0xf]
        %v1713 = vld [vmem:[%s224 + $0x344] sm:$0xff]
        %v1714 = vld [vmem:[%s224 + $0x34c] sm:$0xff]
        %v1715 = vld [vmem:[%s224 + $0x354] sm:$0xff]
        %v1716 = vld [vmem:[%s224 + $0x35c] sm:$0xf]
        %v1717 = vld [vmem:[%s224 + $0x364] sm:$0xff]
        %v1718 = vld [vmem:[%s224 + $0x36c] sm:$0xff]
        %v1719 = vld [vmem:[%s224 + $0x374] sm:$0xff]
        %v1720 = vld [vmem:[%s224 + $0x37c] sm:$0xf]
        %v1721 = vstv %s1608
        %v1722 = vmul.f32 %v1721, %v1609
        %v1723 = vmul.f32 %v1721, %v1610
        %v1724 = vmul.f32 %v1721, %v1611
        %v1725 = vmul.f32 %v1721, %v1612
        %v1726 = vmul.f32 %v1721, %v1613
        %v1727 = vmul.f32 %v1721, %v1614
        %v1728 = vmul.f32 %v1721, %v1615
        %v1729 = vmul.f32 %v1721, %v1616
        %v1730 = vmul.f32 %v1721, %v1617
        %v1731 = vmul.f32 %v1721, %v1618
        %v1732 = vmul.f32 %v1721, %v1619
        %v1733 = vmul.f32 %v1721, %v1620
        %v1734 = vmul.f32 %v1721, %v1621
        %v1735 = vmul.f32 %v1721, %v1622
        %v1736 = vmul.f32 %v1721, %v1623
        %v1737 = vmul.f32 %v1721, %v1624
        %v1738 = vmul.f32 %v1721, %v1625
        %v1739 = vmul.f32 %v1721, %v1626
        %v1740 = vmul.f32 %v1721, %v1627
        %v1741 = vmul.f32 %v1721, %v1628
        %v1742 = vmul.f32 %v1721, %v1629
        %v1743 = vmul.f32 %v1721, %v1630
        %v1744 = vmul.f32 %v1721, %v1631
        %v1745 = vmul.f32 %v1721, %v1632
        %v1746 = vmul.f32 %v1721, %v1633
        %v1747 = vmul.f32 %v1721, %v1634
        %v1748 = vmul.f32 %v1721, %v1635
        %v1749 = vmul.f32 %v1721, %v1636
        %v1750 = vmul.f32 %v1721, %v1637
        %v1751 = vmul.f32 %v1721, %v1638
        %v1752 = vmul.f32 %v1721, %v1639
        %v1753 = vmul.f32 %v1721, %v1640
        %v1754 = vmul.f32 %v1721, %v1641
        %v1755 = vmul.f32 %v1721, %v1642
        %v1756 = vmul.f32 %v1721, %v1643
        %v1757 = vmul.f32 %v1721, %v1644
        %v1758 = vmul.f32 %v1721, %v1645
        %v1759 = vmul.f32 %v1721, %v1646
        %v1760 = vmul.f32 %v1721, %v1647
        %v1761 = vmul.f32 %v1721, %v1648
        %v1762 = vmul.f32 %v1721, %v1649
        %v1763 = vmul.f32 %v1721, %v1650
        %v1764 = vmul.f32 %v1721, %v1651
        %v1765 = vmul.f32 %v1721, %v1652
        %v1766 = vmul.f32 %v1721, %v1653
        %v1767 = vmul.f32 %v1721, %v1654
        %v1768 = vmul.f32 %v1721, %v1655
        %v1769 = vmul.f32 %v1721, %v1656
        %v1770 = vmul.f32 %v1721, %v1657
        %v1771 = vmul.f32 %v1721, %v1658
        %v1772 = vmul.f32 %v1721, %v1659
        %v1773 = vmul.f32 %v1721, %v1660
        %v1774 = vmul.f32 %v1721, %v1661
        %v1775 = vmul.f32 %v1721, %v1662
        %v1776 = vmul.f32 %v1721, %v1663
        %v1777 = vmul.f32 %v1721, %v1664
        %v1778 = vmul.f32 %v1721, %v1665
        %v1779 = vmul.f32 %v1721, %v1666
        %v1780 = vmul.f32 %v1721, %v1667
        %v1781 = vmul.f32 %v1721, %v1668
        %v1782 = vmul.f32 %v1721, %v1669
        %v1783 = vmul.f32 %v1721, %v1670
        %v1784 = vmul.f32 %v1721, %v1671
        %v1785 = vmul.f32 %v1721, %v1672
        %v1786 = vmul.f32 %v1721, %v1673
        %v1787 = vmul.f32 %v1721, %v1674
        %v1788 = vmul.f32 %v1721, %v1675
        %v1789 = vmul.f32 %v1721, %v1676
        %v1790 = vmul.f32 %v1721, %v1677
        %v1791 = vmul.f32 %v1721, %v1678
        %v1792 = vmul.f32 %v1721, %v1679
        %v1793 = vmul.f32 %v1721, %v1680
        %v1794 = vmul.f32 %v1721, %v1681
        %v1795 = vmul.f32 %v1721, %v1682
        %v1796 = vmul.f32 %v1721, %v1683
        %v1797 = vmul.f32 %v1721, %v1684
        %v1798 = vmul.f32 %v1721, %v1685
        %v1799 = vmul.f32 %v1721, %v1686
        %v1800 = vmul.f32 %v1721, %v1687
        %v1801 = vmul.f32 %v1721, %v1688
        %v1802 = vmul.f32 %v1721, %v1689
        %v1803 = vmul.f32 %v1721, %v1690
        %v1804 = vmul.f32 %v1721, %v1691
        %v1805 = vmul.f32 %v1721, %v1692
        %v1806 = vmul.f32 %v1721, %v1693
        %v1807 = vmul.f32 %v1721, %v1694
        %v1808 = vmul.f32 %v1721, %v1695
        %v1809 = vmul.f32 %v1721, %v1696
        %v1810 = vmul.f32 %v1721, %v1697
        %v1811 = vmul.f32 %v1721, %v1698
        %v1812 = vmul.f32 %v1721, %v1699
        %v1813 = vmul.f32 %v1721, %v1700
        %v1814 = vmul.f32 %v1721, %v1701
        %v1815 = vmul.f32 %v1721, %v1702
        %v1816 = vmul.f32 %v1721, %v1703
        %v1817 = vmul.f32 %v1721, %v1704
        %v1818 = vmul.f32 %v1721, %v1705
        %v1819 = vmul.f32 %v1721, %v1706
        %v1820 = vmul.f32 %v1721, %v1707
        %v1821 = vmul.f32 %v1721, %v1708
        %v1822 = vmul.f32 %v1721, %v1709
        %v1823 = vmul.f32 %v1721, %v1710
        %v1824 = vmul.f32 %v1721, %v1711
        %v1825 = vmul.f32 %v1721, %v1712
        %v1826 = vmul.f32 %v1721, %v1713
        %v1827 = vmul.f32 %v1721, %v1714
        %v1828 = vmul.f32 %v1721, %v1715
        %v1829 = vmul.f32 %v1721, %v1716
        %v1830 = vmul.f32 %v1721, %v1717
        %v1831 = vmul.f32 %v1721, %v1718
        %v1832 = vmul.f32 %v1721, %v1719
        %v1833 = vmul.f32 %v1721, %v1720
        %v1834 = vadd.f32 %v1488, %v1722
        %v1835 = vadd.f32 %v1489, %v1723
        %v1836 = vadd.f32 %v1490, %v1724
        %v1837 = vadd.f32 %v1491, %v1725
        %v1838 = vadd.f32 %v1492, %v1726
        %v1839 = vadd.f32 %v1493, %v1727
        %v1840 = vadd.f32 %v1494, %v1728
        %v1841 = vadd.f32 %v1495, %v1729
        %v1842 = vadd.f32 %v1496, %v1730
        %v1843 = vadd.f32 %v1497, %v1731
        %v1844 = vadd.f32 %v1498, %v1732
        %v1845 = vadd.f32 %v1499, %v1733
        %v1846 = vadd.f32 %v1500, %v1734
        %v1847 = vadd.f32 %v1501, %v1735
        %v1848 = vadd.f32 %v1502, %v1736
        %v1849 = vadd.f32 %v1503, %v1737
        %v1850 = vadd.f32 %v1504, %v1738
        %v1851 = vadd.f32 %v1505, %v1739
        %v1852 = vadd.f32 %v1506, %v1740
        %v1853 = vadd.f32 %v1507, %v1741
        %v1854 = vadd.f32 %v1508, %v1742
        %v1855 = vadd.f32 %v1509, %v1743
        %v1856 = vadd.f32 %v1510, %v1744
        %v1857 = vadd.f32 %v1511, %v1745
        %v1858 = vadd.f32 %v1512, %v1746
        %v1859 = vadd.f32 %v1513, %v1747
        %v1860 = vadd.f32 %v1514, %v1748
        %v1861 = vadd.f32 %v1515, %v1749
        %v1862 = vadd.f32 %v1516, %v1750
        %v1863 = vadd.f32 %v1517, %v1751
        %v1864 = vadd.f32 %v1518, %v1752
        %v1865 = vadd.f32 %v1519, %v1753
        %v1866 = vadd.f32 %v1520, %v1754
        %v1867 = vadd.f32 %v1521, %v1755
        %v1868 = vadd.f32 %v1522, %v1756
        %v1869 = vadd.f32 %v1523, %v1757
        %v1870 = vadd.f32 %v1524, %v1758
        %v1871 = vadd.f32 %v1525, %v1759
        %v1872 = vadd.f32 %v1526, %v1760
        %v1873 = vadd.f32 %v1527, %v1761
        %v1874 = vadd.f32 %v1528, %v1762
        %v1875 = vadd.f32 %v1529, %v1763
        %v1876 = vadd.f32 %v1530, %v1764
        %v1877 = vadd.f32 %v1531, %v1765
        %v1878 = vadd.f32 %v1532, %v1766
        %v1879 = vadd.f32 %v1533, %v1767
        %v1880 = vadd.f32 %v1534, %v1768
        %v1881 = vadd.f32 %v1535, %v1769
        %v1882 = vadd.f32 %v1536, %v1770
        %v1883 = vadd.f32 %v1537, %v1771
        %v1884 = vadd.f32 %v1538, %v1772
        %v1885 = vadd.f32 %v1539, %v1773
        %v1886 = vadd.f32 %v1540, %v1774
        %v1887 = vadd.f32 %v1541, %v1775
        %v1888 = vadd.f32 %v1542, %v1776
        %v1889 = vadd.f32 %v1543, %v1777
        %v1890 = vadd.f32 %v1544, %v1778
        %v1891 = vadd.f32 %v1545, %v1779
        %v1892 = vadd.f32 %v1546, %v1780
        %v1893 = vadd.f32 %v1547, %v1781
        %v1894 = vadd.f32 %v1548, %v1782
        %v1895 = vadd.f32 %v1549, %v1783
        %v1896 = vadd.f32 %v1550, %v1784
        %v1897 = vadd.f32 %v1551, %v1785
        %v1898 = vadd.f32 %v1552, %v1786
        %v1899 = vadd.f32 %v1553, %v1787
        %v1900 = vadd.f32 %v1554, %v1788
        %v1901 = vadd.f32 %v1555, %v1789
        %v1902 = vadd.f32 %v1556, %v1790
        %v1903 = vadd.f32 %v1557, %v1791
        %v1904 = vadd.f32 %v1558, %v1792
        %v1905 = vadd.f32 %v1559, %v1793
        %v1906 = vadd.f32 %v1560, %v1794
        %v1907 = vadd.f32 %v1561, %v1795
        %v1908 = vadd.f32 %v1562, %v1796
        %v1909 = vadd.f32 %v1563, %v1797
        %v1910 = vadd.f32 %v1564, %v1798
        %v1911 = vadd.f32 %v1565, %v1799
        %v1912 = vadd.f32 %v1566, %v1800
        %v1913 = vadd.f32 %v1567, %v1801
        %v1914 = vadd.f32 %v1568, %v1802
        %v1915 = vadd.f32 %v1569, %v1803
        %v1916 = vadd.f32 %v1570, %v1804
        %v1917 = vadd.f32 %v1571, %v1805
        %v1918 = vadd.f32 %v1572, %v1806
        %v1919 = vadd.f32 %v1573, %v1807
        %v1920 = vadd.f32 %v1574, %v1808
        %v1921 = vadd.f32 %v1575, %v1809
        %v1922 = vadd.f32 %v1576, %v1810
        %v1923 = vadd.f32 %v1577, %v1811
        %v1924 = vadd.f32 %v1578, %v1812
        %v1925 = vadd.f32 %v1579, %v1813
        %v1926 = vadd.f32 %v1580, %v1814
        %v1927 = vadd.f32 %v1581, %v1815
        %v1928 = vadd.f32 %v1582, %v1816
        %v1929 = vadd.f32 %v1583, %v1817
        %v1930 = vadd.f32 %v1584, %v1818
        %v1931 = vadd.f32 %v1585, %v1819
        %v1932 = vadd.f32 %v1586, %v1820
        %v1933 = vadd.f32 %v1587, %v1821
        %v1934 = vadd.f32 %v1588, %v1822
        %v1935 = vadd.f32 %v1589, %v1823
        %v1936 = vadd.f32 %v1590, %v1824
        %v1937 = vadd.f32 %v1591, %v1825
        %v1938 = vadd.f32 %v1592, %v1826
        %v1939 = vadd.f32 %v1593, %v1827
        %v1940 = vadd.f32 %v1594, %v1828
        %v1941 = vadd.f32 %v1595, %v1829
        %v1942 = vadd.f32 %v1596, %v1830
        %v1943 = vadd.f32 %v1597, %v1831
        %v1944 = vadd.f32 %v1598, %v1832
        %v1945 = vadd.f32 %v1599, %v1833
      $region73: #{lenet5_forward.1} parent=65 // loop_footer
        %s101 = sadd.s32 1, %s97
      $region74: #{lenet5_forward.1} parent=65 // loop_footer_branch
        %96 = sbr.rel target = $region70
      $region75: #{lenet5_forward.1} parent=65 // loop_exit
        _
      %v1946 = vtanh.pop %v102
      %v1947 = vtanh.pop %v103
      %v1948 = vtanh.pop %v104
      %v1949 = vtanh.pop %v105
      %v1950 = vtanh.pop %v106
      %v1951 = vtanh.pop %v107
      %v1952 = vtanh.pop %v108
      %v1953 = vtanh.pop %v109
      %v1954 = vtanh.pop %v110
      %v1955 = vtanh.pop %v111
      %v1956 = vtanh.pop %v112
      %v1957 = vtanh.pop %v113
      %v1958 = vtanh.pop %v114
      %v1959 = vtanh.pop %v115
      %v1960 = vtanh.pop %v116
      %v1961 = vtanh.pop %v117
      %v1962 = vtanh.pop %v118
      %v1963 = vtanh.pop %v119
      %v1964 = vtanh.pop %v120
      %v1965 = vtanh.pop %v121
      %v1966 = vtanh.pop %v122
      %v1967 = vtanh.pop %v123
      %v1968 = vtanh.pop %v124
      %v1969 = vtanh.pop %v125
      %v1970 = vtanh.pop %v126
      %v1971 = vtanh.pop %v127
      %v1972 = vtanh.pop %v128
      %v1973 = vtanh.pop %v129
      %v1974 = vtanh.pop %v130
      %v1975 = vtanh.pop %v131
      %v1976 = vtanh.pop %v132
      %v1977 = vtanh.pop %v133
      %v1978 = vtanh.pop %v134
      %v1979 = vtanh.pop %v135
      %v1980 = vtanh.pop %v136
      %v1981 = vtanh.pop %v137
      %v1982 = vtanh.pop %v138
      %v1983 = vtanh.pop %v139
      %v1984 = vtanh.pop %v140
      %v1985 = vtanh.pop %v141
      %v1986 = vtanh.pop %v142
      %v1987 = vtanh.pop %v143
      %v1988 = vtanh.pop %v144
      %v1989 = vtanh.pop %v145
      %v1990 = vtanh.pop %v146
      %v1991 = vtanh.pop %v147
      %v1992 = vtanh.pop %v148
      %v1993 = vtanh.pop %v149
      %v1994 = vtanh.pop %v150
      %v1995 = vtanh.pop %v151
      %v1996 = vtanh.pop %v152
      %v1997 = vtanh.pop %v153
      %v1998 = vtanh.pop %v154
      %v1999 = vtanh.pop %v155
      %v2000 = vtanh.pop %v156
      %v2001 = vtanh.pop %v157
      %v2002 = vtanh.pop %v158
      %v2003 = vtanh.pop %v159
      %v2004 = vtanh.pop %v160
      %v2005 = vtanh.pop %v161
      %v2006 = vtanh.pop %v162
      %v2007 = vtanh.pop %v163
      %v2008 = vtanh.pop %v164
      %v2009 = vtanh.pop %v165
      %v2010 = vtanh.pop %v166
      %v2011 = vtanh.pop %v167
      %v2012 = vtanh.pop %v168
      %v2013 = vtanh.pop %v169
      %v2014 = vtanh.pop %v170
      %v2015 = vtanh.pop %v171
      %v2016 = vtanh.pop %v172
      %v2017 = vtanh.pop %v173
      %v2018 = vtanh.pop %v174
      %v2019 = vtanh.pop %v175
      %v2020 = vtanh.pop %v176
      %v2021 = vtanh.pop %v177
      %v2022 = vtanh.pop %v178
      %v2023 = vtanh.pop %v179
      %v2024 = vtanh.pop %v180
      %v2025 = vtanh.pop %v181
      %v2026 = vtanh.pop %v182
      %v2027 = vtanh.pop %v183
      %v2028 = vtanh.pop %v184
      %v2029 = vtanh.pop %v185
      %v2030 = vtanh.pop %v186
      %v2031 = vtanh.pop %v187
      %v2032 = vtanh.pop %v188
      %v2033 = vtanh.pop %v189
      %v2034 = vtanh.pop %v190
      %v2035 = vtanh.pop %v191
      %v2036 = vtanh.pop %v192
      %v2037 = vtanh.pop %v193
      %v2038 = vtanh.pop %v194
      %v2039 = vtanh.pop %v195
      %v2040 = vtanh.pop %v196
      %v2041 = vtanh.pop %v197
      %v2042 = vtanh.pop %v198
      %v2043 = vtanh.pop %v199
      %v2044 = vtanh.pop %v200
      %v2045 = vtanh.pop %v201
      %v2046 = vtanh.pop %v202
      %v2047 = vtanh.pop %v203
      %v2048 = vtanh.pop %v204
      %v2049 = vtanh.pop %v205
      %v2050 = vtanh.pop %v206
      %v2051 = vtanh.pop %v207
      %v2052 = vtanh.pop %v208
      %v2053 = vtanh.pop %v209
      %v2054 = vtanh.pop %v210
      %v2055 = vtanh.pop %v211
      %v2056 = vtanh.pop %v212
      %v2057 = vtanh.pop %v213
      %v2058 = vadd.f32 %v1946, %v1950
      %v2059 = vadd.f32 %v1947, %v1951
      %v2060 = vadd.f32 %v1948, %v1952
      %v2061 = vadd.f32 %v1949, %v1953
      %v2062 = vadd.f32 %v1954, %v1958
      %v2063 = vadd.f32 %v1955, %v1959
      %v2064 = vadd.f32 %v1956, %v1960
      %v2065 = vadd.f32 %v1957, %v1961
      %v2066 = vadd.f32 %v1962, %v1966
      %v2067 = vadd.f32 %v1963, %v1967
      %v2068 = vadd.f32 %v1964, %v1968
      %v2069 = vadd.f32 %v1965, %v1969
      %v2070 = vadd.f32 %v1970, %v1974
      %v2071 = vadd.f32 %v1971, %v1975
      %v2072 = vadd.f32 %v1972, %v1976
      %v2073 = vadd.f32 %v1973, %v1977
      %v2074 = vadd.f32 %v1978, %v1982
      %v2075 = vadd.f32 %v1979, %v1983
      %v2076 = vadd.f32 %v1980, %v1984
      %v2077 = vadd.f32 %v1981, %v1985
      %v2078 = vadd.f32 %v1986, %v1990
      %v2079 = vadd.f32 %v1987, %v1991
      %v2080 = vadd.f32 %v1988, %v1992
      %v2081 = vadd.f32 %v1989, %v1993
      %v2082 = vadd.f32 %v1994, %v1998
      %v2083 = vadd.f32 %v1995, %v1999
      %v2084 = vadd.f32 %v1996, %v2000
      %v2085 = vadd.f32 %v1997, %v2001
      %v2086 = vadd.f32 %v2002, %v2006
      %v2087 = vadd.f32 %v2003, %v2007
      %v2088 = vadd.f32 %v2004, %v2008
      %v2089 = vadd.f32 %v2005, %v2009
      %v2090 = vadd.f32 %v2010, %v2014
      %v2091 = vadd.f32 %v2011, %v2015
      %v2092 = vadd.f32 %v2012, %v2016
      %v2093 = vadd.f32 %v2013, %v2017
      %v2094 = vadd.f32 %v2018, %v2022
      %v2095 = vadd.f32 %v2019, %v2023
      %v2096 = vadd.f32 %v2020, %v2024
      %v2097 = vadd.f32 %v2021, %v2025
      %v2098 = vadd.f32 %v2026, %v2030
      %v2099 = vadd.f32 %v2027, %v2031
      %v2100 = vadd.f32 %v2028, %v2032
      %v2101 = vadd.f32 %v2029, %v2033
      %v2102 = vadd.f32 %v2034, %v2038
      %v2103 = vadd.f32 %v2035, %v2039
      %v2104 = vadd.f32 %v2036, %v2040
      %v2105 = vadd.f32 %v2037, %v2041
      %v2106 = vadd.f32 %v2042, %v2046
      %v2107 = vadd.f32 %v2043, %v2047
      %v2108 = vadd.f32 %v2044, %v2048
      %v2109 = vadd.f32 %v2045, %v2049
      %v2110 = vadd.f32 %v2050, %v2054
      %v2111 = vadd.f32 %v2051, %v2055
      %v2112 = vadd.f32 %v2052, %v2056
      %v2113 = vadd.f32 %v2053, %v2057
      %2114 = vst [vmem:[#allocation3] sm:$0xff] %v2058
      %2115 = vst [vmem:[#allocation3 + $0x8] sm:$0xff] %v2059
      %2116 = vst [vmem:[#allocation3 + $0x10] sm:$0xff] %v2060
      %2117 = vst [vmem:[#allocation3 + $0x18] sm:$0xf] %v2061
      %2118 = vst [vmem:[#allocation3 + $0x20] sm:$0xff] %v2062
      %2119 = vst [vmem:[#allocation3 + $0x28] sm:$0xff] %v2063
      %2120 = vst [vmem:[#allocation3 + $0x30] sm:$0xff] %v2064
      %2121 = vst [vmem:[#allocation3 + $0x38] sm:$0xf] %v2065
      %2122 = vst [vmem:[#allocation3 + $0x40] sm:$0xff] %v2066
      %2123 = vst [vmem:[#allocation3 + $0x48] sm:$0xff] %v2067
      %2124 = vst [vmem:[#allocation3 + $0x50] sm:$0xff] %v2068
      %2125 = vst [vmem:[#allocation3 + $0x58] sm:$0xf] %v2069
      %2126 = vst [vmem:[#allocation3 + $0x60] sm:$0xff] %v2070
      %2127 = vst [vmem:[#allocation3 + $0x68] sm:$0xff] %v2071
      %2128 = vst [vmem:[#allocation3 + $0x70] sm:$0xff] %v2072
      %2129 = vst [vmem:[#allocation3 + $0x78] sm:$0xf] %v2073
      %2130 = vst [vmem:[#allocation3 + $0x80] sm:$0xff] %v2074
      %2131 = vst [vmem:[#allocation3 + $0x88] sm:$0xff] %v2075
      %2132 = vst [vmem:[#allocation3 + $0x90] sm:$0xff] %v2076
      %2133 = vst [vmem:[#allocation3 + $0x98] sm:$0xf] %v2077
      %2134 = vst [vmem:[#allocation3 + $0xa0] sm:$0xff] %v2078
      %2135 = vst [vmem:[#allocation3 + $0xa8] sm:$0xff] %v2079
      %2136 = vst [vmem:[#allocation3 + $0xb0] sm:$0xff] %v2080
      %2137 = vst [vmem:[#allocation3 + $0xb8] sm:$0xf] %v2081
      %2138 = vst [vmem:[#allocation3 + $0xc0] sm:$0xff] %v2082
      %2139 = vst [vmem:[#allocation3 + $0xc8] sm:$0xff] %v2083
      %2140 = vst [vmem:[#allocation3 + $0xd0] sm:$0xff] %v2084
      %2141 = vst [vmem:[#allocation3 + $0xd8] sm:$0xf] %v2085
      %2142 = vst [vmem:[#allocation3 + $0xe0] sm:$0xff] %v2086
      %2143 = vst [vmem:[#allocation3 + $0xe8] sm:$0xff] %v2087
      %2144 = vst [vmem:[#allocation3 + $0xf0] sm:$0xff] %v2088
      %2145 = vst [vmem:[#allocation3 + $0xf8] sm:$0xf] %v2089
      %2146 = vst [vmem:[#allocation3 + $0x100] sm:$0xff] %v2090
      %2147 = vst [vmem:[#allocation3 + $0x108] sm:$0xff] %v2091
      %2148 = vst [vmem:[#allocation3 + $0x110] sm:$0xff] %v2092
      %2149 = vst [vmem:[#allocation3 + $0x118] sm:$0xf] %v2093
      %2150 = vst [vmem:[#allocation3 + $0x120] sm:$0xff] %v2094
      %2151 = vst [vmem:[#allocation3 + $0x128] sm:$0xff] %v2095
      %2152 = vst [vmem:[#allocation3 + $0x130] sm:$0xff] %v2096
      %2153 = vst [vmem:[#allocation3 + $0x138] sm:$0xf] %v2097
      %2154 = vst [vmem:[#allocation3 + $0x140] sm:$0xff] %v2098
      %2155 = vst [vmem:[#allocation3 + $0x148] sm:$0xff] %v2099
      %2156 = vst [vmem:[#allocation3 + $0x150] sm:$0xff] %v2100
      %2157 = vst [vmem:[#allocation3 + $0x158] sm:$0xf] %v2101
      %2158 = vst [vmem:[#allocation3 + $0x160] sm:$0xff] %v2102
      %2159 = vst [vmem:[#allocation3 + $0x168] sm:$0xff] %v2103
      %2160 = vst [vmem:[#allocation3 + $0x170] sm:$0xff] %v2104
      %2161 = vst [vmem:[#allocation3 + $0x178] sm:$0xf] %v2105
      %2162 = vst [vmem:[#allocation3 + $0x180] sm:$0xff] %v2106
      %2163 = vst [vmem:[#allocation3 + $0x188] sm:$0xff] %v2107
      %2164 = vst [vmem:[#allocation3 + $0x190] sm:$0xff] %v2108
      %2165 = vst [vmem:[#allocation3 + $0x198] sm:$0xf] %v2109
      %2166 = vst [vmem:[#allocation3 + $0x1a0] sm:$0xff] %v2110
      %2167 = vst [vmem:[#allocation3 + $0x1a8] sm:$0xff] %v2111
      %2168 = vst [vmem:[#allocation3 + $0x1b0] sm:$0xff] %v2112
      %2169 = vst [vmem:[#allocation3 + $0x1b8] sm:$0xf] %v2113
      %v2170 = vld [vmem:[#allocation3] ss:$2 sm:$0xff]
      %s2171 = scalar_lea.vmem [#allocation3], 16
      %v2172 = vld [vmem:[%s2171] ss:$2 sm:$0x3f]
      %s2173 = scalar_lea.vmem [#allocation3], 32
      %v2174 = vld [vmem:[%s2173] ss:$2 sm:$0xff]
      %s2175 = scalar_lea.vmem [#allocation3], 48
      %v2176 = vld [vmem:[%s2175] ss:$2 sm:$0x3f]
      %s2177 = scalar_lea.vmem [#allocation3], 64
      %v2178 = vld [vmem:[%s2177] ss:$2 sm:$0xff]
      %s2179 = scalar_lea.vmem [#allocation3], 80
      %v2180 = vld [vmem:[%s2179] ss:$2 sm:$0x3f]
      %s2181 = scalar_lea.vmem [#allocation3], 96
      %v2182 = vld [vmem:[%s2181] ss:$2 sm:$0xff]
      %s2183 = scalar_lea.vmem [#allocation3], 112
      %v2184 = vld [vmem:[%s2183] ss:$2 sm:$0x3f]
      %s2185 = scalar_lea.vmem [#allocation3], 128
      %v2186 = vld [vmem:[%s2185] ss:$2 sm:$0xff]
      %s2187 = scalar_lea.vmem [#allocation3], 144
      %v2188 = vld [vmem:[%s2187] ss:$2 sm:$0x3f]
      %s2189 = scalar_lea.vmem [#allocation3], 160
      %v2190 = vld [vmem:[%s2189] ss:$2 sm:$0xff]
      %s2191 = scalar_lea.vmem [#allocation3], 176
      %v2192 = vld [vmem:[%s2191] ss:$2 sm:$0x3f]
      %s2193 = scalar_lea.vmem [#allocation3], 192
      %v2194 = vld [vmem:[%s2193] ss:$2 sm:$0xff]
      %s2195 = scalar_lea.vmem [#allocation3], 208
      %v2196 = vld [vmem:[%s2195] ss:$2 sm:$0x3f]
      %s2197 = scalar_lea.vmem [#allocation3], 224
      %v2198 = vld [vmem:[%s2197] ss:$2 sm:$0xff]
      %s2199 = scalar_lea.vmem [#allocation3], 240
      %v2200 = vld [vmem:[%s2199] ss:$2 sm:$0x3f]
      %s2201 = scalar_lea.vmem [#allocation3], 256
      %v2202 = vld [vmem:[%s2201] ss:$2 sm:$0xff]
      %s2203 = scalar_lea.vmem [#allocation3], 272
      %v2204 = vld [vmem:[%s2203] ss:$2 sm:$0x3f]
      %s2205 = scalar_lea.vmem [#allocation3], 288
      %v2206 = vld [vmem:[%s2205] ss:$2 sm:$0xff]
      %s2207 = scalar_lea.vmem [#allocation3], 304
      %v2208 = vld [vmem:[%s2207] ss:$2 sm:$0x3f]
      %s2209 = scalar_lea.vmem [#allocation3], 320
      %v2210 = vld [vmem:[%s2209] ss:$2 sm:$0xff]
      %s2211 = scalar_lea.vmem [#allocation3], 336
      %v2212 = vld [vmem:[%s2211] ss:$2 sm:$0x3f]
      %s2213 = scalar_lea.vmem [#allocation3], 352
      %v2214 = vld [vmem:[%s2213] ss:$2 sm:$0xff]
      %s2215 = scalar_lea.vmem [#allocation3], 368
      %v2216 = vld [vmem:[%s2215] ss:$2 sm:$0x3f]
      %s2217 = scalar_lea.vmem [#allocation3], 384
      %v2218 = vld [vmem:[%s2217] ss:$2 sm:$0xff]
      %s2219 = scalar_lea.vmem [#allocation3], 400
      %v2220 = vld [vmem:[%s2219] ss:$2 sm:$0x3f]
      %s2221 = scalar_lea.vmem [#allocation3], 416
      %v2222 = vld [vmem:[%s2221] ss:$2 sm:$0xff]
      %s2223 = scalar_lea.vmem [#allocation3], 432
      %v2224 = vld [vmem:[%s2223] ss:$2 sm:$0x3f]
      %s2225 = scalar_lea.vmem [#allocation3], 1
      %v2226 = vld [vmem:[%s2225] ss:$2 sm:$0xff]
      %s2227 = scalar_lea.vmem [#allocation3], 17
      %v2228 = vld [vmem:[%s2227] ss:$2 sm:$0x3f]
      %s2229 = scalar_lea.vmem [#allocation3], 33
      %v2230 = vld [vmem:[%s2229] ss:$2 sm:$0xff]
      %s2231 = scalar_lea.vmem [#allocation3], 49
      %v2232 = vld [vmem:[%s2231] ss:$2 sm:$0x3f]
      %s2233 = scalar_lea.vmem [#allocation3], 65
      %v2234 = vld [vmem:[%s2233] ss:$2 sm:$0xff]
      %s2235 = scalar_lea.vmem [#allocation3], 81
      %v2236 = vld [vmem:[%s2235] ss:$2 sm:$0x3f]
      %s2237 = scalar_lea.vmem [#allocation3], 97
      %v2238 = vld [vmem:[%s2237] ss:$2 sm:$0xff]
      %s2239 = scalar_lea.vmem [#allocation3], 113
      %v2240 = vld [vmem:[%s2239] ss:$2 sm:$0x3f]
      %s2241 = scalar_lea.vmem [#allocation3], 129
      %v2242 = vld [vmem:[%s2241] ss:$2 sm:$0xff]
      %s2243 = scalar_lea.vmem [#allocation3], 145
      %v2244 = vld [vmem:[%s2243] ss:$2 sm:$0x3f]
      %s2245 = scalar_lea.vmem [#allocation3], 161
      %v2246 = vld [vmem:[%s2245] ss:$2 sm:$0xff]
      %s2247 = scalar_lea.vmem [#allocation3], 177
      %v2248 = vld [vmem:[%s2247] ss:$2 sm:$0x3f]
      %s2249 = scalar_lea.vmem [#allocation3], 193
      %v2250 = vld [vmem:[%s2249] ss:$2 sm:$0xff]
      %s2251 = scalar_lea.vmem [#allocation3], 209
      %v2252 = vld [vmem:[%s2251] ss:$2 sm:$0x3f]
      %s2253 = scalar_lea.vmem [#allocation3], 225
      %v2254 = vld [vmem:[%s2253] ss:$2 sm:$0xff]
      %s2255 = scalar_lea.vmem [#allocation3], 241
      %v2256 = vld [vmem:[%s2255] ss:$2 sm:$0x3f]
      %s2257 = scalar_lea.vmem [#allocation3], 257
      %v2258 = vld [vmem:[%s2257] ss:$2 sm:$0xff]
      %s2259 = scalar_lea.vmem [#allocation3], 273
      %v2260 = vld [vmem:[%s2259] ss:$2 sm:$0x3f]
      %s2261 = scalar_lea.vmem [#allocation3], 289
      %v2262 = vld [vmem:[%s2261] ss:$2 sm:$0xff]
      %s2263 = scalar_lea.vmem [#allocation3], 305
      %v2264 = vld [vmem:[%s2263] ss:$2 sm:$0x3f]
      %s2265 = scalar_lea.vmem [#allocation3], 321
      %v2266 = vld [vmem:[%s2265] ss:$2 sm:$0xff]
      %s2267 = scalar_lea.vmem [#allocation3], 337
      %v2268 = vld [vmem:[%s2267] ss:$2 sm:$0x3f]
      %s2269 = scalar_lea.vmem [#allocation3], 353
      %v2270 = vld [vmem:[%s2269] ss:$2 sm:$0xff]
      %s2271 = scalar_lea.vmem [#allocation3], 369
      %v2272 = vld [vmem:[%s2271] ss:$2 sm:$0x3f]
      %s2273 = scalar_lea.vmem [#allocation3], 385
      %v2274 = vld [vmem:[%s2273] ss:$2 sm:$0xff]
      %s2275 = scalar_lea.vmem [#allocation3], 401
      %v2276 = vld [vmem:[%s2275] ss:$2 sm:$0x3f]
      %s2277 = scalar_lea.vmem [#allocation3], 417
      %v2278 = vld [vmem:[%s2277] ss:$2 sm:$0xff]
      %s2279 = scalar_lea.vmem [#allocation3], 433
      %v2280 = vld [vmem:[%s2279] ss:$2 sm:$0x3f]
      %v2281 = vadd.f32 %v2170, %v2226
      %v2282 = vadd.f32 %v2172, %v2228
      %v2283 = vadd.f32 %v2174, %v2230
      %v2284 = vadd.f32 %v2176, %v2232
      %v2285 = vadd.f32 %v2178, %v2234
      %v2286 = vadd.f32 %v2180, %v2236
      %v2287 = vadd.f32 %v2182, %v2238
      %v2288 = vadd.f32 %v2184, %v2240
      %v2289 = vadd.f32 %v2186, %v2242
      %v2290 = vadd.f32 %v2188, %v2244
      %v2291 = vadd.f32 %v2190, %v2246
      %v2292 = vadd.f32 %v2192, %v2248
      %v2293 = vadd.f32 %v2194, %v2250
      %v2294 = vadd.f32 %v2196, %v2252
      %v2295 = vadd.f32 %v2198, %v2254
      %v2296 = vadd.f32 %v2200, %v2256
      %v2297 = vadd.f32 %v2202, %v2258
      %v2298 = vadd.f32 %v2204, %v2260
      %v2299 = vadd.f32 %v2206, %v2262
      %v2300 = vadd.f32 %v2208, %v2264
      %v2301 = vadd.f32 %v2210, %v2266
      %v2302 = vadd.f32 %v2212, %v2268
      %v2303 = vadd.f32 %v2214, %v2270
      %v2304 = vadd.f32 %v2216, %v2272
      %v2305 = vadd.f32 %v2218, %v2274
      %v2306 = vadd.f32 %v2220, %v2276
      %v2307 = vadd.f32 %v2222, %v2278
      %v2308 = vadd.f32 %v2224, %v2280
      %v2309 = vmul.f32 %v2281, 0.25
      %v2310 = vmul.f32 %v2282, 0.25
      %v2311 = vmul.f32 %v2283, 0.25
      %v2312 = vmul.f32 %v2284, 0.25
      %v2313 = vmul.f32 %v2285, 0.25
      %v2314 = vmul.f32 %v2286, 0.25
      %v2315 = vmul.f32 %v2287, 0.25
      %v2316 = vmul.f32 %v2288, 0.25
      %v2317 = vmul.f32 %v2289, 0.25
      %v2318 = vmul.f32 %v2290, 0.25
      %v2319 = vmul.f32 %v2291, 0.25
      %v2320 = vmul.f32 %v2292, 0.25
      %v2321 = vmul.f32 %v2293, 0.25
      %v2322 = vmul.f32 %v2294, 0.25
      %v2323 = vmul.f32 %v2295, 0.25
      %v2324 = vmul.f32 %v2296, 0.25
      %v2325 = vmul.f32 %v2297, 0.25
      %v2326 = vmul.f32 %v2298, 0.25
      %v2327 = vmul.f32 %v2299, 0.25
      %v2328 = vmul.f32 %v2300, 0.25
      %v2329 = vmul.f32 %v2301, 0.25
      %v2330 = vmul.f32 %v2302, 0.25
      %v2331 = vmul.f32 %v2303, 0.25
      %v2332 = vmul.f32 %v2304, 0.25
      %v2333 = vmul.f32 %v2305, 0.25
      %v2334 = vmul.f32 %v2306, 0.25
      %v2335 = vmul.f32 %v2307, 0.25
      %v2336 = vmul.f32 %v2308, 0.25
      %s2337 = smul.u32 %s89, 224
      %s2338 = scalar_lea.vmem [#allocation2], %s2337
      %2339 = vst [vmem:[%s2338] sm:$0xff] %v2309
      %2340 = vst [vmem:[%s2338 + $0x8] sm:$0x3f] %v2310
      %2341 = vst [vmem:[%s2338 + $0x10] sm:$0xff] %v2311
      %2342 = vst [vmem:[%s2338 + $0x18] sm:$0x3f] %v2312
      %2343 = vst [vmem:[%s2338 + $0x20] sm:$0xff] %v2313
      %2344 = vst [vmem:[%s2338 + $0x28] sm:$0x3f] %v2314
      %2345 = vst [vmem:[%s2338 + $0x30] sm:$0xff] %v2315
      %2346 = vst [vmem:[%s2338 + $0x38] sm:$0x3f] %v2316
      %2347 = vst [vmem:[%s2338 + $0x40] sm:$0xff] %v2317
      %2348 = vst [vmem:[%s2338 + $0x48] sm:$0x3f] %v2318
      %2349 = vst [vmem:[%s2338 + $0x50] sm:$0xff] %v2319
      %2350 = vst [vmem:[%s2338 + $0x58] sm:$0x3f] %v2320
      %2351 = vst [vmem:[%s2338 + $0x60] sm:$0xff] %v2321
      %2352 = vst [vmem:[%s2338 + $0x68] sm:$0x3f] %v2322
      %2353 = vst [vmem:[%s2338 + $0x70] sm:$0xff] %v2323
      %2354 = vst [vmem:[%s2338 + $0x78] sm:$0x3f] %v2324
      %2355 = vst [vmem:[%s2338 + $0x80] sm:$0xff] %v2325
      %2356 = vst [vmem:[%s2338 + $0x88] sm:$0x3f] %v2326
      %2357 = vst [vmem:[%s2338 + $0x90] sm:$0xff] %v2327
      %2358 = vst [vmem:[%s2338 + $0x98] sm:$0x3f] %v2328
      %2359 = vst [vmem:[%s2338 + $0xa0] sm:$0xff] %v2329
      %2360 = vst [vmem:[%s2338 + $0xa8] sm:$0x3f] %v2330
      %2361 = vst [vmem:[%s2338 + $0xb0] sm:$0xff] %v2331
      %2362 = vst [vmem:[%s2338 + $0xb8] sm:$0x3f] %v2332
      %2363 = vst [vmem:[%s2338 + $0xc0] sm:$0xff] %v2333
      %2364 = vst [vmem:[%s2338 + $0xc8] sm:$0x3f] %v2334
      %2365 = vst [vmem:[%s2338 + $0xd0] sm:$0xff] %v2335
      %2366 = vst [vmem:[%s2338 + $0xd8] sm:$0x3f] %v2336
    $region66: #{lenet5_forward.1} parent=1 // loop_footer
      %s93 = sadd.s32 1, %s89
    $region67: #{lenet5_forward.1} parent=1 // loop_footer_branch
      %88 = sbr.rel target = $region63
    $region68: #{lenet5_forward.1} parent=1 // loop_exit
      _
    loop: start=0, step=1, limit=16
    $region76: #{lenet5_forward.1} parent=1 // loop_pre_header
      _
    $region77: #{lenet5_forward.1} parent=1 // loop_header
      %s2368 = sphi 0, %s2372
      %p2369 = scmp.ge.s32.totalorder %s2368, 16
    $region78: #{lenet5_forward.1} parent=1 // loop_header_branch
      %2371 = sbr.rel (%p2369) target = $region82
    $region79: #{lenet5_forward.1} parent=1 // loop_body
      %s2373 = sld [smem:[#allocation12 + %s2368]]
      %v2374 = vstv %s2373
      loop: start=0, step=1, limit=6
      $region83: #{lenet5_forward.1} parent=79 // loop_pre_header
        _
      $region84: #{lenet5_forward.1} parent=79 // loop_header
        %s2376 = sphi 0, %s2380
        %p2377 = scmp.ge.s32.totalorder %s2376, 6
        %v2381 = vphi %v2374, %v4172
        %v2382 = vphi %v2374, %v4173
        %v2383 = vphi %v2374, %v4174
        %v2384 = vphi %v2374, %v4175
        %v2385 = vphi %v2374, %v4176
        %v2386 = vphi %v2374, %v4177
        %v2387 = vphi %v2374, %v4178
        %v2388 = vphi %v2374, %v4179
        %v2389 = vphi %v2374, %v4180
        %v2390 = vphi %v2374, %v4181
        %v2391 = vphi %v2374, %v4182
        %v2392 = vphi %v2374, %v4183
        %v2393 = vphi %v2374, %v4184
        %v2394 = vphi %v2374, %v4185
        %v2395 = vphi %v2374, %v4186
        %v2396 = vphi %v2374, %v4187
        %v2397 = vphi %v2374, %v4188
        %v2398 = vphi %v2374, %v4189
        %v2399 = vphi %v2374, %v4190
        %v2400 = vphi %v2374, %v4191
      $region85: #{lenet5_forward.1} parent=79 // loop_header_branch
        %2379 = sbr.rel (%p2377) target = $region89
      $region86: #{lenet5_forward.1} parent=79 // loop_body
        %s2401 = smul.u32 %s2376, 25
        %s2402 = sshra.s32 %s2401, 7
        %s2403 = sand.u32 %s2401, 127
        %s2404 = sshra.s32 %s2368, 3
        %s2405 = sand.u32 %s2368, 7
        %s2406 = smul.u32 %s2404, 2
        %s2407 = sadd.s32 %s2402, %s2406
        %s2408 = smul.u32 %s2407, 1024
        %s2409 = sshra.s32 %s2368, 3
        %s2410 = sand.u32 %s2368, 7
        %s2411 = sshra.s32 %s2401, 7
        %s2412 = sand.u32 %s2401, 127
        %s2413 = smul.u32 %s2410, 128
        %s2414 = sadd.s32 %s2413, %s2412
        %s2415 = sadd.s32 %s2408, %s2414
        %s2416 = sld [smem:[#allocation11 + %s2415]]
        %s2417 = smul.u32 %s2376, 224
        %s2418 = scalar_lea.vmem [#allocation2], %s2417
        %v2419 = vld [vmem:[%s2418] sm:$0xff]
        %v2420 = vld [vmem:[%s2418 + $0x8] sm:$0x3]
        %v2421 = vld [vmem:[%s2418 + $0x10] sm:$0xff]
        %v2422 = vld [vmem:[%s2418 + $0x18] sm:$0x3]
        %v2423 = vld [vmem:[%s2418 + $0x20] sm:$0xff]
        %v2424 = vld [vmem:[%s2418 + $0x28] sm:$0x3]
        %v2425 = vld [vmem:[%s2418 + $0x30] sm:$0xff]
        %v2426 = vld [vmem:[%s2418 + $0x38] sm:$0x3]
        %v2427 = vld [vmem:[%s2418 + $0x40] sm:$0xff]
        %v2428 = vld [vmem:[%s2418 + $0x48] sm:$0x3]
        %v2429 = vld [vmem:[%s2418 + $0x50] sm:$0xff]
        %v2430 = vld [vmem:[%s2418 + $0x58] sm:$0x3]
        %v2431 = vld [vmem:[%s2418 + $0x60] sm:$0xff]
        %v2432 = vld [vmem:[%s2418 + $0x68] sm:$0x3]
        %v2433 = vld [vmem:[%s2418 + $0x70] sm:$0xff]
        %v2434 = vld [vmem:[%s2418 + $0x78] sm:$0x3]
        %v2435 = vld [vmem:[%s2418 + $0x80] sm:$0xff]
        %v2436 = vld [vmem:[%s2418 + $0x88] sm:$0x3]
        %v2437 = vld [vmem:[%s2418 + $0x90] sm:$0xff]
        %v2438 = vld [vmem:[%s2418 + $0x98] sm:$0x3]
        %v2439 = vstv %s2416
        %v2440 = vmul.f32 %v2439, %v2419
        %v2441 = vmul.f32 %v2439, %v2420
        %v2442 = vmul.f32 %v2439, %v2421
        %v2443 = vmul.f32 %v2439, %v2422
        %v2444 = vmul.f32 %v2439, %v2423
        %v2445 = vmul.f32 %v2439, %v2424
        %v2446 = vmul.f32 %v2439, %v2425
        %v2447 = vmul.f32 %v2439, %v2426
        %v2448 = vmul.f32 %v2439, %v2427
        %v2449 = vmul.f32 %v2439, %v2428
        %v2450 = vmul.f32 %v2439, %v2429
        %v2451 = vmul.f32 %v2439, %v2430
        %v2452 = vmul.f32 %v2439, %v2431
        %v2453 = vmul.f32 %v2439, %v2432
        %v2454 = vmul.f32 %v2439, %v2433
        %v2455 = vmul.f32 %v2439, %v2434
        %v2456 = vmul.f32 %v2439, %v2435
        %v2457 = vmul.f32 %v2439, %v2436
        %v2458 = vmul.f32 %v2439, %v2437
        %v2459 = vmul.f32 %v2439, %v2438
        %v2460 = vadd.f32 %v2381, %v2440
        %v2461 = vadd.f32 %v2382, %v2441
        %v2462 = vadd.f32 %v2383, %v2442
        %v2463 = vadd.f32 %v2384, %v2443
        %v2464 = vadd.f32 %v2385, %v2444
        %v2465 = vadd.f32 %v2386, %v2445
        %v2466 = vadd.f32 %v2387, %v2446
        %v2467 = vadd.f32 %v2388, %v2447
        %v2468 = vadd.f32 %v2389, %v2448
        %v2469 = vadd.f32 %v2390, %v2449
        %v2470 = vadd.f32 %v2391, %v2450
        %v2471 = vadd.f32 %v2392, %v2451
        %v2472 = vadd.f32 %v2393, %v2452
        %v2473 = vadd.f32 %v2394, %v2453
        %v2474 = vadd.f32 %v2395, %v2454
        %v2475 = vadd.f32 %v2396, %v2455
        %v2476 = vadd.f32 %v2397, %v2456
        %v2477 = vadd.f32 %v2398, %v2457
        %v2478 = vadd.f32 %v2399, %v2458
        %v2479 = vadd.f32 %v2400, %v2459
        %s2480 = sadd.s32 %s2401, 1
        %s2481 = sshra.s32 %s2480, 7
        %s2482 = sand.u32 %s2480, 127
        %s2483 = sadd.s32 %s2481, %s2406
        %s2484 = smul.u32 %s2483, 1024
        %s2485 = sshra.s32 %s2480, 7
        %s2486 = sand.u32 %s2480, 127
        %s2487 = sadd.s32 %s2413, %s2486
        %s2488 = sadd.s32 %s2484, %s2487
        %s2489 = sld [smem:[#allocation11 + %s2488]]
        %v2490 = vld [vmem:[%s2418 + $0x1] sm:$0xff]
        %v2491 = vld [vmem:[%s2418 + $0x9] sm:$0x3]
        %v2492 = vld [vmem:[%s2418 + $0x11] sm:$0xff]
        %v2493 = vld [vmem:[%s2418 + $0x19] sm:$0x3]
        %v2494 = vld [vmem:[%s2418 + $0x21] sm:$0xff]
        %v2495 = vld [vmem:[%s2418 + $0x29] sm:$0x3]
        %v2496 = vld [vmem:[%s2418 + $0x31] sm:$0xff]
        %v2497 = vld [vmem:[%s2418 + $0x39] sm:$0x3]
        %v2498 = vld [vmem:[%s2418 + $0x41] sm:$0xff]
        %v2499 = vld [vmem:[%s2418 + $0x49] sm:$0x3]
        %v2500 = vld [vmem:[%s2418 + $0x51] sm:$0xff]
        %v2501 = vld [vmem:[%s2418 + $0x59] sm:$0x3]
        %v2502 = vld [vmem:[%s2418 + $0x61] sm:$0xff]
        %v2503 = vld [vmem:[%s2418 + $0x69] sm:$0x3]
        %v2504 = vld [vmem:[%s2418 + $0x71] sm:$0xff]
        %v2505 = vld [vmem:[%s2418 + $0x79] sm:$0x3]
        %v2506 = vld [vmem:[%s2418 + $0x81] sm:$0xff]
        %v2507 = vld [vmem:[%s2418 + $0x89] sm:$0x3]
        %v2508 = vld [vmem:[%s2418 + $0x91] sm:$0xff]
        %v2509 = vld [vmem:[%s2418 + $0x99] sm:$0x3]
        %v2510 = vstv %s2489
        %v2511 = vmul.f32 %v2510, %v2490
        %v2512 = vmul.f32 %v2510, %v2491
        %v2513 = vmul.f32 %v2510, %v2492
        %v2514 = vmul.f32 %v2510, %v2493
        %v2515 = vmul.f32 %v2510, %v2494
        %v2516 = vmul.f32 %v2510, %v2495
        %v2517 = vmul.f32 %v2510, %v2496
        %v2518 = vmul.f32 %v2510, %v2497
        %v2519 = vmul.f32 %v2510, %v2498
        %v2520 = vmul.f32 %v2510, %v2499
        %v2521 = vmul.f32 %v2510, %v2500
        %v2522 = vmul.f32 %v2510, %v2501
        %v2523 = vmul.f32 %v2510, %v2502
        %v2524 = vmul.f32 %v2510, %v2503
        %v2525 = vmul.f32 %v2510, %v2504
        %v2526 = vmul.f32 %v2510, %v2505
        %v2527 = vmul.f32 %v2510, %v2506
        %v2528 = vmul.f32 %v2510, %v2507
        %v2529 = vmul.f32 %v2510, %v2508
        %v2530 = vmul.f32 %v2510, %v2509
        %v2531 = vadd.f32 %v2460, %v2511
        %v2532 = vadd.f32 %v2461, %v2512
        %v2533 = vadd.f32 %v2462, %v2513
        %v2534 = vadd.f32 %v2463, %v2514
        %v2535 = vadd.f32 %v2464, %v2515
        %v2536 = vadd.f32 %v2465, %v2516
        %v2537 = vadd.f32 %v2466, %v2517
        %v2538 = vadd.f32 %v2467, %v2518
        %v2539 = vadd.f32 %v2468, %v2519
        %v2540 = vadd.f32 %v2469, %v2520
        %v2541 = vadd.f32 %v2470, %v2521
        %v2542 = vadd.f32 %v2471, %v2522
        %v2543 = vadd.f32 %v2472, %v2523
        %v2544 = vadd.f32 %v2473, %v2524
        %v2545 = vadd.f32 %v2474, %v2525
        %v2546 = vadd.f32 %v2475, %v2526
        %v2547 = vadd.f32 %v2476, %v2527
        %v2548 = vadd.f32 %v2477, %v2528
        %v2549 = vadd.f32 %v2478, %v2529
        %v2550 = vadd.f32 %v2479, %v2530
        %s2551 = sadd.s32 %s2401, 2
        %s2552 = sshra.s32 %s2551, 7
        %s2553 = sand.u32 %s2551, 127
        %s2554 = sadd.s32 %s2552, %s2406
        %s2555 = smul.u32 %s2554, 1024
        %s2556 = sshra.s32 %s2551, 7
        %s2557 = sand.u32 %s2551, 127
        %s2558 = sadd.s32 %s2413, %s2557
        %s2559 = sadd.s32 %s2555, %s2558
        %s2560 = sld [smem:[#allocation11 + %s2559]]
        %v2561 = vld [vmem:[%s2418 + $0x2] sm:$0xff]
        %v2562 = vld [vmem:[%s2418 + $0xa] sm:$0x3]
        %v2563 = vld [vmem:[%s2418 + $0x12] sm:$0xff]
        %v2564 = vld [vmem:[%s2418 + $0x1a] sm:$0x3]
        %v2565 = vld [vmem:[%s2418 + $0x22] sm:$0xff]
        %v2566 = vld [vmem:[%s2418 + $0x2a] sm:$0x3]
        %v2567 = vld [vmem:[%s2418 + $0x32] sm:$0xff]
        %v2568 = vld [vmem:[%s2418 + $0x3a] sm:$0x3]
        %v2569 = vld [vmem:[%s2418 + $0x42] sm:$0xff]
        %v2570 = vld [vmem:[%s2418 + $0x4a] sm:$0x3]
        %v2571 = vld [vmem:[%s2418 + $0x52] sm:$0xff]
        %v2572 = vld [vmem:[%s2418 + $0x5a] sm:$0x3]
        %v2573 = vld [vmem:[%s2418 + $0x62] sm:$0xff]
        %v2574 = vld [vmem:[%s2418 + $0x6a] sm:$0x3]
        %v2575 = vld [vmem:[%s2418 + $0x72] sm:$0xff]
        %v2576 = vld [vmem:[%s2418 + $0x7a] sm:$0x3]
        %v2577 = vld [vmem:[%s2418 + $0x82] sm:$0xff]
        %v2578 = vld [vmem:[%s2418 + $0x8a] sm:$0x3]
        %v2579 = vld [vmem:[%s2418 + $0x92] sm:$0xff]
        %v2580 = vld [vmem:[%s2418 + $0x9a] sm:$0x3]
        %v2581 = vstv %s2560
        %v2582 = vmul.f32 %v2581, %v2561
        %v2583 = vmul.f32 %v2581, %v2562
        %v2584 = vmul.f32 %v2581, %v2563
        %v2585 = vmul.f32 %v2581, %v2564
        %v2586 = vmul.f32 %v2581, %v2565
        %v2587 = vmul.f32 %v2581, %v2566
        %v2588 = vmul.f32 %v2581, %v2567
        %v2589 = vmul.f32 %v2581, %v2568
        %v2590 = vmul.f32 %v2581, %v2569
        %v2591 = vmul.f32 %v2581, %v2570
        %v2592 = vmul.f32 %v2581, %v2571
        %v2593 = vmul.f32 %v2581, %v2572
        %v2594 = vmul.f32 %v2581, %v2573
        %v2595 = vmul.f32 %v2581, %v2574
        %v2596 = vmul.f32 %v2581, %v2575
        %v2597 = vmul.f32 %v2581, %v2576
        %v2598 = vmul.f32 %v2581, %v2577
        %v2599 = vmul.f32 %v2581, %v2578
        %v2600 = vmul.f32 %v2581, %v2579
        %v2601 = vmul.f32 %v2581, %v2580
        %v2602 = vadd.f32 %v2531, %v2582
        %v2603 = vadd.f32 %v2532, %v2583
        %v2604 = vadd.f32 %v2533, %v2584
        %v2605 = vadd.f32 %v2534, %v2585
        %v2606 = vadd.f32 %v2535, %v2586
        %v2607 = vadd.f32 %v2536, %v2587
        %v2608 = vadd.f32 %v2537, %v2588
        %v2609 = vadd.f32 %v2538, %v2589
        %v2610 = vadd.f32 %v2539, %v2590
        %v2611 = vadd.f32 %v2540, %v2591
        %v2612 = vadd.f32 %v2541, %v2592
        %v2613 = vadd.f32 %v2542, %v2593
        %v2614 = vadd.f32 %v2543, %v2594
        %v2615 = vadd.f32 %v2544, %v2595
        %v2616 = vadd.f32 %v2545, %v2596
        %v2617 = vadd.f32 %v2546, %v2597
        %v2618 = vadd.f32 %v2547, %v2598
        %v2619 = vadd.f32 %v2548, %v2599
        %v2620 = vadd.f32 %v2549, %v2600
        %v2621 = vadd.f32 %v2550, %v2601
        %s2622 = sadd.s32 %s2401, 3
        %s2623 = sshra.s32 %s2622, 7
        %s2624 = sand.u32 %s2622, 127
        %s2625 = sadd.s32 %s2623, %s2406
        %s2626 = smul.u32 %s2625, 1024
        %s2627 = sshra.s32 %s2622, 7
        %s2628 = sand.u32 %s2622, 127
        %s2629 = sadd.s32 %s2413, %s2628
        %s2630 = sadd.s32 %s2626, %s2629
        %s2631 = sld [smem:[#allocation11 + %s2630]]
        %v2632 = vld [vmem:[%s2418 + $0x3] sm:$0xff]
        %v2633 = vld [vmem:[%s2418 + $0xb] sm:$0x3]
        %v2634 = vld [vmem:[%s2418 + $0x13] sm:$0xff]
        %v2635 = vld [vmem:[%s2418 + $0x1b] sm:$0x3]
        %v2636 = vld [vmem:[%s2418 + $0x23] sm:$0xff]
        %v2637 = vld [vmem:[%s2418 + $0x2b] sm:$0x3]
        %v2638 = vld [vmem:[%s2418 + $0x33] sm:$0xff]
        %v2639 = vld [vmem:[%s2418 + $0x3b] sm:$0x3]
        %v2640 = vld [vmem:[%s2418 + $0x43] sm:$0xff]
        %v2641 = vld [vmem:[%s2418 + $0x4b] sm:$0x3]
        %v2642 = vld [vmem:[%s2418 + $0x53] sm:$0xff]
        %v2643 = vld [vmem:[%s2418 + $0x5b] sm:$0x3]
        %v2644 = vld [vmem:[%s2418 + $0x63] sm:$0xff]
        %v2645 = vld [vmem:[%s2418 + $0x6b] sm:$0x3]
        %v2646 = vld [vmem:[%s2418 + $0x73] sm:$0xff]
        %v2647 = vld [vmem:[%s2418 + $0x7b] sm:$0x3]
        %v2648 = vld [vmem:[%s2418 + $0x83] sm:$0xff]
        %v2649 = vld [vmem:[%s2418 + $0x8b] sm:$0x3]
        %v2650 = vld [vmem:[%s2418 + $0x93] sm:$0xff]
        %v2651 = vld [vmem:[%s2418 + $0x9b] sm:$0x3]
        %v2652 = vstv %s2631
        %v2653 = vmul.f32 %v2652, %v2632
        %v2654 = vmul.f32 %v2652, %v2633
        %v2655 = vmul.f32 %v2652, %v2634
        %v2656 = vmul.f32 %v2652, %v2635
        %v2657 = vmul.f32 %v2652, %v2636
        %v2658 = vmul.f32 %v2652, %v2637
        %v2659 = vmul.f32 %v2652, %v2638
        %v2660 = vmul.f32 %v2652, %v2639
        %v2661 = vmul.f32 %v2652, %v2640
        %v2662 = vmul.f32 %v2652, %v2641
        %v2663 = vmul.f32 %v2652, %v2642
        %v2664 = vmul.f32 %v2652, %v2643
        %v2665 = vmul.f32 %v2652, %v2644
        %v2666 = vmul.f32 %v2652, %v2645
        %v2667 = vmul.f32 %v2652, %v2646
        %v2668 = vmul.f32 %v2652, %v2647
        %v2669 = vmul.f32 %v2652, %v2648
        %v2670 = vmul.f32 %v2652, %v2649
        %v2671 = vmul.f32 %v2652, %v2650
        %v2672 = vmul.f32 %v2652, %v2651
        %v2673 = vadd.f32 %v2602, %v2653
        %v2674 = vadd.f32 %v2603, %v2654
        %v2675 = vadd.f32 %v2604, %v2655
        %v2676 = vadd.f32 %v2605, %v2656
        %v2677 = vadd.f32 %v2606, %v2657
        %v2678 = vadd.f32 %v2607, %v2658
        %v2679 = vadd.f32 %v2608, %v2659
        %v2680 = vadd.f32 %v2609, %v2660
        %v2681 = vadd.f32 %v2610, %v2661
        %v2682 = vadd.f32 %v2611, %v2662
        %v2683 = vadd.f32 %v2612, %v2663
        %v2684 = vadd.f32 %v2613, %v2664
        %v2685 = vadd.f32 %v2614, %v2665
        %v2686 = vadd.f32 %v2615, %v2666
        %v2687 = vadd.f32 %v2616, %v2667
        %v2688 = vadd.f32 %v2617, %v2668
        %v2689 = vadd.f32 %v2618, %v2669
        %v2690 = vadd.f32 %v2619, %v2670
        %v2691 = vadd.f32 %v2620, %v2671
        %v2692 = vadd.f32 %v2621, %v2672
        %s2693 = sadd.s32 %s2401, 4
        %s2694 = sshra.s32 %s2693, 7
        %s2695 = sand.u32 %s2693, 127
        %s2696 = sadd.s32 %s2694, %s2406
        %s2697 = smul.u32 %s2696, 1024
        %s2698 = sshra.s32 %s2693, 7
        %s2699 = sand.u32 %s2693, 127
        %s2700 = sadd.s32 %s2413, %s2699
        %s2701 = sadd.s32 %s2697, %s2700
        %s2702 = sld [smem:[#allocation11 + %s2701]]
        %v2703 = vld [vmem:[%s2418 + $0x4] sm:$0xff]
        %v2704 = vld [vmem:[%s2418 + $0xc] sm:$0x3]
        %v2705 = vld [vmem:[%s2418 + $0x14] sm:$0xff]
        %v2706 = vld [vmem:[%s2418 + $0x1c] sm:$0x3]
        %v2707 = vld [vmem:[%s2418 + $0x24] sm:$0xff]
        %v2708 = vld [vmem:[%s2418 + $0x2c] sm:$0x3]
        %v2709 = vld [vmem:[%s2418 + $0x34] sm:$0xff]
        %v2710 = vld [vmem:[%s2418 + $0x3c] sm:$0x3]
        %v2711 = vld [vmem:[%s2418 + $0x44] sm:$0xff]
        %v2712 = vld [vmem:[%s2418 + $0x4c] sm:$0x3]
        %v2713 = vld [vmem:[%s2418 + $0x54] sm:$0xff]
        %v2714 = vld [vmem:[%s2418 + $0x5c] sm:$0x3]
        %v2715 = vld [vmem:[%s2418 + $0x64] sm:$0xff]
        %v2716 = vld [vmem:[%s2418 + $0x6c] sm:$0x3]
        %v2717 = vld [vmem:[%s2418 + $0x74] sm:$0xff]
        %v2718 = vld [vmem:[%s2418 + $0x7c] sm:$0x3]
        %v2719 = vld [vmem:[%s2418 + $0x84] sm:$0xff]
        %v2720 = vld [vmem:[%s2418 + $0x8c] sm:$0x3]
        %v2721 = vld [vmem:[%s2418 + $0x94] sm:$0xff]
        %v2722 = vld [vmem:[%s2418 + $0x9c] sm:$0x3]
        %v2723 = vstv %s2702
        %v2724 = vmul.f32 %v2723, %v2703
        %v2725 = vmul.f32 %v2723, %v2704
        %v2726 = vmul.f32 %v2723, %v2705
        %v2727 = vmul.f32 %v2723, %v2706
        %v2728 = vmul.f32 %v2723, %v2707
        %v2729 = vmul.f32 %v2723, %v2708
        %v2730 = vmul.f32 %v2723, %v2709
        %v2731 = vmul.f32 %v2723, %v2710
        %v2732 = vmul.f32 %v2723, %v2711
        %v2733 = vmul.f32 %v2723, %v2712
        %v2734 = vmul.f32 %v2723, %v2713
        %v2735 = vmul.f32 %v2723, %v2714
        %v2736 = vmul.f32 %v2723, %v2715
        %v2737 = vmul.f32 %v2723, %v2716
        %v2738 = vmul.f32 %v2723, %v2717
        %v2739 = vmul.f32 %v2723, %v2718
        %v2740 = vmul.f32 %v2723, %v2719
        %v2741 = vmul.f32 %v2723, %v2720
        %v2742 = vmul.f32 %v2723, %v2721
        %v2743 = vmul.f32 %v2723, %v2722
        %v2744 = vadd.f32 %v2673, %v2724
        %v2745 = vadd.f32 %v2674, %v2725
        %v2746 = vadd.f32 %v2675, %v2726
        %v2747 = vadd.f32 %v2676, %v2727
        %v2748 = vadd.f32 %v2677, %v2728
        %v2749 = vadd.f32 %v2678, %v2729
        %v2750 = vadd.f32 %v2679, %v2730
        %v2751 = vadd.f32 %v2680, %v2731
        %v2752 = vadd.f32 %v2681, %v2732
        %v2753 = vadd.f32 %v2682, %v2733
        %v2754 = vadd.f32 %v2683, %v2734
        %v2755 = vadd.f32 %v2684, %v2735
        %v2756 = vadd.f32 %v2685, %v2736
        %v2757 = vadd.f32 %v2686, %v2737
        %v2758 = vadd.f32 %v2687, %v2738
        %v2759 = vadd.f32 %v2688, %v2739
        %v2760 = vadd.f32 %v2689, %v2740
        %v2761 = vadd.f32 %v2690, %v2741
        %v2762 = vadd.f32 %v2691, %v2742
        %v2763 = vadd.f32 %v2692, %v2743
        %s2764 = sadd.s32 %s2401, 5
        %s2765 = sshra.s32 %s2764, 7
        %s2766 = sand.u32 %s2764, 127
        %s2767 = sadd.s32 %s2765, %s2406
        %s2768 = smul.u32 %s2767, 1024
        %s2769 = sshra.s32 %s2764, 7
        %s2770 = sand.u32 %s2764, 127
        %s2771 = sadd.s32 %s2413, %s2770
        %s2772 = sadd.s32 %s2768, %s2771
        %s2773 = sld [smem:[#allocation11 + %s2772]]
        %s2774 = sadd.s32 16, %s2417
        %s2775 = scalar_lea.vmem [#allocation2], %s2774
        %v2776 = vld [vmem:[%s2775] sm:$0xff]
        %v2777 = vld [vmem:[%s2775 + $0x8] sm:$0x3]
        %v2778 = vld [vmem:[%s2775 + $0x10] sm:$0xff]
        %v2779 = vld [vmem:[%s2775 + $0x18] sm:$0x3]
        %v2780 = vld [vmem:[%s2775 + $0x20] sm:$0xff]
        %v2781 = vld [vmem:[%s2775 + $0x28] sm:$0x3]
        %v2782 = vld [vmem:[%s2775 + $0x30] sm:$0xff]
        %v2783 = vld [vmem:[%s2775 + $0x38] sm:$0x3]
        %v2784 = vld [vmem:[%s2775 + $0x40] sm:$0xff]
        %v2785 = vld [vmem:[%s2775 + $0x48] sm:$0x3]
        %v2786 = vld [vmem:[%s2775 + $0x50] sm:$0xff]
        %v2787 = vld [vmem:[%s2775 + $0x58] sm:$0x3]
        %v2788 = vld [vmem:[%s2775 + $0x60] sm:$0xff]
        %v2789 = vld [vmem:[%s2775 + $0x68] sm:$0x3]
        %v2790 = vld [vmem:[%s2775 + $0x70] sm:$0xff]
        %v2791 = vld [vmem:[%s2775 + $0x78] sm:$0x3]
        %v2792 = vld [vmem:[%s2775 + $0x80] sm:$0xff]
        %v2793 = vld [vmem:[%s2775 + $0x88] sm:$0x3]
        %v2794 = vld [vmem:[%s2775 + $0x90] sm:$0xff]
        %v2795 = vld [vmem:[%s2775 + $0x98] sm:$0x3]
        %v2796 = vstv %s2773
        %v2797 = vmul.f32 %v2796, %v2776
        %v2798 = vmul.f32 %v2796, %v2777
        %v2799 = vmul.f32 %v2796, %v2778
        %v2800 = vmul.f32 %v2796, %v2779
        %v2801 = vmul.f32 %v2796, %v2780
        %v2802 = vmul.f32 %v2796, %v2781
        %v2803 = vmul.f32 %v2796, %v2782
        %v2804 = vmul.f32 %v2796, %v2783
        %v2805 = vmul.f32 %v2796, %v2784
        %v2806 = vmul.f32 %v2796, %v2785
        %v2807 = vmul.f32 %v2796, %v2786
        %v2808 = vmul.f32 %v2796, %v2787
        %v2809 = vmul.f32 %v2796, %v2788
        %v2810 = vmul.f32 %v2796, %v2789
        %v2811 = vmul.f32 %v2796, %v2790
        %v2812 = vmul.f32 %v2796, %v2791
        %v2813 = vmul.f32 %v2796, %v2792
        %v2814 = vmul.f32 %v2796, %v2793
        %v2815 = vmul.f32 %v2796, %v2794
        %v2816 = vmul.f32 %v2796, %v2795
        %v2817 = vadd.f32 %v2744, %v2797
        %v2818 = vadd.f32 %v2745, %v2798
        %v2819 = vadd.f32 %v2746, %v2799
        %v2820 = vadd.f32 %v2747, %v2800
        %v2821 = vadd.f32 %v2748, %v2801
        %v2822 = vadd.f32 %v2749, %v2802
        %v2823 = vadd.f32 %v2750, %v2803
        %v2824 = vadd.f32 %v2751, %v2804
        %v2825 = vadd.f32 %v2752, %v2805
        %v2826 = vadd.f32 %v2753, %v2806
        %v2827 = vadd.f32 %v2754, %v2807
        %v2828 = vadd.f32 %v2755, %v2808
        %v2829 = vadd.f32 %v2756, %v2809
        %v2830 = vadd.f32 %v2757, %v2810
        %v2831 = vadd.f32 %v2758, %v2811
        %v2832 = vadd.f32 %v2759, %v2812
        %v2833 = vadd.f32 %v2760, %v2813
        %v2834 = vadd.f32 %v2761, %v2814
        %v2835 = vadd.f32 %v2762, %v2815
        %v2836 = vadd.f32 %v2763, %v2816
        %s2837 = sadd.s32 %s2401, 6
        %s2838 = sshra.s32 %s2837, 7
        %s2839 = sand.u32 %s2837, 127
        %s2840 = sadd.s32 %s2838, %s2406
        %s2841 = smul.u32 %s2840, 1024
        %s2842 = sshra.s32 %s2837, 7
        %s2843 = sand.u32 %s2837, 127
        %s2844 = sadd.s32 %s2413, %s2843
        %s2845 = sadd.s32 %s2841, %s2844
        %s2846 = sld [smem:[#allocation11 + %s2845]]
        %v2847 = vld [vmem:[%s2775 + $0x1] sm:$0xff]
        %v2848 = vld [vmem:[%s2775 + $0x9] sm:$0x3]
        %v2849 = vld [vmem:[%s2775 + $0x11] sm:$0xff]
        %v2850 = vld [vmem:[%s2775 + $0x19] sm:$0x3]
        %v2851 = vld [vmem:[%s2775 + $0x21] sm:$0xff]
        %v2852 = vld [vmem:[%s2775 + $0x29] sm:$0x3]
        %v2853 = vld [vmem:[%s2775 + $0x31] sm:$0xff]
        %v2854 = vld [vmem:[%s2775 + $0x39] sm:$0x3]
        %v2855 = vld [vmem:[%s2775 + $0x41] sm:$0xff]
        %v2856 = vld [vmem:[%s2775 + $0x49] sm:$0x3]
        %v2857 = vld [vmem:[%s2775 + $0x51] sm:$0xff]
        %v2858 = vld [vmem:[%s2775 + $0x59] sm:$0x3]
        %v2859 = vld [vmem:[%s2775 + $0x61] sm:$0xff]
        %v2860 = vld [vmem:[%s2775 + $0x69] sm:$0x3]
        %v2861 = vld [vmem:[%s2775 + $0x71] sm:$0xff]
        %v2862 = vld [vmem:[%s2775 + $0x79] sm:$0x3]
        %v2863 = vld [vmem:[%s2775 + $0x81] sm:$0xff]
        %v2864 = vld [vmem:[%s2775 + $0x89] sm:$0x3]
        %v2865 = vld [vmem:[%s2775 + $0x91] sm:$0xff]
        %v2866 = vld [vmem:[%s2775 + $0x99] sm:$0x3]
        %v2867 = vstv %s2846
        %v2868 = vmul.f32 %v2867, %v2847
        %v2869 = vmul.f32 %v2867, %v2848
        %v2870 = vmul.f32 %v2867, %v2849
        %v2871 = vmul.f32 %v2867, %v2850
        %v2872 = vmul.f32 %v2867, %v2851
        %v2873 = vmul.f32 %v2867, %v2852
        %v2874 = vmul.f32 %v2867, %v2853
        %v2875 = vmul.f32 %v2867, %v2854
        %v2876 = vmul.f32 %v2867, %v2855
        %v2877 = vmul.f32 %v2867, %v2856
        %v2878 = vmul.f32 %v2867, %v2857
        %v2879 = vmul.f32 %v2867, %v2858
        %v2880 = vmul.f32 %v2867, %v2859
        %v2881 = vmul.f32 %v2867, %v2860
        %v2882 = vmul.f32 %v2867, %v2861
        %v2883 = vmul.f32 %v2867, %v2862
        %v2884 = vmul.f32 %v2867, %v2863
        %v2885 = vmul.f32 %v2867, %v2864
        %v2886 = vmul.f32 %v2867, %v2865
        %v2887 = vmul.f32 %v2867, %v2866
        %v2888 = vadd.f32 %v2817, %v2868
        %v2889 = vadd.f32 %v2818, %v2869
        %v2890 = vadd.f32 %v2819, %v2870
        %v2891 = vadd.f32 %v2820, %v2871
        %v2892 = vadd.f32 %v2821, %v2872
        %v2893 = vadd.f32 %v2822, %v2873
        %v2894 = vadd.f32 %v2823, %v2874
        %v2895 = vadd.f32 %v2824, %v2875
        %v2896 = vadd.f32 %v2825, %v2876
        %v2897 = vadd.f32 %v2826, %v2877
        %v2898 = vadd.f32 %v2827, %v2878
        %v2899 = vadd.f32 %v2828, %v2879
        %v2900 = vadd.f32 %v2829, %v2880
        %v2901 = vadd.f32 %v2830, %v2881
        %v2902 = vadd.f32 %v2831, %v2882
        %v2903 = vadd.f32 %v2832, %v2883
        %v2904 = vadd.f32 %v2833, %v2884
        %v2905 = vadd.f32 %v2834, %v2885
        %v2906 = vadd.f32 %v2835, %v2886
        %v2907 = vadd.f32 %v2836, %v2887
        %s2908 = sadd.s32 %s2401, 7
        %s2909 = sshra.s32 %s2908, 7
        %s2910 = sand.u32 %s2908, 127
        %s2911 = sadd.s32 %s2909, %s2406
        %s2912 = smul.u32 %s2911, 1024
        %s2913 = sshra.s32 %s2908, 7
        %s2914 = sand.u32 %s2908, 127
        %s2915 = sadd.s32 %s2413, %s2914
        %s2916 = sadd.s32 %s2912, %s2915
        %s2917 = sld [smem:[#allocation11 + %s2916]]
        %v2918 = vld [vmem:[%s2775 + $0x2] sm:$0xff]
        %v2919 = vld [vmem:[%s2775 + $0xa] sm:$0x3]
        %v2920 = vld [vmem:[%s2775 + $0x12] sm:$0xff]
        %v2921 = vld [vmem:[%s2775 + $0x1a] sm:$0x3]
        %v2922 = vld [vmem:[%s2775 + $0x22] sm:$0xff]
        %v2923 = vld [vmem:[%s2775 + $0x2a] sm:$0x3]
        %v2924 = vld [vmem:[%s2775 + $0x32] sm:$0xff]
        %v2925 = vld [vmem:[%s2775 + $0x3a] sm:$0x3]
        %v2926 = vld [vmem:[%s2775 + $0x42] sm:$0xff]
        %v2927 = vld [vmem:[%s2775 + $0x4a] sm:$0x3]
        %v2928 = vld [vmem:[%s2775 + $0x52] sm:$0xff]
        %v2929 = vld [vmem:[%s2775 + $0x5a] sm:$0x3]
        %v2930 = vld [vmem:[%s2775 + $0x62] sm:$0xff]
        %v2931 = vld [vmem:[%s2775 + $0x6a] sm:$0x3]
        %v2932 = vld [vmem:[%s2775 + $0x72] sm:$0xff]
        %v2933 = vld [vmem:[%s2775 + $0x7a] sm:$0x3]
        %v2934 = vld [vmem:[%s2775 + $0x82] sm:$0xff]
        %v2935 = vld [vmem:[%s2775 + $0x8a] sm:$0x3]
        %v2936 = vld [vmem:[%s2775 + $0x92] sm:$0xff]
        %v2937 = vld [vmem:[%s2775 + $0x9a] sm:$0x3]
        %v2938 = vstv %s2917
        %v2939 = vmul.f32 %v2938, %v2918
        %v2940 = vmul.f32 %v2938, %v2919
        %v2941 = vmul.f32 %v2938, %v2920
        %v2942 = vmul.f32 %v2938, %v2921
        %v2943 = vmul.f32 %v2938, %v2922
        %v2944 = vmul.f32 %v2938, %v2923
        %v2945 = vmul.f32 %v2938, %v2924
        %v2946 = vmul.f32 %v2938, %v2925
        %v2947 = vmul.f32 %v2938, %v2926
        %v2948 = vmul.f32 %v2938, %v2927
        %v2949 = vmul.f32 %v2938, %v2928
        %v2950 = vmul.f32 %v2938, %v2929
        %v2951 = vmul.f32 %v2938, %v2930
        %v2952 = vmul.f32 %v2938, %v2931
        %v2953 = vmul.f32 %v2938, %v2932
        %v2954 = vmul.f32 %v2938, %v2933
        %v2955 = vmul.f32 %v2938, %v2934
        %v2956 = vmul.f32 %v2938, %v2935
        %v2957 = vmul.f32 %v2938, %v2936
        %v2958 = vmul.f32 %v2938, %v2937
        %v2959 = vadd.f32 %v2888, %v2939
        %v2960 = vadd.f32 %v2889, %v2940
        %v2961 = vadd.f32 %v2890, %v2941
        %v2962 = vadd.f32 %v2891, %v2942
        %v2963 = vadd.f32 %v2892, %v2943
        %v2964 = vadd.f32 %v2893, %v2944
        %v2965 = vadd.f32 %v2894, %v2945
        %v2966 = vadd.f32 %v2895, %v2946
        %v2967 = vadd.f32 %v2896, %v2947
        %v2968 = vadd.f32 %v2897, %v2948
        %v2969 = vadd.f32 %v2898, %v2949
        %v2970 = vadd.f32 %v2899, %v2950
        %v2971 = vadd.f32 %v2900, %v2951
        %v2972 = vadd.f32 %v2901, %v2952
        %v2973 = vadd.f32 %v2902, %v2953
        %v2974 = vadd.f32 %v2903, %v2954
        %v2975 = vadd.f32 %v2904, %v2955
        %v2976 = vadd.f32 %v2905, %v2956
        %v2977 = vadd.f32 %v2906, %v2957
        %v2978 = vadd.f32 %v2907, %v2958
        %s2979 = sadd.s32 %s2401, 8
        %s2980 = sshra.s32 %s2979, 7
        %s2981 = sand.u32 %s2979, 127
        %s2982 = sadd.s32 %s2980, %s2406
        %s2983 = smul.u32 %s2982, 1024
        %s2984 = sshra.s32 %s2979, 7
        %s2985 = sand.u32 %s2979, 127
        %s2986 = sadd.s32 %s2413, %s2985
        %s2987 = sadd.s32 %s2983, %s2986
        %s2988 = sld [smem:[#allocation11 + %s2987]]
        %v2989 = vld [vmem:[%s2775 + $0x3] sm:$0xff]
        %v2990 = vld [vmem:[%s2775 + $0xb] sm:$0x3]
        %v2991 = vld [vmem:[%s2775 + $0x13] sm:$0xff]
        %v2992 = vld [vmem:[%s2775 + $0x1b] sm:$0x3]
        %v2993 = vld [vmem:[%s2775 + $0x23] sm:$0xff]
        %v2994 = vld [vmem:[%s2775 + $0x2b] sm:$0x3]
        %v2995 = vld [vmem:[%s2775 + $0x33] sm:$0xff]
        %v2996 = vld [vmem:[%s2775 + $0x3b] sm:$0x3]
        %v2997 = vld [vmem:[%s2775 + $0x43] sm:$0xff]
        %v2998 = vld [vmem:[%s2775 + $0x4b] sm:$0x3]
        %v2999 = vld [vmem:[%s2775 + $0x53] sm:$0xff]
        %v3000 = vld [vmem:[%s2775 + $0x5b] sm:$0x3]
        %v3001 = vld [vmem:[%s2775 + $0x63] sm:$0xff]
        %v3002 = vld [vmem:[%s2775 + $0x6b] sm:$0x3]
        %v3003 = vld [vmem:[%s2775 + $0x73] sm:$0xff]
        %v3004 = vld [vmem:[%s2775 + $0x7b] sm:$0x3]
        %v3005 = vld [vmem:[%s2775 + $0x83] sm:$0xff]
        %v3006 = vld [vmem:[%s2775 + $0x8b] sm:$0x3]
        %v3007 = vld [vmem:[%s2775 + $0x93] sm:$0xff]
        %v3008 = vld [vmem:[%s2775 + $0x9b] sm:$0x3]
        %v3009 = vstv %s2988
        %v3010 = vmul.f32 %v3009, %v2989
        %v3011 = vmul.f32 %v3009, %v2990
        %v3012 = vmul.f32 %v3009, %v2991
        %v3013 = vmul.f32 %v3009, %v2992
        %v3014 = vmul.f32 %v3009, %v2993
        %v3015 = vmul.f32 %v3009, %v2994
        %v3016 = vmul.f32 %v3009, %v2995
        %v3017 = vmul.f32 %v3009, %v2996
        %v3018 = vmul.f32 %v3009, %v2997
        %v3019 = vmul.f32 %v3009, %v2998
        %v3020 = vmul.f32 %v3009, %v2999
        %v3021 = vmul.f32 %v3009, %v3000
        %v3022 = vmul.f32 %v3009, %v3001
        %v3023 = vmul.f32 %v3009, %v3002
        %v3024 = vmul.f32 %v3009, %v3003
        %v3025 = vmul.f32 %v3009, %v3004
        %v3026 = vmul.f32 %v3009, %v3005
        %v3027 = vmul.f32 %v3009, %v3006
        %v3028 = vmul.f32 %v3009, %v3007
        %v3029 = vmul.f32 %v3009, %v3008
        %v3030 = vadd.f32 %v2959, %v3010
        %v3031 = vadd.f32 %v2960, %v3011
        %v3032 = vadd.f32 %v2961, %v3012
        %v3033 = vadd.f32 %v2962, %v3013
        %v3034 = vadd.f32 %v2963, %v3014
        %v3035 = vadd.f32 %v2964, %v3015
        %v3036 = vadd.f32 %v2965, %v3016
        %v3037 = vadd.f32 %v2966, %v3017
        %v3038 = vadd.f32 %v2967, %v3018
        %v3039 = vadd.f32 %v2968, %v3019
        %v3040 = vadd.f32 %v2969, %v3020
        %v3041 = vadd.f32 %v2970, %v3021
        %v3042 = vadd.f32 %v2971, %v3022
        %v3043 = vadd.f32 %v2972, %v3023
        %v3044 = vadd.f32 %v2973, %v3024
        %v3045 = vadd.f32 %v2974, %v3025
        %v3046 = vadd.f32 %v2975, %v3026
        %v3047 = vadd.f32 %v2976, %v3027
        %v3048 = vadd.f32 %v2977, %v3028
        %v3049 = vadd.f32 %v2978, %v3029
        %s3050 = sadd.s32 %s2401, 9
        %s3051 = sshra.s32 %s3050, 7
        %s3052 = sand.u32 %s3050, 127
        %s3053 = sadd.s32 %s3051, %s2406
        %s3054 = smul.u32 %s3053, 1024
        %s3055 = sshra.s32 %s3050, 7
        %s3056 = sand.u32 %s3050, 127
        %s3057 = sadd.s32 %s2413, %s3056
        %s3058 = sadd.s32 %s3054, %s3057
        %s3059 = sld [smem:[#allocation11 + %s3058]]
        %v3060 = vld [vmem:[%s2775 + $0x4] sm:$0xff]
        %v3061 = vld [vmem:[%s2775 + $0xc] sm:$0x3]
        %v3062 = vld [vmem:[%s2775 + $0x14] sm:$0xff]
        %v3063 = vld [vmem:[%s2775 + $0x1c] sm:$0x3]
        %v3064 = vld [vmem:[%s2775 + $0x24] sm:$0xff]
        %v3065 = vld [vmem:[%s2775 + $0x2c] sm:$0x3]
        %v3066 = vld [vmem:[%s2775 + $0x34] sm:$0xff]
        %v3067 = vld [vmem:[%s2775 + $0x3c] sm:$0x3]
        %v3068 = vld [vmem:[%s2775 + $0x44] sm:$0xff]
        %v3069 = vld [vmem:[%s2775 + $0x4c] sm:$0x3]
        %v3070 = vld [vmem:[%s2775 + $0x54] sm:$0xff]
        %v3071 = vld [vmem:[%s2775 + $0x5c] sm:$0x3]
        %v3072 = vld [vmem:[%s2775 + $0x64] sm:$0xff]
        %v3073 = vld [vmem:[%s2775 + $0x6c] sm:$0x3]
        %v3074 = vld [vmem:[%s2775 + $0x74] sm:$0xff]
        %v3075 = vld [vmem:[%s2775 + $0x7c] sm:$0x3]
        %v3076 = vld [vmem:[%s2775 + $0x84] sm:$0xff]
        %v3077 = vld [vmem:[%s2775 + $0x8c] sm:$0x3]
        %v3078 = vld [vmem:[%s2775 + $0x94] sm:$0xff]
        %v3079 = vld [vmem:[%s2775 + $0x9c] sm:$0x3]
        %v3080 = vstv %s3059
        %v3081 = vmul.f32 %v3080, %v3060
        %v3082 = vmul.f32 %v3080, %v3061
        %v3083 = vmul.f32 %v3080, %v3062
        %v3084 = vmul.f32 %v3080, %v3063
        %v3085 = vmul.f32 %v3080, %v3064
        %v3086 = vmul.f32 %v3080, %v3065
        %v3087 = vmul.f32 %v3080, %v3066
        %v3088 = vmul.f32 %v3080, %v3067
        %v3089 = vmul.f32 %v3080, %v3068
        %v3090 = vmul.f32 %v3080, %v3069
        %v3091 = vmul.f32 %v3080, %v3070
        %v3092 = vmul.f32 %v3080, %v3071
        %v3093 = vmul.f32 %v3080, %v3072
        %v3094 = vmul.f32 %v3080, %v3073
        %v3095 = vmul.f32 %v3080, %v3074
        %v3096 = vmul.f32 %v3080, %v3075
        %v3097 = vmul.f32 %v3080, %v3076
        %v3098 = vmul.f32 %v3080, %v3077
        %v3099 = vmul.f32 %v3080, %v3078
        %v3100 = vmul.f32 %v3080, %v3079
        %v3101 = vadd.f32 %v3030, %v3081
        %v3102 = vadd.f32 %v3031, %v3082
        %v3103 = vadd.f32 %v3032, %v3083
        %v3104 = vadd.f32 %v3033, %v3084
        %v3105 = vadd.f32 %v3034, %v3085
        %v3106 = vadd.f32 %v3035, %v3086
        %v3107 = vadd.f32 %v3036, %v3087
        %v3108 = vadd.f32 %v3037, %v3088
        %v3109 = vadd.f32 %v3038, %v3089
        %v3110 = vadd.f32 %v3039, %v3090
        %v3111 = vadd.f32 %v3040, %v3091
        %v3112 = vadd.f32 %v3041, %v3092
        %v3113 = vadd.f32 %v3042, %v3093
        %v3114 = vadd.f32 %v3043, %v3094
        %v3115 = vadd.f32 %v3044, %v3095
        %v3116 = vadd.f32 %v3045, %v3096
        %v3117 = vadd.f32 %v3046, %v3097
        %v3118 = vadd.f32 %v3047, %v3098
        %v3119 = vadd.f32 %v3048, %v3099
        %v3120 = vadd.f32 %v3049, %v3100
        %s3121 = sadd.s32 %s2401, 10
        %s3122 = sshra.s32 %s3121, 7
        %s3123 = sand.u32 %s3121, 127
        %s3124 = sadd.s32 %s3122, %s2406
        %s3125 = smul.u32 %s3124, 1024
        %s3126 = sshra.s32 %s3121, 7
        %s3127 = sand.u32 %s3121, 127
        %s3128 = sadd.s32 %s2413, %s3127
        %s3129 = sadd.s32 %s3125, %s3128
        %s3130 = sld [smem:[#allocation11 + %s3129]]
        %s3131 = sadd.s32 32, %s2417
        %s3132 = scalar_lea.vmem [#allocation2], %s3131
        %v3133 = vld [vmem:[%s3132] sm:$0xff]
        %v3134 = vld [vmem:[%s3132 + $0x8] sm:$0x3]
        %v3135 = vld [vmem:[%s3132 + $0x10] sm:$0xff]
        %v3136 = vld [vmem:[%s3132 + $0x18] sm:$0x3]
        %v3137 = vld [vmem:[%s3132 + $0x20] sm:$0xff]
        %v3138 = vld [vmem:[%s3132 + $0x28] sm:$0x3]
        %v3139 = vld [vmem:[%s3132 + $0x30] sm:$0xff]
        %v3140 = vld [vmem:[%s3132 + $0x38] sm:$0x3]
        %v3141 = vld [vmem:[%s3132 + $0x40] sm:$0xff]
        %v3142 = vld [vmem:[%s3132 + $0x48] sm:$0x3]
        %v3143 = vld [vmem:[%s3132 + $0x50] sm:$0xff]
        %v3144 = vld [vmem:[%s3132 + $0x58] sm:$0x3]
        %v3145 = vld [vmem:[%s3132 + $0x60] sm:$0xff]
        %v3146 = vld [vmem:[%s3132 + $0x68] sm:$0x3]
        %v3147 = vld [vmem:[%s3132 + $0x70] sm:$0xff]
        %v3148 = vld [vmem:[%s3132 + $0x78] sm:$0x3]
        %v3149 = vld [vmem:[%s3132 + $0x80] sm:$0xff]
        %v3150 = vld [vmem:[%s3132 + $0x88] sm:$0x3]
        %v3151 = vld [vmem:[%s3132 + $0x90] sm:$0xff]
        %v3152 = vld [vmem:[%s3132 + $0x98] sm:$0x3]
        %v3153 = vstv %s3130
        %v3154 = vmul.f32 %v3153, %v3133
        %v3155 = vmul.f32 %v3153, %v3134
        %v3156 = vmul.f32 %v3153, %v3135
        %v3157 = vmul.f32 %v3153, %v3136
        %v3158 = vmul.f32 %v3153, %v3137
        %v3159 = vmul.f32 %v3153, %v3138
        %v3160 = vmul.f32 %v3153, %v3139
        %v3161 = vmul.f32 %v3153, %v3140
        %v3162 = vmul.f32 %v3153, %v3141
        %v3163 = vmul.f32 %v3153, %v3142
        %v3164 = vmul.f32 %v3153, %v3143
        %v3165 = vmul.f32 %v3153, %v3144
        %v3166 = vmul.f32 %v3153, %v3145
        %v3167 = vmul.f32 %v3153, %v3146
        %v3168 = vmul.f32 %v3153, %v3147
        %v3169 = vmul.f32 %v3153, %v3148
        %v3170 = vmul.f32 %v3153, %v3149
        %v3171 = vmul.f32 %v3153, %v3150
        %v3172 = vmul.f32 %v3153, %v3151
        %v3173 = vmul.f32 %v3153, %v3152
        %v3174 = vadd.f32 %v3101, %v3154
        %v3175 = vadd.f32 %v3102, %v3155
        %v3176 = vadd.f32 %v3103, %v3156
        %v3177 = vadd.f32 %v3104, %v3157
        %v3178 = vadd.f32 %v3105, %v3158
        %v3179 = vadd.f32 %v3106, %v3159
        %v3180 = vadd.f32 %v3107, %v3160
        %v3181 = vadd.f32 %v3108, %v3161
        %v3182 = vadd.f32 %v3109, %v3162
        %v3183 = vadd.f32 %v3110, %v3163
        %v3184 = vadd.f32 %v3111, %v3164
        %v3185 = vadd.f32 %v3112, %v3165
        %v3186 = vadd.f32 %v3113, %v3166
        %v3187 = vadd.f32 %v3114, %v3167
        %v3188 = vadd.f32 %v3115, %v3168
        %v3189 = vadd.f32 %v3116, %v3169
        %v3190 = vadd.f32 %v3117, %v3170
        %v3191 = vadd.f32 %v3118, %v3171
        %v3192 = vadd.f32 %v3119, %v3172
        %v3193 = vadd.f32 %v3120, %v3173
        %s3194 = sadd.s32 %s2401, 11
        %s3195 = sshra.s32 %s3194, 7
        %s3196 = sand.u32 %s3194, 127
        %s3197 = sadd.s32 %s3195, %s2406
        %s3198 = smul.u32 %s3197, 1024
        %s3199 = sshra.s32 %s3194, 7
        %s3200 = sand.u32 %s3194, 127
        %s3201 = sadd.s32 %s2413, %s3200
        %s3202 = sadd.s32 %s3198, %s3201
        %s3203 = sld [smem:[#allocation11 + %s3202]]
        %v3204 = vld [vmem:[%s3132 + $0x1] sm:$0xff]
        %v3205 = vld [vmem:[%s3132 + $0x9] sm:$0x3]
        %v3206 = vld [vmem:[%s3132 + $0x11] sm:$0xff]
        %v3207 = vld [vmem:[%s3132 + $0x19] sm:$0x3]
        %v3208 = vld [vmem:[%s3132 + $0x21] sm:$0xff]
        %v3209 = vld [vmem:[%s3132 + $0x29] sm:$0x3]
        %v3210 = vld [vmem:[%s3132 + $0x31] sm:$0xff]
        %v3211 = vld [vmem:[%s3132 + $0x39] sm:$0x3]
        %v3212 = vld [vmem:[%s3132 + $0x41] sm:$0xff]
        %v3213 = vld [vmem:[%s3132 + $0x49] sm:$0x3]
        %v3214 = vld [vmem:[%s3132 + $0x51] sm:$0xff]
        %v3215 = vld [vmem:[%s3132 + $0x59] sm:$0x3]
        %v3216 = vld [vmem:[%s3132 + $0x61] sm:$0xff]
        %v3217 = vld [vmem:[%s3132 + $0x69] sm:$0x3]
        %v3218 = vld [vmem:[%s3132 + $0x71] sm:$0xff]
        %v3219 = vld [vmem:[%s3132 + $0x79] sm:$0x3]
        %v3220 = vld [vmem:[%s3132 + $0x81] sm:$0xff]
        %v3221 = vld [vmem:[%s3132 + $0x89] sm:$0x3]
        %v3222 = vld [vmem:[%s3132 + $0x91] sm:$0xff]
        %v3223 = vld [vmem:[%s3132 + $0x99] sm:$0x3]
        %v3224 = vstv %s3203
        %v3225 = vmul.f32 %v3224, %v3204
        %v3226 = vmul.f32 %v3224, %v3205
        %v3227 = vmul.f32 %v3224, %v3206
        %v3228 = vmul.f32 %v3224, %v3207
        %v3229 = vmul.f32 %v3224, %v3208
        %v3230 = vmul.f32 %v3224, %v3209
        %v3231 = vmul.f32 %v3224, %v3210
        %v3232 = vmul.f32 %v3224, %v3211
        %v3233 = vmul.f32 %v3224, %v3212
        %v3234 = vmul.f32 %v3224, %v3213
        %v3235 = vmul.f32 %v3224, %v3214
        %v3236 = vmul.f32 %v3224, %v3215
        %v3237 = vmul.f32 %v3224, %v3216
        %v3238 = vmul.f32 %v3224, %v3217
        %v3239 = vmul.f32 %v3224, %v3218
        %v3240 = vmul.f32 %v3224, %v3219
        %v3241 = vmul.f32 %v3224, %v3220
        %v3242 = vmul.f32 %v3224, %v3221
        %v3243 = vmul.f32 %v3224, %v3222
        %v3244 = vmul.f32 %v3224, %v3223
        %v3245 = vadd.f32 %v3174, %v3225
        %v3246 = vadd.f32 %v3175, %v3226
        %v3247 = vadd.f32 %v3176, %v3227
        %v3248 = vadd.f32 %v3177, %v3228
        %v3249 = vadd.f32 %v3178, %v3229
        %v3250 = vadd.f32 %v3179, %v3230
        %v3251 = vadd.f32 %v3180, %v3231
        %v3252 = vadd.f32 %v3181, %v3232
        %v3253 = vadd.f32 %v3182, %v3233
        %v3254 = vadd.f32 %v3183, %v3234
        %v3255 = vadd.f32 %v3184, %v3235
        %v3256 = vadd.f32 %v3185, %v3236
        %v3257 = vadd.f32 %v3186, %v3237
        %v3258 = vadd.f32 %v3187, %v3238
        %v3259 = vadd.f32 %v3188, %v3239
        %v3260 = vadd.f32 %v3189, %v3240
        %v3261 = vadd.f32 %v3190, %v3241
        %v3262 = vadd.f32 %v3191, %v3242
        %v3263 = vadd.f32 %v3192, %v3243
        %v3264 = vadd.f32 %v3193, %v3244
        %s3265 = sadd.s32 %s2401, 12
        %s3266 = sshra.s32 %s3265, 7
        %s3267 = sand.u32 %s3265, 127
        %s3268 = sadd.s32 %s3266, %s2406
        %s3269 = smul.u32 %s3268, 1024
        %s3270 = sshra.s32 %s3265, 7
        %s3271 = sand.u32 %s3265, 127
        %s3272 = sadd.s32 %s2413, %s3271
        %s3273 = sadd.s32 %s3269, %s3272
        %s3274 = sld [smem:[#allocation11 + %s3273]]
        %v3275 = vld [vmem:[%s3132 + $0x2] sm:$0xff]
        %v3276 = vld [vmem:[%s3132 + $0xa] sm:$0x3]
        %v3277 = vld [vmem:[%s3132 + $0x12] sm:$0xff]
        %v3278 = vld [vmem:[%s3132 + $0x1a] sm:$0x3]
        %v3279 = vld [vmem:[%s3132 + $0x22] sm:$0xff]
        %v3280 = vld [vmem:[%s3132 + $0x2a] sm:$0x3]
        %v3281 = vld [vmem:[%s3132 + $0x32] sm:$0xff]
        %v3282 = vld [vmem:[%s3132 + $0x3a] sm:$0x3]
        %v3283 = vld [vmem:[%s3132 + $0x42] sm:$0xff]
        %v3284 = vld [vmem:[%s3132 + $0x4a] sm:$0x3]
        %v3285 = vld [vmem:[%s3132 + $0x52] sm:$0xff]
        %v3286 = vld [vmem:[%s3132 + $0x5a] sm:$0x3]
        %v3287 = vld [vmem:[%s3132 + $0x62] sm:$0xff]
        %v3288 = vld [vmem:[%s3132 + $0x6a] sm:$0x3]
        %v3289 = vld [vmem:[%s3132 + $0x72] sm:$0xff]
        %v3290 = vld [vmem:[%s3132 + $0x7a] sm:$0x3]
        %v3291 = vld [vmem:[%s3132 + $0x82] sm:$0xff]
        %v3292 = vld [vmem:[%s3132 + $0x8a] sm:$0x3]
        %v3293 = vld [vmem:[%s3132 + $0x92] sm:$0xff]
        %v3294 = vld [vmem:[%s3132 + $0x9a] sm:$0x3]
        %v3295 = vstv %s3274
        %v3296 = vmul.f32 %v3295, %v3275
        %v3297 = vmul.f32 %v3295, %v3276
        %v3298 = vmul.f32 %v3295, %v3277
        %v3299 = vmul.f32 %v3295, %v3278
        %v3300 = vmul.f32 %v3295, %v3279
        %v3301 = vmul.f32 %v3295, %v3280
        %v3302 = vmul.f32 %v3295, %v3281
        %v3303 = vmul.f32 %v3295, %v3282
        %v3304 = vmul.f32 %v3295, %v3283
        %v3305 = vmul.f32 %v3295, %v3284
        %v3306 = vmul.f32 %v3295, %v3285
        %v3307 = vmul.f32 %v3295, %v3286
        %v3308 = vmul.f32 %v3295, %v3287
        %v3309 = vmul.f32 %v3295, %v3288
        %v3310 = vmul.f32 %v3295, %v3289
        %v3311 = vmul.f32 %v3295, %v3290
        %v3312 = vmul.f32 %v3295, %v3291
        %v3313 = vmul.f32 %v3295, %v3292
        %v3314 = vmul.f32 %v3295, %v3293
        %v3315 = vmul.f32 %v3295, %v3294
        %v3316 = vadd.f32 %v3245, %v3296
        %v3317 = vadd.f32 %v3246, %v3297
        %v3318 = vadd.f32 %v3247, %v3298
        %v3319 = vadd.f32 %v3248, %v3299
        %v3320 = vadd.f32 %v3249, %v3300
        %v3321 = vadd.f32 %v3250, %v3301
        %v3322 = vadd.f32 %v3251, %v3302
        %v3323 = vadd.f32 %v3252, %v3303
        %v3324 = vadd.f32 %v3253, %v3304
        %v3325 = vadd.f32 %v3254, %v3305
        %v3326 = vadd.f32 %v3255, %v3306
        %v3327 = vadd.f32 %v3256, %v3307
        %v3328 = vadd.f32 %v3257, %v3308
        %v3329 = vadd.f32 %v3258, %v3309
        %v3330 = vadd.f32 %v3259, %v3310
        %v3331 = vadd.f32 %v3260, %v3311
        %v3332 = vadd.f32 %v3261, %v3312
        %v3333 = vadd.f32 %v3262, %v3313
        %v3334 = vadd.f32 %v3263, %v3314
        %v3335 = vadd.f32 %v3264, %v3315
        %s3336 = sadd.s32 %s2401, 13
        %s3337 = sshra.s32 %s3336, 7
        %s3338 = sand.u32 %s3336, 127
        %s3339 = sadd.s32 %s3337, %s2406
        %s3340 = smul.u32 %s3339, 1024
        %s3341 = sshra.s32 %s3336, 7
        %s3342 = sand.u32 %s3336, 127
        %s3343 = sadd.s32 %s2413, %s3342
        %s3344 = sadd.s32 %s3340, %s3343
        %s3345 = sld [smem:[#allocation11 + %s3344]]
        %v3346 = vld [vmem:[%s3132 + $0x3] sm:$0xff]
        %v3347 = vld [vmem:[%s3132 + $0xb] sm:$0x3]
        %v3348 = vld [vmem:[%s3132 + $0x13] sm:$0xff]
        %v3349 = vld [vmem:[%s3132 + $0x1b] sm:$0x3]
        %v3350 = vld [vmem:[%s3132 + $0x23] sm:$0xff]
        %v3351 = vld [vmem:[%s3132 + $0x2b] sm:$0x3]
        %v3352 = vld [vmem:[%s3132 + $0x33] sm:$0xff]
        %v3353 = vld [vmem:[%s3132 + $0x3b] sm:$0x3]
        %v3354 = vld [vmem:[%s3132 + $0x43] sm:$0xff]
        %v3355 = vld [vmem:[%s3132 + $0x4b] sm:$0x3]
        %v3356 = vld [vmem:[%s3132 + $0x53] sm:$0xff]
        %v3357 = vld [vmem:[%s3132 + $0x5b] sm:$0x3]
        %v3358 = vld [vmem:[%s3132 + $0x63] sm:$0xff]
        %v3359 = vld [vmem:[%s3132 + $0x6b] sm:$0x3]
        %v3360 = vld [vmem:[%s3132 + $0x73] sm:$0xff]
        %v3361 = vld [vmem:[%s3132 + $0x7b] sm:$0x3]
        %v3362 = vld [vmem:[%s3132 + $0x83] sm:$0xff]
        %v3363 = vld [vmem:[%s3132 + $0x8b] sm:$0x3]
        %v3364 = vld [vmem:[%s3132 + $0x93] sm:$0xff]
        %v3365 = vld [vmem:[%s3132 + $0x9b] sm:$0x3]
        %v3366 = vstv %s3345
        %v3367 = vmul.f32 %v3366, %v3346
        %v3368 = vmul.f32 %v3366, %v3347
        %v3369 = vmul.f32 %v3366, %v3348
        %v3370 = vmul.f32 %v3366, %v3349
        %v3371 = vmul.f32 %v3366, %v3350
        %v3372 = vmul.f32 %v3366, %v3351
        %v3373 = vmul.f32 %v3366, %v3352
        %v3374 = vmul.f32 %v3366, %v3353
        %v3375 = vmul.f32 %v3366, %v3354
        %v3376 = vmul.f32 %v3366, %v3355
        %v3377 = vmul.f32 %v3366, %v3356
        %v3378 = vmul.f32 %v3366, %v3357
        %v3379 = vmul.f32 %v3366, %v3358
        %v3380 = vmul.f32 %v3366, %v3359
        %v3381 = vmul.f32 %v3366, %v3360
        %v3382 = vmul.f32 %v3366, %v3361
        %v3383 = vmul.f32 %v3366, %v3362
        %v3384 = vmul.f32 %v3366, %v3363
        %v3385 = vmul.f32 %v3366, %v3364
        %v3386 = vmul.f32 %v3366, %v3365
        %v3387 = vadd.f32 %v3316, %v3367
        %v3388 = vadd.f32 %v3317, %v3368
        %v3389 = vadd.f32 %v3318, %v3369
        %v3390 = vadd.f32 %v3319, %v3370
        %v3391 = vadd.f32 %v3320, %v3371
        %v3392 = vadd.f32 %v3321, %v3372
        %v3393 = vadd.f32 %v3322, %v3373
        %v3394 = vadd.f32 %v3323, %v3374
        %v3395 = vadd.f32 %v3324, %v3375
        %v3396 = vadd.f32 %v3325, %v3376
        %v3397 = vadd.f32 %v3326, %v3377
        %v3398 = vadd.f32 %v3327, %v3378
        %v3399 = vadd.f32 %v3328, %v3379
        %v3400 = vadd.f32 %v3329, %v3380
        %v3401 = vadd.f32 %v3330, %v3381
        %v3402 = vadd.f32 %v3331, %v3382
        %v3403 = vadd.f32 %v3332, %v3383
        %v3404 = vadd.f32 %v3333, %v3384
        %v3405 = vadd.f32 %v3334, %v3385
        %v3406 = vadd.f32 %v3335, %v3386
        %s3407 = sadd.s32 %s2401, 14
        %s3408 = sshra.s32 %s3407, 7
        %s3409 = sand.u32 %s3407, 127
        %s3410 = sadd.s32 %s3408, %s2406
        %s3411 = smul.u32 %s3410, 1024
        %s3412 = sshra.s32 %s3407, 7
        %s3413 = sand.u32 %s3407, 127
        %s3414 = sadd.s32 %s2413, %s3413
        %s3415 = sadd.s32 %s3411, %s3414
        %s3416 = sld [smem:[#allocation11 + %s3415]]
        %v3417 = vld [vmem:[%s3132 + $0x4] sm:$0xff]
        %v3418 = vld [vmem:[%s3132 + $0xc] sm:$0x3]
        %v3419 = vld [vmem:[%s3132 + $0x14] sm:$0xff]
        %v3420 = vld [vmem:[%s3132 + $0x1c] sm:$0x3]
        %v3421 = vld [vmem:[%s3132 + $0x24] sm:$0xff]
        %v3422 = vld [vmem:[%s3132 + $0x2c] sm:$0x3]
        %v3423 = vld [vmem:[%s3132 + $0x34] sm:$0xff]
        %v3424 = vld [vmem:[%s3132 + $0x3c] sm:$0x3]
        %v3425 = vld [vmem:[%s3132 + $0x44] sm:$0xff]
        %v3426 = vld [vmem:[%s3132 + $0x4c] sm:$0x3]
        %v3427 = vld [vmem:[%s3132 + $0x54] sm:$0xff]
        %v3428 = vld [vmem:[%s3132 + $0x5c] sm:$0x3]
        %v3429 = vld [vmem:[%s3132 + $0x64] sm:$0xff]
        %v3430 = vld [vmem:[%s3132 + $0x6c] sm:$0x3]
        %v3431 = vld [vmem:[%s3132 + $0x74] sm:$0xff]
        %v3432 = vld [vmem:[%s3132 + $0x7c] sm:$0x3]
        %v3433 = vld [vmem:[%s3132 + $0x84] sm:$0xff]
        %v3434 = vld [vmem:[%s3132 + $0x8c] sm:$0x3]
        %v3435 = vld [vmem:[%s3132 + $0x94] sm:$0xff]
        %v3436 = vld [vmem:[%s3132 + $0x9c] sm:$0x3]
        %v3437 = vstv %s3416
        %v3438 = vmul.f32 %v3437, %v3417
        %v3439 = vmul.f32 %v3437, %v3418
        %v3440 = vmul.f32 %v3437, %v3419
        %v3441 = vmul.f32 %v3437, %v3420
        %v3442 = vmul.f32 %v3437, %v3421
        %v3443 = vmul.f32 %v3437, %v3422
        %v3444 = vmul.f32 %v3437, %v3423
        %v3445 = vmul.f32 %v3437, %v3424
        %v3446 = vmul.f32 %v3437, %v3425
        %v3447 = vmul.f32 %v3437, %v3426
        %v3448 = vmul.f32 %v3437, %v3427
        %v3449 = vmul.f32 %v3437, %v3428
        %v3450 = vmul.f32 %v3437, %v3429
        %v3451 = vmul.f32 %v3437, %v3430
        %v3452 = vmul.f32 %v3437, %v3431
        %v3453 = vmul.f32 %v3437, %v3432
        %v3454 = vmul.f32 %v3437, %v3433
        %v3455 = vmul.f32 %v3437, %v3434
        %v3456 = vmul.f32 %v3437, %v3435
        %v3457 = vmul.f32 %v3437, %v3436
        %v3458 = vadd.f32 %v3387, %v3438
        %v3459 = vadd.f32 %v3388, %v3439
        %v3460 = vadd.f32 %v3389, %v3440
        %v3461 = vadd.f32 %v3390, %v3441
        %v3462 = vadd.f32 %v3391, %v3442
        %v3463 = vadd.f32 %v3392, %v3443
        %v3464 = vadd.f32 %v3393, %v3444
        %v3465 = vadd.f32 %v3394, %v3445
        %v3466 = vadd.f32 %v3395, %v3446
        %v3467 = vadd.f32 %v3396, %v3447
        %v3468 = vadd.f32 %v3397, %v3448
        %v3469 = vadd.f32 %v3398, %v3449
        %v3470 = vadd.f32 %v3399, %v3450
        %v3471 = vadd.f32 %v3400, %v3451
        %v3472 = vadd.f32 %v3401, %v3452
        %v3473 = vadd.f32 %v3402, %v3453
        %v3474 = vadd.f32 %v3403, %v3454
        %v3475 = vadd.f32 %v3404, %v3455
        %v3476 = vadd.f32 %v3405, %v3456
        %v3477 = vadd.f32 %v3406, %v3457
        %s3478 = sadd.s32 %s2401, 15
        %s3479 = sshra.s32 %s3478, 7
        %s3480 = sand.u32 %s3478, 127
        %s3481 = sadd.s32 %s3479, %s2406
        %s3482 = smul.u32 %s3481, 1024
        %s3483 = sshra.s32 %s3478, 7
        %s3484 = sand.u32 %s3478, 127
        %s3485 = sadd.s32 %s2413, %s3484
        %s3486 = sadd.s32 %s3482, %s3485
        %s3487 = sld [smem:[#allocation11 + %s3486]]
        %s3488 = sadd.s32 48, %s2417
        %s3489 = scalar_lea.vmem [#allocation2], %s3488
        %v3490 = vld [vmem:[%s3489] sm:$0xff]
        %v3491 = vld [vmem:[%s3489 + $0x8] sm:$0x3]
        %v3492 = vld [vmem:[%s3489 + $0x10] sm:$0xff]
        %v3493 = vld [vmem:[%s3489 + $0x18] sm:$0x3]
        %v3494 = vld [vmem:[%s3489 + $0x20] sm:$0xff]
        %v3495 = vld [vmem:[%s3489 + $0x28] sm:$0x3]
        %v3496 = vld [vmem:[%s3489 + $0x30] sm:$0xff]
        %v3497 = vld [vmem:[%s3489 + $0x38] sm:$0x3]
        %v3498 = vld [vmem:[%s3489 + $0x40] sm:$0xff]
        %v3499 = vld [vmem:[%s3489 + $0x48] sm:$0x3]
        %v3500 = vld [vmem:[%s3489 + $0x50] sm:$0xff]
        %v3501 = vld [vmem:[%s3489 + $0x58] sm:$0x3]
        %v3502 = vld [vmem:[%s3489 + $0x60] sm:$0xff]
        %v3503 = vld [vmem:[%s3489 + $0x68] sm:$0x3]
        %v3504 = vld [vmem:[%s3489 + $0x70] sm:$0xff]
        %v3505 = vld [vmem:[%s3489 + $0x78] sm:$0x3]
        %v3506 = vld [vmem:[%s3489 + $0x80] sm:$0xff]
        %v3507 = vld [vmem:[%s3489 + $0x88] sm:$0x3]
        %v3508 = vld [vmem:[%s3489 + $0x90] sm:$0xff]
        %v3509 = vld [vmem:[%s3489 + $0x98] sm:$0x3]
        %v3510 = vstv %s3487
        %v3511 = vmul.f32 %v3510, %v3490
        %v3512 = vmul.f32 %v3510, %v3491
        %v3513 = vmul.f32 %v3510, %v3492
        %v3514 = vmul.f32 %v3510, %v3493
        %v3515 = vmul.f32 %v3510, %v3494
        %v3516 = vmul.f32 %v3510, %v3495
        %v3517 = vmul.f32 %v3510, %v3496
        %v3518 = vmul.f32 %v3510, %v3497
        %v3519 = vmul.f32 %v3510, %v3498
        %v3520 = vmul.f32 %v3510, %v3499
        %v3521 = vmul.f32 %v3510, %v3500
        %v3522 = vmul.f32 %v3510, %v3501
        %v3523 = vmul.f32 %v3510, %v3502
        %v3524 = vmul.f32 %v3510, %v3503
        %v3525 = vmul.f32 %v3510, %v3504
        %v3526 = vmul.f32 %v3510, %v3505
        %v3527 = vmul.f32 %v3510, %v3506
        %v3528 = vmul.f32 %v3510, %v3507
        %v3529 = vmul.f32 %v3510, %v3508
        %v3530 = vmul.f32 %v3510, %v3509
        %v3531 = vadd.f32 %v3458, %v3511
        %v3532 = vadd.f32 %v3459, %v3512
        %v3533 = vadd.f32 %v3460, %v3513
        %v3534 = vadd.f32 %v3461, %v3514
        %v3535 = vadd.f32 %v3462, %v3515
        %v3536 = vadd.f32 %v3463, %v3516
        %v3537 = vadd.f32 %v3464, %v3517
        %v3538 = vadd.f32 %v3465, %v3518
        %v3539 = vadd.f32 %v3466, %v3519
        %v3540 = vadd.f32 %v3467, %v3520
        %v3541 = vadd.f32 %v3468, %v3521
        %v3542 = vadd.f32 %v3469, %v3522
        %v3543 = vadd.f32 %v3470, %v3523
        %v3544 = vadd.f32 %v3471, %v3524
        %v3545 = vadd.f32 %v3472, %v3525
        %v3546 = vadd.f32 %v3473, %v3526
        %v3547 = vadd.f32 %v3474, %v3527
        %v3548 = vadd.f32 %v3475, %v3528
        %v3549 = vadd.f32 %v3476, %v3529
        %v3550 = vadd.f32 %v3477, %v3530
        %s3551 = sadd.s32 %s2401, 16
        %s3552 = sshra.s32 %s3551, 7
        %s3553 = sand.u32 %s3551, 127
        %s3554 = sadd.s32 %s3552, %s2406
        %s3555 = smul.u32 %s3554, 1024
        %s3556 = sshra.s32 %s3551, 7
        %s3557 = sand.u32 %s3551, 127
        %s3558 = sadd.s32 %s2413, %s3557
        %s3559 = sadd.s32 %s3555, %s3558
        %s3560 = sld [smem:[#allocation11 + %s3559]]
        %v3561 = vld [vmem:[%s3489 + $0x1] sm:$0xff]
        %v3562 = vld [vmem:[%s3489 + $0x9] sm:$0x3]
        %v3563 = vld [vmem:[%s3489 + $0x11] sm:$0xff]
        %v3564 = vld [vmem:[%s3489 + $0x19] sm:$0x3]
        %v3565 = vld [vmem:[%s3489 + $0x21] sm:$0xff]
        %v3566 = vld [vmem:[%s3489 + $0x29] sm:$0x3]
        %v3567 = vld [vmem:[%s3489 + $0x31] sm:$0xff]
        %v3568 = vld [vmem:[%s3489 + $0x39] sm:$0x3]
        %v3569 = vld [vmem:[%s3489 + $0x41] sm:$0xff]
        %v3570 = vld [vmem:[%s3489 + $0x49] sm:$0x3]
        %v3571 = vld [vmem:[%s3489 + $0x51] sm:$0xff]
        %v3572 = vld [vmem:[%s3489 + $0x59] sm:$0x3]
        %v3573 = vld [vmem:[%s3489 + $0x61] sm:$0xff]
        %v3574 = vld [vmem:[%s3489 + $0x69] sm:$0x3]
        %v3575 = vld [vmem:[%s3489 + $0x71] sm:$0xff]
        %v3576 = vld [vmem:[%s3489 + $0x79] sm:$0x3]
        %v3577 = vld [vmem:[%s3489 + $0x81] sm:$0xff]
        %v3578 = vld [vmem:[%s3489 + $0x89] sm:$0x3]
        %v3579 = vld [vmem:[%s3489 + $0x91] sm:$0xff]
        %v3580 = vld [vmem:[%s3489 + $0x99] sm:$0x3]
        %v3581 = vstv %s3560
        %v3582 = vmul.f32 %v3581, %v3561
        %v3583 = vmul.f32 %v3581, %v3562
        %v3584 = vmul.f32 %v3581, %v3563
        %v3585 = vmul.f32 %v3581, %v3564
        %v3586 = vmul.f32 %v3581, %v3565
        %v3587 = vmul.f32 %v3581, %v3566
        %v3588 = vmul.f32 %v3581, %v3567
        %v3589 = vmul.f32 %v3581, %v3568
        %v3590 = vmul.f32 %v3581, %v3569
        %v3591 = vmul.f32 %v3581, %v3570
        %v3592 = vmul.f32 %v3581, %v3571
        %v3593 = vmul.f32 %v3581, %v3572
        %v3594 = vmul.f32 %v3581, %v3573
        %v3595 = vmul.f32 %v3581, %v3574
        %v3596 = vmul.f32 %v3581, %v3575
        %v3597 = vmul.f32 %v3581, %v3576
        %v3598 = vmul.f32 %v3581, %v3577
        %v3599 = vmul.f32 %v3581, %v3578
        %v3600 = vmul.f32 %v3581, %v3579
        %v3601 = vmul.f32 %v3581, %v3580
        %v3602 = vadd.f32 %v3531, %v3582
        %v3603 = vadd.f32 %v3532, %v3583
        %v3604 = vadd.f32 %v3533, %v3584
        %v3605 = vadd.f32 %v3534, %v3585
        %v3606 = vadd.f32 %v3535, %v3586
        %v3607 = vadd.f32 %v3536, %v3587
        %v3608 = vadd.f32 %v3537, %v3588
        %v3609 = vadd.f32 %v3538, %v3589
        %v3610 = vadd.f32 %v3539, %v3590
        %v3611 = vadd.f32 %v3540, %v3591
        %v3612 = vadd.f32 %v3541, %v3592
        %v3613 = vadd.f32 %v3542, %v3593
        %v3614 = vadd.f32 %v3543, %v3594
        %v3615 = vadd.f32 %v3544, %v3595
        %v3616 = vadd.f32 %v3545, %v3596
        %v3617 = vadd.f32 %v3546, %v3597
        %v3618 = vadd.f32 %v3547, %v3598
        %v3619 = vadd.f32 %v3548, %v3599
        %v3620 = vadd.f32 %v3549, %v3600
        %v3621 = vadd.f32 %v3550, %v3601
        %s3622 = sadd.s32 %s2401, 17
        %s3623 = sshra.s32 %s3622, 7
        %s3624 = sand.u32 %s3622, 127
        %s3625 = sadd.s32 %s3623, %s2406
        %s3626 = smul.u32 %s3625, 1024
        %s3627 = sshra.s32 %s3622, 7
        %s3628 = sand.u32 %s3622, 127
        %s3629 = sadd.s32 %s2413, %s3628
        %s3630 = sadd.s32 %s3626, %s3629
        %s3631 = sld [smem:[#allocation11 + %s3630]]
        %v3632 = vld [vmem:[%s3489 + $0x2] sm:$0xff]
        %v3633 = vld [vmem:[%s3489 + $0xa] sm:$0x3]
        %v3634 = vld [vmem:[%s3489 + $0x12] sm:$0xff]
        %v3635 = vld [vmem:[%s3489 + $0x1a] sm:$0x3]
        %v3636 = vld [vmem:[%s3489 + $0x22] sm:$0xff]
        %v3637 = vld [vmem:[%s3489 + $0x2a] sm:$0x3]
        %v3638 = vld [vmem:[%s3489 + $0x32] sm:$0xff]
        %v3639 = vld [vmem:[%s3489 + $0x3a] sm:$0x3]
        %v3640 = vld [vmem:[%s3489 + $0x42] sm:$0xff]
        %v3641 = vld [vmem:[%s3489 + $0x4a] sm:$0x3]
        %v3642 = vld [vmem:[%s3489 + $0x52] sm:$0xff]
        %v3643 = vld [vmem:[%s3489 + $0x5a] sm:$0x3]
        %v3644 = vld [vmem:[%s3489 + $0x62] sm:$0xff]
        %v3645 = vld [vmem:[%s3489 + $0x6a] sm:$0x3]
        %v3646 = vld [vmem:[%s3489 + $0x72] sm:$0xff]
        %v3647 = vld [vmem:[%s3489 + $0x7a] sm:$0x3]
        %v3648 = vld [vmem:[%s3489 + $0x82] sm:$0xff]
        %v3649 = vld [vmem:[%s3489 + $0x8a] sm:$0x3]
        %v3650 = vld [vmem:[%s3489 + $0x92] sm:$0xff]
        %v3651 = vld [vmem:[%s3489 + $0x9a] sm:$0x3]
        %v3652 = vstv %s3631
        %v3653 = vmul.f32 %v3652, %v3632
        %v3654 = vmul.f32 %v3652, %v3633
        %v3655 = vmul.f32 %v3652, %v3634
        %v3656 = vmul.f32 %v3652, %v3635
        %v3657 = vmul.f32 %v3652, %v3636
        %v3658 = vmul.f32 %v3652, %v3637
        %v3659 = vmul.f32 %v3652, %v3638
        %v3660 = vmul.f32 %v3652, %v3639
        %v3661 = vmul.f32 %v3652, %v3640
        %v3662 = vmul.f32 %v3652, %v3641
        %v3663 = vmul.f32 %v3652, %v3642
        %v3664 = vmul.f32 %v3652, %v3643
        %v3665 = vmul.f32 %v3652, %v3644
        %v3666 = vmul.f32 %v3652, %v3645
        %v3667 = vmul.f32 %v3652, %v3646
        %v3668 = vmul.f32 %v3652, %v3647
        %v3669 = vmul.f32 %v3652, %v3648
        %v3670 = vmul.f32 %v3652, %v3649
        %v3671 = vmul.f32 %v3652, %v3650
        %v3672 = vmul.f32 %v3652, %v3651
        %v3673 = vadd.f32 %v3602, %v3653
        %v3674 = vadd.f32 %v3603, %v3654
        %v3675 = vadd.f32 %v3604, %v3655
        %v3676 = vadd.f32 %v3605, %v3656
        %v3677 = vadd.f32 %v3606, %v3657
        %v3678 = vadd.f32 %v3607, %v3658
        %v3679 = vadd.f32 %v3608, %v3659
        %v3680 = vadd.f32 %v3609, %v3660
        %v3681 = vadd.f32 %v3610, %v3661
        %v3682 = vadd.f32 %v3611, %v3662
        %v3683 = vadd.f32 %v3612, %v3663
        %v3684 = vadd.f32 %v3613, %v3664
        %v3685 = vadd.f32 %v3614, %v3665
        %v3686 = vadd.f32 %v3615, %v3666
        %v3687 = vadd.f32 %v3616, %v3667
        %v3688 = vadd.f32 %v3617, %v3668
        %v3689 = vadd.f32 %v3618, %v3669
        %v3690 = vadd.f32 %v3619, %v3670
        %v3691 = vadd.f32 %v3620, %v3671
        %v3692 = vadd.f32 %v3621, %v3672
        %s3693 = sadd.s32 %s2401, 18
        %s3694 = sshra.s32 %s3693, 7
        %s3695 = sand.u32 %s3693, 127
        %s3696 = sadd.s32 %s3694, %s2406
        %s3697 = smul.u32 %s3696, 1024
        %s3698 = sshra.s32 %s3693, 7
        %s3699 = sand.u32 %s3693, 127
        %s3700 = sadd.s32 %s2413, %s3699
        %s3701 = sadd.s32 %s3697, %s3700
        %s3702 = sld [smem:[#allocation11 + %s3701]]
        %v3703 = vld [vmem:[%s3489 + $0x3] sm:$0xff]
        %v3704 = vld [vmem:[%s3489 + $0xb] sm:$0x3]
        %v3705 = vld [vmem:[%s3489 + $0x13] sm:$0xff]
        %v3706 = vld [vmem:[%s3489 + $0x1b] sm:$0x3]
        %v3707 = vld [vmem:[%s3489 + $0x23] sm:$0xff]
        %v3708 = vld [vmem:[%s3489 + $0x2b] sm:$0x3]
        %v3709 = vld [vmem:[%s3489 + $0x33] sm:$0xff]
        %v3710 = vld [vmem:[%s3489 + $0x3b] sm:$0x3]
        %v3711 = vld [vmem:[%s3489 + $0x43] sm:$0xff]
        %v3712 = vld [vmem:[%s3489 + $0x4b] sm:$0x3]
        %v3713 = vld [vmem:[%s3489 + $0x53] sm:$0xff]
        %v3714 = vld [vmem:[%s3489 + $0x5b] sm:$0x3]
        %v3715 = vld [vmem:[%s3489 + $0x63] sm:$0xff]
        %v3716 = vld [vmem:[%s3489 + $0x6b] sm:$0x3]
        %v3717 = vld [vmem:[%s3489 + $0x73] sm:$0xff]
        %v3718 = vld [vmem:[%s3489 + $0x7b] sm:$0x3]
        %v3719 = vld [vmem:[%s3489 + $0x83] sm:$0xff]
        %v3720 = vld [vmem:[%s3489 + $0x8b] sm:$0x3]
        %v3721 = vld [vmem:[%s3489 + $0x93] sm:$0xff]
        %v3722 = vld [vmem:[%s3489 + $0x9b] sm:$0x3]
        %v3723 = vstv %s3702
        %v3724 = vmul.f32 %v3723, %v3703
        %v3725 = vmul.f32 %v3723, %v3704
        %v3726 = vmul.f32 %v3723, %v3705
        %v3727 = vmul.f32 %v3723, %v3706
        %v3728 = vmul.f32 %v3723, %v3707
        %v3729 = vmul.f32 %v3723, %v3708
        %v3730 = vmul.f32 %v3723, %v3709
        %v3731 = vmul.f32 %v3723, %v3710
        %v3732 = vmul.f32 %v3723, %v3711
        %v3733 = vmul.f32 %v3723, %v3712
        %v3734 = vmul.f32 %v3723, %v3713
        %v3735 = vmul.f32 %v3723, %v3714
        %v3736 = vmul.f32 %v3723, %v3715
        %v3737 = vmul.f32 %v3723, %v3716
        %v3738 = vmul.f32 %v3723, %v3717
        %v3739 = vmul.f32 %v3723, %v3718
        %v3740 = vmul.f32 %v3723, %v3719
        %v3741 = vmul.f32 %v3723, %v3720
        %v3742 = vmul.f32 %v3723, %v3721
        %v3743 = vmul.f32 %v3723, %v3722
        %v3744 = vadd.f32 %v3673, %v3724
        %v3745 = vadd.f32 %v3674, %v3725
        %v3746 = vadd.f32 %v3675, %v3726
        %v3747 = vadd.f32 %v3676, %v3727
        %v3748 = vadd.f32 %v3677, %v3728
        %v3749 = vadd.f32 %v3678, %v3729
        %v3750 = vadd.f32 %v3679, %v3730
        %v3751 = vadd.f32 %v3680, %v3731
        %v3752 = vadd.f32 %v3681, %v3732
        %v3753 = vadd.f32 %v3682, %v3733
        %v3754 = vadd.f32 %v3683, %v3734
        %v3755 = vadd.f32 %v3684, %v3735
        %v3756 = vadd.f32 %v3685, %v3736
        %v3757 = vadd.f32 %v3686, %v3737
        %v3758 = vadd.f32 %v3687, %v3738
        %v3759 = vadd.f32 %v3688, %v3739
        %v3760 = vadd.f32 %v3689, %v3740
        %v3761 = vadd.f32 %v3690, %v3741
        %v3762 = vadd.f32 %v3691, %v3742
        %v3763 = vadd.f32 %v3692, %v3743
        %s3764 = sadd.s32 %s2401, 19
        %s3765 = sshra.s32 %s3764, 7
        %s3766 = sand.u32 %s3764, 127
        %s3767 = sadd.s32 %s3765, %s2406
        %s3768 = smul.u32 %s3767, 1024
        %s3769 = sshra.s32 %s3764, 7
        %s3770 = sand.u32 %s3764, 127
        %s3771 = sadd.s32 %s2413, %s3770
        %s3772 = sadd.s32 %s3768, %s3771
        %s3773 = sld [smem:[#allocation11 + %s3772]]
        %v3774 = vld [vmem:[%s3489 + $0x4] sm:$0xff]
        %v3775 = vld [vmem:[%s3489 + $0xc] sm:$0x3]
        %v3776 = vld [vmem:[%s3489 + $0x14] sm:$0xff]
        %v3777 = vld [vmem:[%s3489 + $0x1c] sm:$0x3]
        %v3778 = vld [vmem:[%s3489 + $0x24] sm:$0xff]
        %v3779 = vld [vmem:[%s3489 + $0x2c] sm:$0x3]
        %v3780 = vld [vmem:[%s3489 + $0x34] sm:$0xff]
        %v3781 = vld [vmem:[%s3489 + $0x3c] sm:$0x3]
        %v3782 = vld [vmem:[%s3489 + $0x44] sm:$0xff]
        %v3783 = vld [vmem:[%s3489 + $0x4c] sm:$0x3]
        %v3784 = vld [vmem:[%s3489 + $0x54] sm:$0xff]
        %v3785 = vld [vmem:[%s3489 + $0x5c] sm:$0x3]
        %v3786 = vld [vmem:[%s3489 + $0x64] sm:$0xff]
        %v3787 = vld [vmem:[%s3489 + $0x6c] sm:$0x3]
        %v3788 = vld [vmem:[%s3489 + $0x74] sm:$0xff]
        %v3789 = vld [vmem:[%s3489 + $0x7c] sm:$0x3]
        %v3790 = vld [vmem:[%s3489 + $0x84] sm:$0xff]
        %v3791 = vld [vmem:[%s3489 + $0x8c] sm:$0x3]
        %v3792 = vld [vmem:[%s3489 + $0x94] sm:$0xff]
        %v3793 = vld [vmem:[%s3489 + $0x9c] sm:$0x3]
        %v3794 = vstv %s3773
        %v3795 = vmul.f32 %v3794, %v3774
        %v3796 = vmul.f32 %v3794, %v3775
        %v3797 = vmul.f32 %v3794, %v3776
        %v3798 = vmul.f32 %v3794, %v3777
        %v3799 = vmul.f32 %v3794, %v3778
        %v3800 = vmul.f32 %v3794, %v3779
        %v3801 = vmul.f32 %v3794, %v3780
        %v3802 = vmul.f32 %v3794, %v3781
        %v3803 = vmul.f32 %v3794, %v3782
        %v3804 = vmul.f32 %v3794, %v3783
        %v3805 = vmul.f32 %v3794, %v3784
        %v3806 = vmul.f32 %v3794, %v3785
        %v3807 = vmul.f32 %v3794, %v3786
        %v3808 = vmul.f32 %v3794, %v3787
        %v3809 = vmul.f32 %v3794, %v3788
        %v3810 = vmul.f32 %v3794, %v3789
        %v3811 = vmul.f32 %v3794, %v3790
        %v3812 = vmul.f32 %v3794, %v3791
        %v3813 = vmul.f32 %v3794, %v3792
        %v3814 = vmul.f32 %v3794, %v3793
        %v3815 = vadd.f32 %v3744, %v3795
        %v3816 = vadd.f32 %v3745, %v3796
        %v3817 = vadd.f32 %v3746, %v3797
        %v3818 = vadd.f32 %v3747, %v3798
        %v3819 = vadd.f32 %v3748, %v3799
        %v3820 = vadd.f32 %v3749, %v3800
        %v3821 = vadd.f32 %v3750, %v3801
        %v3822 = vadd.f32 %v3751, %v3802
        %v3823 = vadd.f32 %v3752, %v3803
        %v3824 = vadd.f32 %v3753, %v3804
        %v3825 = vadd.f32 %v3754, %v3805
        %v3826 = vadd.f32 %v3755, %v3806
        %v3827 = vadd.f32 %v3756, %v3807
        %v3828 = vadd.f32 %v3757, %v3808
        %v3829 = vadd.f32 %v3758, %v3809
        %v3830 = vadd.f32 %v3759, %v3810
        %v3831 = vadd.f32 %v3760, %v3811
        %v3832 = vadd.f32 %v3761, %v3812
        %v3833 = vadd.f32 %v3762, %v3813
        %v3834 = vadd.f32 %v3763, %v3814
        %s3835 = sadd.s32 %s2401, 20
        %s3836 = sshra.s32 %s3835, 7
        %s3837 = sand.u32 %s3835, 127
        %s3838 = sadd.s32 %s3836, %s2406
        %s3839 = smul.u32 %s3838, 1024
        %s3840 = sshra.s32 %s3835, 7
        %s3841 = sand.u32 %s3835, 127
        %s3842 = sadd.s32 %s2413, %s3841
        %s3843 = sadd.s32 %s3839, %s3842
        %s3844 = sld [smem:[#allocation11 + %s3843]]
        %s3845 = sadd.s32 64, %s2417
        %s3846 = scalar_lea.vmem [#allocation2], %s3845
        %v3847 = vld [vmem:[%s3846] sm:$0xff]
        %v3848 = vld [vmem:[%s3846 + $0x8] sm:$0x3]
        %v3849 = vld [vmem:[%s3846 + $0x10] sm:$0xff]
        %v3850 = vld [vmem:[%s3846 + $0x18] sm:$0x3]
        %v3851 = vld [vmem:[%s3846 + $0x20] sm:$0xff]
        %v3852 = vld [vmem:[%s3846 + $0x28] sm:$0x3]
        %v3853 = vld [vmem:[%s3846 + $0x30] sm:$0xff]
        %v3854 = vld [vmem:[%s3846 + $0x38] sm:$0x3]
        %v3855 = vld [vmem:[%s3846 + $0x40] sm:$0xff]
        %v3856 = vld [vmem:[%s3846 + $0x48] sm:$0x3]
        %v3857 = vld [vmem:[%s3846 + $0x50] sm:$0xff]
        %v3858 = vld [vmem:[%s3846 + $0x58] sm:$0x3]
        %v3859 = vld [vmem:[%s3846 + $0x60] sm:$0xff]
        %v3860 = vld [vmem:[%s3846 + $0x68] sm:$0x3]
        %v3861 = vld [vmem:[%s3846 + $0x70] sm:$0xff]
        %v3862 = vld [vmem:[%s3846 + $0x78] sm:$0x3]
        %v3863 = vld [vmem:[%s3846 + $0x80] sm:$0xff]
        %v3864 = vld [vmem:[%s3846 + $0x88] sm:$0x3]
        %v3865 = vld [vmem:[%s3846 + $0x90] sm:$0xff]
        %v3866 = vld [vmem:[%s3846 + $0x98] sm:$0x3]
        %v3867 = vstv %s3844
        %v3868 = vmul.f32 %v3867, %v3847
        %v3869 = vmul.f32 %v3867, %v3848
        %v3870 = vmul.f32 %v3867, %v3849
        %v3871 = vmul.f32 %v3867, %v3850
        %v3872 = vmul.f32 %v3867, %v3851
        %v3873 = vmul.f32 %v3867, %v3852
        %v3874 = vmul.f32 %v3867, %v3853
        %v3875 = vmul.f32 %v3867, %v3854
        %v3876 = vmul.f32 %v3867, %v3855
        %v3877 = vmul.f32 %v3867, %v3856
        %v3878 = vmul.f32 %v3867, %v3857
        %v3879 = vmul.f32 %v3867, %v3858
        %v3880 = vmul.f32 %v3867, %v3859
        %v3881 = vmul.f32 %v3867, %v3860
        %v3882 = vmul.f32 %v3867, %v3861
        %v3883 = vmul.f32 %v3867, %v3862
        %v3884 = vmul.f32 %v3867, %v3863
        %v3885 = vmul.f32 %v3867, %v3864
        %v3886 = vmul.f32 %v3867, %v3865
        %v3887 = vmul.f32 %v3867, %v3866
        %v3888 = vadd.f32 %v3815, %v3868
        %v3889 = vadd.f32 %v3816, %v3869
        %v3890 = vadd.f32 %v3817, %v3870
        %v3891 = vadd.f32 %v3818, %v3871
        %v3892 = vadd.f32 %v3819, %v3872
        %v3893 = vadd.f32 %v3820, %v3873
        %v3894 = vadd.f32 %v3821, %v3874
        %v3895 = vadd.f32 %v3822, %v3875
        %v3896 = vadd.f32 %v3823, %v3876
        %v3897 = vadd.f32 %v3824, %v3877
        %v3898 = vadd.f32 %v3825, %v3878
        %v3899 = vadd.f32 %v3826, %v3879
        %v3900 = vadd.f32 %v3827, %v3880
        %v3901 = vadd.f32 %v3828, %v3881
        %v3902 = vadd.f32 %v3829, %v3882
        %v3903 = vadd.f32 %v3830, %v3883
        %v3904 = vadd.f32 %v3831, %v3884
        %v3905 = vadd.f32 %v3832, %v3885
        %v3906 = vadd.f32 %v3833, %v3886
        %v3907 = vadd.f32 %v3834, %v3887
        %s3908 = sadd.s32 %s2401, 21
        %s3909 = sshra.s32 %s3908, 7
        %s3910 = sand.u32 %s3908, 127
        %s3911 = sadd.s32 %s3909, %s2406
        %s3912 = smul.u32 %s3911, 1024
        %s3913 = sshra.s32 %s3908, 7
        %s3914 = sand.u32 %s3908, 127
        %s3915 = sadd.s32 %s2413, %s3914
        %s3916 = sadd.s32 %s3912, %s3915
        %s3917 = sld [smem:[#allocation11 + %s3916]]
        %v3918 = vld [vmem:[%s3846 + $0x1] sm:$0xff]
        %v3919 = vld [vmem:[%s3846 + $0x9] sm:$0x3]
        %v3920 = vld [vmem:[%s3846 + $0x11] sm:$0xff]
        %v3921 = vld [vmem:[%s3846 + $0x19] sm:$0x3]
        %v3922 = vld [vmem:[%s3846 + $0x21] sm:$0xff]
        %v3923 = vld [vmem:[%s3846 + $0x29] sm:$0x3]
        %v3924 = vld [vmem:[%s3846 + $0x31] sm:$0xff]
        %v3925 = vld [vmem:[%s3846 + $0x39] sm:$0x3]
        %v3926 = vld [vmem:[%s3846 + $0x41] sm:$0xff]
        %v3927 = vld [vmem:[%s3846 + $0x49] sm:$0x3]
        %v3928 = vld [vmem:[%s3846 + $0x51] sm:$0xff]
        %v3929 = vld [vmem:[%s3846 + $0x59] sm:$0x3]
        %v3930 = vld [vmem:[%s3846 + $0x61] sm:$0xff]
        %v3931 = vld [vmem:[%s3846 + $0x69] sm:$0x3]
        %v3932 = vld [vmem:[%s3846 + $0x71] sm:$0xff]
        %v3933 = vld [vmem:[%s3846 + $0x79] sm:$0x3]
        %v3934 = vld [vmem:[%s3846 + $0x81] sm:$0xff]
        %v3935 = vld [vmem:[%s3846 + $0x89] sm:$0x3]
        %v3936 = vld [vmem:[%s3846 + $0x91] sm:$0xff]
        %v3937 = vld [vmem:[%s3846 + $0x99] sm:$0x3]
        %v3938 = vstv %s3917
        %v3939 = vmul.f32 %v3938, %v3918
        %v3940 = vmul.f32 %v3938, %v3919
        %v3941 = vmul.f32 %v3938, %v3920
        %v3942 = vmul.f32 %v3938, %v3921
        %v3943 = vmul.f32 %v3938, %v3922
        %v3944 = vmul.f32 %v3938, %v3923
        %v3945 = vmul.f32 %v3938, %v3924
        %v3946 = vmul.f32 %v3938, %v3925
        %v3947 = vmul.f32 %v3938, %v3926
        %v3948 = vmul.f32 %v3938, %v3927
        %v3949 = vmul.f32 %v3938, %v3928
        %v3950 = vmul.f32 %v3938, %v3929
        %v3951 = vmul.f32 %v3938, %v3930
        %v3952 = vmul.f32 %v3938, %v3931
        %v3953 = vmul.f32 %v3938, %v3932
        %v3954 = vmul.f32 %v3938, %v3933
        %v3955 = vmul.f32 %v3938, %v3934
        %v3956 = vmul.f32 %v3938, %v3935
        %v3957 = vmul.f32 %v3938, %v3936
        %v3958 = vmul.f32 %v3938, %v3937
        %v3959 = vadd.f32 %v3888, %v3939
        %v3960 = vadd.f32 %v3889, %v3940
        %v3961 = vadd.f32 %v3890, %v3941
        %v3962 = vadd.f32 %v3891, %v3942
        %v3963 = vadd.f32 %v3892, %v3943
        %v3964 = vadd.f32 %v3893, %v3944
        %v3965 = vadd.f32 %v3894, %v3945
        %v3966 = vadd.f32 %v3895, %v3946
        %v3967 = vadd.f32 %v3896, %v3947
        %v3968 = vadd.f32 %v3897, %v3948
        %v3969 = vadd.f32 %v3898, %v3949
        %v3970 = vadd.f32 %v3899, %v3950
        %v3971 = vadd.f32 %v3900, %v3951
        %v3972 = vadd.f32 %v3901, %v3952
        %v3973 = vadd.f32 %v3902, %v3953
        %v3974 = vadd.f32 %v3903, %v3954
        %v3975 = vadd.f32 %v3904, %v3955
        %v3976 = vadd.f32 %v3905, %v3956
        %v3977 = vadd.f32 %v3906, %v3957
        %v3978 = vadd.f32 %v3907, %v3958
        %s3979 = sadd.s32 %s2401, 22
        %s3980 = sshra.s32 %s3979, 7
        %s3981 = sand.u32 %s3979, 127
        %s3982 = sadd.s32 %s3980, %s2406
        %s3983 = smul.u32 %s3982, 1024
        %s3984 = sshra.s32 %s3979, 7
        %s3985 = sand.u32 %s3979, 127
        %s3986 = sadd.s32 %s2413, %s3985
        %s3987 = sadd.s32 %s3983, %s3986
        %s3988 = sld [smem:[#allocation11 + %s3987]]
        %v3989 = vld [vmem:[%s3846 + $0x2] sm:$0xff]
        %v3990 = vld [vmem:[%s3846 + $0xa] sm:$0x3]
        %v3991 = vld [vmem:[%s3846 + $0x12] sm:$0xff]
        %v3992 = vld [vmem:[%s3846 + $0x1a] sm:$0x3]
        %v3993 = vld [vmem:[%s3846 + $0x22] sm:$0xff]
        %v3994 = vld [vmem:[%s3846 + $0x2a] sm:$0x3]
        %v3995 = vld [vmem:[%s3846 + $0x32] sm:$0xff]
        %v3996 = vld [vmem:[%s3846 + $0x3a] sm:$0x3]
        %v3997 = vld [vmem:[%s3846 + $0x42] sm:$0xff]
        %v3998 = vld [vmem:[%s3846 + $0x4a] sm:$0x3]
        %v3999 = vld [vmem:[%s3846 + $0x52] sm:$0xff]
        %v4000 = vld [vmem:[%s3846 + $0x5a] sm:$0x3]
        %v4001 = vld [vmem:[%s3846 + $0x62] sm:$0xff]
        %v4002 = vld [vmem:[%s3846 + $0x6a] sm:$0x3]
        %v4003 = vld [vmem:[%s3846 + $0x72] sm:$0xff]
        %v4004 = vld [vmem:[%s3846 + $0x7a] sm:$0x3]
        %v4005 = vld [vmem:[%s3846 + $0x82] sm:$0xff]
        %v4006 = vld [vmem:[%s3846 + $0x8a] sm:$0x3]
        %v4007 = vld [vmem:[%s3846 + $0x92] sm:$0xff]
        %v4008 = vld [vmem:[%s3846 + $0x9a] sm:$0x3]
        %v4009 = vstv %s3988
        %v4010 = vmul.f32 %v4009, %v3989
        %v4011 = vmul.f32 %v4009, %v3990
        %v4012 = vmul.f32 %v4009, %v3991
        %v4013 = vmul.f32 %v4009, %v3992
        %v4014 = vmul.f32 %v4009, %v3993
        %v4015 = vmul.f32 %v4009, %v3994
        %v4016 = vmul.f32 %v4009, %v3995
        %v4017 = vmul.f32 %v4009, %v3996
        %v4018 = vmul.f32 %v4009, %v3997
        %v4019 = vmul.f32 %v4009, %v3998
        %v4020 = vmul.f32 %v4009, %v3999
        %v4021 = vmul.f32 %v4009, %v4000
        %v4022 = vmul.f32 %v4009, %v4001
        %v4023 = vmul.f32 %v4009, %v4002
        %v4024 = vmul.f32 %v4009, %v4003
        %v4025 = vmul.f32 %v4009, %v4004
        %v4026 = vmul.f32 %v4009, %v4005
        %v4027 = vmul.f32 %v4009, %v4006
        %v4028 = vmul.f32 %v4009, %v4007
        %v4029 = vmul.f32 %v4009, %v4008
        %v4030 = vadd.f32 %v3959, %v4010
        %v4031 = vadd.f32 %v3960, %v4011
        %v4032 = vadd.f32 %v3961, %v4012
        %v4033 = vadd.f32 %v3962, %v4013
        %v4034 = vadd.f32 %v3963, %v4014
        %v4035 = vadd.f32 %v3964, %v4015
        %v4036 = vadd.f32 %v3965, %v4016
        %v4037 = vadd.f32 %v3966, %v4017
        %v4038 = vadd.f32 %v3967, %v4018
        %v4039 = vadd.f32 %v3968, %v4019
        %v4040 = vadd.f32 %v3969, %v4020
        %v4041 = vadd.f32 %v3970, %v4021
        %v4042 = vadd.f32 %v3971, %v4022
        %v4043 = vadd.f32 %v3972, %v4023
        %v4044 = vadd.f32 %v3973, %v4024
        %v4045 = vadd.f32 %v3974, %v4025
        %v4046 = vadd.f32 %v3975, %v4026
        %v4047 = vadd.f32 %v3976, %v4027
        %v4048 = vadd.f32 %v3977, %v4028
        %v4049 = vadd.f32 %v3978, %v4029
        %s4050 = sadd.s32 %s2401, 23
        %s4051 = sshra.s32 %s4050, 7
        %s4052 = sand.u32 %s4050, 127
        %s4053 = sadd.s32 %s4051, %s2406
        %s4054 = smul.u32 %s4053, 1024
        %s4055 = sshra.s32 %s4050, 7
        %s4056 = sand.u32 %s4050, 127
        %s4057 = sadd.s32 %s2413, %s4056
        %s4058 = sadd.s32 %s4054, %s4057
        %s4059 = sld [smem:[#allocation11 + %s4058]]
        %v4060 = vld [vmem:[%s3846 + $0x3] sm:$0xff]
        %v4061 = vld [vmem:[%s3846 + $0xb] sm:$0x3]
        %v4062 = vld [vmem:[%s3846 + $0x13] sm:$0xff]
        %v4063 = vld [vmem:[%s3846 + $0x1b] sm:$0x3]
        %v4064 = vld [vmem:[%s3846 + $0x23] sm:$0xff]
        %v4065 = vld [vmem:[%s3846 + $0x2b] sm:$0x3]
        %v4066 = vld [vmem:[%s3846 + $0x33] sm:$0xff]
        %v4067 = vld [vmem:[%s3846 + $0x3b] sm:$0x3]
        %v4068 = vld [vmem:[%s3846 + $0x43] sm:$0xff]
        %v4069 = vld [vmem:[%s3846 + $0x4b] sm:$0x3]
        %v4070 = vld [vmem:[%s3846 + $0x53] sm:$0xff]
        %v4071 = vld [vmem:[%s3846 + $0x5b] sm:$0x3]
        %v4072 = vld [vmem:[%s3846 + $0x63] sm:$0xff]
        %v4073 = vld [vmem:[%s3846 + $0x6b] sm:$0x3]
        %v4074 = vld [vmem:[%s3846 + $0x73] sm:$0xff]
        %v4075 = vld [vmem:[%s3846 + $0x7b] sm:$0x3]
        %v4076 = vld [vmem:[%s3846 + $0x83] sm:$0xff]
        %v4077 = vld [vmem:[%s3846 + $0x8b] sm:$0x3]
        %v4078 = vld [vmem:[%s3846 + $0x93] sm:$0xff]
        %v4079 = vld [vmem:[%s3846 + $0x9b] sm:$0x3]
        %v4080 = vstv %s4059
        %v4081 = vmul.f32 %v4080, %v4060
        %v4082 = vmul.f32 %v4080, %v4061
        %v4083 = vmul.f32 %v4080, %v4062
        %v4084 = vmul.f32 %v4080, %v4063
        %v4085 = vmul.f32 %v4080, %v4064
        %v4086 = vmul.f32 %v4080, %v4065
        %v4087 = vmul.f32 %v4080, %v4066
        %v4088 = vmul.f32 %v4080, %v4067
        %v4089 = vmul.f32 %v4080, %v4068
        %v4090 = vmul.f32 %v4080, %v4069
        %v4091 = vmul.f32 %v4080, %v4070
        %v4092 = vmul.f32 %v4080, %v4071
        %v4093 = vmul.f32 %v4080, %v4072
        %v4094 = vmul.f32 %v4080, %v4073
        %v4095 = vmul.f32 %v4080, %v4074
        %v4096 = vmul.f32 %v4080, %v4075
        %v4097 = vmul.f32 %v4080, %v4076
        %v4098 = vmul.f32 %v4080, %v4077
        %v4099 = vmul.f32 %v4080, %v4078
        %v4100 = vmul.f32 %v4080, %v4079
        %v4101 = vadd.f32 %v4030, %v4081
        %v4102 = vadd.f32 %v4031, %v4082
        %v4103 = vadd.f32 %v4032, %v4083
        %v4104 = vadd.f32 %v4033, %v4084
        %v4105 = vadd.f32 %v4034, %v4085
        %v4106 = vadd.f32 %v4035, %v4086
        %v4107 = vadd.f32 %v4036, %v4087
        %v4108 = vadd.f32 %v4037, %v4088
        %v4109 = vadd.f32 %v4038, %v4089
        %v4110 = vadd.f32 %v4039, %v4090
        %v4111 = vadd.f32 %v4040, %v4091
        %v4112 = vadd.f32 %v4041, %v4092
        %v4113 = vadd.f32 %v4042, %v4093
        %v4114 = vadd.f32 %v4043, %v4094
        %v4115 = vadd.f32 %v4044, %v4095
        %v4116 = vadd.f32 %v4045, %v4096
        %v4117 = vadd.f32 %v4046, %v4097
        %v4118 = vadd.f32 %v4047, %v4098
        %v4119 = vadd.f32 %v4048, %v4099
        %v4120 = vadd.f32 %v4049, %v4100
        %s4121 = sadd.s32 %s2401, 24
        %s4122 = sshra.s32 %s4121, 7
        %s4123 = sand.u32 %s4121, 127
        %s4124 = sadd.s32 %s4122, %s2406
        %s4125 = smul.u32 %s4124, 1024
        %s4126 = sshra.s32 %s4121, 7
        %s4127 = sand.u32 %s4121, 127
        %s4128 = sadd.s32 %s2413, %s4127
        %s4129 = sadd.s32 %s4125, %s4128
        %s4130 = sld [smem:[#allocation11 + %s4129]]
        %v4131 = vld [vmem:[%s3846 + $0x4] sm:$0xff]
        %v4132 = vld [vmem:[%s3846 + $0xc] sm:$0x3]
        %v4133 = vld [vmem:[%s3846 + $0x14] sm:$0xff]
        %v4134 = vld [vmem:[%s3846 + $0x1c] sm:$0x3]
        %v4135 = vld [vmem:[%s3846 + $0x24] sm:$0xff]
        %v4136 = vld [vmem:[%s3846 + $0x2c] sm:$0x3]
        %v4137 = vld [vmem:[%s3846 + $0x34] sm:$0xff]
        %v4138 = vld [vmem:[%s3846 + $0x3c] sm:$0x3]
        %v4139 = vld [vmem:[%s3846 + $0x44] sm:$0xff]
        %v4140 = vld [vmem:[%s3846 + $0x4c] sm:$0x3]
        %v4141 = vld [vmem:[%s3846 + $0x54] sm:$0xff]
        %v4142 = vld [vmem:[%s3846 + $0x5c] sm:$0x3]
        %v4143 = vld [vmem:[%s3846 + $0x64] sm:$0xff]
        %v4144 = vld [vmem:[%s3846 + $0x6c] sm:$0x3]
        %v4145 = vld [vmem:[%s3846 + $0x74] sm:$0xff]
        %v4146 = vld [vmem:[%s3846 + $0x7c] sm:$0x3]
        %v4147 = vld [vmem:[%s3846 + $0x84] sm:$0xff]
        %v4148 = vld [vmem:[%s3846 + $0x8c] sm:$0x3]
        %v4149 = vld [vmem:[%s3846 + $0x94] sm:$0xff]
        %v4150 = vld [vmem:[%s3846 + $0x9c] sm:$0x3]
        %v4151 = vstv %s4130
        %v4152 = vmul.f32 %v4151, %v4131
        %v4153 = vmul.f32 %v4151, %v4132
        %v4154 = vmul.f32 %v4151, %v4133
        %v4155 = vmul.f32 %v4151, %v4134
        %v4156 = vmul.f32 %v4151, %v4135
        %v4157 = vmul.f32 %v4151, %v4136
        %v4158 = vmul.f32 %v4151, %v4137
        %v4159 = vmul.f32 %v4151, %v4138
        %v4160 = vmul.f32 %v4151, %v4139
        %v4161 = vmul.f32 %v4151, %v4140
        %v4162 = vmul.f32 %v4151, %v4141
        %v4163 = vmul.f32 %v4151, %v4142
        %v4164 = vmul.f32 %v4151, %v4143
        %v4165 = vmul.f32 %v4151, %v4144
        %v4166 = vmul.f32 %v4151, %v4145
        %v4167 = vmul.f32 %v4151, %v4146
        %v4168 = vmul.f32 %v4151, %v4147
        %v4169 = vmul.f32 %v4151, %v4148
        %v4170 = vmul.f32 %v4151, %v4149
        %v4171 = vmul.f32 %v4151, %v4150
        %v4172 = vadd.f32 %v4101, %v4152
        %v4173 = vadd.f32 %v4102, %v4153
        %v4174 = vadd.f32 %v4103, %v4154
        %v4175 = vadd.f32 %v4104, %v4155
        %v4176 = vadd.f32 %v4105, %v4156
        %v4177 = vadd.f32 %v4106, %v4157
        %v4178 = vadd.f32 %v4107, %v4158
        %v4179 = vadd.f32 %v4108, %v4159
        %v4180 = vadd.f32 %v4109, %v4160
        %v4181 = vadd.f32 %v4110, %v4161
        %v4182 = vadd.f32 %v4111, %v4162
        %v4183 = vadd.f32 %v4112, %v4163
        %v4184 = vadd.f32 %v4113, %v4164
        %v4185 = vadd.f32 %v4114, %v4165
        %v4186 = vadd.f32 %v4115, %v4166
        %v4187 = vadd.f32 %v4116, %v4167
        %v4188 = vadd.f32 %v4117, %v4168
        %v4189 = vadd.f32 %v4118, %v4169
        %v4190 = vadd.f32 %v4119, %v4170
        %v4191 = vadd.f32 %v4120, %v4171
      $region87: #{lenet5_forward.1} parent=79 // loop_footer
        %s2380 = sadd.s32 1, %s2376
      $region88: #{lenet5_forward.1} parent=79 // loop_footer_branch
        %2375 = sbr.rel target = $region84
      $region89: #{lenet5_forward.1} parent=79 // loop_exit
        _
      %v4192 = vtanh.pop %v2381
      %v4193 = vtanh.pop %v2382
      %v4194 = vtanh.pop %v2383
      %v4195 = vtanh.pop %v2384
      %v4196 = vtanh.pop %v2385
      %v4197 = vtanh.pop %v2386
      %v4198 = vtanh.pop %v2387
      %v4199 = vtanh.pop %v2388
      %v4200 = vtanh.pop %v2389
      %v4201 = vtanh.pop %v2390
      %v4202 = vtanh.pop %v2391
      %v4203 = vtanh.pop %v2392
      %v4204 = vtanh.pop %v2393
      %v4205 = vtanh.pop %v2394
      %v4206 = vtanh.pop %v2395
      %v4207 = vtanh.pop %v2396
      %v4208 = vtanh.pop %v2397
      %v4209 = vtanh.pop %v2398
      %v4210 = vtanh.pop %v2399
      %v4211 = vtanh.pop %v2400
      %v4212 = vadd.f32 %v4192, %v4194
      %v4213 = vadd.f32 %v4193, %v4195
      %v4214 = vadd.f32 %v4196, %v4198
      %v4215 = vadd.f32 %v4197, %v4199
      %v4216 = vadd.f32 %v4200, %v4202
      %v4217 = vadd.f32 %v4201, %v4203
      %v4218 = vadd.f32 %v4204, %v4206
      %v4219 = vadd.f32 %v4205, %v4207
      %v4220 = vadd.f32 %v4208, %v4210
      %v4221 = vadd.f32 %v4209, %v4211
      %4222 = vst [vmem:[#allocation5] sm:$0xff] %v4212
      %4223 = vst [vmem:[#allocation5 + $0x8] sm:$0x3] %v4213
      %4224 = vst [vmem:[#allocation5 + $0x10] sm:$0xff] %v4214
      %4225 = vst [vmem:[#allocation5 + $0x18] sm:$0x3] %v4215
      %4226 = vst [vmem:[#allocation5 + $0x20] sm:$0xff] %v4216
      %4227 = vst [vmem:[#allocation5 + $0x28] sm:$0x3] %v4217
      %4228 = vst [vmem:[#allocation5 + $0x30] sm:$0xff] %v4218
      %4229 = vst [vmem:[#allocation5 + $0x38] sm:$0x3] %v4219
      %4230 = vst [vmem:[#allocation5 + $0x40] sm:$0xff] %v4220
      %4231 = vst [vmem:[#allocation5 + $0x48] sm:$0x3] %v4221
      %v4232 = vld [vmem:[#allocation5] ss:$2 sm:$0x1f]
      %s4233 = scalar_lea.vmem [#allocation5], 16
      %v4234 = vld [vmem:[%s4233] ss:$2 sm:$0x1f]
      %s4235 = scalar_lea.vmem [#allocation5], 32
      %v4236 = vld [vmem:[%s4235] ss:$2 sm:$0x1f]
      %s4237 = scalar_lea.vmem [#allocation5], 48
      %v4238 = vld [vmem:[%s4237] ss:$2 sm:$0x1f]
      %s4239 = scalar_lea.vmem [#allocation5], 64
      %v4240 = vld [vmem:[%s4239] ss:$2 sm:$0x1f]
      %s4241 = scalar_lea.vmem [#allocation5], 1
      %v4242 = vld [vmem:[%s4241] ss:$2 sm:$0x1f]
      %s4243 = scalar_lea.vmem [#allocation5], 17
      %v4244 = vld [vmem:[%s4243] ss:$2 sm:$0x1f]
      %s4245 = scalar_lea.vmem [#allocation5], 33
      %v4246 = vld [vmem:[%s4245] ss:$2 sm:$0x1f]
      %s4247 = scalar_lea.vmem [#allocation5], 49
      %v4248 = vld [vmem:[%s4247] ss:$2 sm:$0x1f]
      %s4249 = scalar_lea.vmem [#allocation5], 65
      %v4250 = vld [vmem:[%s4249] ss:$2 sm:$0x1f]
      %v4251 = vadd.f32 %v4232, %v4242
      %v4252 = vadd.f32 %v4234, %v4244
      %v4253 = vadd.f32 %v4236, %v4246
      %v4254 = vadd.f32 %v4238, %v4248
      %v4255 = vadd.f32 %v4240, %v4250
      %v4256 = vmul.f32 %v4251, 0.25
      %v4257 = vmul.f32 %v4252, 0.25
      %v4258 = vmul.f32 %v4253, 0.25
      %v4259 = vmul.f32 %v4254, 0.25
      %v4260 = vmul.f32 %v4255, 0.25
      %s4261 = smul.u32 %s2368, 40
      %s4262 = scalar_lea.vmem [#allocation4], %s4261
      %4263 = vst [vmem:[%s4262] sm:$0x1f] %v4256
      %4264 = vst [vmem:[%s4262 + $0x8] sm:$0x1f] %v4257
      %4265 = vst [vmem:[%s4262 + $0x10] sm:$0x1f] %v4258
      %4266 = vst [vmem:[%s4262 + $0x18] sm:$0x1f] %v4259
      %4267 = vst [vmem:[%s4262 + $0x20] sm:$0x1f] %v4260
    $region80: #{lenet5_forward.1} parent=1 // loop_footer
      %s2372 = sadd.s32 1, %s2368
    $region81: #{lenet5_forward.1} parent=1 // loop_footer_branch
      %2367 = sbr.rel target = $region77
    $region82: #{lenet5_forward.1} parent=1 // loop_exit
      _
    %v4268 = vld [vmem:[#allocation4] sm:$0x1f]
    %v4269 = vld [vmem:[#allocation4 + $0x8] sm:$0x1f]
    %v4270 = vld [vmem:[#allocation4 + $0x10] sm:$0x1f]
    %v4271 = vld [vmem:[#allocation4 + $0x18] sm:$0x1f]
    %v4272 = vld [vmem:[#allocation4 + $0x20] sm:$0x1f]
    %4273 = vst [vmem:[#allocation6] sm:$0x1f] %v4268
    %4274 = vst [vmem:[#allocation6 + $0x5] sm:$0x1f] %v4269
    %4275 = vst [vmem:[#allocation6 + $0xa] sm:$0x1f] %v4270
    %4276 = vst [vmem:[#allocation6 + $0xf] sm:$0x1f] %v4271
    %4277 = vst [vmem:[#allocation6 + $0x14] sm:$0x1f] %v4272
    %s4278 = scalar_lea.vmem [#allocation4], 40
    %v4279 = vld [vmem:[%s4278] sm:$0x1f]
    %v4280 = vld [vmem:[%s4278 + $0x8] sm:$0x1f]
    %v4281 = vld [vmem:[%s4278 + $0x10] sm:$0x1f]
    %v4282 = vld [vmem:[%s4278 + $0x18] sm:$0x1f]
    %v4283 = vld [vmem:[%s4278 + $0x20] sm:$0x1f]
    %4284 = vst [vmem:[#allocation6 + $0x19] sm:$0x1f] %v4279
    %4285 = vst [vmem:[#allocation6 + $0x1e] sm:$0x1f] %v4280
    %4286 = vst [vmem:[#allocation6 + $0x23] sm:$0x1f] %v4281
    %4287 = vst [vmem:[#allocation6 + $0x28] sm:$0x1f] %v4282
    %4288 = vst [vmem:[#allocation6 + $0x2d] sm:$0x1f] %v4283
    %s4289 = scalar_lea.vmem [#allocation4], 80
    %v4290 = vld [vmem:[%s4289] sm:$0x1f]
    %v4291 = vld [vmem:[%s4289 + $0x8] sm:$0x1f]
    %v4292 = vld [vmem:[%s4289 + $0x10] sm:$0x1f]
    %v4293 = vld [vmem:[%s4289 + $0x18] sm:$0x1f]
    %v4294 = vld [vmem:[%s4289 + $0x20] sm:$0x1f]
    %4295 = vst [vmem:[#allocation6 + $0x32] sm:$0x1f] %v4290
    %4296 = vst [vmem:[#allocation6 + $0x37] sm:$0x1f] %v4291
    %4297 = vst [vmem:[#allocation6 + $0x3c] sm:$0x1f] %v4292
    %4298 = vst [vmem:[#allocation6 + $0x41] sm:$0x1f] %v4293
    %4299 = vst [vmem:[#allocation6 + $0x46] sm:$0x1f] %v4294
    %s4300 = scalar_lea.vmem [#allocation4], 120
    %v4301 = vld [vmem:[%s4300] sm:$0x1f]
    %v4302 = vld [vmem:[%s4300 + $0x8] sm:$0x1f]
    %v4303 = vld [vmem:[%s4300 + $0x10] sm:$0x1f]
    %v4304 = vld [vmem:[%s4300 + $0x18] sm:$0x1f]
    %v4305 = vld [vmem:[%s4300 + $0x20] sm:$0x1f]
    %4306 = vst [vmem:[#allocation6 + $0x4b] sm:$0x1f] %v4301
    %4307 = vst [vmem:[#allocation6 + $0x50] sm:$0x1f] %v4302
    %4308 = vst [vmem:[#allocation6 + $0x55] sm:$0x1f] %v4303
    %4309 = vst [vmem:[#allocation6 + $0x5a] sm:$0x1f] %v4304
    %4310 = vst [vmem:[#allocation6 + $0x5f] sm:$0x1f] %v4305
    %s4311 = scalar_lea.vmem [#allocation4], 160
    %v4312 = vld [vmem:[%s4311] sm:$0x1f]
    %v4313 = vld [vmem:[%s4311 + $0x8] sm:$0x1f]
    %v4314 = vld [vmem:[%s4311 + $0x10] sm:$0x1f]
    %v4315 = vld [vmem:[%s4311 + $0x18] sm:$0x1f]
    %v4316 = vld [vmem:[%s4311 + $0x20] sm:$0x1f]
    %4317 = vst [vmem:[#allocation6 + $0x64] sm:$0x1f] %v4312
    %4318 = vst [vmem:[#allocation6 + $0x69] sm:$0x1f] %v4313
    %4319 = vst [vmem:[#allocation6 + $0x6e] sm:$0x1f] %v4314
    %4320 = vst [vmem:[#allocation6 + $0x73] sm:$0x1f] %v4315
    %4321 = vst [vmem:[#allocation6 + $0x78] sm:$0x1f] %v4316
    %s4322 = scalar_lea.vmem [#allocation4], 200
    %v4323 = vld [vmem:[%s4322] sm:$0x1f]
    %v4324 = vld [vmem:[%s4322 + $0x8] sm:$0x1f]
    %v4325 = vld [vmem:[%s4322 + $0x10] sm:$0x1f]
    %v4326 = vld [vmem:[%s4322 + $0x18] sm:$0x1f]
    %v4327 = vld [vmem:[%s4322 + $0x20] sm:$0x1f]
    %4328 = vst [vmem:[#allocation6 + $0x7d] sm:$0x1f] %v4323
    %4329 = vst [vmem:[#allocation6 + $0x82] sm:$0x1f] %v4324
    %4330 = vst [vmem:[#allocation6 + $0x87] sm:$0x1f] %v4325
    %4331 = vst [vmem:[#allocation6 + $0x8c] sm:$0x1f] %v4326
    %4332 = vst [vmem:[#allocation6 + $0x91] sm:$0x1f] %v4327
    %s4333 = scalar_lea.vmem [#allocation4], 240
    %v4334 = vld [vmem:[%s4333] sm:$0x1f]
    %v4335 = vld [vmem:[%s4333 + $0x8] sm:$0x1f]
    %v4336 = vld [vmem:[%s4333 + $0x10] sm:$0x1f]
    %v4337 = vld [vmem:[%s4333 + $0x18] sm:$0x1f]
    %v4338 = vld [vmem:[%s4333 + $0x20] sm:$0x1f]
    %4339 = vst [vmem:[#allocation6 + $0x96] sm:$0x1f] %v4334
    %4340 = vst [vmem:[#allocation6 + $0x9b] sm:$0x1f] %v4335
    %4341 = vst [vmem:[#allocation6 + $0xa0] sm:$0x1f] %v4336
    %4342 = vst [vmem:[#allocation6 + $0xa5] sm:$0x1f] %v4337
    %4343 = vst [vmem:[#allocation6 + $0xaa] sm:$0x1f] %v4338
    %s4344 = scalar_lea.vmem [#allocation4], 280
    %v4345 = vld [vmem:[%s4344] sm:$0x1f]
    %v4346 = vld [vmem:[%s4344 + $0x8] sm:$0x1f]
    %v4347 = vld [vmem:[%s4344 + $0x10] sm:$0x1f]
    %v4348 = vld [vmem:[%s4344 + $0x18] sm:$0x1f]
    %v4349 = vld [vmem:[%s4344 + $0x20] sm:$0x1f]
    %4350 = vst [vmem:[#allocation6 + $0xaf] sm:$0x1f] %v4345
    %4351 = vst [vmem:[#allocation6 + $0xb4] sm:$0x1f] %v4346
    %4352 = vst [vmem:[#allocation6 + $0xb9] sm:$0x1f] %v4347
    %4353 = vst [vmem:[#allocation6 + $0xbe] sm:$0x1f] %v4348
    %4354 = vst [vmem:[#allocation6 + $0xc3] sm:$0x1f] %v4349
    %s4355 = scalar_lea.vmem [#allocation4], 320
    %v4356 = vld [vmem:[%s4355] sm:$0x1f]
    %v4357 = vld [vmem:[%s4355 + $0x8] sm:$0x1f]
    %v4358 = vld [vmem:[%s4355 + $0x10] sm:$0x1f]
    %v4359 = vld [vmem:[%s4355 + $0x18] sm:$0x1f]
    %v4360 = vld [vmem:[%s4355 + $0x20] sm:$0x1f]
    %4361 = vst [vmem:[#allocation6 + $0xc8] sm:$0x1f] %v4356
    %4362 = vst [vmem:[#allocation6 + $0xcd] sm:$0x1f] %v4357
    %4363 = vst [vmem:[#allocation6 + $0xd2] sm:$0x1f] %v4358
    %4364 = vst [vmem:[#allocation6 + $0xd7] sm:$0x1f] %v4359
    %4365 = vst [vmem:[#allocation6 + $0xdc] sm:$0x1f] %v4360
    %s4366 = scalar_lea.vmem [#allocation4], 360
    %v4367 = vld [vmem:[%s4366] sm:$0x1f]
    %v4368 = vld [vmem:[%s4366 + $0x8] sm:$0x1f]
    %v4369 = vld [vmem:[%s4366 + $0x10] sm:$0x1f]
    %v4370 = vld [vmem:[%s4366 + $0x18] sm:$0x1f]
    %v4371 = vld [vmem:[%s4366 + $0x20] sm:$0x1f]
    %4372 = vst [vmem:[#allocation6 + $0xe1] sm:$0x1f] %v4367
    %4373 = vst [vmem:[#allocation6 + $0xe6] sm:$0x1f] %v4368
    %4374 = vst [vmem:[#allocation6 + $0xeb] sm:$0x1f] %v4369
    %4375 = vst [vmem:[#allocation6 + $0xf0] sm:$0x1f] %v4370
    %4376 = vst [vmem:[#allocation6 + $0xf5] sm:$0x1f] %v4371
    %s4377 = scalar_lea.vmem [#allocation4], 400
    %v4378 = vld [vmem:[%s4377] sm:$0x1f]
    %v4379 = vld [vmem:[%s4377 + $0x8] sm:$0x1f]
    %v4380 = vld [vmem:[%s4377 + $0x10] sm:$0x1f]
    %v4381 = vld [vmem:[%s4377 + $0x18] sm:$0x1f]
    %v4382 = vld [vmem:[%s4377 + $0x20] sm:$0x1f]
    %4383 = vst [vmem:[#allocation6 + $0xfa] sm:$0x1f] %v4378
    %4384 = vst [vmem:[#allocation6 + $0xff] sm:$0x1f] %v4379
    %4385 = vst [vmem:[#allocation6 + $0x104] sm:$0x1f] %v4380
    %4386 = vst [vmem:[#allocation6 + $0x109] sm:$0x1f] %v4381
    %4387 = vst [vmem:[#allocation6 + $0x10e] sm:$0x1f] %v4382
    %s4388 = scalar_lea.vmem [#allocation4], 440
    %v4389 = vld [vmem:[%s4388] sm:$0x1f]
    %v4390 = vld [vmem:[%s4388 + $0x8] sm:$0x1f]
    %v4391 = vld [vmem:[%s4388 + $0x10] sm:$0x1f]
    %v4392 = vld [vmem:[%s4388 + $0x18] sm:$0x1f]
    %v4393 = vld [vmem:[%s4388 + $0x20] sm:$0x1f]
    %4394 = vst [vmem:[#allocation6 + $0x113] sm:$0x1f] %v4389
    %4395 = vst [vmem:[#allocation6 + $0x118] sm:$0x1f] %v4390
    %4396 = vst [vmem:[#allocation6 + $0x11d] sm:$0x1f] %v4391
    %4397 = vst [vmem:[#allocation6 + $0x122] sm:$0x1f] %v4392
    %4398 = vst [vmem:[#allocation6 + $0x127] sm:$0x1f] %v4393
    %s4399 = scalar_lea.vmem [#allocation4], 480
    %v4400 = vld [vmem:[%s4399] sm:$0x1f]
    %v4401 = vld [vmem:[%s4399 + $0x8] sm:$0x1f]
    %v4402 = vld [vmem:[%s4399 + $0x10] sm:$0x1f]
    %v4403 = vld [vmem:[%s4399 + $0x18] sm:$0x1f]
    %v4404 = vld [vmem:[%s4399 + $0x20] sm:$0x1f]
    %4405 = vst [vmem:[#allocation6 + $0x12c] sm:$0x1f] %v4400
    %4406 = vst [vmem:[#allocation6 + $0x131] sm:$0x1f] %v4401
    %4407 = vst [vmem:[#allocation6 + $0x136] sm:$0x1f] %v4402
    %4408 = vst [vmem:[#allocation6 + $0x13b] sm:$0x1f] %v4403
    %4409 = vst [vmem:[#allocation6 + $0x140] sm:$0x1f] %v4404
    %s4410 = scalar_lea.vmem [#allocation4], 520
    %v4411 = vld [vmem:[%s4410] sm:$0x1f]
    %v4412 = vld [vmem:[%s4410 + $0x8] sm:$0x1f]
    %v4413 = vld [vmem:[%s4410 + $0x10] sm:$0x1f]
    %v4414 = vld [vmem:[%s4410 + $0x18] sm:$0x1f]
    %v4415 = vld [vmem:[%s4410 + $0x20] sm:$0x1f]
    %4416 = vst [vmem:[#allocation6 + $0x145] sm:$0x1f] %v4411
    %4417 = vst [vmem:[#allocation6 + $0x14a] sm:$0x1f] %v4412
    %4418 = vst [vmem:[#allocation6 + $0x14f] sm:$0x1f] %v4413
    %4419 = vst [vmem:[#allocation6 + $0x154] sm:$0x1f] %v4414
    %4420 = vst [vmem:[#allocation6 + $0x159] sm:$0x1f] %v4415
    %s4421 = scalar_lea.vmem [#allocation4], 560
    %v4422 = vld [vmem:[%s4421] sm:$0x1f]
    %v4423 = vld [vmem:[%s4421 + $0x8] sm:$0x1f]
    %v4424 = vld [vmem:[%s4421 + $0x10] sm:$0x1f]
    %v4425 = vld [vmem:[%s4421 + $0x18] sm:$0x1f]
    %v4426 = vld [vmem:[%s4421 + $0x20] sm:$0x1f]
    %4427 = vst [vmem:[#allocation6 + $0x15e] sm:$0x1f] %v4422
    %4428 = vst [vmem:[#allocation6 + $0x163] sm:$0x1f] %v4423
    %4429 = vst [vmem:[#allocation6 + $0x168] sm:$0x1f] %v4424
    %4430 = vst [vmem:[#allocation6 + $0x16d] sm:$0x1f] %v4425
    %4431 = vst [vmem:[#allocation6 + $0x172] sm:$0x1f] %v4426
    %s4432 = scalar_lea.vmem [#allocation4], 600
    %v4433 = vld [vmem:[%s4432] sm:$0x1f]
    %v4434 = vld [vmem:[%s4432 + $0x8] sm:$0x1f]
    %v4435 = vld [vmem:[%s4432 + $0x10] sm:$0x1f]
    %v4436 = vld [vmem:[%s4432 + $0x18] sm:$0x1f]
    %v4437 = vld [vmem:[%s4432 + $0x20] sm:$0x1f]
    %4438 = vst [vmem:[#allocation6 + $0x177] sm:$0x1f] %v4433
    %4439 = vst [vmem:[#allocation6 + $0x17c] sm:$0x1f] %v4434
    %4440 = vst [vmem:[#allocation6 + $0x181] sm:$0x1f] %v4435
    %4441 = vst [vmem:[#allocation6 + $0x186] sm:$0x1f] %v4436
    %4442 = vst [vmem:[#allocation6 + $0x18b] sm:$0x1f] %v4437
    %v4443 = vld [vmem:[#allocation6] sm:$0xff]
    %v4444 = vld [vmem:[#allocation6 + $0x8] sm:$0xff]
    %v4445 = vld [vmem:[#allocation6 + $0x10] sm:$0xff]
    %v4446 = vld [vmem:[#allocation6 + $0x18] sm:$0xff]
    %v4447 = vld [vmem:[#allocation6 + $0x20] sm:$0xff]
    %v4448 = vld [vmem:[#allocation6 + $0x28] sm:$0xff]
    %v4449 = vld [vmem:[#allocation6 + $0x30] sm:$0xff]
    %v4450 = vld [vmem:[#allocation6 + $0x38] sm:$0xff]
    %v4451 = vld [vmem:[#allocation6 + $0x40] sm:$0xff]
    %v4452 = vld [vmem:[#allocation6 + $0x48] sm:$0xff]
    %v4453 = vld [vmem:[#allocation6 + $0x50] sm:$0xff]
    %v4454 = vld [vmem:[#allocation6 + $0x58] sm:$0xff]
    %v4455 = vld [vmem:[#allocation6 + $0x60] sm:$0xff]
    %v4456 = vld [vmem:[#allocation6 + $0x68] sm:$0xff]
    %v4457 = vld [vmem:[#allocation6 + $0x70] sm:$0xff]
    %v4458 = vld [vmem:[#allocation6 + $0x78] sm:$0xff]
    %v4459 = vld [vmem:[#allocation6 + $0x80] sm:$0xff]
    %v4460 = vld [vmem:[#allocation6 + $0x88] sm:$0xff]
    %v4461 = vld [vmem:[#allocation6 + $0x90] sm:$0xff]
    %v4462 = vld [vmem:[#allocation6 + $0x98] sm:$0xff]
    %v4463 = vld [vmem:[#allocation6 + $0xa0] sm:$0xff]
    %v4464 = vld [vmem:[#allocation6 + $0xa8] sm:$0xff]
    %v4465 = vld [vmem:[#allocation6 + $0xb0] sm:$0xff]
    %v4466 = vld [vmem:[#allocation6 + $0xb8] sm:$0xff]
    %v4467 = vld [vmem:[#allocation6 + $0xc0] sm:$0xff]
    %v4468 = vld [vmem:[#allocation6 + $0xc8] sm:$0xff]
    %v4469 = vld [vmem:[#allocation6 + $0xd0] sm:$0xff]
    %v4470 = vld [vmem:[#allocation6 + $0xd8] sm:$0xff]
    %v4471 = vld [vmem:[#allocation6 + $0xe0] sm:$0xff]
    %v4472 = vld [vmem:[#allocation6 + $0xe8] sm:$0xff]
    %v4473 = vld [vmem:[#allocation6 + $0xf0] sm:$0xff]
    %v4474 = vld [vmem:[#allocation6 + $0xf8] sm:$0xff]
    %v4475 = vld [vmem:[#allocation6 + $0x100] sm:$0xff]
    %v4476 = vld [vmem:[#allocation6 + $0x108] sm:$0xff]
    %v4477 = vld [vmem:[#allocation6 + $0x110] sm:$0xff]
    %v4478 = vld [vmem:[#allocation6 + $0x118] sm:$0xff]
    %v4479 = vld [vmem:[#allocation6 + $0x120] sm:$0xff]
    %v4480 = vld [vmem:[#allocation6 + $0x128] sm:$0xff]
    %v4481 = vld [vmem:[#allocation6 + $0x130] sm:$0xff]
    %v4482 = vld [vmem:[#allocation6 + $0x138] sm:$0xff]
    %v4483 = vld [vmem:[#allocation6 + $0x140] sm:$0xff]
    %v4484 = vld [vmem:[#allocation6 + $0x148] sm:$0xff]
    %v4485 = vld [vmem:[#allocation6 + $0x150] sm:$0xff]
    %v4486 = vld [vmem:[#allocation6 + $0x158] sm:$0xff]
    %v4487 = vld [vmem:[#allocation6 + $0x160] sm:$0xff]
    %v4488 = vld [vmem:[#allocation6 + $0x168] sm:$0xff]
    %v4489 = vld [vmem:[#allocation6 + $0x170] sm:$0xff]
    %v4490 = vld [vmem:[#allocation6 + $0x178] sm:$0xff]
    %v4491 = vld [vmem:[#allocation6 + $0x180] sm:$0xff]
    %v4492 = vld [vmem:[#allocation6 + $0x188] sm:$0xff]
    %v4493 = vld [vmem:[%s5] sm:$0xff]
    %v4494 = vld [vmem:[%s5 + $0x8] sm:$0xff]
    %v4495 = vld [vmem:[%s5 + $0x10] sm:$0xff]
    %v4496 = vld [vmem:[%s5 + $0x18] sm:$0xff]
    %v4497 = vld [vmem:[%s5 + $0x20] sm:$0xff]
    %v4498 = vld [vmem:[%s5 + $0x28] sm:$0xff]
    %v4499 = vld [vmem:[%s5 + $0x30] sm:$0xff]
    %v4500 = vld [vmem:[%s5 + $0x38] sm:$0xff]
    %v4501 = vld [vmem:[%s5 + $0x40] sm:$0xff]
    %v4502 = vld [vmem:[%s5 + $0x48] sm:$0xff]
    %v4503 = vld [vmem:[%s5 + $0x50] sm:$0xff]
    %v4504 = vld [vmem:[%s5 + $0x58] sm:$0xff]
    %v4505 = vld [vmem:[%s5 + $0x60] sm:$0xff]
    %v4506 = vld [vmem:[%s5 + $0x68] sm:$0xff]
    %v4507 = vld [vmem:[%s5 + $0x70] sm:$0xff]
    %v4508 = vld [vmem:[%s5 + $0x78] sm:$0xff]
    %v4509 = vld [vmem:[%s5 + $0x80] sm:$0xff]
    %v4510 = vld [vmem:[%s5 + $0x88] sm:$0xff]
    %v4511 = vld [vmem:[%s5 + $0x90] sm:$0xff]
    %v4512 = vld [vmem:[%s5 + $0x98] sm:$0xff]
    %v4513 = vld [vmem:[%s5 + $0xa0] sm:$0xff]
    %v4514 = vld [vmem:[%s5 + $0xa8] sm:$0xff]
    %v4515 = vld [vmem:[%s5 + $0xb0] sm:$0xff]
    %v4516 = vld [vmem:[%s5 + $0xb8] sm:$0xff]
    %v4517 = vld [vmem:[%s5 + $0xc0] sm:$0xff]
    %v4518 = vld [vmem:[%s5 + $0xc8] sm:$0xff]
    %v4519 = vld [vmem:[%s5 + $0xd0] sm:$0xff]
    %v4520 = vld [vmem:[%s5 + $0xd8] sm:$0xff]
    %v4521 = vld [vmem:[%s5 + $0xe0] sm:$0xff]
    %v4522 = vld [vmem:[%s5 + $0xe8] sm:$0xff]
    %v4523 = vld [vmem:[%s5 + $0xf0] sm:$0xff]
    %v4524 = vld [vmem:[%s5 + $0xf8] sm:$0xff]
    %v4525 = vld [vmem:[%s5 + $0x100] sm:$0xff]
    %v4526 = vld [vmem:[%s5 + $0x108] sm:$0xff]
    %v4527 = vld [vmem:[%s5 + $0x110] sm:$0xff]
    %v4528 = vld [vmem:[%s5 + $0x118] sm:$0xff]
    %v4529 = vld [vmem:[%s5 + $0x120] sm:$0xff]
    %v4530 = vld [vmem:[%s5 + $0x128] sm:$0xff]
    %v4531 = vld [vmem:[%s5 + $0x130] sm:$0xff]
    %v4532 = vld [vmem:[%s5 + $0x138] sm:$0xff]
    %v4533 = vld [vmem:[%s5 + $0x140] sm:$0xff]
    %v4534 = vld [vmem:[%s5 + $0x148] sm:$0xff]
    %v4535 = vld [vmem:[%s5 + $0x150] sm:$0xff]
    %v4536 = vld [vmem:[%s5 + $0x158] sm:$0xff]
    %v4537 = vld [vmem:[%s5 + $0x160] sm:$0xff]
    %v4538 = vld [vmem:[%s5 + $0x168] sm:$0xff]
    %v4539 = vld [vmem:[%s5 + $0x170] sm:$0xff]
    %v4540 = vld [vmem:[%s5 + $0x178] sm:$0xff]
    %v4541 = vld [vmem:[%s5 + $0x180] sm:$0xff]
    %v4542 = vld [vmem:[%s5 + $0x188] sm:$0xff]
    %v4543 = vld [vmem:[%s5 + $0x190] sm:$0xff]
    %v4544 = vld [vmem:[%s5 + $0x198] sm:$0xff]
    %v4545 = vld [vmem:[%s5 + $0x1a0] sm:$0xff]
    %v4546 = vld [vmem:[%s5 + $0x1a8] sm:$0xff]
    %v4547 = vld [vmem:[%s5 + $0x1b0] sm:$0xff]
    %v4548 = vld [vmem:[%s5 + $0x1b8] sm:$0xff]
    %v4549 = vld [vmem:[%s5 + $0x1c0] sm:$0xff]
    %v4550 = vld [vmem:[%s5 + $0x1c8] sm:$0xff]
    %v4551 = vld [vmem:[%s5 + $0x1d0] sm:$0xff]
    %v4552 = vld [vmem:[%s5 + $0x1d8] sm:$0xff]
    %v4553 = vld [vmem:[%s6] sm:$0xff]
    %v4554 = vld [vmem:[%s6 + $0x8] sm:$0xff]
    %v4555 = vld [vmem:[%s6 + $0x10] sm:$0xff]
    %v4556 = vld [vmem:[%s6 + $0x18] sm:$0xff]
    %v4557 = vld [vmem:[%s6 + $0x20] sm:$0xff]
    %v4558 = vld [vmem:[%s6 + $0x28] sm:$0xff]
    %v4559 = vld [vmem:[%s6 + $0x30] sm:$0xff]
    %v4560 = vld [vmem:[%s6 + $0x38] sm:$0xff]
    %v4561 = vld [vmem:[%s6 + $0x40] sm:$0xff]
    %v4562 = vld [vmem:[%s6 + $0x48] sm:$0xff]
    %v4563 = vld [vmem:[%s6 + $0x50] sm:$0xff]
    %v4564 = vld [vmem:[%s6 + $0x58] sm:$0xff]
    %v4565 = vld [vmem:[%s6 + $0x60] sm:$0xff]
    %v4566 = vld [vmem:[%s6 + $0x68] sm:$0xff]
    %v4567 = vld [vmem:[%s6 + $0x70] sm:$0xff]
    %4569 = vset.pattern.permute.xlu0 0
    %4570 = vperm.xlu0 %4569, %v4553
    %v4571 = vpop.permute.xlu0 %4570
    %4574 = vset.pattern.permute.xlu0 0
    %4575 = vperm.xlu0 %4574, %v4554
    %v4576 = vpop.permute.xlu0 %4575
    %4579 = vset.pattern.permute.xlu0 0
    %4580 = vperm.xlu0 %4579, %v4555
    %v4581 = vpop.permute.xlu0 %4580
    %4584 = vset.pattern.permute.xlu0 0
    %4585 = vperm.xlu0 %4584, %v4556
    %v4586 = vpop.permute.xlu0 %4585
    %4589 = vset.pattern.permute.xlu0 0
    %4590 = vperm.xlu0 %4589, %v4557
    %v4591 = vpop.permute.xlu0 %4590
    %4594 = vset.pattern.permute.xlu0 0
    %4595 = vperm.xlu0 %4594, %v4558
    %v4596 = vpop.permute.xlu0 %4595
    %4599 = vset.pattern.permute.xlu0 0
    %4600 = vperm.xlu0 %4599, %v4559
    %v4601 = vpop.permute.xlu0 %4600
    %4604 = vset.pattern.permute.xlu0 0
    %4605 = vperm.xlu0 %4604, %v4560
    %v4606 = vpop.permute.xlu0 %4605
    %4609 = vset.pattern.permute.xlu0 0
    %4610 = vperm.xlu0 %4609, %v4561
    %v4611 = vpop.permute.xlu0 %4610
    %4614 = vset.pattern.permute.xlu0 0
    %4615 = vperm.xlu0 %4614, %v4562
    %v4616 = vpop.permute.xlu0 %4615
    %4619 = vset.pattern.permute.xlu0 0
    %4620 = vperm.xlu0 %4619, %v4563
    %v4621 = vpop.permute.xlu0 %4620
    %4624 = vset.pattern.permute.xlu0 0
    %4625 = vperm.xlu0 %4624, %v4564
    %v4626 = vpop.permute.xlu0 %4625
    %4629 = vset.pattern.permute.xlu0 0
    %4630 = vperm.xlu0 %4629, %v4565
    %v4631 = vpop.permute.xlu0 %4630
    %4634 = vset.pattern.permute.xlu0 0
    %4635 = vperm.xlu0 %4634, %v4566
    %v4636 = vpop.permute.xlu0 %4635
    %4639 = vset.pattern.permute.xlu0 0
    %4640 = vperm.xlu0 %4639, %v4567
    %v4641 = vpop.permute.xlu0 %4640
    %vm4643 = vcmask 130048
    %v4645 = vsel %vm4643, %v4496, 0
    %v4648 = vsel %vm4643, %v4500, 0
    %v4651 = vsel %vm4643, %v4504, 0
    %v4654 = vsel %vm4643, %v4508, 0
    %v4657 = vsel %vm4643, %v4512, 0
    %v4660 = vsel %vm4643, %v4516, 0
    %v4663 = vsel %vm4643, %v4520, 0
    %v4666 = vsel %vm4643, %v4524, 0
    %v4669 = vsel %vm4643, %v4528, 0
    %v4672 = vsel %vm4643, %v4532, 0
    %v4675 = vsel %vm4643, %v4536, 0
    %v4678 = vsel %vm4643, %v4540, 0
    %v4681 = vsel %vm4643, %v4544, 0
    %v4684 = vsel %vm4643, %v4548, 0
    %v4687 = vsel %vm4643, %v4552, 0
    %4689 = vmatprep.subr.mxu0 0.0
    %4690 = vmatpush1.msra.mxu0 %v4443
    %4691 = vmatprep.subr.mxu0 0.0
    %4692 = vmatpush1.msra.mxu0 %v4444
    %4693 = vmatprep.subr.mxu0 0.0
    %4694 = vmatpush1.msra.mxu0 %v4445
    %4695 = vmatprep.subr.mxu0 0.0
    %4696 = vmatpush1.msra.mxu0 %v4446
    %4697 = vmatprep.subr.mxu0 0.0
    %4698 = vmatpush1.msra.mxu0 %v4447
    %4699 = vmatprep.subr.mxu0 0.0
    %4700 = vmatpush1.msra.mxu0 %v4448
    %4701 = vmatprep.subr.mxu0 0.0
    %4702 = vmatpush1.msra.mxu0 %v4449
    %4703 = vmatprep.subr.mxu0 0.0
    %4704 = vmatpush1.msra.mxu0 %v4450
    %4705 = vmatprep.subr.mxu0 0.0
    %4706 = vmatpush1.msra.mxu0 %v4451
    %4707 = vmatprep.subr.mxu0 0.0
    %4708 = vmatpush1.msra.mxu0 %v4452
    %4709 = vmatprep.subr.mxu0 0.0
    %4710 = vmatpush1.msra.mxu0 %v4453
    %4711 = vmatprep.subr.mxu0 0.0
    %4712 = vmatpush1.msra.mxu0 %v4454
    %4713 = vmatprep.subr.mxu0 0.0
    %4714 = vmatpush1.msra.mxu0 %v4455
    %4715 = vmatprep.subr.mxu0 0.0
    %4716 = vmatpush1.msra.mxu0 %v4456
    %4717 = vmatprep.subr.mxu0 0.0
    %4718 = vmatpush1.msra.mxu0 %v4457
    %4719 = vmatprep.subr.mxu0 0.0
    %4720 = vmatpush1.msra.mxu0 %v4458
    %4721 = vmatprep.subr.mxu0 0.0
    %4722 = vmatpush1.msra.mxu0 %v4459
    %4723 = vmatprep.subr.mxu0 0.0
    %4724 = vmatpush1.msra.mxu0 %v4460
    %4725 = vmatprep.subr.mxu0 0.0
    %4726 = vmatpush1.msra.mxu0 %v4461
    %4727 = vmatprep.subr.mxu0 0.0
    %4728 = vmatpush1.msra.mxu0 %v4462
    %4729 = vmatprep.subr.mxu0 0.0
    %4730 = vmatpush1.msra.mxu0 %v4463
    %4731 = vmatprep.subr.mxu0 0.0
    %4732 = vmatpush1.msra.mxu0 %v4464
    %4733 = vmatprep.subr.mxu0 0.0
    %4734 = vmatpush1.msra.mxu0 %v4465
    %4735 = vmatprep.subr.mxu0 0.0
    %4736 = vmatpush1.msra.mxu0 %v4466
    %4737 = vmatprep.subr.mxu0 0.0
    %4738 = vmatpush1.msra.mxu0 %v4467
    %4739 = vmatprep.subr.mxu0 0.0
    %4740 = vmatpush1.msra.mxu0 %v4468
    %4741 = vmatprep.subr.mxu0 0.0
    %4742 = vmatpush1.msra.mxu0 %v4469
    %4743 = vmatprep.subr.mxu0 0.0
    %4744 = vmatpush1.msra.mxu0 %v4470
    %4745 = vmatprep.subr.mxu0 0.0
    %4746 = vmatpush1.msra.mxu0 %v4471
    %4747 = vmatprep.subr.mxu0 0.0
    %4748 = vmatpush1.msra.mxu0 %v4472
    %4749 = vmatprep.subr.mxu0 0.0
    %4750 = vmatpush1.msra.mxu0 %v4473
    %4751 = vmatprep.subr.mxu0 0.0
    %4752 = vmatpush1.msra.mxu0 %v4474
    %4753 = vmatprep.mubr.f32.mxu0 %v4494
    %4754 = vmatmul.mubr.f32.gmra.mrb[0].mxu0 %v4493
    %v4755 = vpop.f32.mrb[0].mxu0
    %v4756 = vadd.f32 %v4571, %v4755
    %v4757 = vpop.f32.mrb[0].mxu0
    %4758 = vmatprep.mubr.f32.mxu0 %v4498
    %4759 = vmatmul.mubr.f32.gmra.mrb[0].mxu0 %v4497
    %v4760 = vpop.f32.mrb[0].mxu0
    %v4761 = vadd.f32 %v4576, %v4760
    %v4762 = vpop.f32.mrb[0].mxu0
    %4763 = vmatprep.mubr.f32.mxu0 %v4502
    %4764 = vmatmul.mubr.f32.gmra.mrb[0].mxu0 %v4501
    %v4765 = vpop.f32.mrb[0].mxu0
    %v4766 = vadd.f32 %v4581, %v4765
    %v4767 = vpop.f32.mrb[0].mxu0
    %4768 = vmatprep.mubr.f32.mxu0 %v4506
    %4769 = vmatmul.mubr.f32.gmra.mrb[0].mxu0 %v4505
    %v4770 = vpop.f32.mrb[0].mxu0
    %v4771 = vadd.f32 %v4586, %v4770
    %v4772 = vpop.f32.mrb[0].mxu0
    %4773 = vmatprep.mubr.f32.mxu0 %v4510
    %4774 = vmatmul.mubr.f32.gmra.mrb[0].mxu0 %v4509
    %v4775 = vpop.f32.mrb[0].mxu0
    %v4776 = vadd.f32 %v4591, %v4775
    %v4777 = vpop.f32.mrb[0].mxu0
    %4778 = vmatprep.mubr.f32.mxu0 %v4514
    %4779 = vmatmul.mubr.f32.gmra.mrb[0].mxu0 %v4513
    %v4780 = vpop.f32.mrb[0].mxu0
    %v4781 = vadd.f32 %v4596, %v4780
    %v4782 = vpop.f32.mrb[0].mxu0
    %4783 = vmatprep.mubr.f32.mxu0 %v4518
    %4784 = vmatmul.mubr.f32.gmra.mrb[0].mxu0 %v4517
    %v4785 = vpop.f32.mrb[0].mxu0
    %v4786 = vadd.f32 %v4601, %v4785
    %v4787 = vpop.f32.mrb[0].mxu0
    %4788 = vmatprep.mubr.f32.mxu0 %v4522
    %4789 = vmatmul.mubr.f32.gmra.mrb[0].mxu0 %v4521
    %v4790 = vpop.f32.mrb[0].mxu0
    %v4791 = vadd.f32 %v4606, %v4790
    %v4792 = vpop.f32.mrb[0].mxu0
    %4793 = vmatprep.mubr.f32.mxu0 %v4526
    %4794 = vmatmul.mubr.f32.gmra.mrb[0].mxu0 %v4525
    %v4795 = vpop.f32.mrb[0].mxu0
    %v4796 = vadd.f32 %v4611, %v4795
    %v4797 = vpop.f32.mrb[0].mxu0
    %4798 = vmatprep.mubr.f32.mxu0 %v4530
    %4799 = vmatmul.mubr.f32.gmra.mrb[0].mxu0 %v4529
    %v4800 = vpop.f32.mrb[0].mxu0
    %v4801 = vadd.f32 %v4616, %v4800
    %v4802 = vpop.f32.mrb[0].mxu0
    %4803 = vmatprep.mubr.f32.mxu0 %v4534
    %4804 = vmatmul.mubr.f32.gmra.mrb[0].mxu0 %v4533
    %v4805 = vpop.f32.mrb[0].mxu0
    %v4806 = vadd.f32 %v4621, %v4805
    %v4807 = vpop.f32.mrb[0].mxu0
    %4808 = vmatprep.mubr.f32.mxu0 %v4538
    %4809 = vmatmul.mubr.f32.gmra.mrb[0].mxu0 %v4537
    %v4810 = vpop.f32.mrb[0].mxu0
    %v4811 = vadd.f32 %v4626, %v4810
    %v4812 = vpop.f32.mrb[0].mxu0
    %4813 = vmatprep.mubr.f32.mxu0 %v4542
    %4814 = vmatmul.mubr.f32.gmra.mrb[0].mxu0 %v4541
    %v4815 = vpop.f32.mrb[0].mxu0
    %v4816 = vadd.f32 %v4631, %v4815
    %v4817 = vpop.f32.mrb[0].mxu0
    %4818 = vmatprep.mubr.f32.mxu0 %v4546
    %4819 = vmatmul.mubr.f32.gmra.mrb[0].mxu0 %v4545
    %v4820 = vpop.f32.mrb[0].mxu0
    %v4821 = vadd.f32 %v4636, %v4820
    %v4822 = vpop.f32.mrb[0].mxu0
    %4823 = vmatprep.mubr.f32.mxu0 %v4550
    %4824 = vmatmul.mubr.f32.gmra.mrb[0].mxu0 %v4549
    %v4825 = vpop.f32.mrb[0].mxu0
    %v4826 = vadd.f32 %v4641, %v4825
    %v4827 = vpop.f32.mrb[0].mxu0
    %4828 = vdwg.mxu0
    %4829 = vmatprep.subr.mxu0 0.0
    %4830 = vmatpush1.msra.mxu0 %v4475
    %4831 = vmatprep.subr.mxu0 0.0
    %4832 = vmatpush1.msra.mxu0 %v4476
    %4833 = vmatprep.subr.mxu0 0.0
    %4834 = vmatpush1.msra.mxu0 %v4477
    %4835 = vmatprep.subr.mxu0 0.0
    %4836 = vmatpush1.msra.mxu0 %v4478
    %4837 = vmatprep.subr.mxu0 0.0
    %4838 = vmatpush1.msra.mxu0 %v4479
    %4839 = vmatprep.subr.mxu0 0.0
    %4840 = vmatpush1.msra.mxu0 %v4480
    %4841 = vmatprep.subr.mxu0 0.0
    %4842 = vmatpush1.msra.mxu0 %v4481
    %4843 = vmatprep.subr.mxu0 0.0
    %4844 = vmatpush1.msra.mxu0 %v4482
    %4845 = vmatprep.subr.mxu0 0.0
    %4846 = vmatpush1.msra.mxu0 %v4483
    %4847 = vmatprep.subr.mxu0 0.0
    %4848 = vmatpush1.msra.mxu0 %v4484
    %4849 = vmatprep.subr.mxu0 0.0
    %4850 = vmatpush1.msra.mxu0 %v4485
    %4851 = vmatprep.subr.mxu0 0.0
    %4852 = vmatpush1.msra.mxu0 %v4486
    %4853 = vmatprep.subr.mxu0 0.0
    %4854 = vmatpush1.msra.mxu0 %v4487
    %4855 = vmatprep.subr.mxu0 0.0
    %4856 = vmatpush1.msra.mxu0 %v4488
    %4857 = vmatprep.subr.mxu0 0.0
    %4858 = vmatpush1.msra.mxu0 %v4489
    %4859 = vmatprep.subr.mxu0 0.0
    %4860 = vmatpush1.msra.mxu0 %v4490
    %4861 = vmatprep.subr.mxu0 0.0
    %4862 = vmatpush1.msra.mxu0 %v4491
    %4863 = vmatprep.subr.mxu0 0.0
    %4864 = vmatpush1.msra.mxu0 %v4492
    %4865 = vmatprep.subr.mxu0 0.0
    %4866 = vmatpush1.msra.mxu0 0.0
    %4867 = vmatprep.subr.mxu0 0.0
    %4868 = vmatpush1.msra.mxu0 0.0
    %4869 = vmatprep.subr.mxu0 0.0
    %4870 = vmatpush1.msra.mxu0 0.0
    %4871 = vmatprep.subr.mxu0 0.0
    %4872 = vmatpush1.msra.mxu0 0.0
    %4873 = vmatprep.subr.mxu0 0.0
    %4874 = vmatpush1.msra.mxu0 0.0
    %4875 = vmatprep.subr.mxu0 0.0
    %4876 = vmatpush1.msra.mxu0 0.0
    %4877 = vmatprep.subr.mxu0 0.0
    %4878 = vmatpush1.msra.mxu0 0.0
    %4879 = vmatprep.subr.mxu0 0.0
    %4880 = vmatpush1.msra.mxu0 0.0
    %4881 = vmatprep.subr.mxu0 0.0
    %4882 = vmatpush1.msra.mxu0 0.0
    %4883 = vmatprep.subr.mxu0 0.0
    %4884 = vmatpush1.msra.mxu0 0.0
    %4885 = vmatprep.subr.mxu0 0.0
    %4886 = vmatpush1.msra.mxu0 0.0
    %4887 = vmatprep.subr.mxu0 0.0
    %4888 = vmatpush1.msra.mxu0 0.0
    %4889 = vmatprep.subr.mxu0 0.0
    %4890 = vmatpush1.msra.mxu0 0.0
    %4891 = vmatprep.subr.mxu0 0.0
    %4892 = vmatpush1.msra.mxu0 0.0
    %4893 = vmatprep.mubr.f32.mxu0 %v4645
    %4894 = vmatmul.mubr.f32.gmra.mrb[0].mxu0 %v4495
    %v4895 = vpop.f32.mrb[0].mxu0
    %v4896 = vadd.f32 %v4756, %v4895
    %v4897 = vpop.f32.mrb[0].mxu0
    %4898 = vmatprep.mubr.f32.mxu0 %v4648
    %4899 = vmatmul.mubr.f32.gmra.mrb[0].mxu0 %v4499
    %v4900 = vpop.f32.mrb[0].mxu0
    %v4901 = vadd.f32 %v4761, %v4900
    %v4902 = vpop.f32.mrb[0].mxu0
    %4903 = vmatprep.mubr.f32.mxu0 %v4651
    %4904 = vmatmul.mubr.f32.gmra.mrb[0].mxu0 %v4503
    %v4905 = vpop.f32.mrb[0].mxu0
    %v4906 = vadd.f32 %v4766, %v4905
    %v4907 = vpop.f32.mrb[0].mxu0
    %4908 = vmatprep.mubr.f32.mxu0 %v4654
    %4909 = vmatmul.mubr.f32.gmra.mrb[0].mxu0 %v4507
    %v4910 = vpop.f32.mrb[0].mxu0
    %v4911 = vadd.f32 %v4771, %v4910
    %v4912 = vpop.f32.mrb[0].mxu0
    %4913 = vmatprep.mubr.f32.mxu0 %v4657
    %4914 = vmatmul.mubr.f32.gmra.mrb[0].mxu0 %v4511
    %v4915 = vpop.f32.mrb[0].mxu0
    %v4916 = vadd.f32 %v4776, %v4915
    %v4917 = vpop.f32.mrb[0].mxu0
    %4918 = vmatprep.mubr.f32.mxu0 %v4660
    %4919 = vmatmul.mubr.f32.gmra.mrb[0].mxu0 %v4515
    %v4920 = vpop.f32.mrb[0].mxu0
    %v4921 = vadd.f32 %v4781, %v4920
    %v4922 = vpop.f32.mrb[0].mxu0
    %4923 = vmatprep.mubr.f32.mxu0 %v4663
    %4924 = vmatmul.mubr.f32.gmra.mrb[0].mxu0 %v4519
    %v4925 = vpop.f32.mrb[0].mxu0
    %v4926 = vadd.f32 %v4786, %v4925
    %v4927 = vpop.f32.mrb[0].mxu0
    %4928 = vmatprep.mubr.f32.mxu0 %v4666
    %4929 = vmatmul.mubr.f32.gmra.mrb[0].mxu0 %v4523
    %v4930 = vpop.f32.mrb[0].mxu0
    %v4931 = vadd.f32 %v4791, %v4930
    %v4932 = vpop.f32.mrb[0].mxu0
    %4933 = vmatprep.mubr.f32.mxu0 %v4669
    %4934 = vmatmul.mubr.f32.gmra.mrb[0].mxu0 %v4527
    %v4935 = vpop.f32.mrb[0].mxu0
    %v4936 = vadd.f32 %v4796, %v4935
    %v4937 = vpop.f32.mrb[0].mxu0
    %4938 = vmatprep.mubr.f32.mxu0 %v4672
    %4939 = vmatmul.mubr.f32.gmra.mrb[0].mxu0 %v4531
    %v4940 = vpop.f32.mrb[0].mxu0
    %v4941 = vadd.f32 %v4801, %v4940
    %v4942 = vpop.f32.mrb[0].mxu0
    %4943 = vmatprep.mubr.f32.mxu0 %v4675
    %4944 = vmatmul.mubr.f32.gmra.mrb[0].mxu0 %v4535
    %v4945 = vpop.f32.mrb[0].mxu0
    %v4946 = vadd.f32 %v4806, %v4945
    %v4947 = vpop.f32.mrb[0].mxu0
    %4948 = vmatprep.mubr.f32.mxu0 %v4678
    %4949 = vmatmul.mubr.f32.gmra.mrb[0].mxu0 %v4539
    %v4950 = vpop.f32.mrb[0].mxu0
    %v4951 = vadd.f32 %v4811, %v4950
    %v4952 = vpop.f32.mrb[0].mxu0
    %4953 = vmatprep.mubr.f32.mxu0 %v4681
    %4954 = vmatmul.mubr.f32.gmra.mrb[0].mxu0 %v4543
    %v4955 = vpop.f32.mrb[0].mxu0
    %v4956 = vadd.f32 %v4816, %v4955
    %v4957 = vpop.f32.mrb[0].mxu0
    %4958 = vmatprep.mubr.f32.mxu0 %v4684
    %4959 = vmatmul.mubr.f32.gmra.mrb[0].mxu0 %v4547
    %v4960 = vpop.f32.mrb[0].mxu0
    %v4961 = vadd.f32 %v4821, %v4960
    %v4962 = vpop.f32.mrb[0].mxu0
    %4963 = vmatprep.mubr.f32.mxu0 %v4687
    %4964 = vmatmul.mubr.f32.gmra.mrb[0].mxu0 %v4551
    %v4965 = vpop.f32.mrb[0].mxu0
    %v4966 = vadd.f32 %v4826, %v4965
    %v4967 = vpop.f32.mrb[0].mxu0
    %4968 = vdwg.mxu0
    %v4969 = vtanh.pop %v4896
    %v4970 = vtanh.pop %v4901
    %v4971 = vtanh.pop %v4906
    %v4972 = vtanh.pop %v4911
    %v4973 = vtanh.pop %v4916
    %v4974 = vtanh.pop %v4921
    %v4975 = vtanh.pop %v4926
    %v4976 = vtanh.pop %v4931
    %v4977 = vtanh.pop %v4936
    %v4978 = vtanh.pop %v4941
    %v4979 = vtanh.pop %v4946
    %v4980 = vtanh.pop %v4951
    %v4981 = vtanh.pop %v4956
    %v4982 = vtanh.pop %v4961
    %v4983 = vtanh.pop %v4966
    %v4984 = vld [vmem:[%s7] sm:$0xff]
    %v4985 = vld [vmem:[%s7 + $0x8] sm:$0xff]
    %v4986 = vld [vmem:[%s7 + $0x10] sm:$0xff]
    %v4987 = vld [vmem:[%s7 + $0x18] sm:$0xff]
    %v4988 = vld [vmem:[%s7 + $0x20] sm:$0xff]
    %v4989 = vld [vmem:[%s7 + $0x28] sm:$0xff]
    %v4990 = vld [vmem:[%s7 + $0x30] sm:$0xff]
    %v4991 = vld [vmem:[%s7 + $0x38] sm:$0xff]
    %v4992 = vld [vmem:[%s7 + $0x40] sm:$0xff]
    %v4993 = vld [vmem:[%s7 + $0x48] sm:$0xff]
    %v4994 = vld [vmem:[%s7 + $0x50] sm:$0xf]
    %v4995 = vld [vmem:[%s8] sm:$0xff]
    %v4996 = vld [vmem:[%s8 + $0x8] sm:$0xff]
    %v4997 = vld [vmem:[%s8 + $0x10] sm:$0xff]
    %v4998 = vld [vmem:[%s8 + $0x18] sm:$0xff]
    %v4999 = vld [vmem:[%s8 + $0x20] sm:$0xff]
    %v5000 = vld [vmem:[%s8 + $0x28] sm:$0xff]
    %v5001 = vld [vmem:[%s8 + $0x30] sm:$0xff]
    %v5002 = vld [vmem:[%s8 + $0x38] sm:$0xff]
    %v5003 = vld [vmem:[%s8 + $0x40] sm:$0xff]
    %v5004 = vld [vmem:[%s8 + $0x48] sm:$0xff]
    %v5005 = vld [vmem:[%s8 + $0x50] sm:$0xf]
    %5007 = vset.pattern.permute.xlu0 0
    %5008 = vperm.xlu0 %5007, %v4995
    %v5009 = vpop.permute.xlu0 %5008
    %5012 = vset.pattern.permute.xlu0 0
    %5013 = vperm.xlu0 %5012, %v4996
    %v5014 = vpop.permute.xlu0 %5013
    %5017 = vset.pattern.permute.xlu0 0
    %5018 = vperm.xlu0 %5017, %v4997
    %v5019 = vpop.permute.xlu0 %5018
    %5022 = vset.pattern.permute.xlu0 0
    %5023 = vperm.xlu0 %5022, %v4998
    %v5024 = vpop.permute.xlu0 %5023
    %5027 = vset.pattern.permute.xlu0 0
    %5028 = vperm.xlu0 %5027, %v4999
    %v5029 = vpop.permute.xlu0 %5028
    %5032 = vset.pattern.permute.xlu0 0
    %5033 = vperm.xlu0 %5032, %v5000
    %v5034 = vpop.permute.xlu0 %5033
    %5037 = vset.pattern.permute.xlu0 0
    %5038 = vperm.xlu0 %5037, %v5001
    %v5039 = vpop.permute.xlu0 %5038
    %5042 = vset.pattern.permute.xlu0 0
    %5043 = vperm.xlu0 %5042, %v5002
    %v5044 = vpop.permute.xlu0 %5043
    %5047 = vset.pattern.permute.xlu0 0
    %5048 = vperm.xlu0 %5047, %v5003
    %v5049 = vpop.permute.xlu0 %5048
    %5052 = vset.pattern.permute.xlu0 0
    %5053 = vperm.xlu0 %5052, %v5004
    %v5054 = vpop.permute.xlu0 %5053
    %5057 = vset.pattern.permute.xlu0 0
    %5058 = vperm.xlu0 %5057, %v5005
    %v5059 = vpop.permute.xlu0 %5058
    %vm5061 = vcmask 982016
    %v5063 = vsel %vm5061, %v4984, 0
    %v5066 = vsel %vm5061, %v4985, 0
    %v5069 = vsel %vm5061, %v4986, 0
    %v5072 = vsel %vm5061, %v4987, 0
    %v5075 = vsel %vm5061, %v4988, 0
    %v5078 = vsel %vm5061, %v4989, 0
    %v5081 = vsel %vm5061, %v4990, 0
    %v5084 = vsel %vm5061, %v4991, 0
    %v5087 = vsel %vm5061, %v4992, 0
    %v5090 = vsel %vm5061, %v4993, 0
    %v5093 = vsel %vm5061, %v4994, 0
    %5095 = vmatprep.subr.mxu0 0.0
    %5096 = vmatpush1.msra.mxu0 %v4969
    %5097 = vmatprep.subr.mxu0 0.0
    %5098 = vmatpush1.msra.mxu0 %v4970
    %5099 = vmatprep.subr.mxu0 0.0
    %5100 = vmatpush1.msra.mxu0 %v4971
    %5101 = vmatprep.subr.mxu0 0.0
    %5102 = vmatpush1.msra.mxu0 %v4972
    %5103 = vmatprep.subr.mxu0 0.0
    %5104 = vmatpush1.msra.mxu0 %v4973
    %5105 = vmatprep.subr.mxu0 0.0
    %5106 = vmatpush1.msra.mxu0 %v4974
    %5107 = vmatprep.subr.mxu0 0.0
    %5108 = vmatpush1.msra.mxu0 %v4975
    %5109 = vmatprep.subr.mxu0 0.0
    %5110 = vmatpush1.msra.mxu0 %v4976
    %5111 = vmatprep.subr.mxu0 0.0
    %5112 = vmatpush1.msra.mxu0 %v4977
    %5113 = vmatprep.subr.mxu0 0.0
    %5114 = vmatpush1.msra.mxu0 %v4978
    %5115 = vmatprep.subr.mxu0 0.0
    %5116 = vmatpush1.msra.mxu0 %v4979
    %5117 = vmatprep.subr.mxu0 0.0
    %5118 = vmatpush1.msra.mxu0 %v4980
    %5119 = vmatprep.subr.mxu0 0.0
    %5120 = vmatpush1.msra.mxu0 %v4981
    %5121 = vmatprep.subr.mxu0 0.0
    %5122 = vmatpush1.msra.mxu0 %v4982
    %5123 = vmatprep.subr.mxu0 0.0
    %5124 = vmatpush1.msra.mxu0 %v4983
    %5125 = vmatprep.subr.mxu0 0.0
    %5126 = vmatpush1.msra.mxu0 0.0
    %5127 = vmatprep.subr.mxu0 0.0
    %5128 = vmatpush1.msra.mxu0 0.0
    %5129 = vmatprep.subr.mxu0 0.0
    %5130 = vmatpush1.msra.mxu0 0.0
    %5131 = vmatprep.subr.mxu0 0.0
    %5132 = vmatpush1.msra.mxu0 0.0
    %5133 = vmatprep.subr.mxu0 0.0
    %5134 = vmatpush1.msra.mxu0 0.0
    %5135 = vmatprep.subr.mxu0 0.0
    %5136 = vmatpush1.msra.mxu0 0.0
    %5137 = vmatprep.subr.mxu0 0.0
    %5138 = vmatpush1.msra.mxu0 0.0
    %5139 = vmatprep.subr.mxu0 0.0
    %5140 = vmatpush1.msra.mxu0 0.0
    %5141 = vmatprep.subr.mxu0 0.0
    %5142 = vmatpush1.msra.mxu0 0.0
    %5143 = vmatprep.subr.mxu0 0.0
    %5144 = vmatpush1.msra.mxu0 0.0
    %5145 = vmatprep.subr.mxu0 0.0
    %5146 = vmatpush1.msra.mxu0 0.0
    %5147 = vmatprep.subr.mxu0 0.0
    %5148 = vmatpush1.msra.mxu0 0.0
    %5149 = vmatprep.subr.mxu0 0.0
    %5150 = vmatpush1.msra.mxu0 0.0
    %5151 = vmatprep.subr.mxu0 0.0
    %5152 = vmatpush1.msra.mxu0 0.0
    %5153 = vmatprep.subr.mxu0 0.0
    %5154 = vmatpush1.msra.mxu0 0.0
    %5155 = vmatprep.subr.mxu0 0.0
    %5156 = vmatpush1.msra.mxu0 0.0
    %5157 = vmatprep.subr.mxu0 0.0
    %5158 = vmatpush1.msra.mxu0 0.0
    %5159 = vmatprep.mubr.f32.mxu0 0.0
    %5160 = vmatmul.mubr.f32.gmra.mrb[0].mxu0 %v5063
    %v5161 = vpop.f32.mrb[0].mxu0
    %v5162 = vadd.f32 %v5009, %v5161
    %v5163 = vpop.f32.mrb[0].mxu0
    %5164 = vmatprep.mubr.f32.mxu0 0.0
    %5165 = vmatmul.mubr.f32.gmra.mrb[0].mxu0 %v5066
    %v5166 = vpop.f32.mrb[0].mxu0
    %v5167 = vadd.f32 %v5014, %v5166
    %v5168 = vpop.f32.mrb[0].mxu0
    %5169 = vmatprep.mubr.f32.mxu0 0.0
    %5170 = vmatmul.mubr.f32.gmra.mrb[0].mxu0 %v5069
    %v5171 = vpop.f32.mrb[0].mxu0
    %v5172 = vadd.f32 %v5019, %v5171
    %v5173 = vpop.f32.mrb[0].mxu0
    %5174 = vmatprep.mubr.f32.mxu0 0.0
    %5175 = vmatmul.mubr.f32.gmra.mrb[0].mxu0 %v5072
    %v5176 = vpop.f32.mrb[0].mxu0
    %v5177 = vadd.f32 %v5024, %v5176
    %v5178 = vpop.f32.mrb[0].mxu0
    %5179 = vmatprep.mubr.f32.mxu0 0.0
    %5180 = vmatmul.mubr.f32.gmra.mrb[0].mxu0 %v5075
    %v5181 = vpop.f32.mrb[0].mxu0
    %v5182 = vadd.f32 %v5029, %v5181
    %v5183 = vpop.f32.mrb[0].mxu0
    %5184 = vmatprep.mubr.f32.mxu0 0.0
    %5185 = vmatmul.mubr.f32.gmra.mrb[0].mxu0 %v5078
    %v5186 = vpop.f32.mrb[0].mxu0
    %v5187 = vadd.f32 %v5034, %v5186
    %v5188 = vpop.f32.mrb[0].mxu0
    %5189 = vmatprep.mubr.f32.mxu0 0.0
    %5190 = vmatmul.mubr.f32.gmra.mrb[0].mxu0 %v5081
    %v5191 = vpop.f32.mrb[0].mxu0
    %v5192 = vadd.f32 %v5039, %v5191
    %v5193 = vpop.f32.mrb[0].mxu0
    %5194 = vmatprep.mubr.f32.mxu0 0.0
    %5195 = vmatmul.mubr.f32.gmra.mrb[0].mxu0 %v5084
    %v5196 = vpop.f32.mrb[0].mxu0
    %v5197 = vadd.f32 %v5044, %v5196
    %v5198 = vpop.f32.mrb[0].mxu0
    %5199 = vmatprep.mubr.f32.mxu0 0.0
    %5200 = vmatmul.mubr.f32.gmra.mrb[0].mxu0 %v5087
    %v5201 = vpop.f32.mrb[0].mxu0
    %v5202 = vadd.f32 %v5049, %v5201
    %v5203 = vpop.f32.mrb[0].mxu0
    %5204 = vmatprep.mubr.f32.mxu0 0.0
    %5205 = vmatmul.mubr.f32.gmra.mrb[0].mxu0 %v5090
    %v5206 = vpop.f32.mrb[0].mxu0
    %v5207 = vadd.f32 %v5054, %v5206
    %v5208 = vpop.f32.mrb[0].mxu0
    %5209 = vmatprep.mubr.f32.mxu0 0.0
    %5210 = vmatmul.mubr.f32.gmra.mrb[0].mxu0 %v5093
    %v5211 = vpop.f32.mrb[0].mxu0
    %v5212 = vadd.f32 %v5059, %v5211
    %v5213 = vpop.f32.mrb[0].mxu0
    %5214 = vdwg.mxu0
    %v5215 = vtanh.pop %v5162
    %v5216 = vtanh.pop %v5167
    %v5217 = vtanh.pop %v5172
    %v5218 = vtanh.pop %v5177
    %v5219 = vtanh.pop %v5182
    %v5220 = vtanh.pop %v5187
    %v5221 = vtanh.pop %v5192
    %v5222 = vtanh.pop %v5197
    %v5223 = vtanh.pop %v5202
    %v5224 = vtanh.pop %v5207
    %v5225 = vtanh.pop %v5212
    %v5226 = vld [vmem:[%s9] sm:$0xff]
    %v5227 = vld [vmem:[%s9 + $0x8] sm:$0x3]
    %v5228 = vld [vmem:[%s10] sm:$0xff]
    %v5229 = vld [vmem:[%s10 + $0x8] sm:$0x3]
    %5231 = vset.pattern.permute.xlu0 0
    %5232 = vperm.xlu0 %5231, %v5228
    %v5233 = vpop.permute.xlu0 %5232
    %5236 = vset.pattern.permute.xlu0 0
    %5237 = vperm.xlu0 %5236, %v5229
    %v5238 = vpop.permute.xlu0 %5237
    %vm5240 = vcmask 687104
    %v5242 = vsel %vm5240, %v5226, 0
    %v5245 = vsel %vm5240, %v5227, 0
    %vm5247 = vcmask 1043456
    %v5249 = vsel %vm5247, %v5225, 0
    %5251 = vmatprep.subr.mxu0 0.0
    %5252 = vmatpush1.msra.mxu0 %v5215
    %5253 = vmatprep.subr.mxu0 0.0
    %5254 = vmatpush1.msra.mxu0 %v5216
    %5255 = vmatprep.subr.mxu0 0.0
    %5256 = vmatpush1.msra.mxu0 %v5217
    %5257 = vmatprep.subr.mxu0 0.0
    %5258 = vmatpush1.msra.mxu0 %v5218
    %5259 = vmatprep.subr.mxu0 0.0
    %5260 = vmatpush1.msra.mxu0 %v5219
    %5261 = vmatprep.subr.mxu0 0.0
    %5262 = vmatpush1.msra.mxu0 %v5220
    %5263 = vmatprep.subr.mxu0 0.0
    %5264 = vmatpush1.msra.mxu0 %v5221
    %5265 = vmatprep.subr.mxu0 0.0
    %5266 = vmatpush1.msra.mxu0 %v5222
    %5267 = vmatprep.subr.mxu0 0.0
    %5268 = vmatpush1.msra.mxu0 %v5223
    %5269 = vmatprep.subr.mxu0 0.0
    %5270 = vmatpush1.msra.mxu0 %v5224
    %5271 = vmatprep.subr.mxu0 0.0
    %5272 = vmatpush1.msra.mxu0 %v5249
    %5273 = vmatprep.subr.mxu0 0.0
    %5274 = vmatpush1.msra.mxu0 0.0
    %5275 = vmatprep.subr.mxu0 0.0
    %5276 = vmatpush1.msra.mxu0 0.0
    %5277 = vmatprep.subr.mxu0 0.0
    %5278 = vmatpush1.msra.mxu0 0.0
    %5279 = vmatprep.subr.mxu0 0.0
    %5280 = vmatpush1.msra.mxu0 0.0
    %5281 = vmatprep.subr.mxu0 0.0
    %5282 = vmatpush1.msra.mxu0 0.0
    %5283 = vmatprep.subr.mxu0 0.0
    %5284 = vmatpush1.msra.mxu0 0.0
    %5285 = vmatprep.subr.mxu0 0.0
    %5286 = vmatpush1.msra.mxu0 0.0
    %5287 = vmatprep.subr.mxu0 0.0
    %5288 = vmatpush1.msra.mxu0 0.0
    %5289 = vmatprep.subr.mxu0 0.0
    %5290 = vmatpush1.msra.mxu0 0.0
    %5291 = vmatprep.subr.mxu0 0.0
    %5292 = vmatpush1.msra.mxu0 0.0
    %5293 = vmatprep.subr.mxu0 0.0
    %5294 = vmatpush1.msra.mxu0 0.0
    %5295 = vmatprep.subr.mxu0 0.0
    %5296 = vmatpush1.msra.mxu0 0.0
    %5297 = vmatprep.subr.mxu0 0.0
    %5298 = vmatpush1.msra.mxu0 0.0
    %5299 = vmatprep.subr.mxu0 0.0
    %5300 = vmatpush1.msra.mxu0 0.0
    %5301 = vmatprep.subr.mxu0 0.0
    %5302 = vmatpush1.msra.mxu0 0.0
    %5303 = vmatprep.subr.mxu0 0.0
    %5304 = vmatpush1.msra.mxu0 0.0
    %5305 = vmatprep.subr.mxu0 0.0
    %5306 = vmatpush1.msra.mxu0 0.0
    %5307 = vmatprep.subr.mxu0 0.0
    %5308 = vmatpush1.msra.mxu0 0.0
    %5309 = vmatprep.subr.mxu0 0.0
    %5310 = vmatpush1.msra.mxu0 0.0
    %5311 = vmatprep.subr.mxu0 0.0
    %5312 = vmatpush1.msra.mxu0 0.0
    %5313 = vmatprep.subr.mxu0 0.0
    %5314 = vmatpush1.msra.mxu0 0.0
    %5315 = vmatprep.mubr.f32.mxu0 0.0
    %5316 = vmatmul.mubr.f32.gmra.mrb[0].mxu0 %v5242
    %v5317 = vpop.f32.mrb[0].mxu0
    %v5318 = vadd.f32 %v5233, %v5317
    %v5319 = vpop.f32.mrb[0].mxu0
    %5320 = vmatprep.mubr.f32.mxu0 0.0
    %5321 = vmatmul.mubr.f32.gmra.mrb[0].mxu0 %v5245
    %v5322 = vpop.f32.mrb[0].mxu0
    %v5323 = vadd.f32 %v5238, %v5322
    %v5324 = vpop.f32.mrb[0].mxu0
    %5325 = vdwg.mxu0
    %5326 = vst [vmem:[%s11] sm:$0xff] %v5318
    %5327 = vst [vmem:[%s11 + $0x8] sm:$0x3] %v5323
    // Predicated region
    $region90: #{lenet5_forward.1} parent=1 // pred_check
      _
    $region91: #{lenet5_forward.1} parent=1 // pred_check_branch
      %5329 = sbr.rel (0) target = $region93
    $region92: #{lenet5_forward.1} parent=1 // pred_region
      _
    $region93: #{lenet5_forward.1} parent=1 // pred_fallthru
      _
    // Predicated region
    $region94: #{lenet5_forward.1} parent=1 // pred_check
      _
    $region95: #{lenet5_forward.1} parent=1 // pred_check_branch
      %5331 = sbr.rel (0) target = $region97
    $region96: #{lenet5_forward.1} parent=1 // pred_region
      _
    $region97: #{lenet5_forward.1} parent=1 // pred_fallthru
      _
    %5332 = vsyncpa [#allocation8], 1
    %5333 = vsyncpa [#allocation10], 1
    %5334 = vsyncpa [#allocation13], 1

</llo_original>
